<compile_context>
chip_gen: v7x
topology: tpu7x:2x2x1
jax: 0.10.0
libtpu: 0.0.40
codegen_flags: <defaults>
</compile_context>

<pallas_src>
import functools

import jax
import jax.numpy as jnp
from jax.experimental import pallas as pl
from jax.experimental.pallas import tpu as pltpu


# Left zero-margin inside each padded scratch buffer, chosen so the interior
# store lands at a sublane-aligned column offset (8 rows = one f32 tile).
_PADL = 8


def _zero_halo(xpad, h, w):
    """Zero only the 1-px halo the 3x3 taps read (top/bottom rows, two columns).

    The interior is fully overwritten every grid step, so re-zeroing the whole
    buffer (previous version) was ~95% wasted vst traffic."""
    c = xpad.shape[-1]
    wl = _PADL - 1            # leftmost column read by the taps
    wr = _PADL + w            # rightmost column read by the taps
    row = jnp.zeros((1, w + 2, c), jnp.float32)
    xpad[0:1, wl:wr + 1, :] = row
    xpad[h + 1:h + 2, wl:wr + 1, :] = row
    col = jnp.zeros((h, 1, c), jnp.float32)
    xpad[1:h + 1, wl:wl + 1, :] = col
    xpad[1:h + 1, wr:wr + 1, :] = col


def _store_interior(xpad, interior):
    h, w = interior.shape[0], interior.shape[1]
    xpad[1:h + 1, _PADL:_PADL + w, :] = interior


def _tap(xpad, dy, dx, h, w):
    """Shifted (h, w, c) view of the padded scratch for conv tap (dy, dx)."""
    c0 = _PADL - 1 + dx
    return xpad[dy:dy + h, c0:c0 + w, :]


def _conv3x3_dx_folded(xpad, colb, w_ref, b_ref, h, w):
    """3x3 conv + bias + ReLU as 3 accumulating GEMMs (one per kernel row dy).

    Only the horizontal taps are folded into the contraction dim (K = 3*cin),
    so the im2col scratch is 3x smaller than a full 9-tap fold.
    xpad : (h+2, w+_PADL+1, cin) padded input (halo already zeroed)
    colb : (h*w, 3*cin) im2col scratch for one kernel row
    w_ref: (3, 3*cin, cout) weights with (kx, cin) folded into K
    b_ref: (1, cout)
    """
    cin = xpad.shape[-1]
    cout = w_ref.shape[-1]
    acc = jnp.zeros((h * w, cout), jnp.float32)
    for dy in range(3):
        taps = [_tap(xpad, dy, dx, h, w).reshape(h * w, cin) for dx in range(3)]
        if 2 * cin <= 128:
            # Pair the first two taps so the store is one full 128-lane slab;
            # the remaining tap lands at a 128-aligned offset.
            colb[:, 0:2 * cin] = jnp.concatenate(taps[:2], axis=-1)
            colb[:, 2 * cin:3 * cin] = taps[2]
        else:
            for dx in range(3):       # cin == 128: every tap store is aligned
                colb[:, dx * cin:(dx + 1) * cin] = taps[dx]
        acc = acc + jnp.dot(colb[...], w_ref[dy],
                            preferred_element_type=jnp.float32)
    return jnp.maximum(acc + b_ref[...], 0.0)          # (h*w, cout)


def _vgg_fused_kernel(x_ref, w1_ref, b1_ref, w2_ref, b2_ref, w3_ref, b3_ref,
                      w4_ref, b4_ref,
                      r11_ref, r12_ref, r21_ref, r22_ref,
                      xpad1, xpad2, xpad3, xpad4, col2, col3, col4, a2_buf,
                      *, H, W):
    H2, W2 = H // 2, W // 2
    c0 = x_ref.shape[-1]           # 3
    c1 = w1_ref.shape[-1]          # 64
    c2 = w2_ref.shape[-1]          # 64
    c3 = w3_ref.shape[-1]          # 128

    # ---- conv1 + ReLU : (H, W, 3) -> (H*W, 64) ------------------------------
    # Cin=3 cannot fill the MXU; per-tap K=3 GEMMs are kept (negligible FLOPs).
    _zero_halo(xpad1, H, W)
    _store_interior(xpad1, x_ref[0])
    a1 = jnp.zeros((H * W, c1), jnp.float32)
    for t in range(9):
        dy, dx = divmod(t, 3)
        patch = _tap(xpad1, dy, dx, H, W).reshape(H * W, c0)
        a1 = a1 + jnp.dot(patch, w1_ref[dy, dx],
                          preferred_element_type=jnp.float32)
    a1 = jnp.maximum(a1 + b1_ref[...], 0.0)                        # (H*W, 64)

    # Stash a1 into conv2's padded scratch, then emit relu1_1 as a lane-dense
    # (H*W/2, 128) slab (two pixels per row) built from even/odd-pixel strided
    # reads -> full-width stores + dense HBM writeback.
    _zero_halo(xpad2, H, W)
    _store_interior(xpad2, a1.reshape(H, W, c1))
    ev1 = xpad2[1:H + 1, pl.ds(_PADL, W2, stride=2), :]            # (H, W/2, 64)
    od1 = xpad2[1:H + 1, pl.ds(_PADL + 1, W2, stride=2), :]
    r11_ref[0] = jnp.concatenate([ev1, od1], axis=-1).reshape(H * W2, 2 * c1)

    # ---- conv2 + ReLU : (H, W, 64) -> (H*W, 64) -----------------------------
    a2 = _conv3x3_dx_folded(xpad2, col2, w2_ref, b2_ref, H, W)     # (H*W, 64)
    a2_buf[...] = a2
    ev2 = a2_buf[pl.ds(0, H * W2, stride=2), :]                    # even pixels
    od2 = a2_buf[pl.ds(1, H * W2, stride=2), :]                    # odd pixels
    r12_ref[0] = jnp.concatenate([ev2, od2], axis=-1)              # (H*W/2, 128)

    # ---- 2x2 max-pool, stride 2: reuse the even/odd split -------------------
    wmax = jnp.maximum(ev2, od2)                                   # (H*W/2, 64)
    v = wmax.reshape(H2, 2, W2, c2)                                # leading split
    p1 = jnp.maximum(v[:, 0], v[:, 1])                             # (H2, W2, 64)

    # ---- conv3 + ReLU : (H2, W2, 64) -> (H2*W2, 128) ------------------------
    _zero_halo(xpad3, H2, W2)
    _store_interior(xpad3, p1)
    a3 = _conv3x3_dx_folded(xpad3, col3, w3_ref, b3_ref, H2, W2)   # (H2*W2, 128)
    r21_ref[0] = a3

    # ---- conv4 + ReLU : (H2, W2, 128) -> (H2*W2, 128) -----------------------
    _zero_halo(xpad4, H2, W2)
    _store_interior(xpad4, a3.reshape(H2, W2, c3))
    a4 = _conv3x3_dx_folded(xpad4, col4, w4_ref, b4_ref, H2, W2)   # (H2*W2, 128)
    r22_ref[0] = a4


def init_vgg_params(key):
    shapes = [(3, 64), (64, 64), (64, 128), (128, 128)]
    params = []
    for cin, cout in shapes:
        key, kw, kb = jax.random.split(key, 3)
        w = jax.random.normal(kw, (3, 3, cin, cout), jnp.float32) * (
            1.0 / jnp.sqrt(9.0 * cin))
        b = jax.random.normal(kb, (cout,), jnp.float32) * 0.01
        params.append((w, b))
    return params


def vgg_v2_forward(x_nchw, params):
    """Returns [relu1_1, relu1_2, relu2_1, relu2_2] in NCHW, like the module."""
    N, cin0, H, W = x_nchw.shape
    # Even H, and W / W//2 multiples of 8 keep the in-kernel reshapes tile-clean
    # (holds for VGG-style sizes: 16, 32, ..., 224).
    assert H % 2 == 0 and W % 16 == 0, "expect even H and W a multiple of 16"
    H2, W2 = H // 2, W // 2
    (w1, b1), (w2, b2), (w3, b3), (w4, b4) = params
    c0, c1 = w1.shape[2], w1.shape[3]
    c2, c3, c4 = w2.shape[3], w3.shape[3], w4.shape[3]
    assert cin0 == c0 and w2.shape[2] == c1
    assert w3.shape[2] == c2 and w4.shape[2] == c3

    x = jnp.transpose(x_nchw, (0, 2, 3, 1))                   # NCHW -> NHWC
    # Fold only the horizontal taps into K: (3, 3*Cin, Cout) per conv.
    w2r = w2.reshape(3, 3 * c1, c2)
    w3r = w3.reshape(3, 3 * c2, c3)
    w4r = w4.reshape(3, 3 * c3, c4)
    b1r, b2r, b3r, b4r = (b.reshape(1, -1) for b in (b1, b2, b3, b4))

    kernel = functools.partial(_vgg_fused_kernel, H=H, W=W)

    flops = 2 * N * 9 * (H * W * c0 * c1 + H * W * c1 * c2
                         + H2 * W2 * c2 * c3 + H2 * W2 * c3 * c4)
    bytes_accessed = 4 * (N * H * W * c0
                          + w1.size + w2.size + w3.size + w4.size
                          + b1.size + b2.size + b3.size + b4.size
                          + N * H * W * (c1 + c2) + N * H2 * W2 * (c3 + c4))

    r11, r12, r21, r22 = pl.pallas_call(
        kernel,
        out_shape=(
            # relu1_1 / relu1_2 are lane-dense 128-wide slabs (2 pixels / row);
            # same contiguous bytes as (N, H, W, 64) -> free reshape below.
            jax.ShapeDtypeStruct((N, H * W // 2, 2 * c1), jnp.float32),
            jax.ShapeDtypeStruct((N, H * W // 2, 2 * c2), jnp.float32),
            jax.ShapeDtypeStruct((N, H2 * W2, c3), jnp.float32),
            jax.ShapeDtypeStruct((N, H2 * W2, c4), jnp.float32),
        ),
        grid_spec=pltpu.PrefetchScalarGridSpec(
            num_scalar_prefetch=0,
            grid=(N,),
            in_specs=[
                # TODO(synk): the (.., 3)-last-dim input block is VMEM/DMA
                # wasteful at large H, W; kept because the chw->hwc relayout is
                # not expressible in-kernel (see header).  Fixed by row tiling
                # at real sizes.
                pl.BlockSpec((1, H, W, c0), lambda n: (n, 0, 0, 0)),     # x
                pl.BlockSpec((3, 3, c0, c1), lambda n: (0, 0, 0, 0)),    # w1 HWIO
                pl.BlockSpec((1, c1), lambda n: (0, 0)),                 # b1
                pl.BlockSpec((3, 3 * c1, c2), lambda n: (0, 0, 0)),      # w2 dx-folded
                pl.BlockSpec((1, c2), lambda n: (0, 0)),                 # b2
                pl.BlockSpec((3, 3 * c2, c3), lambda n: (0, 0, 0)),      # w3 dx-folded
                pl.BlockSpec((1, c3), lambda n: (0, 0)),                 # b3
                pl.BlockSpec((3, 3 * c3, c4), lambda n: (0, 0, 0)),      # w4 dx-folded
                pl.BlockSpec((1, c4), lambda n: (0, 0)),                 # b4
            ],
            out_specs=[
                pl.BlockSpec((1, H * W // 2, 2 * c1), lambda n: (n, 0, 0)),  # relu1_1
                pl.BlockSpec((1, H * W // 2, 2 * c2), lambda n: (n, 0, 0)),  # relu1_2
                pl.BlockSpec((1, H2 * W2, c3), lambda n: (n, 0, 0)),         # relu2_1
                pl.BlockSpec((1, H2 * W2, c4), lambda n: (n, 0, 0)),         # relu2_2
            ],
            scratch_shapes=[
                pltpu.VMEM((H + 2, W + _PADL + 1, c0), jnp.float32),     # pad conv1
                pltpu.VMEM((H + 2, W + _PADL + 1, c1), jnp.float32),     # pad conv2
                pltpu.VMEM((H2 + 2, W2 + _PADL + 1, c2), jnp.float32),   # pad conv3
                pltpu.VMEM((H2 + 2, W2 + _PADL + 1, c3), jnp.float32),   # pad conv4
                pltpu.VMEM((H * W, 3 * c1), jnp.float32),                # im2col c2
                pltpu.VMEM((H2 * W2, 3 * c2), jnp.float32),              # im2col c3
                pltpu.VMEM((H2 * W2, 3 * c3), jnp.float32),              # im2col c4
                pltpu.VMEM((H * W, c2), jnp.float32),                    # a2 stash
            ],
        ),
        compiler_params=pltpu.CompilerParams(
            dimension_semantics=("parallel",)),
        cost_estimate=pl.CostEstimate(flops=int(flops), transcendentals=0,
                                      bytes_accessed=int(bytes_accessed)),
    )(x, w1, b1r, w2r, b2r, w3r, b3r, w4r, b4r)

    def to_nchw(a, h, w, c):
        return jnp.transpose(a.reshape(N, h, w, c), (0, 3, 1, 2))

    return [to_nchw(r11, H, W, c1), to_nchw(r12, H, W, c2),
            to_nchw(r21, H2, W2, c3), to_nchw(r22, H2, W2, c4)]


# ---------------------------------------------------------------------------
# Pure-JAX reference for correctness checking.
# ---------------------------------------------------------------------------
def reference_forward(x_nchw, params):
    x = jnp.transpose(x_nchw, (0, 2, 3, 1))

    def conv(x, w, b):
        y = jax.lax.conv_general_dilated(
            x, w, window_strides=(1, 1), padding="SAME",
            dimension_numbers=("NHWC", "HWIO", "NHWC"),
            precision=jax.lax.Precision.HIGHEST)
        return jnp.maximum(y + b, 0.0)

    def pool(x):
        return jax.lax.reduce_window(x, -jnp.inf, jax.lax.max,
                                     (1, 2, 2, 1), (1, 2, 2, 1), "VALID")

    (w1, b1), (w2, b2), (w3, b3), (w4, b4) = params
    r11 = conv(x, w1, b1)
    r12 = conv(r11, w2, b2)
    p1 = pool(r12)
    r21 = conv(p1, w3, b3)
    r22 = conv(r21, w4, b4)
    return [jnp.transpose(o, (0, 3, 1, 2)) for o in (r11, r12, r21, r22)]


if __name__ == "__main__":
    key = jax.random.PRNGKey(0)
    kx, kp = jax.random.split(key)
    x = jax.random.normal(kx, (2, 3, 16, 16), jnp.float32)   # NCHW input
    params = init_vgg_params(kp)

    outs = jax.jit(vgg_v2_forward)(x, params)
    outs = jax.block_until_ready(outs)

    refs = reference_forward(x, params)
    expected_shapes = [(2, 64, 16, 16), (2, 64, 16, 16),
                       (2, 128, 8, 8), (2, 128, 8, 8)]
    for o, r, s in zip(outs, refs, expected_shapes):
        assert o.shape == s, (o.shape, s)
        assert jnp.allclose(o, r, atol=2e-4, rtol=2e-4), "mismatch vs reference"

    print("KERNEL_OK")
</pallas_src>

<mosaic_0001>
module attributes {stable_mosaic.version = 11 : i64} {
  func.func @_vgg_fused_kernel(%arg0: i32, %arg1: memref<1x16x16x3xf32, #tpu.memory_space<vmem>>, %arg2: memref<3x3x3x64xf32, #tpu.memory_space<vmem>>, %arg3: memref<1x64xf32, #tpu.memory_space<vmem>>, %arg4: memref<3x192x64xf32, #tpu.memory_space<vmem>>, %arg5: memref<1x64xf32, #tpu.memory_space<vmem>>, %arg6: memref<3x192x128xf32, #tpu.memory_space<vmem>>, %arg7: memref<1x128xf32, #tpu.memory_space<vmem>>, %arg8: memref<3x384x128xf32, #tpu.memory_space<vmem>>, %arg9: memref<1x128xf32, #tpu.memory_space<vmem>>, %arg10: memref<1x128x128xf32, #tpu.memory_space<vmem>>, %arg11: memref<1x128x128xf32, #tpu.memory_space<vmem>>, %arg12: memref<1x64x128xf32, #tpu.memory_space<vmem>>, %arg13: memref<1x64x128xf32, #tpu.memory_space<vmem>>, %arg14: memref<18x25x3xf32, #tpu.memory_space<vmem>>, %arg15: memref<18x25x64xf32, #tpu.memory_space<vmem>>, %arg16: memref<10x17x64xf32, #tpu.memory_space<vmem>>, %arg17: memref<10x17x128xf32, #tpu.memory_space<vmem>>, %arg18: memref<256x192xf32, #tpu.memory_space<vmem>>, %arg19: memref<64x192xf32, #tpu.memory_space<vmem>>, %arg20: memref<64x384xf32, #tpu.memory_space<vmem>>, %arg21: memref<256x64xf32, #tpu.memory_space<vmem>>) attributes {dimension_semantics = [#tpu.dimension_semantics<parallel>], iteration_bounds = array<i64: 2>, scalar_prefetch = 0 : i64, scratch_operands = 8 : i64, tpu.core_type = #tpu.core_type<tc>, window_params = [{transform_indices = @transform_0, window_bounds = array<i64: 1, 16, 16, 3>}, {pipeline_mode = #tpu.pipeline_mode<synchronous>, transform_indices = @transform_1, window_bounds = array<i64: 3, 3, 3, 64>}, {pipeline_mode = #tpu.pipeline_mode<synchronous>, transform_indices = @transform_2, window_bounds = array<i64: 1, 64>}, {pipeline_mode = #tpu.pipeline_mode<synchronous>, transform_indices = @transform_3, window_bounds = array<i64: 3, 192, 64>}, {pipeline_mode = #tpu.pipeline_mode<synchronous>, transform_indices = @transform_4, window_bounds = array<i64: 1, 64>}, {pipeline_mode = #tpu.pipeline_mode<synchronous>, transform_indices = @transform_5, window_bounds = array<i64: 3, 192, 128>}, {pipeline_mode = #tpu.pipeline_mode<synchronous>, transform_indices = @transform_6, window_bounds = array<i64: 1, 128>}, {pipeline_mode = #tpu.pipeline_mode<synchronous>, transform_indices = @transform_7, window_bounds = array<i64: 3, 384, 128>}, {pipeline_mode = #tpu.pipeline_mode<synchronous>, transform_indices = @transform_8, window_bounds = array<i64: 1, 128>}, {transform_indices = @transform_9, window_bounds = array<i64: 1, 128, 128>}, {transform_indices = @transform_10, window_bounds = array<i64: 1, 128, 128>}, {transform_indices = @transform_11, window_bounds = array<i64: 1, 64, 128>}, {transform_indices = @transform_12, window_bounds = array<i64: 1, 64, 128>}]} {
    %cst = arith.constant 0.000000e+00 : f32
    %0 = vector.broadcast %cst : f32 to vector<1x18x3xf32>
    %c0 = arith.constant 0 : index
    %c7 = arith.constant 7 : index
    %c0_0 = arith.constant 0 : index
    %1 = vector.load %arg14[%c0, %c7, %c0_0] : memref<18x25x3xf32, #tpu.memory_space<vmem>>, vector<1x18x3xf32>
    tpu.vector_store %arg14[%c0, %c7, %c0_0], %0 {strides = array<i32>} : memref<18x25x3xf32, #tpu.memory_space<vmem>>, vector<1x18x3xf32>,
    %c17 = arith.constant 17 : index
    %c7_1 = arith.constant 7 : index
    %c0_2 = arith.constant 0 : index
    %2 = vector.load %arg14[%c17, %c7_1, %c0_2] : memref<18x25x3xf32, #tpu.memory_space<vmem>>, vector<1x18x3xf32>
    tpu.vector_store %arg14[%c17, %c7_1, %c0_2], %0 {strides = array<i32>} : memref<18x25x3xf32, #tpu.memory_space<vmem>>, vector<1x18x3xf32>,
    %cst_3 = arith.constant 0.000000e+00 : f32
    %3 = vector.broadcast %cst_3 : f32 to vector<16x1x3xf32>
    %c1 = arith.constant 1 : index
    %c7_4 = arith.constant 7 : index
    %c0_5 = arith.constant 0 : index
    %4 = vector.load %arg14[%c1, %c7_4, %c0_5] : memref<18x25x3xf32, #tpu.memory_space<vmem>>, vector<16x1x3xf32>
    tpu.vector_store %arg14[%c1, %c7_4, %c0_5], %3 {strides = array<i32>} : memref<18x25x3xf32, #tpu.memory_space<vmem>>, vector<16x1x3xf32>,
    %c1_6 = arith.constant 1 : index
    %c24 = arith.constant 24 : index
    %c0_7 = arith.constant 0 : index
    %5 = vector.load %arg14[%c1_6, %c24, %c0_7] : memref<18x25x3xf32, #tpu.memory_space<vmem>>, vector<16x1x3xf32>
    tpu.vector_store %arg14[%c1_6, %c24, %c0_7], %3 {strides = array<i32>} : memref<18x25x3xf32, #tpu.memory_space<vmem>>, vector<16x1x3xf32>,
    %c0_8 = arith.constant 0 : index
    %c0_9 = arith.constant 0 : index
    %c0_10 = arith.constant 0 : index
    %c0_11 = arith.constant 0 : index
    %6 = vector.load %arg1[%c0_8, %c0_9, %c0_10, %c0_11] : memref<1x16x16x3xf32, #tpu.memory_space<vmem>>, vector<1x16x16x3xf32>
    %7 = vector.shape_cast %6 : vector<1x16x16x3xf32> to vector<16x16x3xf32>
    %c1_12 = arith.constant 1 : index
    %c8 = arith.constant 8 : index
    %c0_13 = arith.constant 0 : index
    %8 = vector.load %arg14[%c1_12, %c8, %c0_13] : memref<18x25x3xf32, #tpu.memory_space<vmem>>, vector<16x16x3xf32>
    tpu.vector_store %arg14[%c1_12, %c8, %c0_13], %7 {strides = array<i32>} : memref<18x25x3xf32, #tpu.memory_space<vmem>>, vector<16x16x3xf32>,
    %cst_14 = arith.constant 0.000000e+00 : f32
    %9 = vector.broadcast %cst_14 : f32 to vector<256x64xf32>
    %c0_15 = arith.constant 0 : index
    %c7_16 = arith.constant 7 : index
    %c0_17 = arith.constant 0 : index
    %10 = vector.load %arg14[%c0_15, %c7_16, %c0_17] : memref<18x25x3xf32, #tpu.memory_space<vmem>>, vector<16x16x3xf32>
    %11 = vector.shape_cast %10 : vector<16x16x3xf32> to vector<256x3xf32>
    %c0_18 = arith.constant 0 : index
    %c0_19 = arith.constant 0 : index
    %c0_20 = arith.constant 0 : index
    %c0_21 = arith.constant 0 : index
    %12 = vector.load %arg2[%c0_18, %c0_19, %c0_20, %c0_21] : memref<3x3x3x64xf32, #tpu.memory_space<vmem>>, vector<1x1x3x64xf32>
    %13 = vector.shape_cast %12 : vector<1x1x3x64xf32> to vector<3x64xf32>
    %cst_22 = arith.constant dense<0.000000e+00> : vector<256x64xf32>
    %14 = tpu.matmul %11, %13, %cst_22 {dimension_numbers = #tpu.dot_dimension_numbers<[1], [0], [0], [1], [0, 0, 1, 1], [], []>} : vector<256x3xf32>, vector<3x64xf32>, vector<256x64xf32> -> vector<256x64xf32>
    %15 = arith.addf %9, %14 : vector<256x64xf32>
    %c0_23 = arith.constant 0 : index
    %c8_24 = arith.constant 8 : index
    %c0_25 = arith.constant 0 : index
    %16 = vector.load %arg14[%c0_23, %c8_24, %c0_25] : memref<18x25x3xf32, #tpu.memory_space<vmem>>, vector<16x16x3xf32>
    %17 = vector.shape_cast %16 : vector<16x16x3xf32> to vector<256x3xf32>
    %c0_26 = arith.constant 0 : index
    %c1_27 = arith.constant 1 : index
    %c0_28 = arith.constant 0 : index
    %c0_29 = arith.constant 0 : index
    %18 = vector.load %arg2[%c0_26, %c1_27, %c0_28, %c0_29] : memref<3x3x3x64xf32, #tpu.memory_space<vmem>>, vector<1x1x3x64xf32>
    %19 = vector.shape_cast %18 : vector<1x1x3x64xf32> to vector<3x64xf32>
    %cst_30 = arith.constant dense<0.000000e+00> : vector<256x64xf32>
    %20 = tpu.matmul %17, %19, %cst_30 {dimension_numbers = #tpu.dot_dimension_numbers<[1], [0], [0], [1], [0, 0, 1, 1], [], []>} : vector<256x3xf32>, vector<3x64xf32>, vector<256x64xf32> -> vector<256x64xf32>
    %21 = arith.addf %15, %20 : vector<256x64xf32>
    %c0_31 = arith.constant 0 : index
    %c9 = arith.constant 9 : index
    %c0_32 = arith.constant 0 : index
    %22 = vector.load %arg14[%c0_31, %c9, %c0_32] : memref<18x25x3xf32, #tpu.memory_space<vmem>>, vector<16x16x3xf32>
    %23 = vector.shape_cast %22 : vector<16x16x3xf32> to vector<256x3xf32>
    %c0_33 = arith.constant 0 : index
    %c2 = arith.constant 2 : index
    %c0_34 = arith.constant 0 : index
    %c0_35 = arith.constant 0 : index
    %24 = vector.load %arg2[%c0_33, %c2, %c0_34, %c0_35] : memref<3x3x3x64xf32, #tpu.memory_space<vmem>>, vector<1x1x3x64xf32>
    %25 = vector.shape_cast %24 : vector<1x1x3x64xf32> to vector<3x64xf32>
    %cst_36 = arith.constant dense<0.000000e+00> : vector<256x64xf32>
    %26 = tpu.matmul %23, %25, %cst_36 {dimension_numbers = #tpu.dot_dimension_numbers<[1], [0], [0], [1], [0, 0, 1, 1], [], []>} : vector<256x3xf32>, vector<3x64xf32>, vector<256x64xf32> -> vector<256x64xf32>
    %27 = arith.addf %21, %26 : vector<256x64xf32>
    %c1_37 = arith.constant 1 : index
    %c7_38 = arith.constant 7 : index
    %c0_39 = arith.constant 0 : index
    %28 = vector.load %arg14[%c1_37, %c7_38, %c0_39] : memref<18x25x3xf32, #tpu.memory_space<vmem>>, vector<16x16x3xf32>
    %29 = vector.shape_cast %28 : vector<16x16x3xf32> to vector<256x3xf32>
    %c1_40 = arith.constant 1 : index
    %c0_41 = arith.constant 0 : index
    %c0_42 = arith.constant 0 : index
    %c0_43 = arith.constant 0 : index
    %30 = vector.load %arg2[%c1_40, %c0_41, %c0_42, %c0_43] : memref<3x3x3x64xf32, #tpu.memory_space<vmem>>, vector<1x1x3x64xf32>
    %31 = vector.shape_cast %30 : vector<1x1x3x64xf32> to vector<3x64xf32>
    %cst_44 = arith.constant dense<0.000000e+00> : vector<256x64xf32>
    %32 = tpu.matmul %29, %31, %cst_44 {dimension_numbers = #tpu.dot_dimension_numbers<[1], [0], [0], [1], [0, 0, 1, 1], [], []>} : vector<256x3xf32>, vector<3x64xf32>, vector<256x64xf32> -> vector<256x64xf32>
    %33 = arith.addf %27, %32 : vector<256x64xf32>
    %c1_45 = arith.constant 1 : index
    %c8_46 = arith.constant 8 : index
    %c0_47 = arith.constant 0 : index
    %34 = vector.load %arg14[%c1_45, %c8_46, %c0_47] : memref<18x25x3xf32, #tpu.memory_space<vmem>>, vector<16x16x3xf32>
    %35 = vector.shape_cast %34 : vector<16x16x3xf32> to vector<256x3xf32>
    %c1_48 = arith.constant 1 : index
    %c1_49 = arith.constant 1 : index
    %c0_50 = arith.constant 0 : index
    %c0_51 = arith.constant 0 : index
    %36 = vector.load %arg2[%c1_48, %c1_49, %c0_50, %c0_51] : memref<3x3x3x64xf32, #tpu.memory_space<vmem>>, vector<1x1x3x64xf32>
    %37 = vector.shape_cast %36 : vector<1x1x3x64xf32> to vector<3x64xf32>
    %cst_52 = arith.constant dense<0.000000e+00> : vector<256x64xf32>
    %38 = tpu.matmul %35, %37, %cst_52 {dimension_numbers = #tpu.dot_dimension_numbers<[1], [0], [0], [1], [0, 0, 1, 1], [], []>} : vector<256x3xf32>, vector<3x64xf32>, vector<256x64xf32> -> vector<256x64xf32>
    %39 = arith.addf %33, %38 : vector<256x64xf32>
    %c1_53 = arith.constant 1 : index
    %c9_54 = arith.constant 9 : index
    %c0_55 = arith.constant 0 : index
    %40 = vector.load %arg14[%c1_53, %c9_54, %c0_55] : memref<18x25x3xf32, #tpu.memory_space<vmem>>, vector<16x16x3xf32>
    %41 = vector.shape_cast %40 : vector<16x16x3xf32> to vector<256x3xf32>
    %c1_56 = arith.constant 1 : index
    %c2_57 = arith.constant 2 : index
    %c0_58 = arith.constant 0 : index
    %c0_59 = arith.constant 0 : index
    %42 = vector.load %arg2[%c1_56, %c2_57, %c0_58, %c0_59] : memref<3x3x3x64xf32, #tpu.memory_space<vmem>>, vector<1x1x3x64xf32>
    %43 = vector.shape_cast %42 : vector<1x1x3x64xf32> to vector<3x64xf32>
    %cst_60 = arith.constant dense<0.000000e+00> : vector<256x64xf32>
    %44 = tpu.matmul %41, %43, %cst_60 {dimension_numbers = #tpu.dot_dimension_numbers<[1], [0], [0], [1], [0, 0, 1, 1], [], []>} : vector<256x3xf32>, vector<3x64xf32>, vector<256x64xf32> -> vector<256x64xf32>
    %45 = arith.addf %39, %44 : vector<256x64xf32>
    %c2_61 = arith.constant 2 : index
    %c7_62 = arith.constant 7 : index
    %c0_63 = arith.constant 0 : index
    %46 = vector.load %arg14[%c2_61, %c7_62, %c0_63] : memref<18x25x3xf32, #tpu.memory_space<vmem>>, vector<16x16x3xf32>
    %47 = vector.shape_cast %46 : vector<16x16x3xf32> to vector<256x3xf32>
    %c2_64 = arith.constant 2 : index
    %c0_65 = arith.constant 0 : index
    %c0_66 = arith.constant 0 : index
    %c0_67 = arith.constant 0 : index
    %48 = vector.load %arg2[%c2_64, %c0_65, %c0_66, %c0_67] : memref<3x3x3x64xf32, #tpu.memory_space<vmem>>, vector<1x1x3x64xf32>
    %49 = vector.shape_cast %48 : vector<1x1x3x64xf32> to vector<3x64xf32>
    %cst_68 = arith.constant dense<0.000000e+00> : vector<256x64xf32>
    %50 = tpu.matmul %47, %49, %cst_68 {dimension_numbers = #tpu.dot_dimension_numbers<[1], [0], [0], [1], [0, 0, 1, 1], [], []>} : vector<256x3xf32>, vector<3x64xf32>, vector<256x64xf32> -> vector<256x64xf32>
    %51 = arith.addf %45, %50 : vector<256x64xf32>
    %c2_69 = arith.constant 2 : index
    %c8_70 = arith.constant 8 : index
    %c0_71 = arith.constant 0 : index
    %52 = vector.load %arg14[%c2_69, %c8_70, %c0_71] : memref<18x25x3xf32, #tpu.memory_space<vmem>>, vector<16x16x3xf32>
    %53 = vector.shape_cast %52 : vector<16x16x3xf32> to vector<256x3xf32>
    %c2_72 = arith.constant 2 : index
    %c1_73 = arith.constant 1 : index
    %c0_74 = arith.constant 0 : index
    %c0_75 = arith.constant 0 : index
    %54 = vector.load %arg2[%c2_72, %c1_73, %c0_74, %c0_75] : memref<3x3x3x64xf32, #tpu.memory_space<vmem>>, vector<1x1x3x64xf32>
    %55 = vector.shape_cast %54 : vector<1x1x3x64xf32> to vector<3x64xf32>
    %cst_76 = arith.constant dense<0.000000e+00> : vector<256x64xf32>
    %56 = tpu.matmul %53, %55, %cst_76 {dimension_numbers = #tpu.dot_dimension_numbers<[1], [0], [0], [1], [0, 0, 1, 1], [], []>} : vector<256x3xf32>, vector<3x64xf32>, vector<256x64xf32> -> vector<256x64xf32>
    %57 = arith.addf %51, %56 : vector<256x64xf32>
    %c2_77 = arith.constant 2 : index
    %c9_78 = arith.constant 9 : index
    %c0_79 = arith.constant 0 : index
    %58 = vector.load %arg14[%c2_77, %c9_78, %c0_79] : memref<18x25x3xf32, #tpu.memory_space<vmem>>, vector<16x16x3xf32>
    %59 = vector.shape_cast %58 : vector<16x16x3xf32> to vector<256x3xf32>
    %c2_80 = arith.constant 2 : index
    %c2_81 = arith.constant 2 : index
    %c0_82 = arith.constant 0 : index
    %c0_83 = arith.constant 0 : index
    %60 = vector.load %arg2[%c2_80, %c2_81, %c0_82, %c0_83] : memref<3x3x3x64xf32, #tpu.memory_space<vmem>>, vector<1x1x3x64xf32>
    %61 = vector.shape_cast %60 : vector<1x1x3x64xf32> to vector<3x64xf32>
    %cst_84 = arith.constant dense<0.000000e+00> : vector<256x64xf32>
    %62 = tpu.matmul %59, %61, %cst_84 {dimension_numbers = #tpu.dot_dimension_numbers<[1], [0], [0], [1], [0, 0, 1, 1], [], []>} : vector<256x3xf32>, vector<3x64xf32>, vector<256x64xf32> -> vector<256x64xf32>
    %63 = arith.addf %57, %62 : vector<256x64xf32>
    %c0_85 = arith.constant 0 : index
    %c0_86 = arith.constant 0 : index
    %64 = vector.load %arg3[%c0_85, %c0_86] : memref<1x64xf32, #tpu.memory_space<vmem>>, vector<1x64xf32>
    %65 = vector.broadcast %64 : vector<1x64xf32> to vector<256x64xf32>
    %66 = arith.addf %63, %65 : vector<256x64xf32>
    %cst_87 = arith.constant 0.000000e+00 : f32
    %67 = vector.broadcast %cst_87 : f32 to vector<256x64xf32>
    %68 = arith.maximumf %66, %67 : vector<256x64xf32>
    %cst_88 = arith.constant 0.000000e+00 : f32
    %69 = vector.broadcast %cst_88 : f32 to vector<1x18x64xf32>
    %c0_89 = arith.constant 0 : index
    %c7_90 = arith.constant 7 : index
    %c0_91 = arith.constant 0 : index
    %70 = vector.load %arg15[%c0_89, %c7_90, %c0_91] : memref<18x25x64xf32, #tpu.memory_space<vmem>>, vector<1x18x64xf32>
    tpu.vector_store %arg15[%c0_89, %c7_90, %c0_91], %69 {strides = array<i32>} : memref<18x25x64xf32, #tpu.memory_space<vmem>>, vector<1x18x64xf32>,
    %c17_92 = arith.constant 17 : index
    %c7_93 = arith.constant 7 : index
    %c0_94 = arith.constant 0 : index
    %71 = vector.load %arg15[%c17_92, %c7_93, %c0_94] : memref<18x25x64xf32, #tpu.memory_space<vmem>>, vector<1x18x64xf32>
    tpu.vector_store %arg15[%c17_92, %c7_93, %c0_94], %69 {strides = array<i32>} : memref<18x25x64xf32, #tpu.memory_space<vmem>>, vector<1x18x64xf32>,
    %cst_95 = arith.constant 0.000000e+00 : f32
    %72 = vector.broadcast %cst_95 : f32 to vector<16x1x64xf32>
    %c1_96 = arith.constant 1 : index
    %c7_97 = arith.constant 7 : index
    %c0_98 = arith.constant 0 : index
    %73 = vector.load %arg15[%c1_96, %c7_97, %c0_98] : memref<18x25x64xf32, #tpu.memory_space<vmem>>, vector<16x1x64xf32>
    tpu.vector_store %arg15[%c1_96, %c7_97, %c0_98], %72 {strides = array<i32>} : memref<18x25x64xf32, #tpu.memory_space<vmem>>, vector<16x1x64xf32>,
    %c1_99 = arith.constant 1 : index
    %c24_100 = arith.constant 24 : index
    %c0_101 = arith.constant 0 : index
    %74 = vector.load %arg15[%c1_99, %c24_100, %c0_101] : memref<18x25x64xf32, #tpu.memory_space<vmem>>, vector<16x1x64xf32>
    tpu.vector_store %arg15[%c1_99, %c24_100, %c0_101], %72 {strides = array<i32>} : memref<18x25x64xf32, #tpu.memory_space<vmem>>, vector<16x1x64xf32>,
    %75 = vector.shape_cast %68 : vector<256x64xf32> to vector<16x16x64xf32>
    %c1_102 = arith.constant 1 : index
    %c8_103 = arith.constant 8 : index
    %c0_104 = arith.constant 0 : index
    %76 = vector.load %arg15[%c1_102, %c8_103, %c0_104] : memref<18x25x64xf32, #tpu.memory_space<vmem>>, vector<16x16x64xf32>
    tpu.vector_store %arg15[%c1_102, %c8_103, %c0_104], %75 {strides = array<i32>} : memref<18x25x64xf32, #tpu.memory_space<vmem>>, vector<16x16x64xf32>,
    %c1_105 = arith.constant 1 : index
    %c8_106 = arith.constant 8 : index
    %c0_107 = arith.constant 0 : index
    %77 = tpu.strided_load %arg15[%c1_105, %c8_106, %c0_107] {strides = array<i32: 1, 2, 1>} : memref<18x25x64xf32, #tpu.memory_space<vmem>>, vector<16x8x64xf32>
    %c1_108 = arith.constant 1 : index
    %c9_109 = arith.constant 9 : index
    %c0_110 = arith.constant 0 : index
    %78 = tpu.strided_load %arg15[%c1_108, %c9_109, %c0_110] {strides = array<i32: 1, 2, 1>} : memref<18x25x64xf32, #tpu.memory_space<vmem>>, vector<16x8x64xf32>
    %79 = tpu.concatenate %77, %78 in 2 : vector<16x8x64xf32>, vector<16x8x64xf32> -> vector<16x8x128xf32>
    %80 = vector.shape_cast %79 : vector<16x8x128xf32> to vector<128x128xf32>
    %c0_111 = arith.constant 0 : index
    %c0_112 = arith.constant 0 : index
    %c0_113 = arith.constant 0 : index
    %81 = vector.load %arg10[%c0_111, %c0_112, %c0_113] : memref<1x128x128xf32, #tpu.memory_space<vmem>>, vector<1x128x128xf32>
    %82 = vector.shape_cast %81 : vector<1x128x128xf32> to vector<128x128xf32>
    %83 = vector.shape_cast %80 : vector<128x128xf32> to vector<1x128x128xf32>
    tpu.vector_store %arg10[%c0_111, %c0_112, %c0_113], %83 {strides = array<i32>} : memref<1x128x128xf32, #tpu.memory_space<vmem>>, vector<1x128x128xf32>,
    %cst_114 = arith.constant 0.000000e+00 : f32
    %84 = vector.broadcast %cst_114 : f32 to vector<256x64xf32>
    %c0_115 = arith.constant 0 : index
    %c7_116 = arith.constant 7 : index
    %c0_117 = arith.constant 0 : index
    %85 = vector.load %arg15[%c0_115, %c7_116, %c0_117] : memref<18x25x64xf32, #tpu.memory_space<vmem>>, vector<16x16x64xf32>
    %86 = vector.shape_cast %85 : vector<16x16x64xf32> to vector<256x64xf32>
    %c0_118 = arith.constant 0 : index
    %c8_119 = arith.constant 8 : index
    %c0_120 = arith.constant 0 : index
    %87 = vector.load %arg15[%c0_118, %c8_119, %c0_120] : memref<18x25x64xf32, #tpu.memory_space<vmem>>, vector<16x16x64xf32>
    %88 = vector.shape_cast %87 : vector<16x16x64xf32> to vector<256x64xf32>
    %c0_121 = arith.constant 0 : index
    %c9_122 = arith.constant 9 : index
    %c0_123 = arith.constant 0 : index
    %89 = vector.load %arg15[%c0_121, %c9_122, %c0_123] : memref<18x25x64xf32, #tpu.memory_space<vmem>>, vector<16x16x64xf32>
    %90 = vector.shape_cast %89 : vector<16x16x64xf32> to vector<256x64xf32>
    %91 = tpu.concatenate %86, %88 in 1 : vector<256x64xf32>, vector<256x64xf32> -> vector<256x128xf32>
    %c0_124 = arith.constant 0 : index
    %c0_125 = arith.constant 0 : index
    %92 = vector.load %arg18[%c0_124, %c0_125] : memref<256x192xf32, #tpu.memory_space<vmem>>, vector<256x128xf32>
    tpu.vector_store %arg18[%c0_124, %c0_125], %91 {strides = array<i32>} : memref<256x192xf32, #tpu.memory_space<vmem>>, vector<256x128xf32>,
    %c0_126 = arith.constant 0 : index
    %c128 = arith.constant 128 : index
    %93 = vector.load %arg18[%c0_126, %c128] : memref<256x192xf32, #tpu.memory_space<vmem>>, vector<256x64xf32>
    tpu.vector_store %arg18[%c0_126, %c128], %90 {strides = array<i32>} : memref<256x192xf32, #tpu.memory_space<vmem>>, vector<256x64xf32>,
    %c0_127 = arith.constant 0 : index
    %c0_128 = arith.constant 0 : index
    %94 = vector.load %arg18[%c0_127, %c0_128] : memref<256x192xf32, #tpu.memory_space<vmem>>, vector<256x192xf32>
    %c0_129 = arith.constant 0 : index
    %c0_130 = arith.constant 0 : index
    %c0_131 = arith.constant 0 : index
    %95 = vector.load %arg4[%c0_129, %c0_130, %c0_131] : memref<3x192x64xf32, #tpu.memory_space<vmem>>, vector<1x192x64xf32>
    %96 = vector.shape_cast %95 : vector<1x192x64xf32> to vector<192x64xf32>
    %cst_132 = arith.constant dense<0.000000e+00> : vector<256x64xf32>
    %97 = tpu.matmul %94, %96, %cst_132 {dimension_numbers = #tpu.dot_dimension_numbers<[1], [0], [0], [1], [0, 0, 1, 1], [], []>} : vector<256x192xf32>, vector<192x64xf32>, vector<256x64xf32> -> vector<256x64xf32>
    %98 = arith.addf %84, %97 : vector<256x64xf32>
    %c1_133 = arith.constant 1 : index
    %c7_134 = arith.constant 7 : index
    %c0_135 = arith.constant 0 : index
    %99 = vector.load %arg15[%c1_133, %c7_134, %c0_135] : memref<18x25x64xf32, #tpu.memory_space<vmem>>, vector<16x16x64xf32>
    %100 = vector.shape_cast %99 : vector<16x16x64xf32> to vector<256x64xf32>
    %c1_136 = arith.constant 1 : index
    %c8_137 = arith.constant 8 : index
    %c0_138 = arith.constant 0 : index
    %101 = vector.load %arg15[%c1_136, %c8_137, %c0_138] : memref<18x25x64xf32, #tpu.memory_space<vmem>>, vector<16x16x64xf32>
    %102 = vector.shape_cast %101 : vector<16x16x64xf32> to vector<256x64xf32>
    %c1_139 = arith.constant 1 : index
    %c9_140 = arith.constant 9 : index
    %c0_141 = arith.constant 0 : index
    %103 = vector.load %arg15[%c1_139, %c9_140, %c0_141] : memref<18x25x64xf32, #tpu.memory_space<vmem>>, vector<16x16x64xf32>
    %104 = vector.shape_cast %103 : vector<16x16x64xf32> to vector<256x64xf32>
    %105 = tpu.concatenate %100, %102 in 1 : vector<256x64xf32>, vector<256x64xf32> -> vector<256x128xf32>
    %c0_142 = arith.constant 0 : index
    %c0_143 = arith.constant 0 : index
    %106 = vector.load %arg18[%c0_142, %c0_143] : memref<256x192xf32, #tpu.memory_space<vmem>>, vector<256x128xf32>
    tpu.vector_store %arg18[%c0_142, %c0_143], %105 {strides = array<i32>} : memref<256x192xf32, #tpu.memory_space<vmem>>, vector<256x128xf32>,
    %c0_144 = arith.constant 0 : index
    %c128_145 = arith.constant 128 : index
    %107 = vector.load %arg18[%c0_144, %c128_145] : memref<256x192xf32, #tpu.memory_space<vmem>>, vector<256x64xf32>
    tpu.vector_store %arg18[%c0_144, %c128_145], %104 {strides = array<i32>} : memref<256x192xf32, #tpu.memory_space<vmem>>, vector<256x64xf32>,
    %c0_146 = arith.constant 0 : index
    %c0_147 = arith.constant 0 : index
    %108 = vector.load %arg18[%c0_146, %c0_147] : memref<256x192xf32, #tpu.memory_space<vmem>>, vector<256x192xf32>
    %c1_148 = arith.constant 1 : index
    %c0_149 = arith.constant 0 : index
    %c0_150 = arith.constant 0 : index
    %109 = vector.load %arg4[%c1_148, %c0_149, %c0_150] : memref<3x192x64xf32, #tpu.memory_space<vmem>>, vector<1x192x64xf32>
    %110 = vector.shape_cast %109 : vector<1x192x64xf32> to vector<192x64xf32>
    %cst_151 = arith.constant dense<0.000000e+00> : vector<256x64xf32>
    %111 = tpu.matmul %108, %110, %cst_151 {dimension_numbers = #tpu.dot_dimension_numbers<[1], [0], [0], [1], [0, 0, 1, 1], [], []>} : vector<256x192xf32>, vector<192x64xf32>, vector<256x64xf32> -> vector<256x64xf32>
    %112 = arith.addf %98, %111 : vector<256x64xf32>
    %c2_152 = arith.constant 2 : index
    %c7_153 = arith.constant 7 : index
    %c0_154 = arith.constant 0 : index
    %113 = vector.load %arg15[%c2_152, %c7_153, %c0_154] : memref<18x25x64xf32, #tpu.memory_space<vmem>>, vector<16x16x64xf32>
    %114 = vector.shape_cast %113 : vector<16x16x64xf32> to vector<256x64xf32>
    %c2_155 = arith.constant 2 : index
    %c8_156 = arith.constant 8 : index
    %c0_157 = arith.constant 0 : index
    %115 = vector.load %arg15[%c2_155, %c8_156, %c0_157] : memref<18x25x64xf32, #tpu.memory_space<vmem>>, vector<16x16x64xf32>
    %116 = vector.shape_cast %115 : vector<16x16x64xf32> to vector<256x64xf32>
    %c2_158 = arith.constant 2 : index
    %c9_159 = arith.constant 9 : index
    %c0_160 = arith.constant 0 : index
    %117 = vector.load %arg15[%c2_158, %c9_159, %c0_160] : memref<18x25x64xf32, #tpu.memory_space<vmem>>, vector<16x16x64xf32>
    %118 = vector.shape_cast %117 : vector<16x16x64xf32> to vector<256x64xf32>
    %119 = tpu.concatenate %114, %116 in 1 : vector<256x64xf32>, vector<256x64xf32> -> vector<256x128xf32>
    %c0_161 = arith.constant 0 : index
    %c0_162 = arith.constant 0 : index
    %120 = vector.load %arg18[%c0_161, %c0_162] : memref<256x192xf32, #tpu.memory_space<vmem>>, vector<256x128xf32>
    tpu.vector_store %arg18[%c0_161, %c0_162], %119 {strides = array<i32>} : memref<256x192xf32, #tpu.memory_space<vmem>>, vector<256x128xf32>,
    %c0_163 = arith.constant 0 : index
    %c128_164 = arith.constant 128 : index
    %121 = vector.load %arg18[%c0_163, %c128_164] : memref<256x192xf32, #tpu.memory_space<vmem>>, vector<256x64xf32>
    tpu.vector_store %arg18[%c0_163, %c128_164], %118 {strides = array<i32>} : memref<256x192xf32, #tpu.memory_space<vmem>>, vector<256x64xf32>,
    %c0_165 = arith.constant 0 : index
    %c0_166 = arith.constant 0 : index
    %122 = vector.load %arg18[%c0_165, %c0_166] : memref<256x192xf32, #tpu.memory_space<vmem>>, vector<256x192xf32>
    %c2_167 = arith.constant 2 : index
    %c0_168 = arith.constant 0 : index
    %c0_169 = arith.constant 0 : index
    %123 = vector.load %arg4[%c2_167, %c0_168, %c0_169] : memref<3x192x64xf32, #tpu.memory_space<vmem>>, vector<1x192x64xf32>
    %124 = vector.shape_cast %123 : vector<1x192x64xf32> to vector<192x64xf32>
    %cst_170 = arith.constant dense<0.000000e+00> : vector<256x64xf32>
    %125 = tpu.matmul %122, %124, %cst_170 {dimension_numbers = #tpu.dot_dimension_numbers<[1], [0], [0], [1], [0, 0, 1, 1], [], []>} : vector<256x192xf32>, vector<192x64xf32>, vector<256x64xf32> -> vector<256x64xf32>
    %126 = arith.addf %112, %125 : vector<256x64xf32>
    %c0_171 = arith.constant 0 : index
    %c0_172 = arith.constant 0 : index
    %127 = vector.load %arg5[%c0_171, %c0_172] : memref<1x64xf32, #tpu.memory_space<vmem>>, vector<1x64xf32>
    %128 = vector.broadcast %127 : vector<1x64xf32> to vector<256x64xf32>
    %129 = arith.addf %126, %128 : vector<256x64xf32>
    %cst_173 = arith.constant 0.000000e+00 : f32
    %130 = vector.broadcast %cst_173 : f32 to vector<256x64xf32>
    %131 = arith.maximumf %129, %130 : vector<256x64xf32>
    %c0_174 = arith.constant 0 : index
    %c0_175 = arith.constant 0 : index
    %132 = vector.load %arg21[%c0_174, %c0_175] : memref<256x64xf32, #tpu.memory_space<vmem>>, vector<256x64xf32>
    tpu.vector_store %arg21[%c0_174, %c0_175], %131 {strides = array<i32>} : memref<256x64xf32, #tpu.memory_space<vmem>>, vector<256x64xf32>,
    %c0_176 = arith.constant 0 : index
    %c0_177 = arith.constant 0 : index
    %133 = tpu.strided_load %arg21[%c0_176, %c0_177] {strides = array<i32: 2, 1>} : memref<256x64xf32, #tpu.memory_space<vmem>>, vector<128x64xf32>
    %c1_178 = arith.constant 1 : index
    %c0_179 = arith.constant 0 : index
    %134 = tpu.strided_load %arg21[%c1_178, %c0_179] {strides = array<i32: 2, 1>} : memref<256x64xf32, #tpu.memory_space<vmem>>, vector<128x64xf32>
    %135 = tpu.concatenate %133, %134 in 1 : vector<128x64xf32>, vector<128x64xf32> -> vector<128x128xf32>
    %c0_180 = arith.constant 0 : index
    %c0_181 = arith.constant 0 : index
    %c0_182 = arith.constant 0 : index
    %136 = vector.load %arg11[%c0_180, %c0_181, %c0_182] : memref<1x128x128xf32, #tpu.memory_space<vmem>>, vector<1x128x128xf32>
    %137 = vector.shape_cast %136 : vector<1x128x128xf32> to vector<128x128xf32>
    %138 = vector.shape_cast %135 : vector<128x128xf32> to vector<1x128x128xf32>
    tpu.vector_store %arg11[%c0_180, %c0_181, %c0_182], %138 {strides = array<i32>} : memref<1x128x128xf32, #tpu.memory_space<vmem>>, vector<1x128x128xf32>,
    %139 = arith.maximumf %133, %134 : vector<128x64xf32>
    %140 = vector.shape_cast %139 : vector<128x64xf32> to vector<8x2x8x64xf32>
    %141 = vector.extract_strided_slice %140 {offsets = [0, 0, 0, 0], sizes = [8, 1, 8, 64], strides = [1, 1, 1, 1]} : vector<8x2x8x64xf32> to vector<8x1x8x64xf32>
    %142 = vector.shape_cast %141 : vector<8x1x8x64xf32> to vector<8x8x64xf32>
    %143 = vector.extract_strided_slice %140 {offsets = [0, 1, 0, 0], sizes = [8, 1, 8, 64], strides = [1, 1, 1, 1]} : vector<8x2x8x64xf32> to vector<8x1x8x64xf32>
    %144 = vector.shape_cast %143 : vector<8x1x8x64xf32> to vector<8x8x64xf32>
    %145 = arith.maximumf %142, %144 : vector<8x8x64xf32>
    %cst_183 = arith.constant 0.000000e+00 : f32
    %146 = vector.broadcast %cst_183 : f32 to vector<1x10x64xf32>
    %c0_184 = arith.constant 0 : index
    %c7_185 = arith.constant 7 : index
    %c0_186 = arith.constant 0 : index
    %147 = vector.load %arg16[%c0_184, %c7_185, %c0_186] : memref<10x17x64xf32, #tpu.memory_space<vmem>>, vector<1x10x64xf32>
    tpu.vector_store %arg16[%c0_184, %c7_185, %c0_186], %146 {strides = array<i32>} : memref<10x17x64xf32, #tpu.memory_space<vmem>>, vector<1x10x64xf32>,
    %c9_187 = arith.constant 9 : index
    %c7_188 = arith.constant 7 : index
    %c0_189 = arith.constant 0 : index
    %148 = vector.load %arg16[%c9_187, %c7_188, %c0_189] : memref<10x17x64xf32, #tpu.memory_space<vmem>>, vector<1x10x64xf32>
    tpu.vector_store %arg16[%c9_187, %c7_188, %c0_189], %146 {strides = array<i32>} : memref<10x17x64xf32, #tpu.memory_space<vmem>>, vector<1x10x64xf32>,
    %cst_190 = arith.constant 0.000000e+00 : f32
    %149 = vector.broadcast %cst_190 : f32 to vector<8x1x64xf32>
    %c1_191 = arith.constant 1 : index
    %c7_192 = arith.constant 7 : index
    %c0_193 = arith.constant 0 : index
    %150 = vector.load %arg16[%c1_191, %c7_192, %c0_193] : memref<10x17x64xf32, #tpu.memory_space<vmem>>, vector<8x1x64xf32>
    tpu.vector_store %arg16[%c1_191, %c7_192, %c0_193], %149 {strides = array<i32>} : memref<10x17x64xf32, #tpu.memory_space<vmem>>, vector<8x1x64xf32>,
    %c1_194 = arith.constant 1 : index
    %c16 = arith.constant 16 : index
    %c0_195 = arith.constant 0 : index
    %151 = vector.load %arg16[%c1_194, %c16, %c0_195] : memref<10x17x64xf32, #tpu.memory_space<vmem>>, vector<8x1x64xf32>
    tpu.vector_store %arg16[%c1_194, %c16, %c0_195], %149 {strides = array<i32>} : memref<10x17x64xf32, #tpu.memory_space<vmem>>, vector<8x1x64xf32>,
    %c1_196 = arith.constant 1 : index
    %c8_197 = arith.constant 8 : index
    %c0_198 = arith.constant 0 : index
    %152 = vector.load %arg16[%c1_196, %c8_197, %c0_198] : memref<10x17x64xf32, #tpu.memory_space<vmem>>, vector<8x8x64xf32>
    tpu.vector_store %arg16[%c1_196, %c8_197, %c0_198], %145 {strides = array<i32>} : memref<10x17x64xf32, #tpu.memory_space<vmem>>, vector<8x8x64xf32>,
    %cst_199 = arith.constant 0.000000e+00 : f32
    %153 = vector.broadcast %cst_199 : f32 to vector<64x128xf32>
    %c0_200 = arith.constant 0 : index
    %c7_201 = arith.constant 7 : index
    %c0_202 = arith.constant 0 : index
    %154 = vector.load %arg16[%c0_200, %c7_201, %c0_202] : memref<10x17x64xf32, #tpu.memory_space<vmem>>, vector<8x8x64xf32>
    %155 = vector.shape_cast %154 : vector<8x8x64xf32> to vector<64x64xf32>
    %c0_203 = arith.constant 0 : index
    %c8_204 = arith.constant 8 : index
    %c0_205 = arith.constant 0 : index
    %156 = vector.load %arg16[%c0_203, %c8_204, %c0_205] : memref<10x17x64xf32, #tpu.memory_space<vmem>>, vector<8x8x64xf32>
    %157 = vector.shape_cast %156 : vector<8x8x64xf32> to vector<64x64xf32>
    %c0_206 = arith.constant 0 : index
    %c9_207 = arith.constant 9 : index
    %c0_208 = arith.constant 0 : index
    %158 = vector.load %arg16[%c0_206, %c9_207, %c0_208] : memref<10x17x64xf32, #tpu.memory_space<vmem>>, vector<8x8x64xf32>
    %159 = vector.shape_cast %158 : vector<8x8x64xf32> to vector<64x64xf32>
    %160 = tpu.concatenate %155, %157 in 1 : vector<64x64xf32>, vector<64x64xf32> -> vector<64x128xf32>
    %c0_209 = arith.constant 0 : index
    %c0_210 = arith.constant 0 : index
    %161 = vector.load %arg19[%c0_209, %c0_210] : memref<64x192xf32, #tpu.memory_space<vmem>>, vector<64x128xf32>
    tpu.vector_store %arg19[%c0_209, %c0_210], %160 {strides = array<i32>} : memref<64x192xf32, #tpu.memory_space<vmem>>, vector<64x128xf32>,
    %c0_211 = arith.constant 0 : index
    %c128_212 = arith.constant 128 : index
    %162 = vector.load %arg19[%c0_211, %c128_212] : memref<64x192xf32, #tpu.memory_space<vmem>>, vector<64x64xf32>
    tpu.vector_store %arg19[%c0_211, %c128_212], %159 {strides = array<i32>} : memref<64x192xf32, #tpu.memory_space<vmem>>, vector<64x64xf32>,
    %c0_213 = arith.constant 0 : index
    %c0_214 = arith.constant 0 : index
    %163 = vector.load %arg19[%c0_213, %c0_214] : memref<64x192xf32, #tpu.memory_space<vmem>>, vector<64x192xf32>
    %c0_215 = arith.constant 0 : index
    %c0_216 = arith.constant 0 : index
    %c0_217 = arith.constant 0 : index
    %164 = vector.load %arg6[%c0_215, %c0_216, %c0_217] : memref<3x192x128xf32, #tpu.memory_space<vmem>>, vector<1x192x128xf32>
    %165 = vector.shape_cast %164 : vector<1x192x128xf32> to vector<192x128xf32>
    %cst_218 = arith.constant dense<0.000000e+00> : vector<64x128xf32>
    %166 = tpu.matmul %163, %165, %cst_218 {dimension_numbers = #tpu.dot_dimension_numbers<[1], [0], [0], [1], [0, 0, 1, 1], [], []>} : vector<64x192xf32>, vector<192x128xf32>, vector<64x128xf32> -> vector<64x128xf32>
    %167 = arith.addf %153, %166 : vector<64x128xf32>
    %c1_219 = arith.constant 1 : index
    %c7_220 = arith.constant 7 : index
    %c0_221 = arith.constant 0 : index
    %168 = vector.load %arg16[%c1_219, %c7_220, %c0_221] : memref<10x17x64xf32, #tpu.memory_space<vmem>>, vector<8x8x64xf32>
    %169 = vector.shape_cast %168 : vector<8x8x64xf32> to vector<64x64xf32>
    %c1_222 = arith.constant 1 : index
    %c8_223 = arith.constant 8 : index
    %c0_224 = arith.constant 0 : index
    %170 = vector.load %arg16[%c1_222, %c8_223, %c0_224] : memref<10x17x64xf32, #tpu.memory_space<vmem>>, vector<8x8x64xf32>
    %171 = vector.shape_cast %170 : vector<8x8x64xf32> to vector<64x64xf32>
    %c1_225 = arith.constant 1 : index
    %c9_226 = arith.constant 9 : index
    %c0_227 = arith.constant 0 : index
    %172 = vector.load %arg16[%c1_225, %c9_226, %c0_227] : memref<10x17x64xf32, #tpu.memory_space<vmem>>, vector<8x8x64xf32>
    %173 = vector.shape_cast %172 : vector<8x8x64xf32> to vector<64x64xf32>
    %174 = tpu.concatenate %169, %171 in 1 : vector<64x64xf32>, vector<64x64xf32> -> vector<64x128xf32>
    %c0_228 = arith.constant 0 : index
    %c0_229 = arith.constant 0 : index
    %175 = vector.load %arg19[%c0_228, %c0_229] : memref<64x192xf32, #tpu.memory_space<vmem>>, vector<64x128xf32>
    tpu.vector_store %arg19[%c0_228, %c0_229], %174 {strides = array<i32>} : memref<64x192xf32, #tpu.memory_space<vmem>>, vector<64x128xf32>,
    %c0_230 = arith.constant 0 : index
    %c128_231 = arith.constant 128 : index
    %176 = vector.load %arg19[%c0_230, %c128_231] : memref<64x192xf32, #tpu.memory_space<vmem>>, vector<64x64xf32>
    tpu.vector_store %arg19[%c0_230, %c128_231], %173 {strides = array<i32>} : memref<64x192xf32, #tpu.memory_space<vmem>>, vector<64x64xf32>,
    %c0_232 = arith.constant 0 : index
    %c0_233 = arith.constant 0 : index
    %177 = vector.load %arg19[%c0_232, %c0_233] : memref<64x192xf32, #tpu.memory_space<vmem>>, vector<64x192xf32>
    %c1_234 = arith.constant 1 : index
    %c0_235 = arith.constant 0 : index
    %c0_236 = arith.constant 0 : index
    %178 = vector.load %arg6[%c1_234, %c0_235, %c0_236] : memref<3x192x128xf32, #tpu.memory_space<vmem>>, vector<1x192x128xf32>
    %179 = vector.shape_cast %178 : vector<1x192x128xf32> to vector<192x128xf32>
    %cst_237 = arith.constant dense<0.000000e+00> : vector<64x128xf32>
    %180 = tpu.matmul %177, %179, %cst_237 {dimension_numbers = #tpu.dot_dimension_numbers<[1], [0], [0], [1], [0, 0, 1, 1], [], []>} : vector<64x192xf32>, vector<192x128xf32>, vector<64x128xf32> -> vector<64x128xf32>
    %181 = arith.addf %167, %180 : vector<64x128xf32>
    %c2_238 = arith.constant 2 : index
    %c7_239 = arith.constant 7 : index
    %c0_240 = arith.constant 0 : index
    %182 = vector.load %arg16[%c2_238, %c7_239, %c0_240] : memref<10x17x64xf32, #tpu.memory_space<vmem>>, vector<8x8x64xf32>
    %183 = vector.shape_cast %182 : vector<8x8x64xf32> to vector<64x64xf32>
    %c2_241 = arith.constant 2 : index
    %c8_242 = arith.constant 8 : index
    %c0_243 = arith.constant 0 : index
    %184 = vector.load %arg16[%c2_241, %c8_242, %c0_243] : memref<10x17x64xf32, #tpu.memory_space<vmem>>, vector<8x8x64xf32>
    %185 = vector.shape_cast %184 : vector<8x8x64xf32> to vector<64x64xf32>
    %c2_244 = arith.constant 2 : index
    %c9_245 = arith.constant 9 : index
    %c0_246 = arith.constant 0 : index
    %186 = vector.load %arg16[%c2_244, %c9_245, %c0_246] : memref<10x17x64xf32, #tpu.memory_space<vmem>>, vector<8x8x64xf32>
    %187 = vector.shape_cast %186 : vector<8x8x64xf32> to vector<64x64xf32>
    %188 = tpu.concatenate %183, %185 in 1 : vector<64x64xf32>, vector<64x64xf32> -> vector<64x128xf32>
    %c0_247 = arith.constant 0 : index
    %c0_248 = arith.constant 0 : index
    %189 = vector.load %arg19[%c0_247, %c0_248] : memref<64x192xf32, #tpu.memory_space<vmem>>, vector<64x128xf32>
    tpu.vector_store %arg19[%c0_247, %c0_248], %188 {strides = array<i32>} : memref<64x192xf32, #tpu.memory_space<vmem>>, vector<64x128xf32>,
    %c0_249 = arith.constant 0 : index
    %c128_250 = arith.constant 128 : index
    %190 = vector.load %arg19[%c0_249, %c128_250] : memref<64x192xf32, #tpu.memory_space<vmem>>, vector<64x64xf32>
    tpu.vector_store %arg19[%c0_249, %c128_250], %187 {strides = array<i32>} : memref<64x192xf32, #tpu.memory_space<vmem>>, vector<64x64xf32>,
    %c0_251 = arith.constant 0 : index
    %c0_252 = arith.constant 0 : index
    %191 = vector.load %arg19[%c0_251, %c0_252] : memref<64x192xf32, #tpu.memory_space<vmem>>, vector<64x192xf32>
    %c2_253 = arith.constant 2 : index
    %c0_254 = arith.constant 0 : index
    %c0_255 = arith.constant 0 : index
    %192 = vector.load %arg6[%c2_253, %c0_254, %c0_255] : memref<3x192x128xf32, #tpu.memory_space<vmem>>, vector<1x192x128xf32>
    %193 = vector.shape_cast %192 : vector<1x192x128xf32> to vector<192x128xf32>
    %cst_256 = arith.constant dense<0.000000e+00> : vector<64x128xf32>
    %194 = tpu.matmul %191, %193, %cst_256 {dimension_numbers = #tpu.dot_dimension_numbers<[1], [0], [0], [1], [0, 0, 1, 1], [], []>} : vector<64x192xf32>, vector<192x128xf32>, vector<64x128xf32> -> vector<64x128xf32>
    %195 = arith.addf %181, %194 : vector<64x128xf32>
    %c0_257 = arith.constant 0 : index
    %c0_258 = arith.constant 0 : index
    %196 = vector.load %arg7[%c0_257, %c0_258] : memref<1x128xf32, #tpu.memory_space<vmem>>, vector<1x128xf32>
    %197 = vector.broadcast %196 : vector<1x128xf32> to vector<64x128xf32>
    %198 = arith.addf %195, %197 : vector<64x128xf32>
    %cst_259 = arith.constant 0.000000e+00 : f32
    %199 = vector.broadcast %cst_259 : f32 to vector<64x128xf32>
    %200 = arith.maximumf %198, %199 : vector<64x128xf32>
    %c0_260 = arith.constant 0 : index
    %c0_261 = arith.constant 0 : index
    %c0_262 = arith.constant 0 : index
    %201 = vector.load %arg12[%c0_260, %c0_261, %c0_262] : memref<1x64x128xf32, #tpu.memory_space<vmem>>, vector<1x64x128xf32>
    %202 = vector.shape_cast %201 : vector<1x64x128xf32> to vector<64x128xf32>
    %203 = vector.shape_cast %200 : vector<64x128xf32> to vector<1x64x128xf32>
    tpu.vector_store %arg12[%c0_260, %c0_261, %c0_262], %203 {strides = array<i32>} : memref<1x64x128xf32, #tpu.memory_space<vmem>>, vector<1x64x128xf32>,
    %cst_263 = arith.constant 0.000000e+00 : f32
    %204 = vector.broadcast %cst_263 : f32 to vector<1x10x128xf32>
    %c0_264 = arith.constant 0 : index
    %c7_265 = arith.constant 7 : index
    %c0_266 = arith.constant 0 : index
    %205 = vector.load %arg17[%c0_264, %c7_265, %c0_266] : memref<10x17x128xf32, #tpu.memory_space<vmem>>, vector<1x10x128xf32>
    tpu.vector_store %arg17[%c0_264, %c7_265, %c0_266], %204 {strides = array<i32>} : memref<10x17x128xf32, #tpu.memory_space<vmem>>, vector<1x10x128xf32>,
    %c9_267 = arith.constant 9 : index
    %c7_268 = arith.constant 7 : index
    %c0_269 = arith.constant 0 : index
    %206 = vector.load %arg17[%c9_267, %c7_268, %c0_269] : memref<10x17x128xf32, #tpu.memory_space<vmem>>, vector<1x10x128xf32>
    tpu.vector_store %arg17[%c9_267, %c7_268, %c0_269], %204 {strides = array<i32>} : memref<10x17x128xf32, #tpu.memory_space<vmem>>, vector<1x10x128xf32>,
    %cst_270 = arith.constant 0.000000e+00 : f32
    %207 = vector.broadcast %cst_270 : f32 to vector<8x1x128xf32>
    %c1_271 = arith.constant 1 : index
    %c7_272 = arith.constant 7 : index
    %c0_273 = arith.constant 0 : index
    %208 = vector.load %arg17[%c1_271, %c7_272, %c0_273] : memref<10x17x128xf32, #tpu.memory_space<vmem>>, vector<8x1x128xf32>
    tpu.vector_store %arg17[%c1_271, %c7_272, %c0_273], %207 {strides = array<i32>} : memref<10x17x128xf32, #tpu.memory_space<vmem>>, vector<8x1x128xf32>,
    %c1_274 = arith.constant 1 : index
    %c16_275 = arith.constant 16 : index
    %c0_276 = arith.constant 0 : index
    %209 = vector.load %arg17[%c1_274, %c16_275, %c0_276] : memref<10x17x128xf32, #tpu.memory_space<vmem>>, vector<8x1x128xf32>
    tpu.vector_store %arg17[%c1_274, %c16_275, %c0_276], %207 {strides = array<i32>} : memref<10x17x128xf32, #tpu.memory_space<vmem>>, vector<8x1x128xf32>,
    %210 = vector.shape_cast %200 : vector<64x128xf32> to vector<8x8x128xf32>
    %c1_277 = arith.constant 1 : index
    %c8_278 = arith.constant 8 : index
    %c0_279 = arith.constant 0 : index
    %211 = vector.load %arg17[%c1_277, %c8_278, %c0_279] : memref<10x17x128xf32, #tpu.memory_space<vmem>>, vector<8x8x128xf32>
    tpu.vector_store %arg17[%c1_277, %c8_278, %c0_279], %210 {strides = array<i32>} : memref<10x17x128xf32, #tpu.memory_space<vmem>>, vector<8x8x128xf32>,
    %cst_280 = arith.constant 0.000000e+00 : f32
    %212 = vector.broadcast %cst_280 : f32 to vector<64x128xf32>
    %c0_281 = arith.constant 0 : index
    %c7_282 = arith.constant 7 : index
    %c0_283 = arith.constant 0 : index
    %213 = vector.load %arg17[%c0_281, %c7_282, %c0_283] : memref<10x17x128xf32, #tpu.memory_space<vmem>>, vector<8x8x128xf32>
    %214 = vector.shape_cast %213 : vector<8x8x128xf32> to vector<64x128xf32>
    %c0_284 = arith.constant 0 : index
    %c8_285 = arith.constant 8 : index
    %c0_286 = arith.constant 0 : index
    %215 = vector.load %arg17[%c0_284, %c8_285, %c0_286] : memref<10x17x128xf32, #tpu.memory_space<vmem>>, vector<8x8x128xf32>
    %216 = vector.shape_cast %215 : vector<8x8x128xf32> to vector<64x128xf32>
    %c0_287 = arith.constant 0 : index
    %c9_288 = arith.constant 9 : index
    %c0_289 = arith.constant 0 : index
    %217 = vector.load %arg17[%c0_287, %c9_288, %c0_289] : memref<10x17x128xf32, #tpu.memory_space<vmem>>, vector<8x8x128xf32>
    %218 = vector.shape_cast %217 : vector<8x8x128xf32> to vector<64x128xf32>
    %c0_290 = arith.constant 0 : index
    %c0_291 = arith.constant 0 : index
    %219 = vector.load %arg20[%c0_290, %c0_291] : memref<64x384xf32, #tpu.memory_space<vmem>>, vector<64x128xf32>
    tpu.vector_store %arg20[%c0_290, %c0_291], %214 {strides = array<i32>} : memref<64x384xf32, #tpu.memory_space<vmem>>, vector<64x128xf32>,
    %c0_292 = arith.constant 0 : index
    %c128_293 = arith.constant 128 : index
    %220 = vector.load %arg20[%c0_292, %c128_293] : memref<64x384xf32, #tpu.memory_space<vmem>>, vector<64x128xf32>
    tpu.vector_store %arg20[%c0_292, %c128_293], %216 {strides = array<i32>} : memref<64x384xf32, #tpu.memory_space<vmem>>, vector<64x128xf32>,
    %c0_294 = arith.constant 0 : index
    %c256 = arith.constant 256 : index
    %221 = vector.load %arg20[%c0_294, %c256] : memref<64x384xf32, #tpu.memory_space<vmem>>, vector<64x128xf32>
    tpu.vector_store %arg20[%c0_294, %c256], %218 {strides = array<i32>} : memref<64x384xf32, #tpu.memory_space<vmem>>, vector<64x128xf32>,
    %c0_295 = arith.constant 0 : index
    %c0_296 = arith.constant 0 : index
    %222 = vector.load %arg20[%c0_295, %c0_296] : memref<64x384xf32, #tpu.memory_space<vmem>>, vector<64x384xf32>
    %c0_297 = arith.constant 0 : index
    %c0_298 = arith.constant 0 : index
    %c0_299 = arith.constant 0 : index
    %223 = vector.load %arg8[%c0_297, %c0_298, %c0_299] : memref<3x384x128xf32, #tpu.memory_space<vmem>>, vector<1x384x128xf32>
    %224 = vector.shape_cast %223 : vector<1x384x128xf32> to vector<384x128xf32>
    %cst_300 = arith.constant dense<0.000000e+00> : vector<64x128xf32>
    %225 = tpu.matmul %222, %224, %cst_300 {dimension_numbers = #tpu.dot_dimension_numbers<[1], [0], [0], [1], [0, 0, 1, 1], [], []>} : vector<64x384xf32>, vector<384x128xf32>, vector<64x128xf32> -> vector<64x128xf32>
    %226 = arith.addf %212, %225 : vector<64x128xf32>
    %c1_301 = arith.constant 1 : index
    %c7_302 = arith.constant 7 : index
    %c0_303 = arith.constant 0 : index
    %227 = vector.load %arg17[%c1_301, %c7_302, %c0_303] : memref<10x17x128xf32, #tpu.memory_space<vmem>>, vector<8x8x128xf32>
    %228 = vector.shape_cast %227 : vector<8x8x128xf32> to vector<64x128xf32>
    %c1_304 = arith.constant 1 : index
    %c8_305 = arith.constant 8 : index
    %c0_306 = arith.constant 0 : index
    %229 = vector.load %arg17[%c1_304, %c8_305, %c0_306] : memref<10x17x128xf32, #tpu.memory_space<vmem>>, vector<8x8x128xf32>
    %230 = vector.shape_cast %229 : vector<8x8x128xf32> to vector<64x128xf32>
    %c1_307 = arith.constant 1 : index
    %c9_308 = arith.constant 9 : index
    %c0_309 = arith.constant 0 : index
    %231 = vector.load %arg17[%c1_307, %c9_308, %c0_309] : memref<10x17x128xf32, #tpu.memory_space<vmem>>, vector<8x8x128xf32>
    %232 = vector.shape_cast %231 : vector<8x8x128xf32> to vector<64x128xf32>
    %c0_310 = arith.constant 0 : index
    %c0_311 = arith.constant 0 : index
    %233 = vector.load %arg20[%c0_310, %c0_311] : memref<64x384xf32, #tpu.memory_space<vmem>>, vector<64x128xf32>
    tpu.vector_store %arg20[%c0_310, %c0_311], %228 {strides = array<i32>} : memref<64x384xf32, #tpu.memory_space<vmem>>, vector<64x128xf32>,
    %c0_312 = arith.constant 0 : index
    %c128_313 = arith.constant 128 : index
    %234 = vector.load %arg20[%c0_312, %c128_313] : memref<64x384xf32, #tpu.memory_space<vmem>>, vector<64x128xf32>
    tpu.vector_store %arg20[%c0_312, %c128_313], %230 {strides = array<i32>} : memref<64x384xf32, #tpu.memory_space<vmem>>, vector<64x128xf32>,
    %c0_314 = arith.constant 0 : index
    %c256_315 = arith.constant 256 : index
    %235 = vector.load %arg20[%c0_314, %c256_315] : memref<64x384xf32, #tpu.memory_space<vmem>>, vector<64x128xf32>
    tpu.vector_store %arg20[%c0_314, %c256_315], %232 {strides = array<i32>} : memref<64x384xf32, #tpu.memory_space<vmem>>, vector<64x128xf32>,
    %c0_316 = arith.constant 0 : index
    %c0_317 = arith.constant 0 : index
    %236 = vector.load %arg20[%c0_316, %c0_317] : memref<64x384xf32, #tpu.memory_space<vmem>>, vector<64x384xf32>
    %c1_318 = arith.constant 1 : index
    %c0_319 = arith.constant 0 : index
    %c0_320 = arith.constant 0 : index
    %237 = vector.load %arg8[%c1_318, %c0_319, %c0_320] : memref<3x384x128xf32, #tpu.memory_space<vmem>>, vector<1x384x128xf32>
    %238 = vector.shape_cast %237 : vector<1x384x128xf32> to vector<384x128xf32>
    %cst_321 = arith.constant dense<0.000000e+00> : vector<64x128xf32>
    %239 = tpu.matmul %236, %238, %cst_321 {dimension_numbers = #tpu.dot_dimension_numbers<[1], [0], [0], [1], [0, 0, 1, 1], [], []>} : vector<64x384xf32>, vector<384x128xf32>, vector<64x128xf32> -> vector<64x128xf32>
    %240 = arith.addf %226, %239 : vector<64x128xf32>
    %c2_322 = arith.constant 2 : index
    %c7_323 = arith.constant 7 : index
    %c0_324 = arith.constant 0 : index
    %241 = vector.load %arg17[%c2_322, %c7_323, %c0_324] : memref<10x17x128xf32, #tpu.memory_space<vmem>>, vector<8x8x128xf32>
    %242 = vector.shape_cast %241 : vector<8x8x128xf32> to vector<64x128xf32>
    %c2_325 = arith.constant 2 : index
    %c8_326 = arith.constant 8 : index
    %c0_327 = arith.constant 0 : index
    %243 = vector.load %arg17[%c2_325, %c8_326, %c0_327] : memref<10x17x128xf32, #tpu.memory_space<vmem>>, vector<8x8x128xf32>
    %244 = vector.shape_cast %243 : vector<8x8x128xf32> to vector<64x128xf32>
    %c2_328 = arith.constant 2 : index
    %c9_329 = arith.constant 9 : index
    %c0_330 = arith.constant 0 : index
    %245 = vector.load %arg17[%c2_328, %c9_329, %c0_330] : memref<10x17x128xf32, #tpu.memory_space<vmem>>, vector<8x8x128xf32>
    %246 = vector.shape_cast %245 : vector<8x8x128xf32> to vector<64x128xf32>
    %c0_331 = arith.constant 0 : index
    %c0_332 = arith.constant 0 : index
    %247 = vector.load %arg20[%c0_331, %c0_332] : memref<64x384xf32, #tpu.memory_space<vmem>>, vector<64x128xf32>
    tpu.vector_store %arg20[%c0_331, %c0_332], %242 {strides = array<i32>} : memref<64x384xf32, #tpu.memory_space<vmem>>, vector<64x128xf32>,
    %c0_333 = arith.constant 0 : index
    %c128_334 = arith.constant 128 : index
    %248 = vector.load %arg20[%c0_333, %c128_334] : memref<64x384xf32, #tpu.memory_space<vmem>>, vector<64x128xf32>
    tpu.vector_store %arg20[%c0_333, %c128_334], %244 {strides = array<i32>} : memref<64x384xf32, #tpu.memory_space<vmem>>, vector<64x128xf32>,
    %c0_335 = arith.constant 0 : index
    %c256_336 = arith.constant 256 : index
    %249 = vector.load %arg20[%c0_335, %c256_336] : memref<64x384xf32, #tpu.memory_space<vmem>>, vector<64x128xf32>
    tpu.vector_store %arg20[%c0_335, %c256_336], %246 {strides = array<i32>} : memref<64x384xf32, #tpu.memory_space<vmem>>, vector<64x128xf32>,
    %c0_337 = arith.constant 0 : index
    %c0_338 = arith.constant 0 : index
    %250 = vector.load %arg20[%c0_337, %c0_338] : memref<64x384xf32, #tpu.memory_space<vmem>>, vector<64x384xf32>
    %c2_339 = arith.constant 2 : index
    %c0_340 = arith.constant 0 : index
    %c0_341 = arith.constant 0 : index
    %251 = vector.load %arg8[%c2_339, %c0_340, %c0_341] : memref<3x384x128xf32, #tpu.memory_space<vmem>>, vector<1x384x128xf32>
    %252 = vector.shape_cast %251 : vector<1x384x128xf32> to vector<384x128xf32>
    %cst_342 = arith.constant dense<0.000000e+00> : vector<64x128xf32>
    %253 = tpu.matmul %250, %252, %cst_342 {dimension_numbers = #tpu.dot_dimension_numbers<[1], [0], [0], [1], [0, 0, 1, 1], [], []>} : vector<64x384xf32>, vector<384x128xf32>, vector<64x128xf32> -> vector<64x128xf32>
    %254 = arith.addf %240, %253 : vector<64x128xf32>
    %c0_343 = arith.constant 0 : index
    %c0_344 = arith.constant 0 : index
    %255 = vector.load %arg9[%c0_343, %c0_344] : memref<1x128xf32, #tpu.memory_space<vmem>>, vector<1x128xf32>
    %256 = vector.broadcast %255 : vector<1x128xf32> to vector<64x128xf32>
    %257 = arith.addf %254, %256 : vector<64x128xf32>
    %cst_345 = arith.constant 0.000000e+00 : f32
    %258 = vector.broadcast %cst_345 : f32 to vector<64x128xf32>
    %259 = arith.maximumf %257, %258 : vector<64x128xf32>
    %c0_346 = arith.constant 0 : index
    %c0_347 = arith.constant 0 : index
    %c0_348 = arith.constant 0 : index
    %260 = vector.load %arg13[%c0_346, %c0_347, %c0_348] : memref<1x64x128xf32, #tpu.memory_space<vmem>>, vector<1x64x128xf32>
    %261 = vector.shape_cast %260 : vector<1x64x128xf32> to vector<64x128xf32>
    %262 = vector.shape_cast %259 : vector<64x128xf32> to vector<1x64x128xf32>
    tpu.vector_store %arg13[%c0_346, %c0_347, %c0_348], %262 {strides = array<i32>} : memref<1x64x128xf32, #tpu.memory_space<vmem>>, vector<1x64x128xf32>,
    return
  }
  func.func @transform_0(%arg0: i32) -> (i32, i32, i32, i32) {
    %c0_i32 = arith.constant 0 : i32
    %c0_i32_0 = arith.constant 0 : i32
    %c0_i32_1 = arith.constant 0 : i32
    %c0_i32_2 = arith.constant 0 : i32
    return %arg0, %c0_i32, %c0_i32_0, %c0_i32_1 : i32, i32, i32, i32
  }
  func.func @transform_1(%arg0: i32) -> (i32, i32, i32, i32) {
    %c0_i32 = arith.constant 0 : i32
    %c0_i32_0 = arith.constant 0 : i32
    %c0_i32_1 = arith.constant 0 : i32
    %c0_i32_2 = arith.constant 0 : i32
    %c0_i32_3 = arith.constant 0 : i32
    return %c0_i32, %c0_i32_0, %c0_i32_1, %c0_i32_2 : i32, i32, i32, i32
  }
  func.func @transform_2(%arg0: i32) -> (i32, i32) {
    %c0_i32 = arith.constant 0 : i32
    %c0_i32_0 = arith.constant 0 : i32
    %c0_i32_1 = arith.constant 0 : i32
    return %c0_i32, %c0_i32_0 : i32, i32
  }
  func.func @transform_3(%arg0: i32) -> (i32, i32, i32) {
    %c0_i32 = arith.constant 0 : i32
    %c0_i32_0 = arith.constant 0 : i32
    %c0_i32_1 = arith.constant 0 : i32
    %c0_i32_2 = arith.constant 0 : i32
    return %c0_i32, %c0_i32_0, %c0_i32_1 : i32, i32, i32
  }
  func.func @transform_4(%arg0: i32) -> (i32, i32) {
    %c0_i32 = arith.constant 0 : i32
    %c0_i32_0 = arith.constant 0 : i32
    %c0_i32_1 = arith.constant 0 : i32
    return %c0_i32, %c0_i32_0 : i32, i32
  }
  func.func @transform_5(%arg0: i32) -> (i32, i32, i32) {
    %c0_i32 = arith.constant 0 : i32
    %c0_i32_0 = arith.constant 0 : i32
    %c0_i32_1 = arith.constant 0 : i32
    %c0_i32_2 = arith.constant 0 : i32
    return %c0_i32, %c0_i32_0, %c0_i32_1 : i32, i32, i32
  }
  func.func @transform_6(%arg0: i32) -> (i32, i32) {
    %c0_i32 = arith.constant 0 : i32
    %c0_i32_0 = arith.constant 0 : i32
    %c0_i32_1 = arith.constant 0 : i32
    return %c0_i32, %c0_i32_0 : i32, i32
  }
  func.func @transform_7(%arg0: i32) -> (i32, i32, i32) {
    %c0_i32 = arith.constant 0 : i32
    %c0_i32_0 = arith.constant 0 : i32
    %c0_i32_1 = arith.constant 0 : i32
    %c0_i32_2 = arith.constant 0 : i32
    return %c0_i32, %c0_i32_0, %c0_i32_1 : i32, i32, i32
  }
  func.func @transform_8(%arg0: i32) -> (i32, i32) {
    %c0_i32 = arith.constant 0 : i32
    %c0_i32_0 = arith.constant 0 : i32
    %c0_i32_1 = arith.constant 0 : i32
    return %c0_i32, %c0_i32_0 : i32, i32
  }
  func.func @transform_9(%arg0: i32) -> (i32, i32, i32) {
    %c0_i32 = arith.constant 0 : i32
    %c0_i32_0 = arith.constant 0 : i32
    %c0_i32_1 = arith.constant 0 : i32
    return %arg0, %c0_i32, %c0_i32_0 : i32, i32, i32
  }
  func.func @transform_10(%arg0: i32) -> (i32, i32, i32) {
    %c0_i32 = arith.constant 0 : i32
    %c0_i32_0 = arith.constant 0 : i32
    %c0_i32_1 = arith.constant 0 : i32
    return %arg0, %c0_i32, %c0_i32_0 : i32, i32, i32
  }
  func.func @transform_11(%arg0: i32) -> (i32, i32, i32) {
    %c0_i32 = arith.constant 0 : i32
    %c0_i32_0 = arith.constant 0 : i32
    %c0_i32_1 = arith.constant 0 : i32
    return %arg0, %c0_i32, %c0_i32_0 : i32, i32, i32
  }
  func.func @transform_12(%arg0: i32) -> (i32, i32, i32) {
    %c0_i32 = arith.constant 0 : i32
    %c0_i32_0 = arith.constant 0 : i32
    %c0_i32_1 = arith.constant 0 : i32
    return %arg0, %c0_i32, %c0_i32_0 : i32, i32, i32
  }
}

</mosaic_0001>

<llo_original>
// kernel: vgg_v2_forward.1
$region0: #{vgg_v2_forward.1}
  #allocation0 [shape = 'u32[]', space=smem, size = 0x4, offset = 0x4, fixed_abs, tag = 'smem constant byte address 0x4 - core index']
  #allocation1 [shape = 'u32[144,128]{1,0:T(1,128)}', space=vmem, size = 0x12000, scoped, tag = 'internal scratch']
  #allocation2 [shape = 'f32[18,25,3]{2,1,0:T(8,128)}', space=vmem, size = 0x48000, scoped, tag = 'scratch operand']
  #allocation3 [shape = 'f32[18,25,64]{2,1,0:T(8,128)}', space=vmem, size = 0x48000, scoped, tag = 'scratch operand']
  #allocation4 [shape = 'f32[10,17,64]{2,1,0:T(8,128)}', space=vmem, size = 0x1e000, scoped, tag = 'scratch operand']
  #allocation5 [shape = 'f32[10,17,128]{2,1,0:T(8,128)}', space=vmem, size = 0x1e000, scoped, tag = 'scratch operand']
  #allocation6 [shape = 'f32[256,192]{1,0:T(8,128)}', space=vmem, size = 0x40000, scoped, tag = 'scratch operand']
  #allocation7 [shape = 'f32[64,192]{1,0:T(8,128)}', space=vmem, size = 0x10000, scoped, tag = 'scratch operand']
  #allocation8 [shape = 'f32[64,384]{1,0:T(8,128)}', space=vmem, size = 0x18000, scoped, tag = 'scratch operand']
  #allocation9 [shape = 'f32[256,64]{1,0:T(8,128)}', space=vmem, size = 0x20000, scoped, tag = 'scratch operand']
  %s0 = inlined_call_operand.vmem [shape: f32[2,16,16,3], index: 0, kind: input, shape index: {}]
  %s1 = inlined_call_operand.vmem [shape: f32[3,3,3,64], index: 1, kind: input, shape index: {}]
  %s2 = inlined_call_operand.vmem [shape: f32[1,64], index: 2, kind: input, shape index: {}]
  %s3 = inlined_call_operand.vmem [shape: f32[3,192,64], index: 3, kind: input, shape index: {}]
  %s4 = inlined_call_operand.vmem [shape: f32[1,64], index: 4, kind: input, shape index: {}]
  %s5 = inlined_call_operand.hbm [shape: f32[3,192,128], index: 5, kind: input, shape index: {}]
  %s6 = inlined_call_operand.vmem [shape: f32[1,128], index: 6, kind: input, shape index: {}]
  %s7 = inlined_call_operand.hbm [shape: f32[3,384,128], index: 7, kind: input, shape index: {}]
  %s8 = inlined_call_operand.vmem [shape: f32[1,128], index: 8, kind: input, shape index: {}]
  %s9 = inlined_call_operand.vmem [shape: f32[2,128,128], index: 9, kind: output, shape index: {0}]
  %s10 = inlined_call_operand.vmem [shape: f32[2,128,128], index: 10, kind: output, shape index: {1}]
  %s11 = inlined_call_operand.hbm [shape: f32[2,64,128], index: 11, kind: output, shape index: {2}]
  %s12 = inlined_call_operand.hbm [shape: f32[2,64,128], index: 12, kind: output, shape index: {3}]
  %13 = xla_tuple %s9, %s10, %s11, %s12
  %s14 = sld [smem:[#allocation0]]
  $region101: #{vgg_v2_forward.1} parent=0
    _
  %s16 = ssub.s32 1, %s14
  %s17 = scalar_select 0, %s16, %s14
  $region1: #{vgg_v2_forward.1} parent=0
    #allocation10 [shape = 'u8[294912]{0}', space=vmem, size = 0x48000, scoped, tag = 'input window, operand 5, single buffered']
    #allocation11 [shape = 's32[2]{0}', space=sflag, size = 0x8, scoped, tag = 'scoped memory for vgg_v2_forward.1']
    #allocation12 [shape = 's32[2]{0}', space=sflag, size = 0x8, scoped, tag = 'scoped memory for vgg_v2_forward.1']
    #allocation13 [shape = 'u8[589824]{0}', space=vmem, size = 0x90000, scoped, tag = 'input window, operand 7, single buffered']
    #allocation14 [shape = 's32[1]{0}', space=sflag, size = 0x4, scoped, tag = 'scoped memory for vgg_v2_forward.1']
    #allocation15 [shape = 'u8[65536]{0}', space=vmem, size = 0x10000, scoped, tag = 'output window, operand 2']
    #allocation16 [shape = 'u8[65536]{0}', space=vmem, size = 0x10000, scoped, tag = 'output window, operand 3']
    #allocation17 [shape = 's32[2]{0}', space=sflag, size = 0x8, scoped, tag = 'scoped memory for vgg_v2_forward.1']
    %18 = vsyncpa [#allocation11], 0
    %19 = vsyncpa [#allocation14], 0
    %20 = vsyncpa [#allocation12], 0
    %s21 = scalar_lea.sflag [#allocation12], 1
    %22 = vsyncpa %s21, 0
    %23 = vsyncpa [#allocation17], 0
    %s24 = scalar_lea.sflag [#allocation17], 1
    %25 = vsyncpa %s24, 0
    loop: start=0, step=1, limit=4
    $region2: #{vgg_v2_forward.1} parent=1 // loop_pre_header
      _
    $region3: #{vgg_v2_forward.1} parent=1 // loop_header
      %s27 = sphi 0, %s31
      %p28 = scmp.ge.s32.totalorder %s27, 4
      %s37 = sphi 0, %s39
      %s40 = sphi 0, %s37
      %s41 = sphi 0, %s40
      %s57 = sphi 0, %s41
      %s61 = sphi 0, %s61
      %s63 = sphi 0, %s61
      %s64 = sphi 0, %s63
      %s78 = sphi 0, %s64
      %s82 = sphi 0, %s82
      %s84 = sphi 0, %s82
      %s85 = sphi 0, %s84
      %s99 = sphi 0, %s85
      %s103 = sphi 0, %s103
      %s105 = sphi 0, %s103
      %s106 = sphi 0, %s105
      %s120 = sphi 0, %s106
      %s124 = sphi 0, %s124
      %s126 = sphi 0, %s124
      %s127 = sphi 0, %s126
      %s141 = sphi 0, %s127
      %s145 = sphi 0, %s145
      %s147 = sphi 0, %s145
      %s148 = sphi 0, %s147
      %s162 = sphi 0, %s148
      %s166 = sphi 0, %s166
      %s168 = sphi 0, %s166
      %s169 = sphi 0, %s168
      %s183 = sphi 0, %s169
      %s187 = sphi 0, %s187
      %s189 = sphi 0, %s187
      %s190 = sphi 0, %s189
      %s204 = sphi 0, %s190
      %s208 = sphi 0, %s208
      %s210 = sphi 0, %s208
      %s211 = sphi 0, %s210
      %s225 = sphi 0, %s211
      %s231 = sphi 0, %s233
      %s234 = sphi 0, %s231
      %s235 = sphi 0, %s234
      %s251 = sphi 0, %s235
      %s257 = sphi 0, %s259
      %s260 = sphi 0, %s257
      %s261 = sphi 0, %s260
      %s277 = sphi 0, %s261
      %s283 = sphi 0, %s285
      %s286 = sphi 0, %s283
      %s287 = sphi 0, %s286
      %s303 = sphi 0, %s287
      %s309 = sphi 0, %s311
      %s312 = sphi 0, %s309
      %s313 = sphi 0, %s312
      %s329 = sphi 0, %s313
    $region4: #{vgg_v2_forward.1} parent=1 // loop_header_branch
      %30 = sbr.rel (%p28) target = $region8
    $region5: #{vgg_v2_forward.1} parent=1 // loop_body
      %s32 = ssub.s32 %s27, 1
      %s33 = ssub.s32 %s27, 2
      %s34 = sadd.s32 %s27, 1
      %s35 = ssub.s32 %s27, %s34
      %p36 = scmp.eq.s32.totalorder %s35, 0
      %s38 = sadd.s32 %s37, 1
      %s39 = scalar_select %p36, %s37, %s38
      %p42 = pneg %p36
      %p43 = scmp.eq.s32.totalorder %s27, 1
      %p44 = por %p42, %p43
      %p45 = scmp.ne.s32.totalorder %s37, %s40
      %p46 = scmp.eq.s32.totalorder %s27, 0
      %p47 = por %p45, %p46
      %p48 = scmp.ne.s32.totalorder %s37, %s40
      %p49 = scmp.eq.s32.totalorder %s32, 1
      %p50 = por %p48, %p49
      %p51 = scmp.ne.s32.totalorder %s40, %s41
      %p52 = scmp.eq.s32.totalorder %s32, 0
      %p53 = por %p51, %p52
      %p54 = scmp.ne.s32.totalorder %s40, %s41
      %p55 = scmp.eq.s32.totalorder %s33, 1
      %p56 = por %p54, %p55
      %p58 = scmp.ne.s32.totalorder %s41, %s57
      %p59 = scmp.eq.s32.totalorder %s33, 0
      %p60 = por %p58, %p59
      %s62 = sadd.s32 %s61, 1
      %p65 = scmp.eq.s32.totalorder %s27, 1
      %p66 = scmp.ne.s32.totalorder %s61, %s63
      %p67 = scmp.eq.s32.totalorder %s27, 0
      %p68 = por %p66, %p67
      %p69 = scmp.ne.s32.totalorder %s61, %s63
      %p70 = scmp.eq.s32.totalorder %s32, 1
      %p71 = por %p69, %p70
      %p72 = scmp.ne.s32.totalorder %s63, %s64
      %p73 = scmp.eq.s32.totalorder %s32, 0
      %p74 = por %p72, %p73
      %p75 = scmp.ne.s32.totalorder %s63, %s64
      %p76 = scmp.eq.s32.totalorder %s33, 1
      %p77 = por %p75, %p76
      %p79 = scmp.ne.s32.totalorder %s64, %s78
      %p80 = scmp.eq.s32.totalorder %s33, 0
      %p81 = por %p79, %p80
      %s83 = sadd.s32 %s82, 1
      %p86 = scmp.eq.s32.totalorder %s27, 1
      %p87 = scmp.ne.s32.totalorder %s82, %s84
      %p88 = scmp.eq.s32.totalorder %s27, 0
      %p89 = por %p87, %p88
      %p90 = scmp.ne.s32.totalorder %s82, %s84
      %p91 = scmp.eq.s32.totalorder %s32, 1
      %p92 = por %p90, %p91
      %p93 = scmp.ne.s32.totalorder %s84, %s85
      %p94 = scmp.eq.s32.totalorder %s32, 0
      %p95 = por %p93, %p94
      %p96 = scmp.ne.s32.totalorder %s84, %s85
      %p97 = scmp.eq.s32.totalorder %s33, 1
      %p98 = por %p96, %p97
      %p100 = scmp.ne.s32.totalorder %s85, %s99
      %p101 = scmp.eq.s32.totalorder %s33, 0
      %p102 = por %p100, %p101
      %s104 = sadd.s32 %s103, 1
      %p107 = scmp.eq.s32.totalorder %s27, 1
      %p108 = scmp.ne.s32.totalorder %s103, %s105
      %p109 = scmp.eq.s32.totalorder %s27, 0
      %p110 = por %p108, %p109
      %p111 = scmp.ne.s32.totalorder %s103, %s105
      %p112 = scmp.eq.s32.totalorder %s32, 1
      %p113 = por %p111, %p112
      %p114 = scmp.ne.s32.totalorder %s105, %s106
      %p115 = scmp.eq.s32.totalorder %s32, 0
      %p116 = por %p114, %p115
      %p117 = scmp.ne.s32.totalorder %s105, %s106
      %p118 = scmp.eq.s32.totalorder %s33, 1
      %p119 = por %p117, %p118
      %p121 = scmp.ne.s32.totalorder %s106, %s120
      %p122 = scmp.eq.s32.totalorder %s33, 0
      %p123 = por %p121, %p122
      %s125 = sadd.s32 %s124, 1
      %p128 = scmp.eq.s32.totalorder %s27, 1
      %p129 = scmp.ne.s32.totalorder %s124, %s126
      %p130 = scmp.eq.s32.totalorder %s27, 0
      %p131 = por %p129, %p130
      %p132 = scmp.ne.s32.totalorder %s124, %s126
      %p133 = scmp.eq.s32.totalorder %s32, 1
      %p134 = por %p132, %p133
      %p135 = scmp.ne.s32.totalorder %s126, %s127
      %p136 = scmp.eq.s32.totalorder %s32, 0
      %p137 = por %p135, %p136
      %p138 = scmp.ne.s32.totalorder %s126, %s127
      %p139 = scmp.eq.s32.totalorder %s33, 1
      %p140 = por %p138, %p139
      %p142 = scmp.ne.s32.totalorder %s127, %s141
      %p143 = scmp.eq.s32.totalorder %s33, 0
      %p144 = por %p142, %p143
      %s146 = sadd.s32 %s145, 1
      %p149 = scmp.eq.s32.totalorder %s27, 1
      %p150 = scmp.ne.s32.totalorder %s145, %s147
      %p151 = scmp.eq.s32.totalorder %s27, 0
      %p152 = por %p150, %p151
      %p153 = scmp.ne.s32.totalorder %s145, %s147
      %p154 = scmp.eq.s32.totalorder %s32, 1
      %p155 = por %p153, %p154
      %p156 = scmp.ne.s32.totalorder %s147, %s148
      %p157 = scmp.eq.s32.totalorder %s32, 0
      %p158 = por %p156, %p157
      %p159 = scmp.ne.s32.totalorder %s147, %s148
      %p160 = scmp.eq.s32.totalorder %s33, 1
      %p161 = por %p159, %p160
      %p163 = scmp.ne.s32.totalorder %s148, %s162
      %p164 = scmp.eq.s32.totalorder %s33, 0
      %p165 = por %p163, %p164
      %s167 = sadd.s32 %s166, 1
      %p170 = scmp.eq.s32.totalorder %s27, 1
      %p171 = scmp.ne.s32.totalorder %s166, %s168
      %p172 = scmp.eq.s32.totalorder %s27, 0
      %p173 = por %p171, %p172
      %p174 = scmp.ne.s32.totalorder %s166, %s168
      %p175 = scmp.eq.s32.totalorder %s32, 1
      %p176 = por %p174, %p175
      %p177 = scmp.ne.s32.totalorder %s168, %s169
      %p178 = scmp.eq.s32.totalorder %s32, 0
      %p179 = por %p177, %p178
      %p180 = scmp.ne.s32.totalorder %s168, %s169
      %p181 = scmp.eq.s32.totalorder %s33, 1
      %p182 = por %p180, %p181
      %p184 = scmp.ne.s32.totalorder %s169, %s183
      %p185 = scmp.eq.s32.totalorder %s33, 0
      %p186 = por %p184, %p185
      %s188 = sadd.s32 %s187, 1
      %p191 = scmp.eq.s32.totalorder %s27, 1
      %p192 = scmp.ne.s32.totalorder %s187, %s189
      %p193 = scmp.eq.s32.totalorder %s27, 0
      %p194 = por %p192, %p193
      %p195 = scmp.ne.s32.totalorder %s187, %s189
      %p196 = scmp.eq.s32.totalorder %s32, 1
      %p197 = por %p195, %p196
      %p198 = scmp.ne.s32.totalorder %s189, %s190
      %p199 = scmp.eq.s32.totalorder %s32, 0
      %p200 = por %p198, %p199
      %p201 = scmp.ne.s32.totalorder %s189, %s190
      %p202 = scmp.eq.s32.totalorder %s33, 1
      %p203 = por %p201, %p202
      %p205 = scmp.ne.s32.totalorder %s190, %s204
      %p206 = scmp.eq.s32.totalorder %s33, 0
      %p207 = por %p205, %p206
      %s209 = sadd.s32 %s208, 1
      %p212 = scmp.eq.s32.totalorder %s27, 1
      %p213 = scmp.ne.s32.totalorder %s208, %s210
      %p214 = scmp.eq.s32.totalorder %s27, 0
      %p215 = por %p213, %p214
      %p216 = scmp.ne.s32.totalorder %s208, %s210
      %p217 = scmp.eq.s32.totalorder %s32, 1
      %p218 = por %p216, %p217
      %p219 = scmp.ne.s32.totalorder %s210, %s211
      %p220 = scmp.eq.s32.totalorder %s32, 0
      %p221 = por %p219, %p220
      %p222 = scmp.ne.s32.totalorder %s210, %s211
      %p223 = scmp.eq.s32.totalorder %s33, 1
      %p224 = por %p222, %p223
      %p226 = scmp.ne.s32.totalorder %s211, %s225
      %p227 = scmp.eq.s32.totalorder %s33, 0
      %p228 = por %p226, %p227
      %s229 = ssub.s32 %s27, %s34
      %p230 = scmp.eq.s32.totalorder %s229, 0
      %s232 = sadd.s32 %s231, 1
      %s233 = scalar_select %p230, %s231, %s232
      %p236 = pneg %p230
      %p237 = scmp.eq.s32.totalorder %s27, 1
      %p238 = por %p236, %p237
      %p239 = scmp.ne.s32.totalorder %s231, %s234
      %p240 = scmp.eq.s32.totalorder %s27, 0
      %p241 = por %p239, %p240
      %p242 = scmp.ne.s32.totalorder %s231, %s234
      %p243 = scmp.eq.s32.totalorder %s32, 1
      %p244 = por %p242, %p243
      %p245 = scmp.ne.s32.totalorder %s234, %s235
      %p246 = scmp.eq.s32.totalorder %s32, 0
      %p247 = por %p245, %p246
      %p248 = scmp.ne.s32.totalorder %s234, %s235
      %p249 = scmp.eq.s32.totalorder %s33, 1
      %p250 = por %p248, %p249
      %p252 = scmp.ne.s32.totalorder %s235, %s251
      %p253 = scmp.eq.s32.totalorder %s33, 0
      %p254 = por %p252, %p253
      %s255 = ssub.s32 %s27, %s34
      %p256 = scmp.eq.s32.totalorder %s255, 0
      %s258 = sadd.s32 %s257, 1
      %s259 = scalar_select %p256, %s257, %s258
      %p262 = pneg %p256
      %p263 = scmp.eq.s32.totalorder %s27, 1
      %p264 = por %p262, %p263
      %p265 = scmp.ne.s32.totalorder %s257, %s260
      %p266 = scmp.eq.s32.totalorder %s27, 0
      %p267 = por %p265, %p266
      %p268 = scmp.ne.s32.totalorder %s257, %s260
      %p269 = scmp.eq.s32.totalorder %s32, 1
      %p270 = por %p268, %p269
      %p271 = scmp.ne.s32.totalorder %s260, %s261
      %p272 = scmp.eq.s32.totalorder %s32, 0
      %p273 = por %p271, %p272
      %p274 = scmp.ne.s32.totalorder %s260, %s261
      %p275 = scmp.eq.s32.totalorder %s33, 1
      %p276 = por %p274, %p275
      %p278 = scmp.ne.s32.totalorder %s261, %s277
      %p279 = scmp.eq.s32.totalorder %s33, 0
      %p280 = por %p278, %p279
      %s281 = ssub.s32 %s27, %s34
      %p282 = scmp.eq.s32.totalorder %s281, 0
      %s284 = sadd.s32 %s283, 1
      %s285 = scalar_select %p282, %s283, %s284
      %p288 = pneg %p282
      %p289 = scmp.eq.s32.totalorder %s27, 1
      %p290 = por %p288, %p289
      %p291 = scmp.ne.s32.totalorder %s283, %s286
      %p292 = scmp.eq.s32.totalorder %s27, 0
      %p293 = por %p291, %p292
      %p294 = scmp.ne.s32.totalorder %s283, %s286
      %p295 = scmp.eq.s32.totalorder %s32, 1
      %p296 = por %p294, %p295
      %p297 = scmp.ne.s32.totalorder %s286, %s287
      %p298 = scmp.eq.s32.totalorder %s32, 0
      %p299 = por %p297, %p298
      %p300 = scmp.ne.s32.totalorder %s286, %s287
      %p301 = scmp.eq.s32.totalorder %s33, 1
      %p302 = por %p300, %p301
      %p304 = scmp.ne.s32.totalorder %s287, %s303
      %p305 = scmp.eq.s32.totalorder %s33, 0
      %p306 = por %p304, %p305
      %s307 = ssub.s32 %s27, %s34
      %p308 = scmp.eq.s32.totalorder %s307, 0
      %s310 = sadd.s32 %s309, 1
      %s311 = scalar_select %p308, %s309, %s310
      %p314 = pneg %p308
      %p315 = scmp.eq.s32.totalorder %s27, 1
      %p316 = por %p314, %p315
      %p317 = scmp.ne.s32.totalorder %s309, %s312
      %p318 = scmp.eq.s32.totalorder %s27, 0
      %p319 = por %p317, %p318
      %p320 = scmp.ne.s32.totalorder %s309, %s312
      %p321 = scmp.eq.s32.totalorder %s32, 1
      %p322 = por %p320, %p321
      %p323 = scmp.ne.s32.totalorder %s312, %s313
      %p324 = scmp.eq.s32.totalorder %s32, 0
      %p325 = por %p323, %p324
      %p326 = scmp.ne.s32.totalorder %s312, %s313
      %p327 = scmp.eq.s32.totalorder %s33, 1
      %p328 = por %p326, %p327
      %p330 = scmp.ne.s32.totalorder %s313, %s329
      %p331 = scmp.eq.s32.totalorder %s33, 0
      %p332 = por %p330, %p331
      %p333 = scmp.le.s32.totalorder 1, %s27
      %p334 = scmp.lt.s32.totalorder %s27, 3
      %p335 = pnand %p333, %p334
      %p336 = pneg %p335
      // Predicated region
      $region9: #{vgg_v2_forward.1} parent=5 // pred_check
        _
      $region10: #{vgg_v2_forward.1} parent=5 // pred_check_branch
        %338 = sbr.rel (%p335) target = $region12
      $region11: #{vgg_v2_forward.1} parent=5 // pred_region
        %s339 = ssub.s32 %s27, 1
        // Predicated region
        $region13: #{vgg_v2_forward.1} parent=11 // pred_check
          %p340 = pneg %p74
        $region14: #{vgg_v2_forward.1} parent=11 // pred_check_branch
          %342 = sbr.rel (%p340) target = $region16
        $region15: #{vgg_v2_forward.1} parent=11 // pred_region
          _
        $region16: #{vgg_v2_forward.1} parent=11 // pred_fallthru
          _
        // Predicated region
        $region17: #{vgg_v2_forward.1} parent=11 // pred_check
          %p343 = pneg %p95
        $region18: #{vgg_v2_forward.1} parent=11 // pred_check_branch
          %345 = sbr.rel (%p343) target = $region20
        $region19: #{vgg_v2_forward.1} parent=11 // pred_region
          _
        $region20: #{vgg_v2_forward.1} parent=11 // pred_fallthru
          _
        // Predicated region
        $region21: #{vgg_v2_forward.1} parent=11 // pred_check
          %p346 = pneg %p116
        $region22: #{vgg_v2_forward.1} parent=11 // pred_check_branch
          %348 = sbr.rel (%p346) target = $region24
        $region23: #{vgg_v2_forward.1} parent=11 // pred_region
          _
        $region24: #{vgg_v2_forward.1} parent=11 // pred_fallthru
          _
        // Predicated region
        $region25: #{vgg_v2_forward.1} parent=11 // pred_check
          %p349 = pneg %p137
        $region26: #{vgg_v2_forward.1} parent=11 // pred_check_branch
          %351 = sbr.rel (%p349) target = $region28
        $region27: #{vgg_v2_forward.1} parent=11 // pred_region
          _
        $region28: #{vgg_v2_forward.1} parent=11 // pred_fallthru
          _
        // Predicated region
        $region29: #{vgg_v2_forward.1} parent=11 // pred_check
          %p352 = pneg %p158
        $region30: #{vgg_v2_forward.1} parent=11 // pred_check_branch
          %354 = sbr.rel (%p352) target = $region32
        $region31: #{vgg_v2_forward.1} parent=11 // pred_region
          %s356 = ssub.s32 9216, 9216
          %357 = vsyncadd [#allocation11], %s356
          %s358 = sshll.u32 [#allocation10], 4
          %s359 = int_to_ptr.vmem [resolvable:$true] %s358
          %364 = dma.hbm_to_vmem [thread:$0]  %s5, 9216, %s359, [#allocation11], 128, 128, 8
        $region32: #{vgg_v2_forward.1} parent=11 // pred_fallthru
          _
        // Predicated region
        $region33: #{vgg_v2_forward.1} parent=11 // pred_check
          %p365 = pneg %p179
        $region34: #{vgg_v2_forward.1} parent=11 // pred_check_branch
          %367 = sbr.rel (%p365) target = $region36
        $region35: #{vgg_v2_forward.1} parent=11 // pred_region
          _
        $region36: #{vgg_v2_forward.1} parent=11 // pred_fallthru
          _
        // Predicated region
        $region37: #{vgg_v2_forward.1} parent=11 // pred_check
          %p368 = pneg %p200
        $region38: #{vgg_v2_forward.1} parent=11 // pred_check_branch
          %370 = sbr.rel (%p368) target = $region40
        $region39: #{vgg_v2_forward.1} parent=11 // pred_region
          %s372 = ssub.s32 18432, 18432
          %373 = vsyncadd [#allocation14], %s372
          %s374 = sshll.u32 [#allocation13], 4
          %s375 = int_to_ptr.vmem [resolvable:$true] %s374
          %380 = dma.hbm_to_vmem [thread:$0]  %s7, 18432, %s375, [#allocation14], 128, 128, 8
        $region40: #{vgg_v2_forward.1} parent=11 // pred_fallthru
          _
        // Predicated region
        $region41: #{vgg_v2_forward.1} parent=11 // pred_check
          %p381 = pneg %p221
        $region42: #{vgg_v2_forward.1} parent=11 // pred_check_branch
          %383 = sbr.rel (%p381) target = $region44
        $region43: #{vgg_v2_forward.1} parent=11 // pred_region
          _
        $region44: #{vgg_v2_forward.1} parent=11 // pred_fallthru
          _
      $region12: #{vgg_v2_forward.1} parent=5 // pred_fallthru
        _
      %p384 = scmp.lt.s32.totalorder %s27, 2
      // Predicated region
      $region45: #{vgg_v2_forward.1} parent=5 // pred_check
        %p385 = pneg %p384
      $region46: #{vgg_v2_forward.1} parent=5 // pred_check_branch
        %387 = sbr.rel (%p385) target = $region48
      $region47: #{vgg_v2_forward.1} parent=5 // pred_region
        // Predicated region
        $region49: #{vgg_v2_forward.1} parent=47 // pred_check
          %p388 = pneg %p47
        $region50: #{vgg_v2_forward.1} parent=47 // pred_check_branch
          %390 = sbr.rel (%p388) target = $region52
        $region51: #{vgg_v2_forward.1} parent=47 // pred_region
          %p391 = scmp.lt.s32.totalorder %s27, 1
          %s392 = scalar_select %p391, %s27, 1
          %s393 = smul.addr %s392, 32
          %s394 = smul.addr %s393, 8
          %s395 = scalar_lea.vmem %s0, %s394
        $region52: #{vgg_v2_forward.1} parent=47 // pred_fallthru
          _
      $region48: #{vgg_v2_forward.1} parent=5 // pred_fallthru
        _
      %p396 = scmp.le.s32.totalorder 1, %s27
      %p397 = scmp.lt.s32.totalorder %s27, 3
      %p398 = pnand %p396, %p397
      %p399 = pneg %p398
      // Predicated region
      $region53: #{vgg_v2_forward.1} parent=5 // pred_check
        _
      $region54: #{vgg_v2_forward.1} parent=5 // pred_check_branch
        %401 = sbr.rel (%p398) target = $region56
      $region55: #{vgg_v2_forward.1} parent=5 // pred_region
        %s402 = ssub.s32 %s27, 1
        // Predicated region
        $region57: #{vgg_v2_forward.1} parent=55 // pred_check
          %p403 = pneg %p158
        $region58: #{vgg_v2_forward.1} parent=55 // pred_check_branch
          %405 = sbr.rel (%p403) target = $region60
        $region59: #{vgg_v2_forward.1} parent=55 // pred_region
          %406 = dma.done [#allocation11], 9216
        $region60: #{vgg_v2_forward.1} parent=55 // pred_fallthru
          _
        // Predicated region
        $region61: #{vgg_v2_forward.1} parent=55 // pred_check
          %p407 = pneg %p200
        $region62: #{vgg_v2_forward.1} parent=55 // pred_check_branch
          %409 = sbr.rel (%p407) target = $region64
        $region63: #{vgg_v2_forward.1} parent=55 // pred_region
          %410 = dma.done [#allocation14], 18432
        $region64: #{vgg_v2_forward.1} parent=55 // pred_fallthru
          _
        %p411 = scmp.lt.s32.totalorder %s32, 1
        %s412 = scalar_select %p411, %s32, 1
        %s413 = smul.addr %s412, 32
        %s414 = smul.addr %s413, 8
        %s415 = scalar_lea.vmem %s0, %s414
        %p416 = pneg %p53
        %p417 = pneg %p50
        %p418 = pneg %p74
        %p419 = pneg %p71
        %p420 = pneg %p95
        %p421 = pneg %p92
        %p422 = pneg %p116
        %p423 = pneg %p113
        %p424 = pneg %p137
        %p425 = pneg %p134
        %p426 = pneg %p158
        %p427 = pneg %p155
        %p428 = pneg %p179
        %p429 = pneg %p176
        %p430 = pneg %p200
        %p431 = pneg %p197
        %p432 = pneg %p221
        %p433 = pneg %p218
        %p434 = pneg %p247
        %p435 = pneg %p244
        %p436 = scmp.lt.s32.totalorder %s32, 1
        %s437 = scalar_select %p436, %s32, 1
        %s438 = smul.addr %s437, 16
        %s439 = smul.addr %s438, 8
        %s440 = scalar_lea.vmem %s9, %s439
        %p441 = pneg %p273
        %p442 = pneg %p270
        %p443 = scmp.lt.s32.totalorder %s32, 1
        %s444 = scalar_select %p443, %s32, 1
        %s445 = smul.addr %s444, 16
        %s446 = smul.addr %s445, 8
        %s447 = scalar_lea.vmem %s10, %s446
        %p448 = pneg %p299
        %p449 = pneg %p296
        %s450 = sand.u32 %s286, 1
        %s451 = scalar_lea.sflag [#allocation12], %s450
        %s452 = sand.u32 %s286, 1
        %s453 = smul.addr %s452, 64
        %s454 = scalar_lea.vmem [#allocation15], %s453
        %p455 = pneg %p325
        %p456 = pneg %p322
        %s457 = sand.u32 %s312, 1
        %s458 = scalar_lea.sflag [#allocation17], %s457
        %s459 = sand.u32 %s312, 1
        %s460 = smul.addr %s459, 64
        %s461 = scalar_lea.vmem [#allocation16], %s460
        %p462 = scmp.lt.s32.totalorder %s32, 1
        %s463 = scalar_select %p462, %s32, 1
        %s464 = smul.addr %s463, 32
        %s465 = smul.addr %s464, 8
        %s466 = scalar_lea.vmem %s0, %s465
        %p467 = scmp.lt.s32.totalorder %s32, 1
        %s468 = scalar_select %p467, %s32, 1
        %s469 = smul.addr %s468, 16
        %s470 = smul.addr %s469, 8
        %s471 = scalar_lea.vmem %s9, %s470
        %p472 = scmp.lt.s32.totalorder %s32, 1
        %s473 = scalar_select %p472, %s32, 1
        %s474 = smul.addr %s473, 16
        %s475 = smul.addr %s474, 8
        %s476 = scalar_lea.vmem %s10, %s475
        %vm477 = vcmask 23552
        %478 = vst.msk [vmem:[#allocation2 + $0x7] sm:$0xff] %vm477, 0.0
        %479 = vst.msk [vmem:[#allocation2 + $0xf] sm:$0xff] %vm477, 0.0
        %vm480 = vcmask 17408
        %481 = vst.msk [vmem:[#allocation2 + $0x17] sm:$0x3] %vm480, 0.0
        %s482 = scalar_lea.vmem [#allocation2], 544
        %483 = vst.msk [vmem:[%s482 + $0x7] sm:$0xff] %vm477, 0.0
        %484 = vst.msk [vmem:[%s482 + $0xf] sm:$0xff] %vm477, 0.0
        %485 = vst.msk [vmem:[%s482 + $0x17] sm:$0x3] %vm480, 0.0
        %s486 = scalar_lea.vmem [#allocation2], 32
        %vm487 = vcmask 16384
        %488 = vst.msk [vmem:[%s486 + $0x7] sm:$0x1] %vm487, 0.0
        %489 = vst.msk [vmem:[%s486 + $0x27] sm:$0x1] %vm487, 0.0
        %490 = vst.msk [vmem:[%s486 + $0x47] sm:$0x1] %vm487, 0.0
        %491 = vst.msk [vmem:[%s486 + $0x67] sm:$0x1] %vm487, 0.0
        %492 = vst.msk [vmem:[%s486 + $0x87] sm:$0x1] %vm487, 0.0
        %493 = vst.msk [vmem:[%s486 + $0xa7] sm:$0x1] %vm487, 0.0
        %494 = vst.msk [vmem:[%s486 + $0xc7] sm:$0x1] %vm487, 0.0
        %495 = vst.msk [vmem:[%s486 + $0xe7] sm:$0x1] %vm487, 0.0
        %496 = vst.msk [vmem:[%s486 + $0x107] sm:$0x1] %vm487, 0.0
        %497 = vst.msk [vmem:[%s486 + $0x127] sm:$0x1] %vm487, 0.0
        %498 = vst.msk [vmem:[%s486 + $0x147] sm:$0x1] %vm487, 0.0
        %499 = vst.msk [vmem:[%s486 + $0x167] sm:$0x1] %vm487, 0.0
        %500 = vst.msk [vmem:[%s486 + $0x187] sm:$0x1] %vm487, 0.0
        %501 = vst.msk [vmem:[%s486 + $0x1a7] sm:$0x1] %vm487, 0.0
        %502 = vst.msk [vmem:[%s486 + $0x1c7] sm:$0x1] %vm487, 0.0
        %503 = vst.msk [vmem:[%s486 + $0x1e7] sm:$0x1] %vm487, 0.0
        %504 = vst.msk [vmem:[%s486 + $0x18] sm:$0x1] %vm487, 0.0
        %505 = vst.msk [vmem:[%s486 + $0x38] sm:$0x1] %vm487, 0.0
        %506 = vst.msk [vmem:[%s486 + $0x58] sm:$0x1] %vm487, 0.0
        %507 = vst.msk [vmem:[%s486 + $0x78] sm:$0x1] %vm487, 0.0
        %508 = vst.msk [vmem:[%s486 + $0x98] sm:$0x1] %vm487, 0.0
        %509 = vst.msk [vmem:[%s486 + $0xb8] sm:$0x1] %vm487, 0.0
        %510 = vst.msk [vmem:[%s486 + $0xd8] sm:$0x1] %vm487, 0.0
        %511 = vst.msk [vmem:[%s486 + $0xf8] sm:$0x1] %vm487, 0.0
        %512 = vst.msk [vmem:[%s486 + $0x118] sm:$0x1] %vm487, 0.0
        %513 = vst.msk [vmem:[%s486 + $0x138] sm:$0x1] %vm487, 0.0
        %514 = vst.msk [vmem:[%s486 + $0x158] sm:$0x1] %vm487, 0.0
        %515 = vst.msk [vmem:[%s486 + $0x178] sm:$0x1] %vm487, 0.0
        %516 = vst.msk [vmem:[%s486 + $0x198] sm:$0x1] %vm487, 0.0
        %517 = vst.msk [vmem:[%s486 + $0x1b8] sm:$0x1] %vm487, 0.0
        %518 = vst.msk [vmem:[%s486 + $0x1d8] sm:$0x1] %vm487, 0.0
        %519 = vst.msk [vmem:[%s486 + $0x1f8] sm:$0x1] %vm487, 0.0
        %v520 = vld [vmem:[%s466] sm:$0xff]
        %v521 = vld [vmem:[%s466 + $0x8] sm:$0xff]
        %v522 = vld [vmem:[%s466 + $0x10] sm:$0xff]
        %v523 = vld [vmem:[%s466 + $0x18] sm:$0xff]
        %v524 = vld [vmem:[%s466 + $0x20] sm:$0xff]
        %v525 = vld [vmem:[%s466 + $0x28] sm:$0xff]
        %v526 = vld [vmem:[%s466 + $0x30] sm:$0xff]
        %v527 = vld [vmem:[%s466 + $0x38] sm:$0xff]
        %v528 = vld [vmem:[%s466 + $0x40] sm:$0xff]
        %v529 = vld [vmem:[%s466 + $0x48] sm:$0xff]
        %v530 = vld [vmem:[%s466 + $0x50] sm:$0xff]
        %v531 = vld [vmem:[%s466 + $0x58] sm:$0xff]
        %v532 = vld [vmem:[%s466 + $0x60] sm:$0xff]
        %v533 = vld [vmem:[%s466 + $0x68] sm:$0xff]
        %v534 = vld [vmem:[%s466 + $0x70] sm:$0xff]
        %v535 = vld [vmem:[%s466 + $0x78] sm:$0xff]
        %v536 = vld [vmem:[%s466 + $0x80] sm:$0xff]
        %v537 = vld [vmem:[%s466 + $0x88] sm:$0xff]
        %v538 = vld [vmem:[%s466 + $0x90] sm:$0xff]
        %v539 = vld [vmem:[%s466 + $0x98] sm:$0xff]
        %v540 = vld [vmem:[%s466 + $0xa0] sm:$0xff]
        %v541 = vld [vmem:[%s466 + $0xa8] sm:$0xff]
        %v542 = vld [vmem:[%s466 + $0xb0] sm:$0xff]
        %v543 = vld [vmem:[%s466 + $0xb8] sm:$0xff]
        %v544 = vld [vmem:[%s466 + $0xc0] sm:$0xff]
        %v545 = vld [vmem:[%s466 + $0xc8] sm:$0xff]
        %v546 = vld [vmem:[%s466 + $0xd0] sm:$0xff]
        %v547 = vld [vmem:[%s466 + $0xd8] sm:$0xff]
        %v548 = vld [vmem:[%s466 + $0xe0] sm:$0xff]
        %v549 = vld [vmem:[%s466 + $0xe8] sm:$0xff]
        %v550 = vld [vmem:[%s466 + $0xf0] sm:$0xff]
        %v551 = vld [vmem:[%s466 + $0xf8] sm:$0xff]
        %552 = vst.msk [vmem:[%s486 + $0x8] sm:$0xff] %vm477, %v520
        %553 = vst.msk [vmem:[%s486 + $0x10] sm:$0xff] %vm477, %v521
        %554 = vst.msk [vmem:[%s486 + $0x28] sm:$0xff] %vm477, %v522
        %555 = vst.msk [vmem:[%s486 + $0x30] sm:$0xff] %vm477, %v523
        %556 = vst.msk [vmem:[%s486 + $0x48] sm:$0xff] %vm477, %v524
        %557 = vst.msk [vmem:[%s486 + $0x50] sm:$0xff] %vm477, %v525
        %558 = vst.msk [vmem:[%s486 + $0x68] sm:$0xff] %vm477, %v526
        %559 = vst.msk [vmem:[%s486 + $0x70] sm:$0xff] %vm477, %v527
        %560 = vst.msk [vmem:[%s486 + $0x88] sm:$0xff] %vm477, %v528
        %561 = vst.msk [vmem:[%s486 + $0x90] sm:$0xff] %vm477, %v529
        %562 = vst.msk [vmem:[%s486 + $0xa8] sm:$0xff] %vm477, %v530
        %563 = vst.msk [vmem:[%s486 + $0xb0] sm:$0xff] %vm477, %v531
        %564 = vst.msk [vmem:[%s486 + $0xc8] sm:$0xff] %vm477, %v532
        %565 = vst.msk [vmem:[%s486 + $0xd0] sm:$0xff] %vm477, %v533
        %566 = vst.msk [vmem:[%s486 + $0xe8] sm:$0xff] %vm477, %v534
        %567 = vst.msk [vmem:[%s486 + $0xf0] sm:$0xff] %vm477, %v535
        %568 = vst.msk [vmem:[%s486 + $0x108] sm:$0xff] %vm477, %v536
        %569 = vst.msk [vmem:[%s486 + $0x110] sm:$0xff] %vm477, %v537
        %570 = vst.msk [vmem:[%s486 + $0x128] sm:$0xff] %vm477, %v538
        %571 = vst.msk [vmem:[%s486 + $0x130] sm:$0xff] %vm477, %v539
        %572 = vst.msk [vmem:[%s486 + $0x148] sm:$0xff] %vm477, %v540
        %573 = vst.msk [vmem:[%s486 + $0x150] sm:$0xff] %vm477, %v541
        %574 = vst.msk [vmem:[%s486 + $0x168] sm:$0xff] %vm477, %v542
        %575 = vst.msk [vmem:[%s486 + $0x170] sm:$0xff] %vm477, %v543
        %576 = vst.msk [vmem:[%s486 + $0x188] sm:$0xff] %vm477, %v544
        %577 = vst.msk [vmem:[%s486 + $0x190] sm:$0xff] %vm477, %v545
        %578 = vst.msk [vmem:[%s486 + $0x1a8] sm:$0xff] %vm477, %v546
        %579 = vst.msk [vmem:[%s486 + $0x1b0] sm:$0xff] %vm477, %v547
        %580 = vst.msk [vmem:[%s486 + $0x1c8] sm:$0xff] %vm477, %v548
        %581 = vst.msk [vmem:[%s486 + $0x1d0] sm:$0xff] %vm477, %v549
        %582 = vst.msk [vmem:[%s486 + $0x1e8] sm:$0xff] %vm477, %v550
        %583 = vst.msk [vmem:[%s486 + $0x1f0] sm:$0xff] %vm477, %v551
        %v584 = vld [vmem:[#allocation2 + $0x7] sm:$0xff]
        %v585 = vld [vmem:[#allocation2 + $0xf] sm:$0xff]
        %v586 = vld [vmem:[#allocation2 + $0x27] sm:$0xff]
        %v587 = vld [vmem:[#allocation2 + $0x2f] sm:$0xff]
        %v588 = vld [vmem:[#allocation2 + $0x47] sm:$0xff]
        %v589 = vld [vmem:[#allocation2 + $0x4f] sm:$0xff]
        %v590 = vld [vmem:[#allocation2 + $0x67] sm:$0xff]
        %v591 = vld [vmem:[#allocation2 + $0x6f] sm:$0xff]
        %v592 = vld [vmem:[#allocation2 + $0x87] sm:$0xff]
        %v593 = vld [vmem:[#allocation2 + $0x8f] sm:$0xff]
        %v594 = vld [vmem:[#allocation2 + $0xa7] sm:$0xff]
        %v595 = vld [vmem:[#allocation2 + $0xaf] sm:$0xff]
        %v596 = vld [vmem:[#allocation2 + $0xc7] sm:$0xff]
        %v597 = vld [vmem:[#allocation2 + $0xcf] sm:$0xff]
        %v598 = vld [vmem:[#allocation2 + $0xe7] sm:$0xff]
        %v599 = vld [vmem:[#allocation2 + $0xef] sm:$0xff]
        %v600 = vld [vmem:[#allocation2 + $0x107] sm:$0xff]
        %v601 = vld [vmem:[#allocation2 + $0x10f] sm:$0xff]
        %v602 = vld [vmem:[#allocation2 + $0x127] sm:$0xff]
        %v603 = vld [vmem:[#allocation2 + $0x12f] sm:$0xff]
        %v604 = vld [vmem:[#allocation2 + $0x147] sm:$0xff]
        %v605 = vld [vmem:[#allocation2 + $0x14f] sm:$0xff]
        %v606 = vld [vmem:[#allocation2 + $0x167] sm:$0xff]
        %v607 = vld [vmem:[#allocation2 + $0x16f] sm:$0xff]
        %v608 = vld [vmem:[#allocation2 + $0x187] sm:$0xff]
        %v609 = vld [vmem:[#allocation2 + $0x18f] sm:$0xff]
        %v610 = vld [vmem:[#allocation2 + $0x1a7] sm:$0xff]
        %v611 = vld [vmem:[#allocation2 + $0x1af] sm:$0xff]
        %v612 = vld [vmem:[#allocation2 + $0x1c7] sm:$0xff]
        %v613 = vld [vmem:[#allocation2 + $0x1cf] sm:$0xff]
        %v614 = vld [vmem:[#allocation2 + $0x1e7] sm:$0xff]
        %v615 = vld [vmem:[#allocation2 + $0x1ef] sm:$0xff]
        %v616 = vld [vmem:[%s1] sm:$0x7]
        %v617 = vld [vmem:[#allocation2 + $0x8] sm:$0xff]
        %v618 = vld [vmem:[#allocation2 + $0x10] sm:$0xff]
        %v619 = vld [vmem:[#allocation2 + $0x28] sm:$0xff]
        %v620 = vld [vmem:[#allocation2 + $0x30] sm:$0xff]
        %v621 = vld [vmem:[#allocation2 + $0x48] sm:$0xff]
        %v622 = vld [vmem:[#allocation2 + $0x50] sm:$0xff]
        %v623 = vld [vmem:[#allocation2 + $0x68] sm:$0xff]
        %v624 = vld [vmem:[#allocation2 + $0x70] sm:$0xff]
        %v625 = vld [vmem:[#allocation2 + $0x88] sm:$0xff]
        %v626 = vld [vmem:[#allocation2 + $0x90] sm:$0xff]
        %v627 = vld [vmem:[#allocation2 + $0xa8] sm:$0xff]
        %v628 = vld [vmem:[#allocation2 + $0xb0] sm:$0xff]
        %v629 = vld [vmem:[#allocation2 + $0xc8] sm:$0xff]
        %v630 = vld [vmem:[#allocation2 + $0xd0] sm:$0xff]
        %v631 = vld [vmem:[#allocation2 + $0xe8] sm:$0xff]
        %v632 = vld [vmem:[#allocation2 + $0xf0] sm:$0xff]
        %v633 = vld [vmem:[#allocation2 + $0x108] sm:$0xff]
        %v634 = vld [vmem:[#allocation2 + $0x110] sm:$0xff]
        %v635 = vld [vmem:[#allocation2 + $0x128] sm:$0xff]
        %v636 = vld [vmem:[#allocation2 + $0x130] sm:$0xff]
        %v637 = vld [vmem:[#allocation2 + $0x148] sm:$0xff]
        %v638 = vld [vmem:[#allocation2 + $0x150] sm:$0xff]
        %v639 = vld [vmem:[#allocation2 + $0x168] sm:$0xff]
        %v640 = vld [vmem:[#allocation2 + $0x170] sm:$0xff]
        %v641 = vld [vmem:[#allocation2 + $0x188] sm:$0xff]
        %v642 = vld [vmem:[#allocation2 + $0x190] sm:$0xff]
        %v643 = vld [vmem:[#allocation2 + $0x1a8] sm:$0xff]
        %v644 = vld [vmem:[#allocation2 + $0x1b0] sm:$0xff]
        %v645 = vld [vmem:[#allocation2 + $0x1c8] sm:$0xff]
        %v646 = vld [vmem:[#allocation2 + $0x1d0] sm:$0xff]
        %v647 = vld [vmem:[#allocation2 + $0x1e8] sm:$0xff]
        %v648 = vld [vmem:[#allocation2 + $0x1f0] sm:$0xff]
        %s649 = scalar_lea.vmem %s1, 4
        %v650 = vld [vmem:[%s649] sm:$0x7]
        %v652 = vsel %vm477, %v617, 0
        %v655 = vsel %vm477, %v618, 0
        %v658 = vsel %vm477, %v619, 0
        %v661 = vsel %vm477, %v620, 0
        %v664 = vsel %vm477, %v621, 0
        %v667 = vsel %vm477, %v622, 0
        %v670 = vsel %vm477, %v623, 0
        %v673 = vsel %vm477, %v624, 0
        %v676 = vsel %vm477, %v625, 0
        %v679 = vsel %vm477, %v626, 0
        %v682 = vsel %vm477, %v627, 0
        %v685 = vsel %vm477, %v628, 0
        %v688 = vsel %vm477, %v629, 0
        %v691 = vsel %vm477, %v630, 0
        %v694 = vsel %vm477, %v631, 0
        %v697 = vsel %vm477, %v632, 0
        %v700 = vsel %vm477, %v633, 0
        %v703 = vsel %vm477, %v634, 0
        %v706 = vsel %vm477, %v635, 0
        %v709 = vsel %vm477, %v636, 0
        %v712 = vsel %vm477, %v637, 0
        %v715 = vsel %vm477, %v638, 0
        %v718 = vsel %vm477, %v639, 0
        %v721 = vsel %vm477, %v640, 0
        %v724 = vsel %vm477, %v641, 0
        %v727 = vsel %vm477, %v642, 0
        %v730 = vsel %vm477, %v643, 0
        %v733 = vsel %vm477, %v644, 0
        %v736 = vsel %vm477, %v645, 0
        %v739 = vsel %vm477, %v646, 0
        %v742 = vsel %vm477, %v647, 0
        %v745 = vsel %vm477, %v648, 0
        %vm747 = vcmask 1042432
        %v749 = vsel %vm747, %v650, 0
        %751 = vmatprep.subr.mxu0 0.0
        %752 = vmatpush1.msra.mxu0 %v749
        %753 = vmatprep.subr.mxu0 0.0
        %754 = vmatpush1.msra.mxu0 0.0
        %755 = vmatprep.subr.mxu0 0.0
        %756 = vmatpush1.msra.mxu0 0.0
        %757 = vmatprep.subr.mxu0 0.0
        %758 = vmatpush1.msra.mxu0 0.0
        %759 = vmatprep.subr.mxu0 0.0
        %760 = vmatpush1.msra.mxu0 0.0
        %761 = vmatprep.subr.mxu0 0.0
        %762 = vmatpush1.msra.mxu0 0.0
        %763 = vmatprep.subr.mxu0 0.0
        %764 = vmatpush1.msra.mxu0 0.0
        %765 = vmatprep.subr.mxu0 0.0
        %766 = vmatpush1.msra.mxu0 0.0
        %767 = vmatprep.subr.mxu0 0.0
        %768 = vmatpush1.msra.mxu0 0.0
        %769 = vmatprep.subr.mxu0 0.0
        %770 = vmatpush1.msra.mxu0 0.0
        %771 = vmatprep.subr.mxu0 0.0
        %772 = vmatpush1.msra.mxu0 0.0
        %773 = vmatprep.subr.mxu0 0.0
        %774 = vmatpush1.msra.mxu0 0.0
        %775 = vmatprep.subr.mxu0 0.0
        %776 = vmatpush1.msra.mxu0 0.0
        %777 = vmatprep.subr.mxu0 0.0
        %778 = vmatpush1.msra.mxu0 0.0
        %779 = vmatprep.subr.mxu0 0.0
        %780 = vmatpush1.msra.mxu0 0.0
        %781 = vmatprep.subr.mxu0 0.0
        %782 = vmatpush1.msra.mxu0 0.0
        %783 = vmatprep.subr.mxu0 0.0
        %784 = vmatpush1.msra.mxu0 0.0
        %785 = vmatprep.subr.mxu0 0.0
        %786 = vmatpush1.msra.mxu0 0.0
        %787 = vmatprep.subr.mxu0 0.0
        %788 = vmatpush1.msra.mxu0 0.0
        %789 = vmatprep.subr.mxu0 0.0
        %790 = vmatpush1.msra.mxu0 0.0
        %791 = vmatprep.subr.mxu0 0.0
        %792 = vmatpush1.msra.mxu0 0.0
        %793 = vmatprep.subr.mxu0 0.0
        %794 = vmatpush1.msra.mxu0 0.0
        %795 = vmatprep.subr.mxu0 0.0
        %796 = vmatpush1.msra.mxu0 0.0
        %797 = vmatprep.subr.mxu0 0.0
        %798 = vmatpush1.msra.mxu0 0.0
        %799 = vmatprep.subr.mxu0 0.0
        %800 = vmatpush1.msra.mxu0 0.0
        %801 = vmatprep.subr.mxu0 0.0
        %802 = vmatpush1.msra.mxu0 0.0
        %803 = vmatprep.subr.mxu0 0.0
        %804 = vmatpush1.msra.mxu0 0.0
        %805 = vmatprep.subr.mxu0 0.0
        %806 = vmatpush1.msra.mxu0 0.0
        %807 = vmatprep.subr.mxu0 0.0
        %808 = vmatpush1.msra.mxu0 0.0
        %809 = vmatprep.subr.mxu0 0.0
        %810 = vmatpush1.msra.mxu0 0.0
        %811 = vmatprep.subr.mxu0 0.0
        %812 = vmatpush1.msra.mxu0 0.0
        %813 = vmatprep.subr.mxu0 0.0
        %814 = vmatpush1.msra.mxu0 0.0
        %815 = vmatprep.mubr.f32.mxu0 0.0
        %816 = vmatmul.mubr.f32.gmra.mrb[0].mxu0 %v652
        %v817 = vpop.f32.mrb[0].mxu0
        %v818 = vadd.f32 0.0, %v817
        %v819 = vpop.f32.mrb[0].mxu0
        %820 = vmatprep.mubr.f32.mxu0 0.0
        %821 = vmatmul.mubr.f32.gmra.mrb[0].mxu0 %v655
        %v822 = vpop.f32.mrb[0].mxu0
        %v823 = vadd.f32 0.0, %v822
        %v824 = vpop.f32.mrb[0].mxu0
        %825 = vmatprep.mubr.f32.mxu0 0.0
        %826 = vmatmul.mubr.f32.gmra.mrb[0].mxu0 %v658
        %v827 = vpop.f32.mrb[0].mxu0
        %v828 = vadd.f32 0.0, %v827
        %v829 = vpop.f32.mrb[0].mxu0
        %830 = vmatprep.mubr.f32.mxu0 0.0
        %831 = vmatmul.mubr.f32.gmra.mrb[0].mxu0 %v661
        %v832 = vpop.f32.mrb[0].mxu0
        %v833 = vadd.f32 0.0, %v832
        %v834 = vpop.f32.mrb[0].mxu0
        %835 = vmatprep.mubr.f32.mxu0 0.0
        %836 = vmatmul.mubr.f32.gmra.mrb[0].mxu0 %v664
        %v837 = vpop.f32.mrb[0].mxu0
        %v838 = vadd.f32 0.0, %v837
        %v839 = vpop.f32.mrb[0].mxu0
        %840 = vmatprep.mubr.f32.mxu0 0.0
        %841 = vmatmul.mubr.f32.gmra.mrb[0].mxu0 %v667
        %v842 = vpop.f32.mrb[0].mxu0
        %v843 = vadd.f32 0.0, %v842
        %v844 = vpop.f32.mrb[0].mxu0
        %845 = vmatprep.mubr.f32.mxu0 0.0
        %846 = vmatmul.mubr.f32.gmra.mrb[0].mxu0 %v670
        %v847 = vpop.f32.mrb[0].mxu0
        %v848 = vadd.f32 0.0, %v847
        %v849 = vpop.f32.mrb[0].mxu0
        %850 = vmatprep.mubr.f32.mxu0 0.0
        %851 = vmatmul.mubr.f32.gmra.mrb[0].mxu0 %v673
        %v852 = vpop.f32.mrb[0].mxu0
        %v853 = vadd.f32 0.0, %v852
        %v854 = vpop.f32.mrb[0].mxu0
        %855 = vmatprep.mubr.f32.mxu0 0.0
        %856 = vmatmul.mubr.f32.gmra.mrb[0].mxu0 %v676
        %v857 = vpop.f32.mrb[0].mxu0
        %v858 = vadd.f32 0.0, %v857
        %v859 = vpop.f32.mrb[0].mxu0
        %860 = vmatprep.mubr.f32.mxu0 0.0
        %861 = vmatmul.mubr.f32.gmra.mrb[0].mxu0 %v679
        %v862 = vpop.f32.mrb[0].mxu0
        %v863 = vadd.f32 0.0, %v862
        %v864 = vpop.f32.mrb[0].mxu0
        %865 = vmatprep.mubr.f32.mxu0 0.0
        %866 = vmatmul.mubr.f32.gmra.mrb[0].mxu0 %v682
        %v867 = vpop.f32.mrb[0].mxu0
        %v868 = vadd.f32 0.0, %v867
        %v869 = vpop.f32.mrb[0].mxu0
        %870 = vmatprep.mubr.f32.mxu0 0.0
        %871 = vmatmul.mubr.f32.gmra.mrb[0].mxu0 %v685
        %v872 = vpop.f32.mrb[0].mxu0
        %v873 = vadd.f32 0.0, %v872
        %v874 = vpop.f32.mrb[0].mxu0
        %875 = vmatprep.mubr.f32.mxu0 0.0
        %876 = vmatmul.mubr.f32.gmra.mrb[0].mxu0 %v688
        %v877 = vpop.f32.mrb[0].mxu0
        %v878 = vadd.f32 0.0, %v877
        %v879 = vpop.f32.mrb[0].mxu0
        %880 = vmatprep.mubr.f32.mxu0 0.0
        %881 = vmatmul.mubr.f32.gmra.mrb[0].mxu0 %v691
        %v882 = vpop.f32.mrb[0].mxu0
        %v883 = vadd.f32 0.0, %v882
        %v884 = vpop.f32.mrb[0].mxu0
        %885 = vmatprep.mubr.f32.mxu0 0.0
        %886 = vmatmul.mubr.f32.gmra.mrb[0].mxu0 %v694
        %v887 = vpop.f32.mrb[0].mxu0
        %v888 = vadd.f32 0.0, %v887
        %v889 = vpop.f32.mrb[0].mxu0
        %890 = vmatprep.mubr.f32.mxu0 0.0
        %891 = vmatmul.mubr.f32.gmra.mrb[0].mxu0 %v697
        %v892 = vpop.f32.mrb[0].mxu0
        %v893 = vadd.f32 0.0, %v892
        %v894 = vpop.f32.mrb[0].mxu0
        %895 = vmatprep.mubr.f32.mxu0 0.0
        %896 = vmatmul.mubr.f32.gmra.mrb[0].mxu0 %v700
        %v897 = vpop.f32.mrb[0].mxu0
        %v898 = vadd.f32 0.0, %v897
        %v899 = vpop.f32.mrb[0].mxu0
        %900 = vmatprep.mubr.f32.mxu0 0.0
        %901 = vmatmul.mubr.f32.gmra.mrb[0].mxu0 %v703
        %v902 = vpop.f32.mrb[0].mxu0
        %v903 = vadd.f32 0.0, %v902
        %v904 = vpop.f32.mrb[0].mxu0
        %905 = vmatprep.mubr.f32.mxu0 0.0
        %906 = vmatmul.mubr.f32.gmra.mrb[0].mxu0 %v706
        %v907 = vpop.f32.mrb[0].mxu0
        %v908 = vadd.f32 0.0, %v907
        %v909 = vpop.f32.mrb[0].mxu0
        %910 = vmatprep.mubr.f32.mxu0 0.0
        %911 = vmatmul.mubr.f32.gmra.mrb[0].mxu0 %v709
        %v912 = vpop.f32.mrb[0].mxu0
        %v913 = vadd.f32 0.0, %v912
        %v914 = vpop.f32.mrb[0].mxu0
        %915 = vmatprep.mubr.f32.mxu0 0.0
        %916 = vmatmul.mubr.f32.gmra.mrb[0].mxu0 %v712
        %v917 = vpop.f32.mrb[0].mxu0
        %v918 = vadd.f32 0.0, %v917
        %v919 = vpop.f32.mrb[0].mxu0
        %920 = vmatprep.mubr.f32.mxu0 0.0
        %921 = vmatmul.mubr.f32.gmra.mrb[0].mxu0 %v715
        %v922 = vpop.f32.mrb[0].mxu0
        %v923 = vadd.f32 0.0, %v922
        %v924 = vpop.f32.mrb[0].mxu0
        %925 = vmatprep.mubr.f32.mxu0 0.0
        %926 = vmatmul.mubr.f32.gmra.mrb[0].mxu0 %v718
        %v927 = vpop.f32.mrb[0].mxu0
        %v928 = vadd.f32 0.0, %v927
        %v929 = vpop.f32.mrb[0].mxu0
        %930 = vmatprep.mubr.f32.mxu0 0.0
        %931 = vmatmul.mubr.f32.gmra.mrb[0].mxu0 %v721
        %v932 = vpop.f32.mrb[0].mxu0
        %v933 = vadd.f32 0.0, %v932
        %v934 = vpop.f32.mrb[0].mxu0
        %935 = vmatprep.mubr.f32.mxu0 0.0
        %936 = vmatmul.mubr.f32.gmra.mrb[0].mxu0 %v724
        %v937 = vpop.f32.mrb[0].mxu0
        %v938 = vadd.f32 0.0, %v937
        %v939 = vpop.f32.mrb[0].mxu0
        %940 = vmatprep.mubr.f32.mxu0 0.0
        %941 = vmatmul.mubr.f32.gmra.mrb[0].mxu0 %v727
        %v942 = vpop.f32.mrb[0].mxu0
        %v943 = vadd.f32 0.0, %v942
        %v944 = vpop.f32.mrb[0].mxu0
        %945 = vmatprep.mubr.f32.mxu0 0.0
        %946 = vmatmul.mubr.f32.gmra.mrb[0].mxu0 %v730
        %v947 = vpop.f32.mrb[0].mxu0
        %v948 = vadd.f32 0.0, %v947
        %v949 = vpop.f32.mrb[0].mxu0
        %950 = vmatprep.mubr.f32.mxu0 0.0
        %951 = vmatmul.mubr.f32.gmra.mrb[0].mxu0 %v733
        %v952 = vpop.f32.mrb[0].mxu0
        %v953 = vadd.f32 0.0, %v952
        %v954 = vpop.f32.mrb[0].mxu0
        %955 = vmatprep.mubr.f32.mxu0 0.0
        %956 = vmatmul.mubr.f32.gmra.mrb[0].mxu0 %v736
        %v957 = vpop.f32.mrb[0].mxu0
        %v958 = vadd.f32 0.0, %v957
        %v959 = vpop.f32.mrb[0].mxu0
        %960 = vmatprep.mubr.f32.mxu0 0.0
        %961 = vmatmul.mubr.f32.gmra.mrb[0].mxu0 %v739
        %v962 = vpop.f32.mrb[0].mxu0
        %v963 = vadd.f32 0.0, %v962
        %v964 = vpop.f32.mrb[0].mxu0
        %965 = vmatprep.mubr.f32.mxu0 0.0
        %966 = vmatmul.mubr.f32.gmra.mrb[0].mxu0 %v742
        %v967 = vpop.f32.mrb[0].mxu0
        %v968 = vadd.f32 0.0, %v967
        %v969 = vpop.f32.mrb[0].mxu0
        %970 = vmatprep.mubr.f32.mxu0 0.0
        %971 = vmatmul.mubr.f32.gmra.mrb[0].mxu0 %v745
        %v972 = vpop.f32.mrb[0].mxu0
        %v973 = vadd.f32 0.0, %v972
        %v974 = vpop.f32.mrb[0].mxu0
        %975 = vdwg.mxu0
        %v977 = vsel %vm477, %v584, 0
        %v980 = vsel %vm477, %v585, 0
        %v983 = vsel %vm477, %v586, 0
        %v986 = vsel %vm477, %v587, 0
        %v989 = vsel %vm477, %v588, 0
        %v992 = vsel %vm477, %v589, 0
        %v995 = vsel %vm477, %v590, 0
        %v998 = vsel %vm477, %v591, 0
        %v1001 = vsel %vm477, %v592, 0
        %v1004 = vsel %vm477, %v593, 0
        %v1007 = vsel %vm477, %v594, 0
        %v1010 = vsel %vm477, %v595, 0
        %v1013 = vsel %vm477, %v596, 0
        %v1016 = vsel %vm477, %v597, 0
        %v1019 = vsel %vm477, %v598, 0
        %v1022 = vsel %vm477, %v599, 0
        %v1025 = vsel %vm477, %v600, 0
        %v1028 = vsel %vm477, %v601, 0
        %v1031 = vsel %vm477, %v602, 0
        %v1034 = vsel %vm477, %v603, 0
        %v1037 = vsel %vm477, %v604, 0
        %v1040 = vsel %vm477, %v605, 0
        %v1043 = vsel %vm477, %v606, 0
        %v1046 = vsel %vm477, %v607, 0
        %v1049 = vsel %vm477, %v608, 0
        %v1052 = vsel %vm477, %v609, 0
        %v1055 = vsel %vm477, %v610, 0
        %v1058 = vsel %vm477, %v611, 0
        %v1061 = vsel %vm477, %v612, 0
        %v1064 = vsel %vm477, %v613, 0
        %v1067 = vsel %vm477, %v614, 0
        %v1070 = vsel %vm477, %v615, 0
        %v1073 = vsel %vm747, %v616, 0
        %1075 = vmatprep.subr.mxu0 0.0
        %1076 = vmatpush1.msra.mxu0 %v1073
        %1077 = vmatprep.subr.mxu0 0.0
        %1078 = vmatpush1.msra.mxu0 0.0
        %1079 = vmatprep.subr.mxu0 0.0
        %1080 = vmatpush1.msra.mxu0 0.0
        %1081 = vmatprep.subr.mxu0 0.0
        %1082 = vmatpush1.msra.mxu0 0.0
        %1083 = vmatprep.subr.mxu0 0.0
        %1084 = vmatpush1.msra.mxu0 0.0
        %1085 = vmatprep.subr.mxu0 0.0
        %1086 = vmatpush1.msra.mxu0 0.0
        %1087 = vmatprep.subr.mxu0 0.0
        %1088 = vmatpush1.msra.mxu0 0.0
        %1089 = vmatprep.subr.mxu0 0.0
        %1090 = vmatpush1.msra.mxu0 0.0
        %1091 = vmatprep.subr.mxu0 0.0
        %1092 = vmatpush1.msra.mxu0 0.0
        %1093 = vmatprep.subr.mxu0 0.0
        %1094 = vmatpush1.msra.mxu0 0.0
        %1095 = vmatprep.subr.mxu0 0.0
        %1096 = vmatpush1.msra.mxu0 0.0
        %1097 = vmatprep.subr.mxu0 0.0
        %1098 = vmatpush1.msra.mxu0 0.0
        %1099 = vmatprep.subr.mxu0 0.0
        %1100 = vmatpush1.msra.mxu0 0.0
        %1101 = vmatprep.subr.mxu0 0.0
        %1102 = vmatpush1.msra.mxu0 0.0
        %1103 = vmatprep.subr.mxu0 0.0
        %1104 = vmatpush1.msra.mxu0 0.0
        %1105 = vmatprep.subr.mxu0 0.0
        %1106 = vmatpush1.msra.mxu0 0.0
        %1107 = vmatprep.subr.mxu0 0.0
        %1108 = vmatpush1.msra.mxu0 0.0
        %1109 = vmatprep.subr.mxu0 0.0
        %1110 = vmatpush1.msra.mxu0 0.0
        %1111 = vmatprep.subr.mxu0 0.0
        %1112 = vmatpush1.msra.mxu0 0.0
        %1113 = vmatprep.subr.mxu0 0.0
        %1114 = vmatpush1.msra.mxu0 0.0
        %1115 = vmatprep.subr.mxu0 0.0
        %1116 = vmatpush1.msra.mxu0 0.0
        %1117 = vmatprep.subr.mxu0 0.0
        %1118 = vmatpush1.msra.mxu0 0.0
        %1119 = vmatprep.subr.mxu0 0.0
        %1120 = vmatpush1.msra.mxu0 0.0
        %1121 = vmatprep.subr.mxu0 0.0
        %1122 = vmatpush1.msra.mxu0 0.0
        %1123 = vmatprep.subr.mxu0 0.0
        %1124 = vmatpush1.msra.mxu0 0.0
        %1125 = vmatprep.subr.mxu0 0.0
        %1126 = vmatpush1.msra.mxu0 0.0
        %1127 = vmatprep.subr.mxu0 0.0
        %1128 = vmatpush1.msra.mxu0 0.0
        %1129 = vmatprep.subr.mxu0 0.0
        %1130 = vmatpush1.msra.mxu0 0.0
        %1131 = vmatprep.subr.mxu0 0.0
        %1132 = vmatpush1.msra.mxu0 0.0
        %1133 = vmatprep.subr.mxu0 0.0
        %1134 = vmatpush1.msra.mxu0 0.0
        %1135 = vmatprep.subr.mxu0 0.0
        %1136 = vmatpush1.msra.mxu0 0.0
        %1137 = vmatprep.subr.mxu0 0.0
        %1138 = vmatpush1.msra.mxu0 0.0
        %1139 = vmatprep.mubr.f32.mxu0 0.0
        %1140 = vmatmul.mubr.f32.gmra.mrb[0].mxu0 %v977
        %v1141 = vpop.f32.mrb[0].mxu0
        %v1142 = vadd.f32 %v818, %v1141
        %v1143 = vpop.f32.mrb[0].mxu0
        %1144 = vmatprep.mubr.f32.mxu0 0.0
        %1145 = vmatmul.mubr.f32.gmra.mrb[0].mxu0 %v980
        %v1146 = vpop.f32.mrb[0].mxu0
        %v1147 = vadd.f32 %v823, %v1146
        %v1148 = vpop.f32.mrb[0].mxu0
        %1149 = vmatprep.mubr.f32.mxu0 0.0
        %1150 = vmatmul.mubr.f32.gmra.mrb[0].mxu0 %v983
        %v1151 = vpop.f32.mrb[0].mxu0
        %v1152 = vadd.f32 %v828, %v1151
        %v1153 = vpop.f32.mrb[0].mxu0
        %1154 = vmatprep.mubr.f32.mxu0 0.0
        %1155 = vmatmul.mubr.f32.gmra.mrb[0].mxu0 %v986
        %v1156 = vpop.f32.mrb[0].mxu0
        %v1157 = vadd.f32 %v833, %v1156
        %v1158 = vpop.f32.mrb[0].mxu0
        %1159 = vmatprep.mubr.f32.mxu0 0.0
        %1160 = vmatmul.mubr.f32.gmra.mrb[0].mxu0 %v989
        %v1161 = vpop.f32.mrb[0].mxu0
        %v1162 = vadd.f32 %v838, %v1161
        %v1163 = vpop.f32.mrb[0].mxu0
        %1164 = vmatprep.mubr.f32.mxu0 0.0
        %1165 = vmatmul.mubr.f32.gmra.mrb[0].mxu0 %v992
        %v1166 = vpop.f32.mrb[0].mxu0
        %v1167 = vadd.f32 %v843, %v1166
        %v1168 = vpop.f32.mrb[0].mxu0
        %1169 = vmatprep.mubr.f32.mxu0 0.0
        %1170 = vmatmul.mubr.f32.gmra.mrb[0].mxu0 %v995
        %v1171 = vpop.f32.mrb[0].mxu0
        %v1172 = vadd.f32 %v848, %v1171
        %v1173 = vpop.f32.mrb[0].mxu0
        %1174 = vmatprep.mubr.f32.mxu0 0.0
        %1175 = vmatmul.mubr.f32.gmra.mrb[0].mxu0 %v998
        %v1176 = vpop.f32.mrb[0].mxu0
        %v1177 = vadd.f32 %v853, %v1176
        %v1178 = vpop.f32.mrb[0].mxu0
        %1179 = vmatprep.mubr.f32.mxu0 0.0
        %1180 = vmatmul.mubr.f32.gmra.mrb[0].mxu0 %v1001
        %v1181 = vpop.f32.mrb[0].mxu0
        %v1182 = vadd.f32 %v858, %v1181
        %v1183 = vpop.f32.mrb[0].mxu0
        %1184 = vmatprep.mubr.f32.mxu0 0.0
        %1185 = vmatmul.mubr.f32.gmra.mrb[0].mxu0 %v1004
        %v1186 = vpop.f32.mrb[0].mxu0
        %v1187 = vadd.f32 %v863, %v1186
        %v1188 = vpop.f32.mrb[0].mxu0
        %1189 = vmatprep.mubr.f32.mxu0 0.0
        %1190 = vmatmul.mubr.f32.gmra.mrb[0].mxu0 %v1007
        %v1191 = vpop.f32.mrb[0].mxu0
        %v1192 = vadd.f32 %v868, %v1191
        %v1193 = vpop.f32.mrb[0].mxu0
        %1194 = vmatprep.mubr.f32.mxu0 0.0
        %1195 = vmatmul.mubr.f32.gmra.mrb[0].mxu0 %v1010
        %v1196 = vpop.f32.mrb[0].mxu0
        %v1197 = vadd.f32 %v873, %v1196
        %v1198 = vpop.f32.mrb[0].mxu0
        %1199 = vmatprep.mubr.f32.mxu0 0.0
        %1200 = vmatmul.mubr.f32.gmra.mrb[0].mxu0 %v1013
        %v1201 = vpop.f32.mrb[0].mxu0
        %v1202 = vadd.f32 %v878, %v1201
        %v1203 = vpop.f32.mrb[0].mxu0
        %1204 = vmatprep.mubr.f32.mxu0 0.0
        %1205 = vmatmul.mubr.f32.gmra.mrb[0].mxu0 %v1016
        %v1206 = vpop.f32.mrb[0].mxu0
        %v1207 = vadd.f32 %v883, %v1206
        %v1208 = vpop.f32.mrb[0].mxu0
        %1209 = vmatprep.mubr.f32.mxu0 0.0
        %1210 = vmatmul.mubr.f32.gmra.mrb[0].mxu0 %v1019
        %v1211 = vpop.f32.mrb[0].mxu0
        %v1212 = vadd.f32 %v888, %v1211
        %v1213 = vpop.f32.mrb[0].mxu0
        %1214 = vmatprep.mubr.f32.mxu0 0.0
        %1215 = vmatmul.mubr.f32.gmra.mrb[0].mxu0 %v1022
        %v1216 = vpop.f32.mrb[0].mxu0
        %v1217 = vadd.f32 %v893, %v1216
        %v1218 = vpop.f32.mrb[0].mxu0
        %1219 = vmatprep.mubr.f32.mxu0 0.0
        %1220 = vmatmul.mubr.f32.gmra.mrb[0].mxu0 %v1025
        %v1221 = vpop.f32.mrb[0].mxu0
        %v1222 = vadd.f32 %v898, %v1221
        %v1223 = vpop.f32.mrb[0].mxu0
        %1224 = vmatprep.mubr.f32.mxu0 0.0
        %1225 = vmatmul.mubr.f32.gmra.mrb[0].mxu0 %v1028
        %v1226 = vpop.f32.mrb[0].mxu0
        %v1227 = vadd.f32 %v903, %v1226
        %v1228 = vpop.f32.mrb[0].mxu0
        %1229 = vmatprep.mubr.f32.mxu0 0.0
        %1230 = vmatmul.mubr.f32.gmra.mrb[0].mxu0 %v1031
        %v1231 = vpop.f32.mrb[0].mxu0
        %v1232 = vadd.f32 %v908, %v1231
        %v1233 = vpop.f32.mrb[0].mxu0
        %1234 = vmatprep.mubr.f32.mxu0 0.0
        %1235 = vmatmul.mubr.f32.gmra.mrb[0].mxu0 %v1034
        %v1236 = vpop.f32.mrb[0].mxu0
        %v1237 = vadd.f32 %v913, %v1236
        %v1238 = vpop.f32.mrb[0].mxu0
        %1239 = vmatprep.mubr.f32.mxu0 0.0
        %1240 = vmatmul.mubr.f32.gmra.mrb[0].mxu0 %v1037
        %v1241 = vpop.f32.mrb[0].mxu0
        %v1242 = vadd.f32 %v918, %v1241
        %v1243 = vpop.f32.mrb[0].mxu0
        %1244 = vmatprep.mubr.f32.mxu0 0.0
        %1245 = vmatmul.mubr.f32.gmra.mrb[0].mxu0 %v1040
        %v1246 = vpop.f32.mrb[0].mxu0
        %v1247 = vadd.f32 %v923, %v1246
        %v1248 = vpop.f32.mrb[0].mxu0
        %1249 = vmatprep.mubr.f32.mxu0 0.0
        %1250 = vmatmul.mubr.f32.gmra.mrb[0].mxu0 %v1043
        %v1251 = vpop.f32.mrb[0].mxu0
        %v1252 = vadd.f32 %v928, %v1251
        %v1253 = vpop.f32.mrb[0].mxu0
        %1254 = vmatprep.mubr.f32.mxu0 0.0
        %1255 = vmatmul.mubr.f32.gmra.mrb[0].mxu0 %v1046
        %v1256 = vpop.f32.mrb[0].mxu0
        %v1257 = vadd.f32 %v933, %v1256
        %v1258 = vpop.f32.mrb[0].mxu0
        %1259 = vmatprep.mubr.f32.mxu0 0.0
        %1260 = vmatmul.mubr.f32.gmra.mrb[0].mxu0 %v1049
        %v1261 = vpop.f32.mrb[0].mxu0
        %v1262 = vadd.f32 %v938, %v1261
        %v1263 = vpop.f32.mrb[0].mxu0
        %1264 = vmatprep.mubr.f32.mxu0 0.0
        %1265 = vmatmul.mubr.f32.gmra.mrb[0].mxu0 %v1052
        %v1266 = vpop.f32.mrb[0].mxu0
        %v1267 = vadd.f32 %v943, %v1266
        %v1268 = vpop.f32.mrb[0].mxu0
        %1269 = vmatprep.mubr.f32.mxu0 0.0
        %1270 = vmatmul.mubr.f32.gmra.mrb[0].mxu0 %v1055
        %v1271 = vpop.f32.mrb[0].mxu0
        %v1272 = vadd.f32 %v948, %v1271
        %v1273 = vpop.f32.mrb[0].mxu0
        %1274 = vmatprep.mubr.f32.mxu0 0.0
        %1275 = vmatmul.mubr.f32.gmra.mrb[0].mxu0 %v1058
        %v1276 = vpop.f32.mrb[0].mxu0
        %v1277 = vadd.f32 %v953, %v1276
        %v1278 = vpop.f32.mrb[0].mxu0
        %1279 = vmatprep.mubr.f32.mxu0 0.0
        %1280 = vmatmul.mubr.f32.gmra.mrb[0].mxu0 %v1061
        %v1281 = vpop.f32.mrb[0].mxu0
        %v1282 = vadd.f32 %v958, %v1281
        %v1283 = vpop.f32.mrb[0].mxu0
        %1284 = vmatprep.mubr.f32.mxu0 0.0
        %1285 = vmatmul.mubr.f32.gmra.mrb[0].mxu0 %v1064
        %v1286 = vpop.f32.mrb[0].mxu0
        %v1287 = vadd.f32 %v963, %v1286
        %v1288 = vpop.f32.mrb[0].mxu0
        %1289 = vmatprep.mubr.f32.mxu0 0.0
        %1290 = vmatmul.mubr.f32.gmra.mrb[0].mxu0 %v1067
        %v1291 = vpop.f32.mrb[0].mxu0
        %v1292 = vadd.f32 %v968, %v1291
        %v1293 = vpop.f32.mrb[0].mxu0
        %1294 = vmatprep.mubr.f32.mxu0 0.0
        %1295 = vmatmul.mubr.f32.gmra.mrb[0].mxu0 %v1070
        %v1296 = vpop.f32.mrb[0].mxu0
        %v1297 = vadd.f32 %v973, %v1296
        %v1298 = vpop.f32.mrb[0].mxu0
        %1299 = vdwg.mxu0
        %v1300 = vld [vmem:[#allocation2 + $0x9] sm:$0xff]
        %v1301 = vld [vmem:[#allocation2 + $0x11] sm:$0xff]
        %v1302 = vld [vmem:[#allocation2 + $0x29] sm:$0xff]
        %v1303 = vld [vmem:[#allocation2 + $0x31] sm:$0xff]
        %v1304 = vld [vmem:[#allocation2 + $0x49] sm:$0xff]
        %v1305 = vld [vmem:[#allocation2 + $0x51] sm:$0xff]
        %v1306 = vld [vmem:[#allocation2 + $0x69] sm:$0xff]
        %v1307 = vld [vmem:[#allocation2 + $0x71] sm:$0xff]
        %v1308 = vld [vmem:[#allocation2 + $0x89] sm:$0xff]
        %v1309 = vld [vmem:[#allocation2 + $0x91] sm:$0xff]
        %v1310 = vld [vmem:[#allocation2 + $0xa9] sm:$0xff]
        %v1311 = vld [vmem:[#allocation2 + $0xb1] sm:$0xff]
        %v1312 = vld [vmem:[#allocation2 + $0xc9] sm:$0xff]
        %v1313 = vld [vmem:[#allocation2 + $0xd1] sm:$0xff]
        %v1314 = vld [vmem:[#allocation2 + $0xe9] sm:$0xff]
        %v1315 = vld [vmem:[#allocation2 + $0xf1] sm:$0xff]
        %v1316 = vld [vmem:[#allocation2 + $0x109] sm:$0xff]
        %v1317 = vld [vmem:[#allocation2 + $0x111] sm:$0xff]
        %v1318 = vld [vmem:[#allocation2 + $0x129] sm:$0xff]
        %v1319 = vld [vmem:[#allocation2 + $0x131] sm:$0xff]
        %v1320 = vld [vmem:[#allocation2 + $0x149] sm:$0xff]
        %v1321 = vld [vmem:[#allocation2 + $0x151] sm:$0xff]
        %v1322 = vld [vmem:[#allocation2 + $0x169] sm:$0xff]
        %v1323 = vld [vmem:[#allocation2 + $0x171] sm:$0xff]
        %v1324 = vld [vmem:[#allocation2 + $0x189] sm:$0xff]
        %v1325 = vld [vmem:[#allocation2 + $0x191] sm:$0xff]
        %v1326 = vld [vmem:[#allocation2 + $0x1a9] sm:$0xff]
        %v1327 = vld [vmem:[#allocation2 + $0x1b1] sm:$0xff]
        %v1328 = vld [vmem:[#allocation2 + $0x1c9] sm:$0xff]
        %v1329 = vld [vmem:[#allocation2 + $0x1d1] sm:$0xff]
        %v1330 = vld [vmem:[#allocation2 + $0x1e9] sm:$0xff]
        %v1331 = vld [vmem:[#allocation2 + $0x1f1] sm:$0xff]
        %s1332 = scalar_lea.vmem %s1, 8
        %v1333 = vld [vmem:[%s1332] sm:$0x7]
        %v1335 = vsel %vm477, %v1300, 0
        %v1338 = vsel %vm477, %v1301, 0
        %v1341 = vsel %vm477, %v1302, 0
        %v1344 = vsel %vm477, %v1303, 0
        %v1347 = vsel %vm477, %v1304, 0
        %v1350 = vsel %vm477, %v1305, 0
        %v1353 = vsel %vm477, %v1306, 0
        %v1356 = vsel %vm477, %v1307, 0
        %v1359 = vsel %vm477, %v1308, 0
        %v1362 = vsel %vm477, %v1309, 0
        %v1365 = vsel %vm477, %v1310, 0
        %v1368 = vsel %vm477, %v1311, 0
        %v1371 = vsel %vm477, %v1312, 0
        %v1374 = vsel %vm477, %v1313, 0
        %v1377 = vsel %vm477, %v1314, 0
        %v1380 = vsel %vm477, %v1315, 0
        %v1383 = vsel %vm477, %v1316, 0
        %v1386 = vsel %vm477, %v1317, 0
        %v1389 = vsel %vm477, %v1318, 0
        %v1392 = vsel %vm477, %v1319, 0
        %v1395 = vsel %vm477, %v1320, 0
        %v1398 = vsel %vm477, %v1321, 0
        %v1401 = vsel %vm477, %v1322, 0
        %v1404 = vsel %vm477, %v1323, 0
        %v1407 = vsel %vm477, %v1324, 0
        %v1410 = vsel %vm477, %v1325, 0
        %v1413 = vsel %vm477, %v1326, 0
        %v1416 = vsel %vm477, %v1327, 0
        %v1419 = vsel %vm477, %v1328, 0
        %v1422 = vsel %vm477, %v1329, 0
        %v1425 = vsel %vm477, %v1330, 0
        %v1428 = vsel %vm477, %v1331, 0
        %v1431 = vsel %vm747, %v1333, 0
        %1433 = vmatprep.subr.mxu0 0.0
        %1434 = vmatpush1.msra.mxu0 %v1431
        %1435 = vmatprep.subr.mxu0 0.0
        %1436 = vmatpush1.msra.mxu0 0.0
        %1437 = vmatprep.subr.mxu0 0.0
        %1438 = vmatpush1.msra.mxu0 0.0
        %1439 = vmatprep.subr.mxu0 0.0
        %1440 = vmatpush1.msra.mxu0 0.0
        %1441 = vmatprep.subr.mxu0 0.0
        %1442 = vmatpush1.msra.mxu0 0.0
        %1443 = vmatprep.subr.mxu0 0.0
        %1444 = vmatpush1.msra.mxu0 0.0
        %1445 = vmatprep.subr.mxu0 0.0
        %1446 = vmatpush1.msra.mxu0 0.0
        %1447 = vmatprep.subr.mxu0 0.0
        %1448 = vmatpush1.msra.mxu0 0.0
        %1449 = vmatprep.subr.mxu0 0.0
        %1450 = vmatpush1.msra.mxu0 0.0
        %1451 = vmatprep.subr.mxu0 0.0
        %1452 = vmatpush1.msra.mxu0 0.0
        %1453 = vmatprep.subr.mxu0 0.0
        %1454 = vmatpush1.msra.mxu0 0.0
        %1455 = vmatprep.subr.mxu0 0.0
        %1456 = vmatpush1.msra.mxu0 0.0
        %1457 = vmatprep.subr.mxu0 0.0
        %1458 = vmatpush1.msra.mxu0 0.0
        %1459 = vmatprep.subr.mxu0 0.0
        %1460 = vmatpush1.msra.mxu0 0.0
        %1461 = vmatprep.subr.mxu0 0.0
        %1462 = vmatpush1.msra.mxu0 0.0
        %1463 = vmatprep.subr.mxu0 0.0
        %1464 = vmatpush1.msra.mxu0 0.0
        %1465 = vmatprep.subr.mxu0 0.0
        %1466 = vmatpush1.msra.mxu0 0.0
        %1467 = vmatprep.subr.mxu0 0.0
        %1468 = vmatpush1.msra.mxu0 0.0
        %1469 = vmatprep.subr.mxu0 0.0
        %1470 = vmatpush1.msra.mxu0 0.0
        %1471 = vmatprep.subr.mxu0 0.0
        %1472 = vmatpush1.msra.mxu0 0.0
        %1473 = vmatprep.subr.mxu0 0.0
        %1474 = vmatpush1.msra.mxu0 0.0
        %1475 = vmatprep.subr.mxu0 0.0
        %1476 = vmatpush1.msra.mxu0 0.0
        %1477 = vmatprep.subr.mxu0 0.0
        %1478 = vmatpush1.msra.mxu0 0.0
        %1479 = vmatprep.subr.mxu0 0.0
        %1480 = vmatpush1.msra.mxu0 0.0
        %1481 = vmatprep.subr.mxu0 0.0
        %1482 = vmatpush1.msra.mxu0 0.0
        %1483 = vmatprep.subr.mxu0 0.0
        %1484 = vmatpush1.msra.mxu0 0.0
        %1485 = vmatprep.subr.mxu0 0.0
        %1486 = vmatpush1.msra.mxu0 0.0
        %1487 = vmatprep.subr.mxu0 0.0
        %1488 = vmatpush1.msra.mxu0 0.0
        %1489 = vmatprep.subr.mxu0 0.0
        %1490 = vmatpush1.msra.mxu0 0.0
        %1491 = vmatprep.subr.mxu0 0.0
        %1492 = vmatpush1.msra.mxu0 0.0
        %1493 = vmatprep.subr.mxu0 0.0
        %1494 = vmatpush1.msra.mxu0 0.0
        %1495 = vmatprep.subr.mxu0 0.0
        %1496 = vmatpush1.msra.mxu0 0.0
        %1497 = vmatprep.mubr.f32.mxu0 0.0
        %1498 = vmatmul.mubr.f32.gmra.mrb[0].mxu0 %v1335
        %v1499 = vpop.f32.mrb[0].mxu0
        %v1500 = vadd.f32 0.0, %v1499
        %v1501 = vpop.f32.mrb[0].mxu0
        %1502 = vmatprep.mubr.f32.mxu0 0.0
        %1503 = vmatmul.mubr.f32.gmra.mrb[0].mxu0 %v1338
        %v1504 = vpop.f32.mrb[0].mxu0
        %v1505 = vadd.f32 0.0, %v1504
        %v1506 = vpop.f32.mrb[0].mxu0
        %1507 = vmatprep.mubr.f32.mxu0 0.0
        %1508 = vmatmul.mubr.f32.gmra.mrb[0].mxu0 %v1341
        %v1509 = vpop.f32.mrb[0].mxu0
        %v1510 = vadd.f32 0.0, %v1509
        %v1511 = vpop.f32.mrb[0].mxu0
        %1512 = vmatprep.mubr.f32.mxu0 0.0
        %1513 = vmatmul.mubr.f32.gmra.mrb[0].mxu0 %v1344
        %v1514 = vpop.f32.mrb[0].mxu0
        %v1515 = vadd.f32 0.0, %v1514
        %v1516 = vpop.f32.mrb[0].mxu0
        %1517 = vmatprep.mubr.f32.mxu0 0.0
        %1518 = vmatmul.mubr.f32.gmra.mrb[0].mxu0 %v1347
        %v1519 = vpop.f32.mrb[0].mxu0
        %v1520 = vadd.f32 0.0, %v1519
        %v1521 = vpop.f32.mrb[0].mxu0
        %1522 = vmatprep.mubr.f32.mxu0 0.0
        %1523 = vmatmul.mubr.f32.gmra.mrb[0].mxu0 %v1350
        %v1524 = vpop.f32.mrb[0].mxu0
        %v1525 = vadd.f32 0.0, %v1524
        %v1526 = vpop.f32.mrb[0].mxu0
        %1527 = vmatprep.mubr.f32.mxu0 0.0
        %1528 = vmatmul.mubr.f32.gmra.mrb[0].mxu0 %v1353
        %v1529 = vpop.f32.mrb[0].mxu0
        %v1530 = vadd.f32 0.0, %v1529
        %v1531 = vpop.f32.mrb[0].mxu0
        %1532 = vmatprep.mubr.f32.mxu0 0.0
        %1533 = vmatmul.mubr.f32.gmra.mrb[0].mxu0 %v1356
        %v1534 = vpop.f32.mrb[0].mxu0
        %v1535 = vadd.f32 0.0, %v1534
        %v1536 = vpop.f32.mrb[0].mxu0
        %1537 = vmatprep.mubr.f32.mxu0 0.0
        %1538 = vmatmul.mubr.f32.gmra.mrb[0].mxu0 %v1359
        %v1539 = vpop.f32.mrb[0].mxu0
        %v1540 = vadd.f32 0.0, %v1539
        %v1541 = vpop.f32.mrb[0].mxu0
        %1542 = vmatprep.mubr.f32.mxu0 0.0
        %1543 = vmatmul.mubr.f32.gmra.mrb[0].mxu0 %v1362
        %v1544 = vpop.f32.mrb[0].mxu0
        %v1545 = vadd.f32 0.0, %v1544
        %v1546 = vpop.f32.mrb[0].mxu0
        %1547 = vmatprep.mubr.f32.mxu0 0.0
        %1548 = vmatmul.mubr.f32.gmra.mrb[0].mxu0 %v1365
        %v1549 = vpop.f32.mrb[0].mxu0
        %v1550 = vadd.f32 0.0, %v1549
        %v1551 = vpop.f32.mrb[0].mxu0
        %1552 = vmatprep.mubr.f32.mxu0 0.0
        %1553 = vmatmul.mubr.f32.gmra.mrb[0].mxu0 %v1368
        %v1554 = vpop.f32.mrb[0].mxu0
        %v1555 = vadd.f32 0.0, %v1554
        %v1556 = vpop.f32.mrb[0].mxu0
        %1557 = vmatprep.mubr.f32.mxu0 0.0
        %1558 = vmatmul.mubr.f32.gmra.mrb[0].mxu0 %v1371
        %v1559 = vpop.f32.mrb[0].mxu0
        %v1560 = vadd.f32 0.0, %v1559
        %v1561 = vpop.f32.mrb[0].mxu0
        %1562 = vmatprep.mubr.f32.mxu0 0.0
        %1563 = vmatmul.mubr.f32.gmra.mrb[0].mxu0 %v1374
        %v1564 = vpop.f32.mrb[0].mxu0
        %v1565 = vadd.f32 0.0, %v1564
        %v1566 = vpop.f32.mrb[0].mxu0
        %1567 = vmatprep.mubr.f32.mxu0 0.0
        %1568 = vmatmul.mubr.f32.gmra.mrb[0].mxu0 %v1377
        %v1569 = vpop.f32.mrb[0].mxu0
        %v1570 = vadd.f32 0.0, %v1569
        %v1571 = vpop.f32.mrb[0].mxu0
        %1572 = vmatprep.mubr.f32.mxu0 0.0
        %1573 = vmatmul.mubr.f32.gmra.mrb[0].mxu0 %v1380
        %v1574 = vpop.f32.mrb[0].mxu0
        %v1575 = vadd.f32 0.0, %v1574
        %v1576 = vpop.f32.mrb[0].mxu0
        %1577 = vmatprep.mubr.f32.mxu0 0.0
        %1578 = vmatmul.mubr.f32.gmra.mrb[0].mxu0 %v1383
        %v1579 = vpop.f32.mrb[0].mxu0
        %v1580 = vadd.f32 0.0, %v1579
        %v1581 = vpop.f32.mrb[0].mxu0
        %1582 = vmatprep.mubr.f32.mxu0 0.0
        %1583 = vmatmul.mubr.f32.gmra.mrb[0].mxu0 %v1386
        %v1584 = vpop.f32.mrb[0].mxu0
        %v1585 = vadd.f32 0.0, %v1584
        %v1586 = vpop.f32.mrb[0].mxu0
        %1587 = vmatprep.mubr.f32.mxu0 0.0
        %1588 = vmatmul.mubr.f32.gmra.mrb[0].mxu0 %v1389
        %v1589 = vpop.f32.mrb[0].mxu0
        %v1590 = vadd.f32 0.0, %v1589
        %v1591 = vpop.f32.mrb[0].mxu0
        %1592 = vmatprep.mubr.f32.mxu0 0.0
        %1593 = vmatmul.mubr.f32.gmra.mrb[0].mxu0 %v1392
        %v1594 = vpop.f32.mrb[0].mxu0
        %v1595 = vadd.f32 0.0, %v1594
        %v1596 = vpop.f32.mrb[0].mxu0
        %1597 = vmatprep.mubr.f32.mxu0 0.0
        %1598 = vmatmul.mubr.f32.gmra.mrb[0].mxu0 %v1395
        %v1599 = vpop.f32.mrb[0].mxu0
        %v1600 = vadd.f32 0.0, %v1599
        %v1601 = vpop.f32.mrb[0].mxu0
        %1602 = vmatprep.mubr.f32.mxu0 0.0
        %1603 = vmatmul.mubr.f32.gmra.mrb[0].mxu0 %v1398
        %v1604 = vpop.f32.mrb[0].mxu0
        %v1605 = vadd.f32 0.0, %v1604
        %v1606 = vpop.f32.mrb[0].mxu0
        %1607 = vmatprep.mubr.f32.mxu0 0.0
        %1608 = vmatmul.mubr.f32.gmra.mrb[0].mxu0 %v1401
        %v1609 = vpop.f32.mrb[0].mxu0
        %v1610 = vadd.f32 0.0, %v1609
        %v1611 = vpop.f32.mrb[0].mxu0
        %1612 = vmatprep.mubr.f32.mxu0 0.0
        %1613 = vmatmul.mubr.f32.gmra.mrb[0].mxu0 %v1404
        %v1614 = vpop.f32.mrb[0].mxu0
        %v1615 = vadd.f32 0.0, %v1614
        %v1616 = vpop.f32.mrb[0].mxu0
        %1617 = vmatprep.mubr.f32.mxu0 0.0
        %1618 = vmatmul.mubr.f32.gmra.mrb[0].mxu0 %v1407
        %v1619 = vpop.f32.mrb[0].mxu0
        %v1620 = vadd.f32 0.0, %v1619
        %v1621 = vpop.f32.mrb[0].mxu0
        %1622 = vmatprep.mubr.f32.mxu0 0.0
        %1623 = vmatmul.mubr.f32.gmra.mrb[0].mxu0 %v1410
        %v1624 = vpop.f32.mrb[0].mxu0
        %v1625 = vadd.f32 0.0, %v1624
        %v1626 = vpop.f32.mrb[0].mxu0
        %1627 = vmatprep.mubr.f32.mxu0 0.0
        %1628 = vmatmul.mubr.f32.gmra.mrb[0].mxu0 %v1413
        %v1629 = vpop.f32.mrb[0].mxu0
        %v1630 = vadd.f32 0.0, %v1629
        %v1631 = vpop.f32.mrb[0].mxu0
        %1632 = vmatprep.mubr.f32.mxu0 0.0
        %1633 = vmatmul.mubr.f32.gmra.mrb[0].mxu0 %v1416
        %v1634 = vpop.f32.mrb[0].mxu0
        %v1635 = vadd.f32 0.0, %v1634
        %v1636 = vpop.f32.mrb[0].mxu0
        %1637 = vmatprep.mubr.f32.mxu0 0.0
        %1638 = vmatmul.mubr.f32.gmra.mrb[0].mxu0 %v1419
        %v1639 = vpop.f32.mrb[0].mxu0
        %v1640 = vadd.f32 0.0, %v1639
        %v1641 = vpop.f32.mrb[0].mxu0
        %1642 = vmatprep.mubr.f32.mxu0 0.0
        %1643 = vmatmul.mubr.f32.gmra.mrb[0].mxu0 %v1422
        %v1644 = vpop.f32.mrb[0].mxu0
        %v1645 = vadd.f32 0.0, %v1644
        %v1646 = vpop.f32.mrb[0].mxu0
        %1647 = vmatprep.mubr.f32.mxu0 0.0
        %1648 = vmatmul.mubr.f32.gmra.mrb[0].mxu0 %v1425
        %v1649 = vpop.f32.mrb[0].mxu0
        %v1650 = vadd.f32 0.0, %v1649
        %v1651 = vpop.f32.mrb[0].mxu0
        %1652 = vmatprep.mubr.f32.mxu0 0.0
        %1653 = vmatmul.mubr.f32.gmra.mrb[0].mxu0 %v1428
        %v1654 = vpop.f32.mrb[0].mxu0
        %v1655 = vadd.f32 0.0, %v1654
        %v1656 = vpop.f32.mrb[0].mxu0
        %1657 = vdwg.mxu0
        %v1658 = vadd.f32 %v1142, %v1500
        %v1659 = vadd.f32 %v1147, %v1505
        %v1660 = vadd.f32 %v1152, %v1510
        %v1661 = vadd.f32 %v1157, %v1515
        %v1662 = vadd.f32 %v1162, %v1520
        %v1663 = vadd.f32 %v1167, %v1525
        %v1664 = vadd.f32 %v1172, %v1530
        %v1665 = vadd.f32 %v1177, %v1535
        %v1666 = vadd.f32 %v1182, %v1540
        %v1667 = vadd.f32 %v1187, %v1545
        %v1668 = vadd.f32 %v1192, %v1550
        %v1669 = vadd.f32 %v1197, %v1555
        %v1670 = vadd.f32 %v1202, %v1560
        %v1671 = vadd.f32 %v1207, %v1565
        %v1672 = vadd.f32 %v1212, %v1570
        %v1673 = vadd.f32 %v1217, %v1575
        %v1674 = vadd.f32 %v1222, %v1580
        %v1675 = vadd.f32 %v1227, %v1585
        %v1676 = vadd.f32 %v1232, %v1590
        %v1677 = vadd.f32 %v1237, %v1595
        %v1678 = vadd.f32 %v1242, %v1600
        %v1679 = vadd.f32 %v1247, %v1605
        %v1680 = vadd.f32 %v1252, %v1610
        %v1681 = vadd.f32 %v1257, %v1615
        %v1682 = vadd.f32 %v1262, %v1620
        %v1683 = vadd.f32 %v1267, %v1625
        %v1684 = vadd.f32 %v1272, %v1630
        %v1685 = vadd.f32 %v1277, %v1635
        %v1686 = vadd.f32 %v1282, %v1640
        %v1687 = vadd.f32 %v1287, %v1645
        %v1688 = vadd.f32 %v1292, %v1650
        %v1689 = vadd.f32 %v1297, %v1655
        %v1690 = vld [vmem:[%s486 + $0x7] sm:$0xff]
        %v1691 = vld [vmem:[%s486 + $0xf] sm:$0xff]
        %v1692 = vld [vmem:[%s486 + $0x27] sm:$0xff]
        %v1693 = vld [vmem:[%s486 + $0x2f] sm:$0xff]
        %v1694 = vld [vmem:[%s486 + $0x47] sm:$0xff]
        %v1695 = vld [vmem:[%s486 + $0x4f] sm:$0xff]
        %v1696 = vld [vmem:[%s486 + $0x67] sm:$0xff]
        %v1697 = vld [vmem:[%s486 + $0x6f] sm:$0xff]
        %v1698 = vld [vmem:[%s486 + $0x87] sm:$0xff]
        %v1699 = vld [vmem:[%s486 + $0x8f] sm:$0xff]
        %v1700 = vld [vmem:[%s486 + $0xa7] sm:$0xff]
        %v1701 = vld [vmem:[%s486 + $0xaf] sm:$0xff]
        %v1702 = vld [vmem:[%s486 + $0xc7] sm:$0xff]
        %v1703 = vld [vmem:[%s486 + $0xcf] sm:$0xff]
        %v1704 = vld [vmem:[%s486 + $0xe7] sm:$0xff]
        %v1705 = vld [vmem:[%s486 + $0xef] sm:$0xff]
        %v1706 = vld [vmem:[%s486 + $0x107] sm:$0xff]
        %v1707 = vld [vmem:[%s486 + $0x10f] sm:$0xff]
        %v1708 = vld [vmem:[%s486 + $0x127] sm:$0xff]
        %v1709 = vld [vmem:[%s486 + $0x12f] sm:$0xff]
        %v1710 = vld [vmem:[%s486 + $0x147] sm:$0xff]
        %v1711 = vld [vmem:[%s486 + $0x14f] sm:$0xff]
        %v1712 = vld [vmem:[%s486 + $0x167] sm:$0xff]
        %v1713 = vld [vmem:[%s486 + $0x16f] sm:$0xff]
        %v1714 = vld [vmem:[%s486 + $0x187] sm:$0xff]
        %v1715 = vld [vmem:[%s486 + $0x18f] sm:$0xff]
        %v1716 = vld [vmem:[%s486 + $0x1a7] sm:$0xff]
        %v1717 = vld [vmem:[%s486 + $0x1af] sm:$0xff]
        %v1718 = vld [vmem:[%s486 + $0x1c7] sm:$0xff]
        %v1719 = vld [vmem:[%s486 + $0x1cf] sm:$0xff]
        %v1720 = vld [vmem:[%s486 + $0x1e7] sm:$0xff]
        %v1721 = vld [vmem:[%s486 + $0x1ef] sm:$0xff]
        %s1722 = scalar_lea.vmem %s1, 12
        %v1723 = vld [vmem:[%s1722] sm:$0x7]
        %v1725 = vsel %vm477, %v1690, 0
        %v1728 = vsel %vm477, %v1691, 0
        %v1731 = vsel %vm477, %v1692, 0
        %v1734 = vsel %vm477, %v1693, 0
        %v1737 = vsel %vm477, %v1694, 0
        %v1740 = vsel %vm477, %v1695, 0
        %v1743 = vsel %vm477, %v1696, 0
        %v1746 = vsel %vm477, %v1697, 0
        %v1749 = vsel %vm477, %v1698, 0
        %v1752 = vsel %vm477, %v1699, 0
        %v1755 = vsel %vm477, %v1700, 0
        %v1758 = vsel %vm477, %v1701, 0
        %v1761 = vsel %vm477, %v1702, 0
        %v1764 = vsel %vm477, %v1703, 0
        %v1767 = vsel %vm477, %v1704, 0
        %v1770 = vsel %vm477, %v1705, 0
        %v1773 = vsel %vm477, %v1706, 0
        %v1776 = vsel %vm477, %v1707, 0
        %v1779 = vsel %vm477, %v1708, 0
        %v1782 = vsel %vm477, %v1709, 0
        %v1785 = vsel %vm477, %v1710, 0
        %v1788 = vsel %vm477, %v1711, 0
        %v1791 = vsel %vm477, %v1712, 0
        %v1794 = vsel %vm477, %v1713, 0
        %v1797 = vsel %vm477, %v1714, 0
        %v1800 = vsel %vm477, %v1715, 0
        %v1803 = vsel %vm477, %v1716, 0
        %v1806 = vsel %vm477, %v1717, 0
        %v1809 = vsel %vm477, %v1718, 0
        %v1812 = vsel %vm477, %v1719, 0
        %v1815 = vsel %vm477, %v1720, 0
        %v1818 = vsel %vm477, %v1721, 0
        %v1821 = vsel %vm747, %v1723, 0
        %1823 = vmatprep.subr.mxu0 0.0
        %1824 = vmatpush1.msra.mxu0 %v1821
        %1825 = vmatprep.subr.mxu0 0.0
        %1826 = vmatpush1.msra.mxu0 0.0
        %1827 = vmatprep.subr.mxu0 0.0
        %1828 = vmatpush1.msra.mxu0 0.0
        %1829 = vmatprep.subr.mxu0 0.0
        %1830 = vmatpush1.msra.mxu0 0.0
        %1831 = vmatprep.subr.mxu0 0.0
        %1832 = vmatpush1.msra.mxu0 0.0
        %1833 = vmatprep.subr.mxu0 0.0
        %1834 = vmatpush1.msra.mxu0 0.0
        %1835 = vmatprep.subr.mxu0 0.0
        %1836 = vmatpush1.msra.mxu0 0.0
        %1837 = vmatprep.subr.mxu0 0.0
        %1838 = vmatpush1.msra.mxu0 0.0
        %1839 = vmatprep.subr.mxu0 0.0
        %1840 = vmatpush1.msra.mxu0 0.0
        %1841 = vmatprep.subr.mxu0 0.0
        %1842 = vmatpush1.msra.mxu0 0.0
        %1843 = vmatprep.subr.mxu0 0.0
        %1844 = vmatpush1.msra.mxu0 0.0
        %1845 = vmatprep.subr.mxu0 0.0
        %1846 = vmatpush1.msra.mxu0 0.0
        %1847 = vmatprep.subr.mxu0 0.0
        %1848 = vmatpush1.msra.mxu0 0.0
        %1849 = vmatprep.subr.mxu0 0.0
        %1850 = vmatpush1.msra.mxu0 0.0
        %1851 = vmatprep.subr.mxu0 0.0
        %1852 = vmatpush1.msra.mxu0 0.0
        %1853 = vmatprep.subr.mxu0 0.0
        %1854 = vmatpush1.msra.mxu0 0.0
        %1855 = vmatprep.subr.mxu0 0.0
        %1856 = vmatpush1.msra.mxu0 0.0
        %1857 = vmatprep.subr.mxu0 0.0
        %1858 = vmatpush1.msra.mxu0 0.0
        %1859 = vmatprep.subr.mxu0 0.0
        %1860 = vmatpush1.msra.mxu0 0.0
        %1861 = vmatprep.subr.mxu0 0.0
        %1862 = vmatpush1.msra.mxu0 0.0
        %1863 = vmatprep.subr.mxu0 0.0
        %1864 = vmatpush1.msra.mxu0 0.0
        %1865 = vmatprep.subr.mxu0 0.0
        %1866 = vmatpush1.msra.mxu0 0.0
        %1867 = vmatprep.subr.mxu0 0.0
        %1868 = vmatpush1.msra.mxu0 0.0
        %1869 = vmatprep.subr.mxu0 0.0
        %1870 = vmatpush1.msra.mxu0 0.0
        %1871 = vmatprep.subr.mxu0 0.0
        %1872 = vmatpush1.msra.mxu0 0.0
        %1873 = vmatprep.subr.mxu0 0.0
        %1874 = vmatpush1.msra.mxu0 0.0
        %1875 = vmatprep.subr.mxu0 0.0
        %1876 = vmatpush1.msra.mxu0 0.0
        %1877 = vmatprep.subr.mxu0 0.0
        %1878 = vmatpush1.msra.mxu0 0.0
        %1879 = vmatprep.subr.mxu0 0.0
        %1880 = vmatpush1.msra.mxu0 0.0
        %1881 = vmatprep.subr.mxu0 0.0
        %1882 = vmatpush1.msra.mxu0 0.0
        %1883 = vmatprep.subr.mxu0 0.0
        %1884 = vmatpush1.msra.mxu0 0.0
        %1885 = vmatprep.subr.mxu0 0.0
        %1886 = vmatpush1.msra.mxu0 0.0
        %1887 = vmatprep.mubr.f32.mxu0 0.0
        %1888 = vmatmul.mubr.f32.gmra.mrb[0].mxu0 %v1725
        %v1889 = vpop.f32.mrb[0].mxu0
        %v1890 = vadd.f32 0.0, %v1889
        %v1891 = vpop.f32.mrb[0].mxu0
        %1892 = vmatprep.mubr.f32.mxu0 0.0
        %1893 = vmatmul.mubr.f32.gmra.mrb[0].mxu0 %v1728
        %v1894 = vpop.f32.mrb[0].mxu0
        %v1895 = vadd.f32 0.0, %v1894
        %v1896 = vpop.f32.mrb[0].mxu0
        %1897 = vmatprep.mubr.f32.mxu0 0.0
        %1898 = vmatmul.mubr.f32.gmra.mrb[0].mxu0 %v1731
        %v1899 = vpop.f32.mrb[0].mxu0
        %v1900 = vadd.f32 0.0, %v1899
        %v1901 = vpop.f32.mrb[0].mxu0
        %1902 = vmatprep.mubr.f32.mxu0 0.0
        %1903 = vmatmul.mubr.f32.gmra.mrb[0].mxu0 %v1734
        %v1904 = vpop.f32.mrb[0].mxu0
        %v1905 = vadd.f32 0.0, %v1904
        %v1906 = vpop.f32.mrb[0].mxu0
        %1907 = vmatprep.mubr.f32.mxu0 0.0
        %1908 = vmatmul.mubr.f32.gmra.mrb[0].mxu0 %v1737
        %v1909 = vpop.f32.mrb[0].mxu0
        %v1910 = vadd.f32 0.0, %v1909
        %v1911 = vpop.f32.mrb[0].mxu0
        %1912 = vmatprep.mubr.f32.mxu0 0.0
        %1913 = vmatmul.mubr.f32.gmra.mrb[0].mxu0 %v1740
        %v1914 = vpop.f32.mrb[0].mxu0
        %v1915 = vadd.f32 0.0, %v1914
        %v1916 = vpop.f32.mrb[0].mxu0
        %1917 = vmatprep.mubr.f32.mxu0 0.0
        %1918 = vmatmul.mubr.f32.gmra.mrb[0].mxu0 %v1743
        %v1919 = vpop.f32.mrb[0].mxu0
        %v1920 = vadd.f32 0.0, %v1919
        %v1921 = vpop.f32.mrb[0].mxu0
        %1922 = vmatprep.mubr.f32.mxu0 0.0
        %1923 = vmatmul.mubr.f32.gmra.mrb[0].mxu0 %v1746
        %v1924 = vpop.f32.mrb[0].mxu0
        %v1925 = vadd.f32 0.0, %v1924
        %v1926 = vpop.f32.mrb[0].mxu0
        %1927 = vmatprep.mubr.f32.mxu0 0.0
        %1928 = vmatmul.mubr.f32.gmra.mrb[0].mxu0 %v1749
        %v1929 = vpop.f32.mrb[0].mxu0
        %v1930 = vadd.f32 0.0, %v1929
        %v1931 = vpop.f32.mrb[0].mxu0
        %1932 = vmatprep.mubr.f32.mxu0 0.0
        %1933 = vmatmul.mubr.f32.gmra.mrb[0].mxu0 %v1752
        %v1934 = vpop.f32.mrb[0].mxu0
        %v1935 = vadd.f32 0.0, %v1934
        %v1936 = vpop.f32.mrb[0].mxu0
        %1937 = vmatprep.mubr.f32.mxu0 0.0
        %1938 = vmatmul.mubr.f32.gmra.mrb[0].mxu0 %v1755
        %v1939 = vpop.f32.mrb[0].mxu0
        %v1940 = vadd.f32 0.0, %v1939
        %v1941 = vpop.f32.mrb[0].mxu0
        %1942 = vmatprep.mubr.f32.mxu0 0.0
        %1943 = vmatmul.mubr.f32.gmra.mrb[0].mxu0 %v1758
        %v1944 = vpop.f32.mrb[0].mxu0
        %v1945 = vadd.f32 0.0, %v1944
        %v1946 = vpop.f32.mrb[0].mxu0
        %1947 = vmatprep.mubr.f32.mxu0 0.0
        %1948 = vmatmul.mubr.f32.gmra.mrb[0].mxu0 %v1761
        %v1949 = vpop.f32.mrb[0].mxu0
        %v1950 = vadd.f32 0.0, %v1949
        %v1951 = vpop.f32.mrb[0].mxu0
        %1952 = vmatprep.mubr.f32.mxu0 0.0
        %1953 = vmatmul.mubr.f32.gmra.mrb[0].mxu0 %v1764
        %v1954 = vpop.f32.mrb[0].mxu0
        %v1955 = vadd.f32 0.0, %v1954
        %v1956 = vpop.f32.mrb[0].mxu0
        %1957 = vmatprep.mubr.f32.mxu0 0.0
        %1958 = vmatmul.mubr.f32.gmra.mrb[0].mxu0 %v1767
        %v1959 = vpop.f32.mrb[0].mxu0
        %v1960 = vadd.f32 0.0, %v1959
        %v1961 = vpop.f32.mrb[0].mxu0
        %1962 = vmatprep.mubr.f32.mxu0 0.0
        %1963 = vmatmul.mubr.f32.gmra.mrb[0].mxu0 %v1770
        %v1964 = vpop.f32.mrb[0].mxu0
        %v1965 = vadd.f32 0.0, %v1964
        %v1966 = vpop.f32.mrb[0].mxu0
        %1967 = vmatprep.mubr.f32.mxu0 0.0
        %1968 = vmatmul.mubr.f32.gmra.mrb[0].mxu0 %v1773
        %v1969 = vpop.f32.mrb[0].mxu0
        %v1970 = vadd.f32 0.0, %v1969
        %v1971 = vpop.f32.mrb[0].mxu0
        %1972 = vmatprep.mubr.f32.mxu0 0.0
        %1973 = vmatmul.mubr.f32.gmra.mrb[0].mxu0 %v1776
        %v1974 = vpop.f32.mrb[0].mxu0
        %v1975 = vadd.f32 0.0, %v1974
        %v1976 = vpop.f32.mrb[0].mxu0
        %1977 = vmatprep.mubr.f32.mxu0 0.0
        %1978 = vmatmul.mubr.f32.gmra.mrb[0].mxu0 %v1779
        %v1979 = vpop.f32.mrb[0].mxu0
        %v1980 = vadd.f32 0.0, %v1979
        %v1981 = vpop.f32.mrb[0].mxu0
        %1982 = vmatprep.mubr.f32.mxu0 0.0
        %1983 = vmatmul.mubr.f32.gmra.mrb[0].mxu0 %v1782
        %v1984 = vpop.f32.mrb[0].mxu0
        %v1985 = vadd.f32 0.0, %v1984
        %v1986 = vpop.f32.mrb[0].mxu0
        %1987 = vmatprep.mubr.f32.mxu0 0.0
        %1988 = vmatmul.mubr.f32.gmra.mrb[0].mxu0 %v1785
        %v1989 = vpop.f32.mrb[0].mxu0
        %v1990 = vadd.f32 0.0, %v1989
        %v1991 = vpop.f32.mrb[0].mxu0
        %1992 = vmatprep.mubr.f32.mxu0 0.0
        %1993 = vmatmul.mubr.f32.gmra.mrb[0].mxu0 %v1788
        %v1994 = vpop.f32.mrb[0].mxu0
        %v1995 = vadd.f32 0.0, %v1994
        %v1996 = vpop.f32.mrb[0].mxu0
        %1997 = vmatprep.mubr.f32.mxu0 0.0
        %1998 = vmatmul.mubr.f32.gmra.mrb[0].mxu0 %v1791
        %v1999 = vpop.f32.mrb[0].mxu0
        %v2000 = vadd.f32 0.0, %v1999
        %v2001 = vpop.f32.mrb[0].mxu0
        %2002 = vmatprep.mubr.f32.mxu0 0.0
        %2003 = vmatmul.mubr.f32.gmra.mrb[0].mxu0 %v1794
        %v2004 = vpop.f32.mrb[0].mxu0
        %v2005 = vadd.f32 0.0, %v2004
        %v2006 = vpop.f32.mrb[0].mxu0
        %2007 = vmatprep.mubr.f32.mxu0 0.0
        %2008 = vmatmul.mubr.f32.gmra.mrb[0].mxu0 %v1797
        %v2009 = vpop.f32.mrb[0].mxu0
        %v2010 = vadd.f32 0.0, %v2009
        %v2011 = vpop.f32.mrb[0].mxu0
        %2012 = vmatprep.mubr.f32.mxu0 0.0
        %2013 = vmatmul.mubr.f32.gmra.mrb[0].mxu0 %v1800
        %v2014 = vpop.f32.mrb[0].mxu0
        %v2015 = vadd.f32 0.0, %v2014
        %v2016 = vpop.f32.mrb[0].mxu0
        %2017 = vmatprep.mubr.f32.mxu0 0.0
        %2018 = vmatmul.mubr.f32.gmra.mrb[0].mxu0 %v1803
        %v2019 = vpop.f32.mrb[0].mxu0
        %v2020 = vadd.f32 0.0, %v2019
        %v2021 = vpop.f32.mrb[0].mxu0
        %2022 = vmatprep.mubr.f32.mxu0 0.0
        %2023 = vmatmul.mubr.f32.gmra.mrb[0].mxu0 %v1806
        %v2024 = vpop.f32.mrb[0].mxu0
        %v2025 = vadd.f32 0.0, %v2024
        %v2026 = vpop.f32.mrb[0].mxu0
        %2027 = vmatprep.mubr.f32.mxu0 0.0
        %2028 = vmatmul.mubr.f32.gmra.mrb[0].mxu0 %v1809
        %v2029 = vpop.f32.mrb[0].mxu0
        %v2030 = vadd.f32 0.0, %v2029
        %v2031 = vpop.f32.mrb[0].mxu0
        %2032 = vmatprep.mubr.f32.mxu0 0.0
        %2033 = vmatmul.mubr.f32.gmra.mrb[0].mxu0 %v1812
        %v2034 = vpop.f32.mrb[0].mxu0
        %v2035 = vadd.f32 0.0, %v2034
        %v2036 = vpop.f32.mrb[0].mxu0
        %2037 = vmatprep.mubr.f32.mxu0 0.0
        %2038 = vmatmul.mubr.f32.gmra.mrb[0].mxu0 %v1815
        %v2039 = vpop.f32.mrb[0].mxu0
        %v2040 = vadd.f32 0.0, %v2039
        %v2041 = vpop.f32.mrb[0].mxu0
        %2042 = vmatprep.mubr.f32.mxu0 0.0
        %2043 = vmatmul.mubr.f32.gmra.mrb[0].mxu0 %v1818
        %v2044 = vpop.f32.mrb[0].mxu0
        %v2045 = vadd.f32 0.0, %v2044
        %v2046 = vpop.f32.mrb[0].mxu0
        %2047 = vdwg.mxu0
        %v2048 = vadd.f32 %v1658, %v1890
        %v2049 = vadd.f32 %v1659, %v1895
        %v2050 = vadd.f32 %v1660, %v1900
        %v2051 = vadd.f32 %v1661, %v1905
        %v2052 = vadd.f32 %v1662, %v1910
        %v2053 = vadd.f32 %v1663, %v1915
        %v2054 = vadd.f32 %v1664, %v1920
        %v2055 = vadd.f32 %v1665, %v1925
        %v2056 = vadd.f32 %v1666, %v1930
        %v2057 = vadd.f32 %v1667, %v1935
        %v2058 = vadd.f32 %v1668, %v1940
        %v2059 = vadd.f32 %v1669, %v1945
        %v2060 = vadd.f32 %v1670, %v1950
        %v2061 = vadd.f32 %v1671, %v1955
        %v2062 = vadd.f32 %v1672, %v1960
        %v2063 = vadd.f32 %v1673, %v1965
        %v2064 = vadd.f32 %v1674, %v1970
        %v2065 = vadd.f32 %v1675, %v1975
        %v2066 = vadd.f32 %v1676, %v1980
        %v2067 = vadd.f32 %v1677, %v1985
        %v2068 = vadd.f32 %v1678, %v1990
        %v2069 = vadd.f32 %v1679, %v1995
        %v2070 = vadd.f32 %v1680, %v2000
        %v2071 = vadd.f32 %v1681, %v2005
        %v2072 = vadd.f32 %v1682, %v2010
        %v2073 = vadd.f32 %v1683, %v2015
        %v2074 = vadd.f32 %v1684, %v2020
        %v2075 = vadd.f32 %v1685, %v2025
        %v2076 = vadd.f32 %v1686, %v2030
        %v2077 = vadd.f32 %v1687, %v2035
        %v2078 = vadd.f32 %v1688, %v2040
        %v2079 = vadd.f32 %v1689, %v2045
        %v2080 = vld [vmem:[%s486 + $0x8] sm:$0xff]
        %v2081 = vld [vmem:[%s486 + $0x10] sm:$0xff]
        %v2082 = vld [vmem:[%s486 + $0x28] sm:$0xff]
        %v2083 = vld [vmem:[%s486 + $0x30] sm:$0xff]
        %v2084 = vld [vmem:[%s486 + $0x48] sm:$0xff]
        %v2085 = vld [vmem:[%s486 + $0x50] sm:$0xff]
        %v2086 = vld [vmem:[%s486 + $0x68] sm:$0xff]
        %v2087 = vld [vmem:[%s486 + $0x70] sm:$0xff]
        %v2088 = vld [vmem:[%s486 + $0x88] sm:$0xff]
        %v2089 = vld [vmem:[%s486 + $0x90] sm:$0xff]
        %v2090 = vld [vmem:[%s486 + $0xa8] sm:$0xff]
        %v2091 = vld [vmem:[%s486 + $0xb0] sm:$0xff]
        %v2092 = vld [vmem:[%s486 + $0xc8] sm:$0xff]
        %v2093 = vld [vmem:[%s486 + $0xd0] sm:$0xff]
        %v2094 = vld [vmem:[%s486 + $0xe8] sm:$0xff]
        %v2095 = vld [vmem:[%s486 + $0xf0] sm:$0xff]
        %v2096 = vld [vmem:[%s486 + $0x108] sm:$0xff]
        %v2097 = vld [vmem:[%s486 + $0x110] sm:$0xff]
        %v2098 = vld [vmem:[%s486 + $0x128] sm:$0xff]
        %v2099 = vld [vmem:[%s486 + $0x130] sm:$0xff]
        %v2100 = vld [vmem:[%s486 + $0x148] sm:$0xff]
        %v2101 = vld [vmem:[%s486 + $0x150] sm:$0xff]
        %v2102 = vld [vmem:[%s486 + $0x168] sm:$0xff]
        %v2103 = vld [vmem:[%s486 + $0x170] sm:$0xff]
        %v2104 = vld [vmem:[%s486 + $0x188] sm:$0xff]
        %v2105 = vld [vmem:[%s486 + $0x190] sm:$0xff]
        %v2106 = vld [vmem:[%s486 + $0x1a8] sm:$0xff]
        %v2107 = vld [vmem:[%s486 + $0x1b0] sm:$0xff]
        %v2108 = vld [vmem:[%s486 + $0x1c8] sm:$0xff]
        %v2109 = vld [vmem:[%s486 + $0x1d0] sm:$0xff]
        %v2110 = vld [vmem:[%s486 + $0x1e8] sm:$0xff]
        %v2111 = vld [vmem:[%s486 + $0x1f0] sm:$0xff]
        %s2112 = scalar_lea.vmem %s1, 16
        %v2113 = vld [vmem:[%s2112] sm:$0x7]
        %v2115 = vsel %vm477, %v2080, 0
        %v2118 = vsel %vm477, %v2081, 0
        %v2121 = vsel %vm477, %v2082, 0
        %v2124 = vsel %vm477, %v2083, 0
        %v2127 = vsel %vm477, %v2084, 0
        %v2130 = vsel %vm477, %v2085, 0
        %v2133 = vsel %vm477, %v2086, 0
        %v2136 = vsel %vm477, %v2087, 0
        %v2139 = vsel %vm477, %v2088, 0
        %v2142 = vsel %vm477, %v2089, 0
        %v2145 = vsel %vm477, %v2090, 0
        %v2148 = vsel %vm477, %v2091, 0
        %v2151 = vsel %vm477, %v2092, 0
        %v2154 = vsel %vm477, %v2093, 0
        %v2157 = vsel %vm477, %v2094, 0
        %v2160 = vsel %vm477, %v2095, 0
        %v2163 = vsel %vm477, %v2096, 0
        %v2166 = vsel %vm477, %v2097, 0
        %v2169 = vsel %vm477, %v2098, 0
        %v2172 = vsel %vm477, %v2099, 0
        %v2175 = vsel %vm477, %v2100, 0
        %v2178 = vsel %vm477, %v2101, 0
        %v2181 = vsel %vm477, %v2102, 0
        %v2184 = vsel %vm477, %v2103, 0
        %v2187 = vsel %vm477, %v2104, 0
        %v2190 = vsel %vm477, %v2105, 0
        %v2193 = vsel %vm477, %v2106, 0
        %v2196 = vsel %vm477, %v2107, 0
        %v2199 = vsel %vm477, %v2108, 0
        %v2202 = vsel %vm477, %v2109, 0
        %v2205 = vsel %vm477, %v2110, 0
        %v2208 = vsel %vm477, %v2111, 0
        %v2211 = vsel %vm747, %v2113, 0
        %2213 = vmatprep.subr.mxu0 0.0
        %2214 = vmatpush1.msra.mxu0 %v2211
        %2215 = vmatprep.subr.mxu0 0.0
        %2216 = vmatpush1.msra.mxu0 0.0
        %2217 = vmatprep.subr.mxu0 0.0
        %2218 = vmatpush1.msra.mxu0 0.0
        %2219 = vmatprep.subr.mxu0 0.0
        %2220 = vmatpush1.msra.mxu0 0.0
        %2221 = vmatprep.subr.mxu0 0.0
        %2222 = vmatpush1.msra.mxu0 0.0
        %2223 = vmatprep.subr.mxu0 0.0
        %2224 = vmatpush1.msra.mxu0 0.0
        %2225 = vmatprep.subr.mxu0 0.0
        %2226 = vmatpush1.msra.mxu0 0.0
        %2227 = vmatprep.subr.mxu0 0.0
        %2228 = vmatpush1.msra.mxu0 0.0
        %2229 = vmatprep.subr.mxu0 0.0
        %2230 = vmatpush1.msra.mxu0 0.0
        %2231 = vmatprep.subr.mxu0 0.0
        %2232 = vmatpush1.msra.mxu0 0.0
        %2233 = vmatprep.subr.mxu0 0.0
        %2234 = vmatpush1.msra.mxu0 0.0
        %2235 = vmatprep.subr.mxu0 0.0
        %2236 = vmatpush1.msra.mxu0 0.0
        %2237 = vmatprep.subr.mxu0 0.0
        %2238 = vmatpush1.msra.mxu0 0.0
        %2239 = vmatprep.subr.mxu0 0.0
        %2240 = vmatpush1.msra.mxu0 0.0
        %2241 = vmatprep.subr.mxu0 0.0
        %2242 = vmatpush1.msra.mxu0 0.0
        %2243 = vmatprep.subr.mxu0 0.0
        %2244 = vmatpush1.msra.mxu0 0.0
        %2245 = vmatprep.subr.mxu0 0.0
        %2246 = vmatpush1.msra.mxu0 0.0
        %2247 = vmatprep.subr.mxu0 0.0
        %2248 = vmatpush1.msra.mxu0 0.0
        %2249 = vmatprep.subr.mxu0 0.0
        %2250 = vmatpush1.msra.mxu0 0.0
        %2251 = vmatprep.subr.mxu0 0.0
        %2252 = vmatpush1.msra.mxu0 0.0
        %2253 = vmatprep.subr.mxu0 0.0
        %2254 = vmatpush1.msra.mxu0 0.0
        %2255 = vmatprep.subr.mxu0 0.0
        %2256 = vmatpush1.msra.mxu0 0.0
        %2257 = vmatprep.subr.mxu0 0.0
        %2258 = vmatpush1.msra.mxu0 0.0
        %2259 = vmatprep.subr.mxu0 0.0
        %2260 = vmatpush1.msra.mxu0 0.0
        %2261 = vmatprep.subr.mxu0 0.0
        %2262 = vmatpush1.msra.mxu0 0.0
        %2263 = vmatprep.subr.mxu0 0.0
        %2264 = vmatpush1.msra.mxu0 0.0
        %2265 = vmatprep.subr.mxu0 0.0
        %2266 = vmatpush1.msra.mxu0 0.0
        %2267 = vmatprep.subr.mxu0 0.0
        %2268 = vmatpush1.msra.mxu0 0.0
        %2269 = vmatprep.subr.mxu0 0.0
        %2270 = vmatpush1.msra.mxu0 0.0
        %2271 = vmatprep.subr.mxu0 0.0
        %2272 = vmatpush1.msra.mxu0 0.0
        %2273 = vmatprep.subr.mxu0 0.0
        %2274 = vmatpush1.msra.mxu0 0.0
        %2275 = vmatprep.subr.mxu0 0.0
        %2276 = vmatpush1.msra.mxu0 0.0
        %2277 = vmatprep.mubr.f32.mxu0 0.0
        %2278 = vmatmul.mubr.f32.gmra.mrb[0].mxu0 %v2115
        %v2279 = vpop.f32.mrb[0].mxu0
        %v2280 = vadd.f32 0.0, %v2279
        %v2281 = vpop.f32.mrb[0].mxu0
        %2282 = vmatprep.mubr.f32.mxu0 0.0
        %2283 = vmatmul.mubr.f32.gmra.mrb[0].mxu0 %v2118
        %v2284 = vpop.f32.mrb[0].mxu0
        %v2285 = vadd.f32 0.0, %v2284
        %v2286 = vpop.f32.mrb[0].mxu0
        %2287 = vmatprep.mubr.f32.mxu0 0.0
        %2288 = vmatmul.mubr.f32.gmra.mrb[0].mxu0 %v2121
        %v2289 = vpop.f32.mrb[0].mxu0
        %v2290 = vadd.f32 0.0, %v2289
        %v2291 = vpop.f32.mrb[0].mxu0
        %2292 = vmatprep.mubr.f32.mxu0 0.0
        %2293 = vmatmul.mubr.f32.gmra.mrb[0].mxu0 %v2124
        %v2294 = vpop.f32.mrb[0].mxu0
        %v2295 = vadd.f32 0.0, %v2294
        %v2296 = vpop.f32.mrb[0].mxu0
        %2297 = vmatprep.mubr.f32.mxu0 0.0
        %2298 = vmatmul.mubr.f32.gmra.mrb[0].mxu0 %v2127
        %v2299 = vpop.f32.mrb[0].mxu0
        %v2300 = vadd.f32 0.0, %v2299
        %v2301 = vpop.f32.mrb[0].mxu0
        %2302 = vmatprep.mubr.f32.mxu0 0.0
        %2303 = vmatmul.mubr.f32.gmra.mrb[0].mxu0 %v2130
        %v2304 = vpop.f32.mrb[0].mxu0
        %v2305 = vadd.f32 0.0, %v2304
        %v2306 = vpop.f32.mrb[0].mxu0
        %2307 = vmatprep.mubr.f32.mxu0 0.0
        %2308 = vmatmul.mubr.f32.gmra.mrb[0].mxu0 %v2133
        %v2309 = vpop.f32.mrb[0].mxu0
        %v2310 = vadd.f32 0.0, %v2309
        %v2311 = vpop.f32.mrb[0].mxu0
        %2312 = vmatprep.mubr.f32.mxu0 0.0
        %2313 = vmatmul.mubr.f32.gmra.mrb[0].mxu0 %v2136
        %v2314 = vpop.f32.mrb[0].mxu0
        %v2315 = vadd.f32 0.0, %v2314
        %v2316 = vpop.f32.mrb[0].mxu0
        %2317 = vmatprep.mubr.f32.mxu0 0.0
        %2318 = vmatmul.mubr.f32.gmra.mrb[0].mxu0 %v2139
        %v2319 = vpop.f32.mrb[0].mxu0
        %v2320 = vadd.f32 0.0, %v2319
        %v2321 = vpop.f32.mrb[0].mxu0
        %2322 = vmatprep.mubr.f32.mxu0 0.0
        %2323 = vmatmul.mubr.f32.gmra.mrb[0].mxu0 %v2142
        %v2324 = vpop.f32.mrb[0].mxu0
        %v2325 = vadd.f32 0.0, %v2324
        %v2326 = vpop.f32.mrb[0].mxu0
        %2327 = vmatprep.mubr.f32.mxu0 0.0
        %2328 = vmatmul.mubr.f32.gmra.mrb[0].mxu0 %v2145
        %v2329 = vpop.f32.mrb[0].mxu0
        %v2330 = vadd.f32 0.0, %v2329
        %v2331 = vpop.f32.mrb[0].mxu0
        %2332 = vmatprep.mubr.f32.mxu0 0.0
        %2333 = vmatmul.mubr.f32.gmra.mrb[0].mxu0 %v2148
        %v2334 = vpop.f32.mrb[0].mxu0
        %v2335 = vadd.f32 0.0, %v2334
        %v2336 = vpop.f32.mrb[0].mxu0
        %2337 = vmatprep.mubr.f32.mxu0 0.0
        %2338 = vmatmul.mubr.f32.gmra.mrb[0].mxu0 %v2151
        %v2339 = vpop.f32.mrb[0].mxu0
        %v2340 = vadd.f32 0.0, %v2339
        %v2341 = vpop.f32.mrb[0].mxu0
        %2342 = vmatprep.mubr.f32.mxu0 0.0
        %2343 = vmatmul.mubr.f32.gmra.mrb[0].mxu0 %v2154
        %v2344 = vpop.f32.mrb[0].mxu0
        %v2345 = vadd.f32 0.0, %v2344
        %v2346 = vpop.f32.mrb[0].mxu0
        %2347 = vmatprep.mubr.f32.mxu0 0.0
        %2348 = vmatmul.mubr.f32.gmra.mrb[0].mxu0 %v2157
        %v2349 = vpop.f32.mrb[0].mxu0
        %v2350 = vadd.f32 0.0, %v2349
        %v2351 = vpop.f32.mrb[0].mxu0
        %2352 = vmatprep.mubr.f32.mxu0 0.0
        %2353 = vmatmul.mubr.f32.gmra.mrb[0].mxu0 %v2160
        %v2354 = vpop.f32.mrb[0].mxu0
        %v2355 = vadd.f32 0.0, %v2354
        %v2356 = vpop.f32.mrb[0].mxu0
        %2357 = vmatprep.mubr.f32.mxu0 0.0
        %2358 = vmatmul.mubr.f32.gmra.mrb[0].mxu0 %v2163
        %v2359 = vpop.f32.mrb[0].mxu0
        %v2360 = vadd.f32 0.0, %v2359
        %v2361 = vpop.f32.mrb[0].mxu0
        %2362 = vmatprep.mubr.f32.mxu0 0.0
        %2363 = vmatmul.mubr.f32.gmra.mrb[0].mxu0 %v2166
        %v2364 = vpop.f32.mrb[0].mxu0
        %v2365 = vadd.f32 0.0, %v2364
        %v2366 = vpop.f32.mrb[0].mxu0
        %2367 = vmatprep.mubr.f32.mxu0 0.0
        %2368 = vmatmul.mubr.f32.gmra.mrb[0].mxu0 %v2169
        %v2369 = vpop.f32.mrb[0].mxu0
        %v2370 = vadd.f32 0.0, %v2369
        %v2371 = vpop.f32.mrb[0].mxu0
        %2372 = vmatprep.mubr.f32.mxu0 0.0
        %2373 = vmatmul.mubr.f32.gmra.mrb[0].mxu0 %v2172
        %v2374 = vpop.f32.mrb[0].mxu0
        %v2375 = vadd.f32 0.0, %v2374
        %v2376 = vpop.f32.mrb[0].mxu0
        %2377 = vmatprep.mubr.f32.mxu0 0.0
        %2378 = vmatmul.mubr.f32.gmra.mrb[0].mxu0 %v2175
        %v2379 = vpop.f32.mrb[0].mxu0
        %v2380 = vadd.f32 0.0, %v2379
        %v2381 = vpop.f32.mrb[0].mxu0
        %2382 = vmatprep.mubr.f32.mxu0 0.0
        %2383 = vmatmul.mubr.f32.gmra.mrb[0].mxu0 %v2178
        %v2384 = vpop.f32.mrb[0].mxu0
        %v2385 = vadd.f32 0.0, %v2384
        %v2386 = vpop.f32.mrb[0].mxu0
        %2387 = vmatprep.mubr.f32.mxu0 0.0
        %2388 = vmatmul.mubr.f32.gmra.mrb[0].mxu0 %v2181
        %v2389 = vpop.f32.mrb[0].mxu0
        %v2390 = vadd.f32 0.0, %v2389
        %v2391 = vpop.f32.mrb[0].mxu0
        %2392 = vmatprep.mubr.f32.mxu0 0.0
        %2393 = vmatmul.mubr.f32.gmra.mrb[0].mxu0 %v2184
        %v2394 = vpop.f32.mrb[0].mxu0
        %v2395 = vadd.f32 0.0, %v2394
        %v2396 = vpop.f32.mrb[0].mxu0
        %2397 = vmatprep.mubr.f32.mxu0 0.0
        %2398 = vmatmul.mubr.f32.gmra.mrb[0].mxu0 %v2187
        %v2399 = vpop.f32.mrb[0].mxu0
        %v2400 = vadd.f32 0.0, %v2399
        %v2401 = vpop.f32.mrb[0].mxu0
        %2402 = vmatprep.mubr.f32.mxu0 0.0
        %2403 = vmatmul.mubr.f32.gmra.mrb[0].mxu0 %v2190
        %v2404 = vpop.f32.mrb[0].mxu0
        %v2405 = vadd.f32 0.0, %v2404
        %v2406 = vpop.f32.mrb[0].mxu0
        %2407 = vmatprep.mubr.f32.mxu0 0.0
        %2408 = vmatmul.mubr.f32.gmra.mrb[0].mxu0 %v2193
        %v2409 = vpop.f32.mrb[0].mxu0
        %v2410 = vadd.f32 0.0, %v2409
        %v2411 = vpop.f32.mrb[0].mxu0
        %2412 = vmatprep.mubr.f32.mxu0 0.0
        %2413 = vmatmul.mubr.f32.gmra.mrb[0].mxu0 %v2196
        %v2414 = vpop.f32.mrb[0].mxu0
        %v2415 = vadd.f32 0.0, %v2414
        %v2416 = vpop.f32.mrb[0].mxu0
        %2417 = vmatprep.mubr.f32.mxu0 0.0
        %2418 = vmatmul.mubr.f32.gmra.mrb[0].mxu0 %v2199
        %v2419 = vpop.f32.mrb[0].mxu0
        %v2420 = vadd.f32 0.0, %v2419
        %v2421 = vpop.f32.mrb[0].mxu0
        %2422 = vmatprep.mubr.f32.mxu0 0.0
        %2423 = vmatmul.mubr.f32.gmra.mrb[0].mxu0 %v2202
        %v2424 = vpop.f32.mrb[0].mxu0
        %v2425 = vadd.f32 0.0, %v2424
        %v2426 = vpop.f32.mrb[0].mxu0
        %2427 = vmatprep.mubr.f32.mxu0 0.0
        %2428 = vmatmul.mubr.f32.gmra.mrb[0].mxu0 %v2205
        %v2429 = vpop.f32.mrb[0].mxu0
        %v2430 = vadd.f32 0.0, %v2429
        %v2431 = vpop.f32.mrb[0].mxu0
        %2432 = vmatprep.mubr.f32.mxu0 0.0
        %2433 = vmatmul.mubr.f32.gmra.mrb[0].mxu0 %v2208
        %v2434 = vpop.f32.mrb[0].mxu0
        %v2435 = vadd.f32 0.0, %v2434
        %v2436 = vpop.f32.mrb[0].mxu0
        %2437 = vdwg.mxu0
        %v2438 = vadd.f32 %v2048, %v2280
        %v2439 = vadd.f32 %v2049, %v2285
        %v2440 = vadd.f32 %v2050, %v2290
        %v2441 = vadd.f32 %v2051, %v2295
        %v2442 = vadd.f32 %v2052, %v2300
        %v2443 = vadd.f32 %v2053, %v2305
        %v2444 = vadd.f32 %v2054, %v2310
        %v2445 = vadd.f32 %v2055, %v2315
        %v2446 = vadd.f32 %v2056, %v2320
        %v2447 = vadd.f32 %v2057, %v2325
        %v2448 = vadd.f32 %v2058, %v2330
        %v2449 = vadd.f32 %v2059, %v2335
        %v2450 = vadd.f32 %v2060, %v2340
        %v2451 = vadd.f32 %v2061, %v2345
        %v2452 = vadd.f32 %v2062, %v2350
        %v2453 = vadd.f32 %v2063, %v2355
        %v2454 = vadd.f32 %v2064, %v2360
        %v2455 = vadd.f32 %v2065, %v2365
        %v2456 = vadd.f32 %v2066, %v2370
        %v2457 = vadd.f32 %v2067, %v2375
        %v2458 = vadd.f32 %v2068, %v2380
        %v2459 = vadd.f32 %v2069, %v2385
        %v2460 = vadd.f32 %v2070, %v2390
        %v2461 = vadd.f32 %v2071, %v2395
        %v2462 = vadd.f32 %v2072, %v2400
        %v2463 = vadd.f32 %v2073, %v2405
        %v2464 = vadd.f32 %v2074, %v2410
        %v2465 = vadd.f32 %v2075, %v2415
        %v2466 = vadd.f32 %v2076, %v2420
        %v2467 = vadd.f32 %v2077, %v2425
        %v2468 = vadd.f32 %v2078, %v2430
        %v2469 = vadd.f32 %v2079, %v2435
        %v2470 = vld [vmem:[%s486 + $0x9] sm:$0xff]
        %v2471 = vld [vmem:[%s486 + $0x11] sm:$0xff]
        %v2472 = vld [vmem:[%s486 + $0x29] sm:$0xff]
        %v2473 = vld [vmem:[%s486 + $0x31] sm:$0xff]
        %v2474 = vld [vmem:[%s486 + $0x49] sm:$0xff]
        %v2475 = vld [vmem:[%s486 + $0x51] sm:$0xff]
        %v2476 = vld [vmem:[%s486 + $0x69] sm:$0xff]
        %v2477 = vld [vmem:[%s486 + $0x71] sm:$0xff]
        %v2478 = vld [vmem:[%s486 + $0x89] sm:$0xff]
        %v2479 = vld [vmem:[%s486 + $0x91] sm:$0xff]
        %v2480 = vld [vmem:[%s486 + $0xa9] sm:$0xff]
        %v2481 = vld [vmem:[%s486 + $0xb1] sm:$0xff]
        %v2482 = vld [vmem:[%s486 + $0xc9] sm:$0xff]
        %v2483 = vld [vmem:[%s486 + $0xd1] sm:$0xff]
        %v2484 = vld [vmem:[%s486 + $0xe9] sm:$0xff]
        %v2485 = vld [vmem:[%s486 + $0xf1] sm:$0xff]
        %v2486 = vld [vmem:[%s486 + $0x109] sm:$0xff]
        %v2487 = vld [vmem:[%s486 + $0x111] sm:$0xff]
        %v2488 = vld [vmem:[%s486 + $0x129] sm:$0xff]
        %v2489 = vld [vmem:[%s486 + $0x131] sm:$0xff]
        %v2490 = vld [vmem:[%s486 + $0x149] sm:$0xff]
        %v2491 = vld [vmem:[%s486 + $0x151] sm:$0xff]
        %v2492 = vld [vmem:[%s486 + $0x169] sm:$0xff]
        %v2493 = vld [vmem:[%s486 + $0x171] sm:$0xff]
        %v2494 = vld [vmem:[%s486 + $0x189] sm:$0xff]
        %v2495 = vld [vmem:[%s486 + $0x191] sm:$0xff]
        %v2496 = vld [vmem:[%s486 + $0x1a9] sm:$0xff]
        %v2497 = vld [vmem:[%s486 + $0x1b1] sm:$0xff]
        %v2498 = vld [vmem:[%s486 + $0x1c9] sm:$0xff]
        %v2499 = vld [vmem:[%s486 + $0x1d1] sm:$0xff]
        %v2500 = vld [vmem:[%s486 + $0x1e9] sm:$0xff]
        %v2501 = vld [vmem:[%s486 + $0x1f1] sm:$0xff]
        %s2502 = scalar_lea.vmem %s1, 20
        %v2503 = vld [vmem:[%s2502] sm:$0x7]
        %v2505 = vsel %vm477, %v2470, 0
        %v2508 = vsel %vm477, %v2471, 0
        %v2511 = vsel %vm477, %v2472, 0
        %v2514 = vsel %vm477, %v2473, 0
        %v2517 = vsel %vm477, %v2474, 0
        %v2520 = vsel %vm477, %v2475, 0
        %v2523 = vsel %vm477, %v2476, 0
        %v2526 = vsel %vm477, %v2477, 0
        %v2529 = vsel %vm477, %v2478, 0
        %v2532 = vsel %vm477, %v2479, 0
        %v2535 = vsel %vm477, %v2480, 0
        %v2538 = vsel %vm477, %v2481, 0
        %v2541 = vsel %vm477, %v2482, 0
        %v2544 = vsel %vm477, %v2483, 0
        %v2547 = vsel %vm477, %v2484, 0
        %v2550 = vsel %vm477, %v2485, 0
        %v2553 = vsel %vm477, %v2486, 0
        %v2556 = vsel %vm477, %v2487, 0
        %v2559 = vsel %vm477, %v2488, 0
        %v2562 = vsel %vm477, %v2489, 0
        %v2565 = vsel %vm477, %v2490, 0
        %v2568 = vsel %vm477, %v2491, 0
        %v2571 = vsel %vm477, %v2492, 0
        %v2574 = vsel %vm477, %v2493, 0
        %v2577 = vsel %vm477, %v2494, 0
        %v2580 = vsel %vm477, %v2495, 0
        %v2583 = vsel %vm477, %v2496, 0
        %v2586 = vsel %vm477, %v2497, 0
        %v2589 = vsel %vm477, %v2498, 0
        %v2592 = vsel %vm477, %v2499, 0
        %v2595 = vsel %vm477, %v2500, 0
        %v2598 = vsel %vm477, %v2501, 0
        %v2601 = vsel %vm747, %v2503, 0
        %2603 = vmatprep.subr.mxu0 0.0
        %2604 = vmatpush1.msra.mxu0 %v2601
        %2605 = vmatprep.subr.mxu0 0.0
        %2606 = vmatpush1.msra.mxu0 0.0
        %2607 = vmatprep.subr.mxu0 0.0
        %2608 = vmatpush1.msra.mxu0 0.0
        %2609 = vmatprep.subr.mxu0 0.0
        %2610 = vmatpush1.msra.mxu0 0.0
        %2611 = vmatprep.subr.mxu0 0.0
        %2612 = vmatpush1.msra.mxu0 0.0
        %2613 = vmatprep.subr.mxu0 0.0
        %2614 = vmatpush1.msra.mxu0 0.0
        %2615 = vmatprep.subr.mxu0 0.0
        %2616 = vmatpush1.msra.mxu0 0.0
        %2617 = vmatprep.subr.mxu0 0.0
        %2618 = vmatpush1.msra.mxu0 0.0
        %2619 = vmatprep.subr.mxu0 0.0
        %2620 = vmatpush1.msra.mxu0 0.0
        %2621 = vmatprep.subr.mxu0 0.0
        %2622 = vmatpush1.msra.mxu0 0.0
        %2623 = vmatprep.subr.mxu0 0.0
        %2624 = vmatpush1.msra.mxu0 0.0
        %2625 = vmatprep.subr.mxu0 0.0
        %2626 = vmatpush1.msra.mxu0 0.0
        %2627 = vmatprep.subr.mxu0 0.0
        %2628 = vmatpush1.msra.mxu0 0.0
        %2629 = vmatprep.subr.mxu0 0.0
        %2630 = vmatpush1.msra.mxu0 0.0
        %2631 = vmatprep.subr.mxu0 0.0
        %2632 = vmatpush1.msra.mxu0 0.0
        %2633 = vmatprep.subr.mxu0 0.0
        %2634 = vmatpush1.msra.mxu0 0.0
        %2635 = vmatprep.subr.mxu0 0.0
        %2636 = vmatpush1.msra.mxu0 0.0
        %2637 = vmatprep.subr.mxu0 0.0
        %2638 = vmatpush1.msra.mxu0 0.0
        %2639 = vmatprep.subr.mxu0 0.0
        %2640 = vmatpush1.msra.mxu0 0.0
        %2641 = vmatprep.subr.mxu0 0.0
        %2642 = vmatpush1.msra.mxu0 0.0
        %2643 = vmatprep.subr.mxu0 0.0
        %2644 = vmatpush1.msra.mxu0 0.0
        %2645 = vmatprep.subr.mxu0 0.0
        %2646 = vmatpush1.msra.mxu0 0.0
        %2647 = vmatprep.subr.mxu0 0.0
        %2648 = vmatpush1.msra.mxu0 0.0
        %2649 = vmatprep.subr.mxu0 0.0
        %2650 = vmatpush1.msra.mxu0 0.0
        %2651 = vmatprep.subr.mxu0 0.0
        %2652 = vmatpush1.msra.mxu0 0.0
        %2653 = vmatprep.subr.mxu0 0.0
        %2654 = vmatpush1.msra.mxu0 0.0
        %2655 = vmatprep.subr.mxu0 0.0
        %2656 = vmatpush1.msra.mxu0 0.0
        %2657 = vmatprep.subr.mxu0 0.0
        %2658 = vmatpush1.msra.mxu0 0.0
        %2659 = vmatprep.subr.mxu0 0.0
        %2660 = vmatpush1.msra.mxu0 0.0
        %2661 = vmatprep.subr.mxu0 0.0
        %2662 = vmatpush1.msra.mxu0 0.0
        %2663 = vmatprep.subr.mxu0 0.0
        %2664 = vmatpush1.msra.mxu0 0.0
        %2665 = vmatprep.subr.mxu0 0.0
        %2666 = vmatpush1.msra.mxu0 0.0
        %2667 = vmatprep.mubr.f32.mxu0 0.0
        %2668 = vmatmul.mubr.f32.gmra.mrb[0].mxu0 %v2505
        %v2669 = vpop.f32.mrb[0].mxu0
        %v2670 = vadd.f32 0.0, %v2669
        %v2671 = vpop.f32.mrb[0].mxu0
        %2672 = vmatprep.mubr.f32.mxu0 0.0
        %2673 = vmatmul.mubr.f32.gmra.mrb[0].mxu0 %v2508
        %v2674 = vpop.f32.mrb[0].mxu0
        %v2675 = vadd.f32 0.0, %v2674
        %v2676 = vpop.f32.mrb[0].mxu0
        %2677 = vmatprep.mubr.f32.mxu0 0.0
        %2678 = vmatmul.mubr.f32.gmra.mrb[0].mxu0 %v2511
        %v2679 = vpop.f32.mrb[0].mxu0
        %v2680 = vadd.f32 0.0, %v2679
        %v2681 = vpop.f32.mrb[0].mxu0
        %2682 = vmatprep.mubr.f32.mxu0 0.0
        %2683 = vmatmul.mubr.f32.gmra.mrb[0].mxu0 %v2514
        %v2684 = vpop.f32.mrb[0].mxu0
        %v2685 = vadd.f32 0.0, %v2684
        %v2686 = vpop.f32.mrb[0].mxu0
        %2687 = vmatprep.mubr.f32.mxu0 0.0
        %2688 = vmatmul.mubr.f32.gmra.mrb[0].mxu0 %v2517
        %v2689 = vpop.f32.mrb[0].mxu0
        %v2690 = vadd.f32 0.0, %v2689
        %v2691 = vpop.f32.mrb[0].mxu0
        %2692 = vmatprep.mubr.f32.mxu0 0.0
        %2693 = vmatmul.mubr.f32.gmra.mrb[0].mxu0 %v2520
        %v2694 = vpop.f32.mrb[0].mxu0
        %v2695 = vadd.f32 0.0, %v2694
        %v2696 = vpop.f32.mrb[0].mxu0
        %2697 = vmatprep.mubr.f32.mxu0 0.0
        %2698 = vmatmul.mubr.f32.gmra.mrb[0].mxu0 %v2523
        %v2699 = vpop.f32.mrb[0].mxu0
        %v2700 = vadd.f32 0.0, %v2699
        %v2701 = vpop.f32.mrb[0].mxu0
        %2702 = vmatprep.mubr.f32.mxu0 0.0
        %2703 = vmatmul.mubr.f32.gmra.mrb[0].mxu0 %v2526
        %v2704 = vpop.f32.mrb[0].mxu0
        %v2705 = vadd.f32 0.0, %v2704
        %v2706 = vpop.f32.mrb[0].mxu0
        %2707 = vmatprep.mubr.f32.mxu0 0.0
        %2708 = vmatmul.mubr.f32.gmra.mrb[0].mxu0 %v2529
        %v2709 = vpop.f32.mrb[0].mxu0
        %v2710 = vadd.f32 0.0, %v2709
        %v2711 = vpop.f32.mrb[0].mxu0
        %2712 = vmatprep.mubr.f32.mxu0 0.0
        %2713 = vmatmul.mubr.f32.gmra.mrb[0].mxu0 %v2532
        %v2714 = vpop.f32.mrb[0].mxu0
        %v2715 = vadd.f32 0.0, %v2714
        %v2716 = vpop.f32.mrb[0].mxu0
        %2717 = vmatprep.mubr.f32.mxu0 0.0
        %2718 = vmatmul.mubr.f32.gmra.mrb[0].mxu0 %v2535
        %v2719 = vpop.f32.mrb[0].mxu0
        %v2720 = vadd.f32 0.0, %v2719
        %v2721 = vpop.f32.mrb[0].mxu0
        %2722 = vmatprep.mubr.f32.mxu0 0.0
        %2723 = vmatmul.mubr.f32.gmra.mrb[0].mxu0 %v2538
        %v2724 = vpop.f32.mrb[0].mxu0
        %v2725 = vadd.f32 0.0, %v2724
        %v2726 = vpop.f32.mrb[0].mxu0
        %2727 = vmatprep.mubr.f32.mxu0 0.0
        %2728 = vmatmul.mubr.f32.gmra.mrb[0].mxu0 %v2541
        %v2729 = vpop.f32.mrb[0].mxu0
        %v2730 = vadd.f32 0.0, %v2729
        %v2731 = vpop.f32.mrb[0].mxu0
        %2732 = vmatprep.mubr.f32.mxu0 0.0
        %2733 = vmatmul.mubr.f32.gmra.mrb[0].mxu0 %v2544
        %v2734 = vpop.f32.mrb[0].mxu0
        %v2735 = vadd.f32 0.0, %v2734
        %v2736 = vpop.f32.mrb[0].mxu0
        %2737 = vmatprep.mubr.f32.mxu0 0.0
        %2738 = vmatmul.mubr.f32.gmra.mrb[0].mxu0 %v2547
        %v2739 = vpop.f32.mrb[0].mxu0
        %v2740 = vadd.f32 0.0, %v2739
        %v2741 = vpop.f32.mrb[0].mxu0
        %2742 = vmatprep.mubr.f32.mxu0 0.0
        %2743 = vmatmul.mubr.f32.gmra.mrb[0].mxu0 %v2550
        %v2744 = vpop.f32.mrb[0].mxu0
        %v2745 = vadd.f32 0.0, %v2744
        %v2746 = vpop.f32.mrb[0].mxu0
        %2747 = vmatprep.mubr.f32.mxu0 0.0
        %2748 = vmatmul.mubr.f32.gmra.mrb[0].mxu0 %v2553
        %v2749 = vpop.f32.mrb[0].mxu0
        %v2750 = vadd.f32 0.0, %v2749
        %v2751 = vpop.f32.mrb[0].mxu0
        %2752 = vmatprep.mubr.f32.mxu0 0.0
        %2753 = vmatmul.mubr.f32.gmra.mrb[0].mxu0 %v2556
        %v2754 = vpop.f32.mrb[0].mxu0
        %v2755 = vadd.f32 0.0, %v2754
        %v2756 = vpop.f32.mrb[0].mxu0
        %2757 = vmatprep.mubr.f32.mxu0 0.0
        %2758 = vmatmul.mubr.f32.gmra.mrb[0].mxu0 %v2559
        %v2759 = vpop.f32.mrb[0].mxu0
        %v2760 = vadd.f32 0.0, %v2759
        %v2761 = vpop.f32.mrb[0].mxu0
        %2762 = vmatprep.mubr.f32.mxu0 0.0
        %2763 = vmatmul.mubr.f32.gmra.mrb[0].mxu0 %v2562
        %v2764 = vpop.f32.mrb[0].mxu0
        %v2765 = vadd.f32 0.0, %v2764
        %v2766 = vpop.f32.mrb[0].mxu0
        %2767 = vmatprep.mubr.f32.mxu0 0.0
        %2768 = vmatmul.mubr.f32.gmra.mrb[0].mxu0 %v2565
        %v2769 = vpop.f32.mrb[0].mxu0
        %v2770 = vadd.f32 0.0, %v2769
        %v2771 = vpop.f32.mrb[0].mxu0
        %2772 = vmatprep.mubr.f32.mxu0 0.0
        %2773 = vmatmul.mubr.f32.gmra.mrb[0].mxu0 %v2568
        %v2774 = vpop.f32.mrb[0].mxu0
        %v2775 = vadd.f32 0.0, %v2774
        %v2776 = vpop.f32.mrb[0].mxu0
        %2777 = vmatprep.mubr.f32.mxu0 0.0
        %2778 = vmatmul.mubr.f32.gmra.mrb[0].mxu0 %v2571
        %v2779 = vpop.f32.mrb[0].mxu0
        %v2780 = vadd.f32 0.0, %v2779
        %v2781 = vpop.f32.mrb[0].mxu0
        %2782 = vmatprep.mubr.f32.mxu0 0.0
        %2783 = vmatmul.mubr.f32.gmra.mrb[0].mxu0 %v2574
        %v2784 = vpop.f32.mrb[0].mxu0
        %v2785 = vadd.f32 0.0, %v2784
        %v2786 = vpop.f32.mrb[0].mxu0
        %2787 = vmatprep.mubr.f32.mxu0 0.0
        %2788 = vmatmul.mubr.f32.gmra.mrb[0].mxu0 %v2577
        %v2789 = vpop.f32.mrb[0].mxu0
        %v2790 = vadd.f32 0.0, %v2789
        %v2791 = vpop.f32.mrb[0].mxu0
        %2792 = vmatprep.mubr.f32.mxu0 0.0
        %2793 = vmatmul.mubr.f32.gmra.mrb[0].mxu0 %v2580
        %v2794 = vpop.f32.mrb[0].mxu0
        %v2795 = vadd.f32 0.0, %v2794
        %v2796 = vpop.f32.mrb[0].mxu0
        %2797 = vmatprep.mubr.f32.mxu0 0.0
        %2798 = vmatmul.mubr.f32.gmra.mrb[0].mxu0 %v2583
        %v2799 = vpop.f32.mrb[0].mxu0
        %v2800 = vadd.f32 0.0, %v2799
        %v2801 = vpop.f32.mrb[0].mxu0
        %2802 = vmatprep.mubr.f32.mxu0 0.0
        %2803 = vmatmul.mubr.f32.gmra.mrb[0].mxu0 %v2586
        %v2804 = vpop.f32.mrb[0].mxu0
        %v2805 = vadd.f32 0.0, %v2804
        %v2806 = vpop.f32.mrb[0].mxu0
        %2807 = vmatprep.mubr.f32.mxu0 0.0
        %2808 = vmatmul.mubr.f32.gmra.mrb[0].mxu0 %v2589
        %v2809 = vpop.f32.mrb[0].mxu0
        %v2810 = vadd.f32 0.0, %v2809
        %v2811 = vpop.f32.mrb[0].mxu0
        %2812 = vmatprep.mubr.f32.mxu0 0.0
        %2813 = vmatmul.mubr.f32.gmra.mrb[0].mxu0 %v2592
        %v2814 = vpop.f32.mrb[0].mxu0
        %v2815 = vadd.f32 0.0, %v2814
        %v2816 = vpop.f32.mrb[0].mxu0
        %2817 = vmatprep.mubr.f32.mxu0 0.0
        %2818 = vmatmul.mubr.f32.gmra.mrb[0].mxu0 %v2595
        %v2819 = vpop.f32.mrb[0].mxu0
        %v2820 = vadd.f32 0.0, %v2819
        %v2821 = vpop.f32.mrb[0].mxu0
        %2822 = vmatprep.mubr.f32.mxu0 0.0
        %2823 = vmatmul.mubr.f32.gmra.mrb[0].mxu0 %v2598
        %v2824 = vpop.f32.mrb[0].mxu0
        %v2825 = vadd.f32 0.0, %v2824
        %v2826 = vpop.f32.mrb[0].mxu0
        %2827 = vdwg.mxu0
        %v2828 = vadd.f32 %v2438, %v2670
        %v2829 = vadd.f32 %v2439, %v2675
        %v2830 = vadd.f32 %v2440, %v2680
        %v2831 = vadd.f32 %v2441, %v2685
        %v2832 = vadd.f32 %v2442, %v2690
        %v2833 = vadd.f32 %v2443, %v2695
        %v2834 = vadd.f32 %v2444, %v2700
        %v2835 = vadd.f32 %v2445, %v2705
        %v2836 = vadd.f32 %v2446, %v2710
        %v2837 = vadd.f32 %v2447, %v2715
        %v2838 = vadd.f32 %v2448, %v2720
        %v2839 = vadd.f32 %v2449, %v2725
        %v2840 = vadd.f32 %v2450, %v2730
        %v2841 = vadd.f32 %v2451, %v2735
        %v2842 = vadd.f32 %v2452, %v2740
        %v2843 = vadd.f32 %v2453, %v2745
        %v2844 = vadd.f32 %v2454, %v2750
        %v2845 = vadd.f32 %v2455, %v2755
        %v2846 = vadd.f32 %v2456, %v2760
        %v2847 = vadd.f32 %v2457, %v2765
        %v2848 = vadd.f32 %v2458, %v2770
        %v2849 = vadd.f32 %v2459, %v2775
        %v2850 = vadd.f32 %v2460, %v2780
        %v2851 = vadd.f32 %v2461, %v2785
        %v2852 = vadd.f32 %v2462, %v2790
        %v2853 = vadd.f32 %v2463, %v2795
        %v2854 = vadd.f32 %v2464, %v2800
        %v2855 = vadd.f32 %v2465, %v2805
        %v2856 = vadd.f32 %v2466, %v2810
        %v2857 = vadd.f32 %v2467, %v2815
        %v2858 = vadd.f32 %v2468, %v2820
        %v2859 = vadd.f32 %v2469, %v2825
        %s2860 = scalar_lea.vmem [#allocation2], 64
        %v2861 = vld [vmem:[%s2860 + $0x7] sm:$0xff]
        %v2862 = vld [vmem:[%s2860 + $0xf] sm:$0xff]
        %v2863 = vld [vmem:[%s2860 + $0x27] sm:$0xff]
        %v2864 = vld [vmem:[%s2860 + $0x2f] sm:$0xff]
        %v2865 = vld [vmem:[%s2860 + $0x47] sm:$0xff]
        %v2866 = vld [vmem:[%s2860 + $0x4f] sm:$0xff]
        %v2867 = vld [vmem:[%s2860 + $0x67] sm:$0xff]
        %v2868 = vld [vmem:[%s2860 + $0x6f] sm:$0xff]
        %v2869 = vld [vmem:[%s2860 + $0x87] sm:$0xff]
        %v2870 = vld [vmem:[%s2860 + $0x8f] sm:$0xff]
        %v2871 = vld [vmem:[%s2860 + $0xa7] sm:$0xff]
        %v2872 = vld [vmem:[%s2860 + $0xaf] sm:$0xff]
        %v2873 = vld [vmem:[%s2860 + $0xc7] sm:$0xff]
        %v2874 = vld [vmem:[%s2860 + $0xcf] sm:$0xff]
        %v2875 = vld [vmem:[%s2860 + $0xe7] sm:$0xff]
        %v2876 = vld [vmem:[%s2860 + $0xef] sm:$0xff]
        %v2877 = vld [vmem:[%s2860 + $0x107] sm:$0xff]
        %v2878 = vld [vmem:[%s2860 + $0x10f] sm:$0xff]
        %v2879 = vld [vmem:[%s2860 + $0x127] sm:$0xff]
        %v2880 = vld [vmem:[%s2860 + $0x12f] sm:$0xff]
        %v2881 = vld [vmem:[%s2860 + $0x147] sm:$0xff]
        %v2882 = vld [vmem:[%s2860 + $0x14f] sm:$0xff]
        %v2883 = vld [vmem:[%s2860 + $0x167] sm:$0xff]
        %v2884 = vld [vmem:[%s2860 + $0x16f] sm:$0xff]
        %v2885 = vld [vmem:[%s2860 + $0x187] sm:$0xff]
        %v2886 = vld [vmem:[%s2860 + $0x18f] sm:$0xff]
        %v2887 = vld [vmem:[%s2860 + $0x1a7] sm:$0xff]
        %v2888 = vld [vmem:[%s2860 + $0x1af] sm:$0xff]
        %v2889 = vld [vmem:[%s2860 + $0x1c7] sm:$0xff]
        %v2890 = vld [vmem:[%s2860 + $0x1cf] sm:$0xff]
        %v2891 = vld [vmem:[%s2860 + $0x1e7] sm:$0xff]
        %v2892 = vld [vmem:[%s2860 + $0x1ef] sm:$0xff]
        %s2893 = scalar_lea.vmem %s1, 24
        %v2894 = vld [vmem:[%s2893] sm:$0x7]
        %v2896 = vsel %vm477, %v2861, 0
        %v2899 = vsel %vm477, %v2862, 0
        %v2902 = vsel %vm477, %v2863, 0
        %v2905 = vsel %vm477, %v2864, 0
        %v2908 = vsel %vm477, %v2865, 0
        %v2911 = vsel %vm477, %v2866, 0
        %v2914 = vsel %vm477, %v2867, 0
        %v2917 = vsel %vm477, %v2868, 0
        %v2920 = vsel %vm477, %v2869, 0
        %v2923 = vsel %vm477, %v2870, 0
        %v2926 = vsel %vm477, %v2871, 0
        %v2929 = vsel %vm477, %v2872, 0
        %v2932 = vsel %vm477, %v2873, 0
        %v2935 = vsel %vm477, %v2874, 0
        %v2938 = vsel %vm477, %v2875, 0
        %v2941 = vsel %vm477, %v2876, 0
        %v2944 = vsel %vm477, %v2877, 0
        %v2947 = vsel %vm477, %v2878, 0
        %v2950 = vsel %vm477, %v2879, 0
        %v2953 = vsel %vm477, %v2880, 0
        %v2956 = vsel %vm477, %v2881, 0
        %v2959 = vsel %vm477, %v2882, 0
        %v2962 = vsel %vm477, %v2883, 0
        %v2965 = vsel %vm477, %v2884, 0
        %v2968 = vsel %vm477, %v2885, 0
        %v2971 = vsel %vm477, %v2886, 0
        %v2974 = vsel %vm477, %v2887, 0
        %v2977 = vsel %vm477, %v2888, 0
        %v2980 = vsel %vm477, %v2889, 0
        %v2983 = vsel %vm477, %v2890, 0
        %v2986 = vsel %vm477, %v2891, 0
        %v2989 = vsel %vm477, %v2892, 0
        %v2992 = vsel %vm747, %v2894, 0
        %2994 = vmatprep.subr.mxu0 0.0
        %2995 = vmatpush1.msra.mxu0 %v2992
        %2996 = vmatprep.subr.mxu0 0.0
        %2997 = vmatpush1.msra.mxu0 0.0
        %2998 = vmatprep.subr.mxu0 0.0
        %2999 = vmatpush1.msra.mxu0 0.0
        %3000 = vmatprep.subr.mxu0 0.0
        %3001 = vmatpush1.msra.mxu0 0.0
        %3002 = vmatprep.subr.mxu0 0.0
        %3003 = vmatpush1.msra.mxu0 0.0
        %3004 = vmatprep.subr.mxu0 0.0
        %3005 = vmatpush1.msra.mxu0 0.0
        %3006 = vmatprep.subr.mxu0 0.0
        %3007 = vmatpush1.msra.mxu0 0.0
        %3008 = vmatprep.subr.mxu0 0.0
        %3009 = vmatpush1.msra.mxu0 0.0
        %3010 = vmatprep.subr.mxu0 0.0
        %3011 = vmatpush1.msra.mxu0 0.0
        %3012 = vmatprep.subr.mxu0 0.0
        %3013 = vmatpush1.msra.mxu0 0.0
        %3014 = vmatprep.subr.mxu0 0.0
        %3015 = vmatpush1.msra.mxu0 0.0
        %3016 = vmatprep.subr.mxu0 0.0
        %3017 = vmatpush1.msra.mxu0 0.0
        %3018 = vmatprep.subr.mxu0 0.0
        %3019 = vmatpush1.msra.mxu0 0.0
        %3020 = vmatprep.subr.mxu0 0.0
        %3021 = vmatpush1.msra.mxu0 0.0
        %3022 = vmatprep.subr.mxu0 0.0
        %3023 = vmatpush1.msra.mxu0 0.0
        %3024 = vmatprep.subr.mxu0 0.0
        %3025 = vmatpush1.msra.mxu0 0.0
        %3026 = vmatprep.subr.mxu0 0.0
        %3027 = vmatpush1.msra.mxu0 0.0
        %3028 = vmatprep.subr.mxu0 0.0
        %3029 = vmatpush1.msra.mxu0 0.0
        %3030 = vmatprep.subr.mxu0 0.0
        %3031 = vmatpush1.msra.mxu0 0.0
        %3032 = vmatprep.subr.mxu0 0.0
        %3033 = vmatpush1.msra.mxu0 0.0
        %3034 = vmatprep.subr.mxu0 0.0
        %3035 = vmatpush1.msra.mxu0 0.0
        %3036 = vmatprep.subr.mxu0 0.0
        %3037 = vmatpush1.msra.mxu0 0.0
        %3038 = vmatprep.subr.mxu0 0.0
        %3039 = vmatpush1.msra.mxu0 0.0
        %3040 = vmatprep.subr.mxu0 0.0
        %3041 = vmatpush1.msra.mxu0 0.0
        %3042 = vmatprep.subr.mxu0 0.0
        %3043 = vmatpush1.msra.mxu0 0.0
        %3044 = vmatprep.subr.mxu0 0.0
        %3045 = vmatpush1.msra.mxu0 0.0
        %3046 = vmatprep.subr.mxu0 0.0
        %3047 = vmatpush1.msra.mxu0 0.0
        %3048 = vmatprep.subr.mxu0 0.0
        %3049 = vmatpush1.msra.mxu0 0.0
        %3050 = vmatprep.subr.mxu0 0.0
        %3051 = vmatpush1.msra.mxu0 0.0
        %3052 = vmatprep.subr.mxu0 0.0
        %3053 = vmatpush1.msra.mxu0 0.0
        %3054 = vmatprep.subr.mxu0 0.0
        %3055 = vmatpush1.msra.mxu0 0.0
        %3056 = vmatprep.subr.mxu0 0.0
        %3057 = vmatpush1.msra.mxu0 0.0
        %3058 = vmatprep.mubr.f32.mxu0 0.0
        %3059 = vmatmul.mubr.f32.gmra.mrb[0].mxu0 %v2896
        %v3060 = vpop.f32.mrb[0].mxu0
        %v3061 = vadd.f32 0.0, %v3060
        %v3062 = vpop.f32.mrb[0].mxu0
        %3063 = vmatprep.mubr.f32.mxu0 0.0
        %3064 = vmatmul.mubr.f32.gmra.mrb[0].mxu0 %v2899
        %v3065 = vpop.f32.mrb[0].mxu0
        %v3066 = vadd.f32 0.0, %v3065
        %v3067 = vpop.f32.mrb[0].mxu0
        %3068 = vmatprep.mubr.f32.mxu0 0.0
        %3069 = vmatmul.mubr.f32.gmra.mrb[0].mxu0 %v2902
        %v3070 = vpop.f32.mrb[0].mxu0
        %v3071 = vadd.f32 0.0, %v3070
        %v3072 = vpop.f32.mrb[0].mxu0
        %3073 = vmatprep.mubr.f32.mxu0 0.0
        %3074 = vmatmul.mubr.f32.gmra.mrb[0].mxu0 %v2905
        %v3075 = vpop.f32.mrb[0].mxu0
        %v3076 = vadd.f32 0.0, %v3075
        %v3077 = vpop.f32.mrb[0].mxu0
        %3078 = vmatprep.mubr.f32.mxu0 0.0
        %3079 = vmatmul.mubr.f32.gmra.mrb[0].mxu0 %v2908
        %v3080 = vpop.f32.mrb[0].mxu0
        %v3081 = vadd.f32 0.0, %v3080
        %v3082 = vpop.f32.mrb[0].mxu0
        %3083 = vmatprep.mubr.f32.mxu0 0.0
        %3084 = vmatmul.mubr.f32.gmra.mrb[0].mxu0 %v2911
        %v3085 = vpop.f32.mrb[0].mxu0
        %v3086 = vadd.f32 0.0, %v3085
        %v3087 = vpop.f32.mrb[0].mxu0
        %3088 = vmatprep.mubr.f32.mxu0 0.0
        %3089 = vmatmul.mubr.f32.gmra.mrb[0].mxu0 %v2914
        %v3090 = vpop.f32.mrb[0].mxu0
        %v3091 = vadd.f32 0.0, %v3090
        %v3092 = vpop.f32.mrb[0].mxu0
        %3093 = vmatprep.mubr.f32.mxu0 0.0
        %3094 = vmatmul.mubr.f32.gmra.mrb[0].mxu0 %v2917
        %v3095 = vpop.f32.mrb[0].mxu0
        %v3096 = vadd.f32 0.0, %v3095
        %v3097 = vpop.f32.mrb[0].mxu0
        %3098 = vmatprep.mubr.f32.mxu0 0.0
        %3099 = vmatmul.mubr.f32.gmra.mrb[0].mxu0 %v2920
        %v3100 = vpop.f32.mrb[0].mxu0
        %v3101 = vadd.f32 0.0, %v3100
        %v3102 = vpop.f32.mrb[0].mxu0
        %3103 = vmatprep.mubr.f32.mxu0 0.0
        %3104 = vmatmul.mubr.f32.gmra.mrb[0].mxu0 %v2923
        %v3105 = vpop.f32.mrb[0].mxu0
        %v3106 = vadd.f32 0.0, %v3105
        %v3107 = vpop.f32.mrb[0].mxu0
        %3108 = vmatprep.mubr.f32.mxu0 0.0
        %3109 = vmatmul.mubr.f32.gmra.mrb[0].mxu0 %v2926
        %v3110 = vpop.f32.mrb[0].mxu0
        %v3111 = vadd.f32 0.0, %v3110
        %v3112 = vpop.f32.mrb[0].mxu0
        %3113 = vmatprep.mubr.f32.mxu0 0.0
        %3114 = vmatmul.mubr.f32.gmra.mrb[0].mxu0 %v2929
        %v3115 = vpop.f32.mrb[0].mxu0
        %v3116 = vadd.f32 0.0, %v3115
        %v3117 = vpop.f32.mrb[0].mxu0
        %3118 = vmatprep.mubr.f32.mxu0 0.0
        %3119 = vmatmul.mubr.f32.gmra.mrb[0].mxu0 %v2932
        %v3120 = vpop.f32.mrb[0].mxu0
        %v3121 = vadd.f32 0.0, %v3120
        %v3122 = vpop.f32.mrb[0].mxu0
        %3123 = vmatprep.mubr.f32.mxu0 0.0
        %3124 = vmatmul.mubr.f32.gmra.mrb[0].mxu0 %v2935
        %v3125 = vpop.f32.mrb[0].mxu0
        %v3126 = vadd.f32 0.0, %v3125
        %v3127 = vpop.f32.mrb[0].mxu0
        %3128 = vmatprep.mubr.f32.mxu0 0.0
        %3129 = vmatmul.mubr.f32.gmra.mrb[0].mxu0 %v2938
        %v3130 = vpop.f32.mrb[0].mxu0
        %v3131 = vadd.f32 0.0, %v3130
        %v3132 = vpop.f32.mrb[0].mxu0
        %3133 = vmatprep.mubr.f32.mxu0 0.0
        %3134 = vmatmul.mubr.f32.gmra.mrb[0].mxu0 %v2941
        %v3135 = vpop.f32.mrb[0].mxu0
        %v3136 = vadd.f32 0.0, %v3135
        %v3137 = vpop.f32.mrb[0].mxu0
        %3138 = vmatprep.mubr.f32.mxu0 0.0
        %3139 = vmatmul.mubr.f32.gmra.mrb[0].mxu0 %v2944
        %v3140 = vpop.f32.mrb[0].mxu0
        %v3141 = vadd.f32 0.0, %v3140
        %v3142 = vpop.f32.mrb[0].mxu0
        %3143 = vmatprep.mubr.f32.mxu0 0.0
        %3144 = vmatmul.mubr.f32.gmra.mrb[0].mxu0 %v2947
        %v3145 = vpop.f32.mrb[0].mxu0
        %v3146 = vadd.f32 0.0, %v3145
        %v3147 = vpop.f32.mrb[0].mxu0
        %3148 = vmatprep.mubr.f32.mxu0 0.0
        %3149 = vmatmul.mubr.f32.gmra.mrb[0].mxu0 %v2950
        %v3150 = vpop.f32.mrb[0].mxu0
        %v3151 = vadd.f32 0.0, %v3150
        %v3152 = vpop.f32.mrb[0].mxu0
        %3153 = vmatprep.mubr.f32.mxu0 0.0
        %3154 = vmatmul.mubr.f32.gmra.mrb[0].mxu0 %v2953
        %v3155 = vpop.f32.mrb[0].mxu0
        %v3156 = vadd.f32 0.0, %v3155
        %v3157 = vpop.f32.mrb[0].mxu0
        %3158 = vmatprep.mubr.f32.mxu0 0.0
        %3159 = vmatmul.mubr.f32.gmra.mrb[0].mxu0 %v2956
        %v3160 = vpop.f32.mrb[0].mxu0
        %v3161 = vadd.f32 0.0, %v3160
        %v3162 = vpop.f32.mrb[0].mxu0
        %3163 = vmatprep.mubr.f32.mxu0 0.0
        %3164 = vmatmul.mubr.f32.gmra.mrb[0].mxu0 %v2959
        %v3165 = vpop.f32.mrb[0].mxu0
        %v3166 = vadd.f32 0.0, %v3165
        %v3167 = vpop.f32.mrb[0].mxu0
        %3168 = vmatprep.mubr.f32.mxu0 0.0
        %3169 = vmatmul.mubr.f32.gmra.mrb[0].mxu0 %v2962
        %v3170 = vpop.f32.mrb[0].mxu0
        %v3171 = vadd.f32 0.0, %v3170
        %v3172 = vpop.f32.mrb[0].mxu0
        %3173 = vmatprep.mubr.f32.mxu0 0.0
        %3174 = vmatmul.mubr.f32.gmra.mrb[0].mxu0 %v2965
        %v3175 = vpop.f32.mrb[0].mxu0
        %v3176 = vadd.f32 0.0, %v3175
        %v3177 = vpop.f32.mrb[0].mxu0
        %3178 = vmatprep.mubr.f32.mxu0 0.0
        %3179 = vmatmul.mubr.f32.gmra.mrb[0].mxu0 %v2968
        %v3180 = vpop.f32.mrb[0].mxu0
        %v3181 = vadd.f32 0.0, %v3180
        %v3182 = vpop.f32.mrb[0].mxu0
        %3183 = vmatprep.mubr.f32.mxu0 0.0
        %3184 = vmatmul.mubr.f32.gmra.mrb[0].mxu0 %v2971
        %v3185 = vpop.f32.mrb[0].mxu0
        %v3186 = vadd.f32 0.0, %v3185
        %v3187 = vpop.f32.mrb[0].mxu0
        %3188 = vmatprep.mubr.f32.mxu0 0.0
        %3189 = vmatmul.mubr.f32.gmra.mrb[0].mxu0 %v2974
        %v3190 = vpop.f32.mrb[0].mxu0
        %v3191 = vadd.f32 0.0, %v3190
        %v3192 = vpop.f32.mrb[0].mxu0
        %3193 = vmatprep.mubr.f32.mxu0 0.0
        %3194 = vmatmul.mubr.f32.gmra.mrb[0].mxu0 %v2977
        %v3195 = vpop.f32.mrb[0].mxu0
        %v3196 = vadd.f32 0.0, %v3195
        %v3197 = vpop.f32.mrb[0].mxu0
        %3198 = vmatprep.mubr.f32.mxu0 0.0
        %3199 = vmatmul.mubr.f32.gmra.mrb[0].mxu0 %v2980
        %v3200 = vpop.f32.mrb[0].mxu0
        %v3201 = vadd.f32 0.0, %v3200
        %v3202 = vpop.f32.mrb[0].mxu0
        %3203 = vmatprep.mubr.f32.mxu0 0.0
        %3204 = vmatmul.mubr.f32.gmra.mrb[0].mxu0 %v2983
        %v3205 = vpop.f32.mrb[0].mxu0
        %v3206 = vadd.f32 0.0, %v3205
        %v3207 = vpop.f32.mrb[0].mxu0
        %3208 = vmatprep.mubr.f32.mxu0 0.0
        %3209 = vmatmul.mubr.f32.gmra.mrb[0].mxu0 %v2986
        %v3210 = vpop.f32.mrb[0].mxu0
        %v3211 = vadd.f32 0.0, %v3210
        %v3212 = vpop.f32.mrb[0].mxu0
        %3213 = vmatprep.mubr.f32.mxu0 0.0
        %3214 = vmatmul.mubr.f32.gmra.mrb[0].mxu0 %v2989
        %v3215 = vpop.f32.mrb[0].mxu0
        %v3216 = vadd.f32 0.0, %v3215
        %v3217 = vpop.f32.mrb[0].mxu0
        %3218 = vdwg.mxu0
        %v3219 = vadd.f32 %v2828, %v3061
        %v3220 = vadd.f32 %v2829, %v3066
        %v3221 = vadd.f32 %v2830, %v3071
        %v3222 = vadd.f32 %v2831, %v3076
        %v3223 = vadd.f32 %v2832, %v3081
        %v3224 = vadd.f32 %v2833, %v3086
        %v3225 = vadd.f32 %v2834, %v3091
        %v3226 = vadd.f32 %v2835, %v3096
        %v3227 = vadd.f32 %v2836, %v3101
        %v3228 = vadd.f32 %v2837, %v3106
        %v3229 = vadd.f32 %v2838, %v3111
        %v3230 = vadd.f32 %v2839, %v3116
        %v3231 = vadd.f32 %v2840, %v3121
        %v3232 = vadd.f32 %v2841, %v3126
        %v3233 = vadd.f32 %v2842, %v3131
        %v3234 = vadd.f32 %v2843, %v3136
        %v3235 = vadd.f32 %v2844, %v3141
        %v3236 = vadd.f32 %v2845, %v3146
        %v3237 = vadd.f32 %v2846, %v3151
        %v3238 = vadd.f32 %v2847, %v3156
        %v3239 = vadd.f32 %v2848, %v3161
        %v3240 = vadd.f32 %v2849, %v3166
        %v3241 = vadd.f32 %v2850, %v3171
        %v3242 = vadd.f32 %v2851, %v3176
        %v3243 = vadd.f32 %v2852, %v3181
        %v3244 = vadd.f32 %v2853, %v3186
        %v3245 = vadd.f32 %v2854, %v3191
        %v3246 = vadd.f32 %v2855, %v3196
        %v3247 = vadd.f32 %v2856, %v3201
        %v3248 = vadd.f32 %v2857, %v3206
        %v3249 = vadd.f32 %v2858, %v3211
        %v3250 = vadd.f32 %v2859, %v3216
        %v3251 = vld [vmem:[%s2860 + $0x8] sm:$0xff]
        %v3252 = vld [vmem:[%s2860 + $0x10] sm:$0xff]
        %v3253 = vld [vmem:[%s2860 + $0x28] sm:$0xff]
        %v3254 = vld [vmem:[%s2860 + $0x30] sm:$0xff]
        %v3255 = vld [vmem:[%s2860 + $0x48] sm:$0xff]
        %v3256 = vld [vmem:[%s2860 + $0x50] sm:$0xff]
        %v3257 = vld [vmem:[%s2860 + $0x68] sm:$0xff]
        %v3258 = vld [vmem:[%s2860 + $0x70] sm:$0xff]
        %v3259 = vld [vmem:[%s2860 + $0x88] sm:$0xff]
        %v3260 = vld [vmem:[%s2860 + $0x90] sm:$0xff]
        %v3261 = vld [vmem:[%s2860 + $0xa8] sm:$0xff]
        %v3262 = vld [vmem:[%s2860 + $0xb0] sm:$0xff]
        %v3263 = vld [vmem:[%s2860 + $0xc8] sm:$0xff]
        %v3264 = vld [vmem:[%s2860 + $0xd0] sm:$0xff]
        %v3265 = vld [vmem:[%s2860 + $0xe8] sm:$0xff]
        %v3266 = vld [vmem:[%s2860 + $0xf0] sm:$0xff]
        %v3267 = vld [vmem:[%s2860 + $0x108] sm:$0xff]
        %v3268 = vld [vmem:[%s2860 + $0x110] sm:$0xff]
        %v3269 = vld [vmem:[%s2860 + $0x128] sm:$0xff]
        %v3270 = vld [vmem:[%s2860 + $0x130] sm:$0xff]
        %v3271 = vld [vmem:[%s2860 + $0x148] sm:$0xff]
        %v3272 = vld [vmem:[%s2860 + $0x150] sm:$0xff]
        %v3273 = vld [vmem:[%s2860 + $0x168] sm:$0xff]
        %v3274 = vld [vmem:[%s2860 + $0x170] sm:$0xff]
        %v3275 = vld [vmem:[%s2860 + $0x188] sm:$0xff]
        %v3276 = vld [vmem:[%s2860 + $0x190] sm:$0xff]
        %v3277 = vld [vmem:[%s2860 + $0x1a8] sm:$0xff]
        %v3278 = vld [vmem:[%s2860 + $0x1b0] sm:$0xff]
        %v3279 = vld [vmem:[%s2860 + $0x1c8] sm:$0xff]
        %v3280 = vld [vmem:[%s2860 + $0x1d0] sm:$0xff]
        %v3281 = vld [vmem:[%s2860 + $0x1e8] sm:$0xff]
        %v3282 = vld [vmem:[%s2860 + $0x1f0] sm:$0xff]
        %s3283 = scalar_lea.vmem %s1, 28
        %v3284 = vld [vmem:[%s3283] sm:$0x7]
        %v3286 = vsel %vm477, %v3251, 0
        %v3289 = vsel %vm477, %v3252, 0
        %v3292 = vsel %vm477, %v3253, 0
        %v3295 = vsel %vm477, %v3254, 0
        %v3298 = vsel %vm477, %v3255, 0
        %v3301 = vsel %vm477, %v3256, 0
        %v3304 = vsel %vm477, %v3257, 0
        %v3307 = vsel %vm477, %v3258, 0
        %v3310 = vsel %vm477, %v3259, 0
        %v3313 = vsel %vm477, %v3260, 0
        %v3316 = vsel %vm477, %v3261, 0
        %v3319 = vsel %vm477, %v3262, 0
        %v3322 = vsel %vm477, %v3263, 0
        %v3325 = vsel %vm477, %v3264, 0
        %v3328 = vsel %vm477, %v3265, 0
        %v3331 = vsel %vm477, %v3266, 0
        %v3334 = vsel %vm477, %v3267, 0
        %v3337 = vsel %vm477, %v3268, 0
        %v3340 = vsel %vm477, %v3269, 0
        %v3343 = vsel %vm477, %v3270, 0
        %v3346 = vsel %vm477, %v3271, 0
        %v3349 = vsel %vm477, %v3272, 0
        %v3352 = vsel %vm477, %v3273, 0
        %v3355 = vsel %vm477, %v3274, 0
        %v3358 = vsel %vm477, %v3275, 0
        %v3361 = vsel %vm477, %v3276, 0
        %v3364 = vsel %vm477, %v3277, 0
        %v3367 = vsel %vm477, %v3278, 0
        %v3370 = vsel %vm477, %v3279, 0
        %v3373 = vsel %vm477, %v3280, 0
        %v3376 = vsel %vm477, %v3281, 0
        %v3379 = vsel %vm477, %v3282, 0
        %v3382 = vsel %vm747, %v3284, 0
        %3384 = vmatprep.subr.mxu0 0.0
        %3385 = vmatpush1.msra.mxu0 %v3382
        %3386 = vmatprep.subr.mxu0 0.0
        %3387 = vmatpush1.msra.mxu0 0.0
        %3388 = vmatprep.subr.mxu0 0.0
        %3389 = vmatpush1.msra.mxu0 0.0
        %3390 = vmatprep.subr.mxu0 0.0
        %3391 = vmatpush1.msra.mxu0 0.0
        %3392 = vmatprep.subr.mxu0 0.0
        %3393 = vmatpush1.msra.mxu0 0.0
        %3394 = vmatprep.subr.mxu0 0.0
        %3395 = vmatpush1.msra.mxu0 0.0
        %3396 = vmatprep.subr.mxu0 0.0
        %3397 = vmatpush1.msra.mxu0 0.0
        %3398 = vmatprep.subr.mxu0 0.0
        %3399 = vmatpush1.msra.mxu0 0.0
        %3400 = vmatprep.subr.mxu0 0.0
        %3401 = vmatpush1.msra.mxu0 0.0
        %3402 = vmatprep.subr.mxu0 0.0
        %3403 = vmatpush1.msra.mxu0 0.0
        %3404 = vmatprep.subr.mxu0 0.0
        %3405 = vmatpush1.msra.mxu0 0.0
        %3406 = vmatprep.subr.mxu0 0.0
        %3407 = vmatpush1.msra.mxu0 0.0
        %3408 = vmatprep.subr.mxu0 0.0
        %3409 = vmatpush1.msra.mxu0 0.0
        %3410 = vmatprep.subr.mxu0 0.0
        %3411 = vmatpush1.msra.mxu0 0.0
        %3412 = vmatprep.subr.mxu0 0.0
        %3413 = vmatpush1.msra.mxu0 0.0
        %3414 = vmatprep.subr.mxu0 0.0
        %3415 = vmatpush1.msra.mxu0 0.0
        %3416 = vmatprep.subr.mxu0 0.0
        %3417 = vmatpush1.msra.mxu0 0.0
        %3418 = vmatprep.subr.mxu0 0.0
        %3419 = vmatpush1.msra.mxu0 0.0
        %3420 = vmatprep.subr.mxu0 0.0
        %3421 = vmatpush1.msra.mxu0 0.0
        %3422 = vmatprep.subr.mxu0 0.0
        %3423 = vmatpush1.msra.mxu0 0.0
        %3424 = vmatprep.subr.mxu0 0.0
        %3425 = vmatpush1.msra.mxu0 0.0
        %3426 = vmatprep.subr.mxu0 0.0
        %3427 = vmatpush1.msra.mxu0 0.0
        %3428 = vmatprep.subr.mxu0 0.0
        %3429 = vmatpush1.msra.mxu0 0.0
        %3430 = vmatprep.subr.mxu0 0.0
        %3431 = vmatpush1.msra.mxu0 0.0
        %3432 = vmatprep.subr.mxu0 0.0
        %3433 = vmatpush1.msra.mxu0 0.0
        %3434 = vmatprep.subr.mxu0 0.0
        %3435 = vmatpush1.msra.mxu0 0.0
        %3436 = vmatprep.subr.mxu0 0.0
        %3437 = vmatpush1.msra.mxu0 0.0
        %3438 = vmatprep.subr.mxu0 0.0
        %3439 = vmatpush1.msra.mxu0 0.0
        %3440 = vmatprep.subr.mxu0 0.0
        %3441 = vmatpush1.msra.mxu0 0.0
        %3442 = vmatprep.subr.mxu0 0.0
        %3443 = vmatpush1.msra.mxu0 0.0
        %3444 = vmatprep.subr.mxu0 0.0
        %3445 = vmatpush1.msra.mxu0 0.0
        %3446 = vmatprep.subr.mxu0 0.0
        %3447 = vmatpush1.msra.mxu0 0.0
        %3448 = vmatprep.mubr.f32.mxu0 0.0
        %3449 = vmatmul.mubr.f32.gmra.mrb[0].mxu0 %v3286
        %v3450 = vpop.f32.mrb[0].mxu0
        %v3451 = vadd.f32 0.0, %v3450
        %v3452 = vpop.f32.mrb[0].mxu0
        %3453 = vmatprep.mubr.f32.mxu0 0.0
        %3454 = vmatmul.mubr.f32.gmra.mrb[0].mxu0 %v3289
        %v3455 = vpop.f32.mrb[0].mxu0
        %v3456 = vadd.f32 0.0, %v3455
        %v3457 = vpop.f32.mrb[0].mxu0
        %3458 = vmatprep.mubr.f32.mxu0 0.0
        %3459 = vmatmul.mubr.f32.gmra.mrb[0].mxu0 %v3292
        %v3460 = vpop.f32.mrb[0].mxu0
        %v3461 = vadd.f32 0.0, %v3460
        %v3462 = vpop.f32.mrb[0].mxu0
        %3463 = vmatprep.mubr.f32.mxu0 0.0
        %3464 = vmatmul.mubr.f32.gmra.mrb[0].mxu0 %v3295
        %v3465 = vpop.f32.mrb[0].mxu0
        %v3466 = vadd.f32 0.0, %v3465
        %v3467 = vpop.f32.mrb[0].mxu0
        %3468 = vmatprep.mubr.f32.mxu0 0.0
        %3469 = vmatmul.mubr.f32.gmra.mrb[0].mxu0 %v3298
        %v3470 = vpop.f32.mrb[0].mxu0
        %v3471 = vadd.f32 0.0, %v3470
        %v3472 = vpop.f32.mrb[0].mxu0
        %3473 = vmatprep.mubr.f32.mxu0 0.0
        %3474 = vmatmul.mubr.f32.gmra.mrb[0].mxu0 %v3301
        %v3475 = vpop.f32.mrb[0].mxu0
        %v3476 = vadd.f32 0.0, %v3475
        %v3477 = vpop.f32.mrb[0].mxu0
        %3478 = vmatprep.mubr.f32.mxu0 0.0
        %3479 = vmatmul.mubr.f32.gmra.mrb[0].mxu0 %v3304
        %v3480 = vpop.f32.mrb[0].mxu0
        %v3481 = vadd.f32 0.0, %v3480
        %v3482 = vpop.f32.mrb[0].mxu0
        %3483 = vmatprep.mubr.f32.mxu0 0.0
        %3484 = vmatmul.mubr.f32.gmra.mrb[0].mxu0 %v3307
        %v3485 = vpop.f32.mrb[0].mxu0
        %v3486 = vadd.f32 0.0, %v3485
        %v3487 = vpop.f32.mrb[0].mxu0
        %3488 = vmatprep.mubr.f32.mxu0 0.0
        %3489 = vmatmul.mubr.f32.gmra.mrb[0].mxu0 %v3310
        %v3490 = vpop.f32.mrb[0].mxu0
        %v3491 = vadd.f32 0.0, %v3490
        %v3492 = vpop.f32.mrb[0].mxu0
        %3493 = vmatprep.mubr.f32.mxu0 0.0
        %3494 = vmatmul.mubr.f32.gmra.mrb[0].mxu0 %v3313
        %v3495 = vpop.f32.mrb[0].mxu0
        %v3496 = vadd.f32 0.0, %v3495
        %v3497 = vpop.f32.mrb[0].mxu0
        %3498 = vmatprep.mubr.f32.mxu0 0.0
        %3499 = vmatmul.mubr.f32.gmra.mrb[0].mxu0 %v3316
        %v3500 = vpop.f32.mrb[0].mxu0
        %v3501 = vadd.f32 0.0, %v3500
        %v3502 = vpop.f32.mrb[0].mxu0
        %3503 = vmatprep.mubr.f32.mxu0 0.0
        %3504 = vmatmul.mubr.f32.gmra.mrb[0].mxu0 %v3319
        %v3505 = vpop.f32.mrb[0].mxu0
        %v3506 = vadd.f32 0.0, %v3505
        %v3507 = vpop.f32.mrb[0].mxu0
        %3508 = vmatprep.mubr.f32.mxu0 0.0
        %3509 = vmatmul.mubr.f32.gmra.mrb[0].mxu0 %v3322
        %v3510 = vpop.f32.mrb[0].mxu0
        %v3511 = vadd.f32 0.0, %v3510
        %v3512 = vpop.f32.mrb[0].mxu0
        %3513 = vmatprep.mubr.f32.mxu0 0.0
        %3514 = vmatmul.mubr.f32.gmra.mrb[0].mxu0 %v3325
        %v3515 = vpop.f32.mrb[0].mxu0
        %v3516 = vadd.f32 0.0, %v3515
        %v3517 = vpop.f32.mrb[0].mxu0
        %3518 = vmatprep.mubr.f32.mxu0 0.0
        %3519 = vmatmul.mubr.f32.gmra.mrb[0].mxu0 %v3328
        %v3520 = vpop.f32.mrb[0].mxu0
        %v3521 = vadd.f32 0.0, %v3520
        %v3522 = vpop.f32.mrb[0].mxu0
        %3523 = vmatprep.mubr.f32.mxu0 0.0
        %3524 = vmatmul.mubr.f32.gmra.mrb[0].mxu0 %v3331
        %v3525 = vpop.f32.mrb[0].mxu0
        %v3526 = vadd.f32 0.0, %v3525
        %v3527 = vpop.f32.mrb[0].mxu0
        %3528 = vmatprep.mubr.f32.mxu0 0.0
        %3529 = vmatmul.mubr.f32.gmra.mrb[0].mxu0 %v3334
        %v3530 = vpop.f32.mrb[0].mxu0
        %v3531 = vadd.f32 0.0, %v3530
        %v3532 = vpop.f32.mrb[0].mxu0
        %3533 = vmatprep.mubr.f32.mxu0 0.0
        %3534 = vmatmul.mubr.f32.gmra.mrb[0].mxu0 %v3337
        %v3535 = vpop.f32.mrb[0].mxu0
        %v3536 = vadd.f32 0.0, %v3535
        %v3537 = vpop.f32.mrb[0].mxu0
        %3538 = vmatprep.mubr.f32.mxu0 0.0
        %3539 = vmatmul.mubr.f32.gmra.mrb[0].mxu0 %v3340
        %v3540 = vpop.f32.mrb[0].mxu0
        %v3541 = vadd.f32 0.0, %v3540
        %v3542 = vpop.f32.mrb[0].mxu0
        %3543 = vmatprep.mubr.f32.mxu0 0.0
        %3544 = vmatmul.mubr.f32.gmra.mrb[0].mxu0 %v3343
        %v3545 = vpop.f32.mrb[0].mxu0
        %v3546 = vadd.f32 0.0, %v3545
        %v3547 = vpop.f32.mrb[0].mxu0
        %3548 = vmatprep.mubr.f32.mxu0 0.0
        %3549 = vmatmul.mubr.f32.gmra.mrb[0].mxu0 %v3346
        %v3550 = vpop.f32.mrb[0].mxu0
        %v3551 = vadd.f32 0.0, %v3550
        %v3552 = vpop.f32.mrb[0].mxu0
        %3553 = vmatprep.mubr.f32.mxu0 0.0
        %3554 = vmatmul.mubr.f32.gmra.mrb[0].mxu0 %v3349
        %v3555 = vpop.f32.mrb[0].mxu0
        %v3556 = vadd.f32 0.0, %v3555
        %v3557 = vpop.f32.mrb[0].mxu0
        %3558 = vmatprep.mubr.f32.mxu0 0.0
        %3559 = vmatmul.mubr.f32.gmra.mrb[0].mxu0 %v3352
        %v3560 = vpop.f32.mrb[0].mxu0
        %v3561 = vadd.f32 0.0, %v3560
        %v3562 = vpop.f32.mrb[0].mxu0
        %3563 = vmatprep.mubr.f32.mxu0 0.0
        %3564 = vmatmul.mubr.f32.gmra.mrb[0].mxu0 %v3355
        %v3565 = vpop.f32.mrb[0].mxu0
        %v3566 = vadd.f32 0.0, %v3565
        %v3567 = vpop.f32.mrb[0].mxu0
        %3568 = vmatprep.mubr.f32.mxu0 0.0
        %3569 = vmatmul.mubr.f32.gmra.mrb[0].mxu0 %v3358
        %v3570 = vpop.f32.mrb[0].mxu0
        %v3571 = vadd.f32 0.0, %v3570
        %v3572 = vpop.f32.mrb[0].mxu0
        %3573 = vmatprep.mubr.f32.mxu0 0.0
        %3574 = vmatmul.mubr.f32.gmra.mrb[0].mxu0 %v3361
        %v3575 = vpop.f32.mrb[0].mxu0
        %v3576 = vadd.f32 0.0, %v3575
        %v3577 = vpop.f32.mrb[0].mxu0
        %3578 = vmatprep.mubr.f32.mxu0 0.0
        %3579 = vmatmul.mubr.f32.gmra.mrb[0].mxu0 %v3364
        %v3580 = vpop.f32.mrb[0].mxu0
        %v3581 = vadd.f32 0.0, %v3580
        %v3582 = vpop.f32.mrb[0].mxu0
        %3583 = vmatprep.mubr.f32.mxu0 0.0
        %3584 = vmatmul.mubr.f32.gmra.mrb[0].mxu0 %v3367
        %v3585 = vpop.f32.mrb[0].mxu0
        %v3586 = vadd.f32 0.0, %v3585
        %v3587 = vpop.f32.mrb[0].mxu0
        %3588 = vmatprep.mubr.f32.mxu0 0.0
        %3589 = vmatmul.mubr.f32.gmra.mrb[0].mxu0 %v3370
        %v3590 = vpop.f32.mrb[0].mxu0
        %v3591 = vadd.f32 0.0, %v3590
        %v3592 = vpop.f32.mrb[0].mxu0
        %3593 = vmatprep.mubr.f32.mxu0 0.0
        %3594 = vmatmul.mubr.f32.gmra.mrb[0].mxu0 %v3373
        %v3595 = vpop.f32.mrb[0].mxu0
        %v3596 = vadd.f32 0.0, %v3595
        %v3597 = vpop.f32.mrb[0].mxu0
        %3598 = vmatprep.mubr.f32.mxu0 0.0
        %3599 = vmatmul.mubr.f32.gmra.mrb[0].mxu0 %v3376
        %v3600 = vpop.f32.mrb[0].mxu0
        %v3601 = vadd.f32 0.0, %v3600
        %v3602 = vpop.f32.mrb[0].mxu0
        %3603 = vmatprep.mubr.f32.mxu0 0.0
        %3604 = vmatmul.mubr.f32.gmra.mrb[0].mxu0 %v3379
        %v3605 = vpop.f32.mrb[0].mxu0
        %v3606 = vadd.f32 0.0, %v3605
        %v3607 = vpop.f32.mrb[0].mxu0
        %3608 = vdwg.mxu0
        %v3609 = vadd.f32 %v3219, %v3451
        %v3610 = vadd.f32 %v3220, %v3456
        %v3611 = vadd.f32 %v3221, %v3461
        %v3612 = vadd.f32 %v3222, %v3466
        %v3613 = vadd.f32 %v3223, %v3471
        %v3614 = vadd.f32 %v3224, %v3476
        %v3615 = vadd.f32 %v3225, %v3481
        %v3616 = vadd.f32 %v3226, %v3486
        %v3617 = vadd.f32 %v3227, %v3491
        %v3618 = vadd.f32 %v3228, %v3496
        %v3619 = vadd.f32 %v3229, %v3501
        %v3620 = vadd.f32 %v3230, %v3506
        %v3621 = vadd.f32 %v3231, %v3511
        %v3622 = vadd.f32 %v3232, %v3516
        %v3623 = vadd.f32 %v3233, %v3521
        %v3624 = vadd.f32 %v3234, %v3526
        %v3625 = vadd.f32 %v3235, %v3531
        %v3626 = vadd.f32 %v3236, %v3536
        %v3627 = vadd.f32 %v3237, %v3541
        %v3628 = vadd.f32 %v3238, %v3546
        %v3629 = vadd.f32 %v3239, %v3551
        %v3630 = vadd.f32 %v3240, %v3556
        %v3631 = vadd.f32 %v3241, %v3561
        %v3632 = vadd.f32 %v3242, %v3566
        %v3633 = vadd.f32 %v3243, %v3571
        %v3634 = vadd.f32 %v3244, %v3576
        %v3635 = vadd.f32 %v3245, %v3581
        %v3636 = vadd.f32 %v3246, %v3586
        %v3637 = vadd.f32 %v3247, %v3591
        %v3638 = vadd.f32 %v3248, %v3596
        %v3639 = vadd.f32 %v3249, %v3601
        %v3640 = vadd.f32 %v3250, %v3606
        %v3641 = vld [vmem:[%s2860 + $0x9] sm:$0xff]
        %v3642 = vld [vmem:[%s2860 + $0x11] sm:$0xff]
        %v3643 = vld [vmem:[%s2860 + $0x29] sm:$0xff]
        %v3644 = vld [vmem:[%s2860 + $0x31] sm:$0xff]
        %v3645 = vld [vmem:[%s2860 + $0x49] sm:$0xff]
        %v3646 = vld [vmem:[%s2860 + $0x51] sm:$0xff]
        %v3647 = vld [vmem:[%s2860 + $0x69] sm:$0xff]
        %v3648 = vld [vmem:[%s2860 + $0x71] sm:$0xff]
        %v3649 = vld [vmem:[%s2860 + $0x89] sm:$0xff]
        %v3650 = vld [vmem:[%s2860 + $0x91] sm:$0xff]
        %v3651 = vld [vmem:[%s2860 + $0xa9] sm:$0xff]
        %v3652 = vld [vmem:[%s2860 + $0xb1] sm:$0xff]
        %v3653 = vld [vmem:[%s2860 + $0xc9] sm:$0xff]
        %v3654 = vld [vmem:[%s2860 + $0xd1] sm:$0xff]
        %v3655 = vld [vmem:[%s2860 + $0xe9] sm:$0xff]
        %v3656 = vld [vmem:[%s2860 + $0xf1] sm:$0xff]
        %v3657 = vld [vmem:[%s2860 + $0x109] sm:$0xff]
        %v3658 = vld [vmem:[%s2860 + $0x111] sm:$0xff]
        %v3659 = vld [vmem:[%s2860 + $0x129] sm:$0xff]
        %v3660 = vld [vmem:[%s2860 + $0x131] sm:$0xff]
        %v3661 = vld [vmem:[%s2860 + $0x149] sm:$0xff]
        %v3662 = vld [vmem:[%s2860 + $0x151] sm:$0xff]
        %v3663 = vld [vmem:[%s2860 + $0x169] sm:$0xff]
        %v3664 = vld [vmem:[%s2860 + $0x171] sm:$0xff]
        %v3665 = vld [vmem:[%s2860 + $0x189] sm:$0xff]
        %v3666 = vld [vmem:[%s2860 + $0x191] sm:$0xff]
        %v3667 = vld [vmem:[%s2860 + $0x1a9] sm:$0xff]
        %v3668 = vld [vmem:[%s2860 + $0x1b1] sm:$0xff]
        %v3669 = vld [vmem:[%s2860 + $0x1c9] sm:$0xff]
        %v3670 = vld [vmem:[%s2860 + $0x1d1] sm:$0xff]
        %v3671 = vld [vmem:[%s2860 + $0x1e9] sm:$0xff]
        %v3672 = vld [vmem:[%s2860 + $0x1f1] sm:$0xff]
        %s3673 = scalar_lea.vmem %s1, 32
        %v3674 = vld [vmem:[%s3673] sm:$0x7]
        %v3676 = vsel %vm477, %v3641, 0
        %v3679 = vsel %vm477, %v3642, 0
        %v3682 = vsel %vm477, %v3643, 0
        %v3685 = vsel %vm477, %v3644, 0
        %v3688 = vsel %vm477, %v3645, 0
        %v3691 = vsel %vm477, %v3646, 0
        %v3694 = vsel %vm477, %v3647, 0
        %v3697 = vsel %vm477, %v3648, 0
        %v3700 = vsel %vm477, %v3649, 0
        %v3703 = vsel %vm477, %v3650, 0
        %v3706 = vsel %vm477, %v3651, 0
        %v3709 = vsel %vm477, %v3652, 0
        %v3712 = vsel %vm477, %v3653, 0
        %v3715 = vsel %vm477, %v3654, 0
        %v3718 = vsel %vm477, %v3655, 0
        %v3721 = vsel %vm477, %v3656, 0
        %v3724 = vsel %vm477, %v3657, 0
        %v3727 = vsel %vm477, %v3658, 0
        %v3730 = vsel %vm477, %v3659, 0
        %v3733 = vsel %vm477, %v3660, 0
        %v3736 = vsel %vm477, %v3661, 0
        %v3739 = vsel %vm477, %v3662, 0
        %v3742 = vsel %vm477, %v3663, 0
        %v3745 = vsel %vm477, %v3664, 0
        %v3748 = vsel %vm477, %v3665, 0
        %v3751 = vsel %vm477, %v3666, 0
        %v3754 = vsel %vm477, %v3667, 0
        %v3757 = vsel %vm477, %v3668, 0
        %v3760 = vsel %vm477, %v3669, 0
        %v3763 = vsel %vm477, %v3670, 0
        %v3766 = vsel %vm477, %v3671, 0
        %v3769 = vsel %vm477, %v3672, 0
        %v3772 = vsel %vm747, %v3674, 0
        %3774 = vmatprep.subr.mxu0 0.0
        %3775 = vmatpush1.msra.mxu0 %v3772
        %3776 = vmatprep.subr.mxu0 0.0
        %3777 = vmatpush1.msra.mxu0 0.0
        %3778 = vmatprep.subr.mxu0 0.0
        %3779 = vmatpush1.msra.mxu0 0.0
        %3780 = vmatprep.subr.mxu0 0.0
        %3781 = vmatpush1.msra.mxu0 0.0
        %3782 = vmatprep.subr.mxu0 0.0
        %3783 = vmatpush1.msra.mxu0 0.0
        %3784 = vmatprep.subr.mxu0 0.0
        %3785 = vmatpush1.msra.mxu0 0.0
        %3786 = vmatprep.subr.mxu0 0.0
        %3787 = vmatpush1.msra.mxu0 0.0
        %3788 = vmatprep.subr.mxu0 0.0
        %3789 = vmatpush1.msra.mxu0 0.0
        %3790 = vmatprep.subr.mxu0 0.0
        %3791 = vmatpush1.msra.mxu0 0.0
        %3792 = vmatprep.subr.mxu0 0.0
        %3793 = vmatpush1.msra.mxu0 0.0
        %3794 = vmatprep.subr.mxu0 0.0
        %3795 = vmatpush1.msra.mxu0 0.0
        %3796 = vmatprep.subr.mxu0 0.0
        %3797 = vmatpush1.msra.mxu0 0.0
        %3798 = vmatprep.subr.mxu0 0.0
        %3799 = vmatpush1.msra.mxu0 0.0
        %3800 = vmatprep.subr.mxu0 0.0
        %3801 = vmatpush1.msra.mxu0 0.0
        %3802 = vmatprep.subr.mxu0 0.0
        %3803 = vmatpush1.msra.mxu0 0.0
        %3804 = vmatprep.subr.mxu0 0.0
        %3805 = vmatpush1.msra.mxu0 0.0
        %3806 = vmatprep.subr.mxu0 0.0
        %3807 = vmatpush1.msra.mxu0 0.0
        %3808 = vmatprep.subr.mxu0 0.0
        %3809 = vmatpush1.msra.mxu0 0.0
        %3810 = vmatprep.subr.mxu0 0.0
        %3811 = vmatpush1.msra.mxu0 0.0
        %3812 = vmatprep.subr.mxu0 0.0
        %3813 = vmatpush1.msra.mxu0 0.0
        %3814 = vmatprep.subr.mxu0 0.0
        %3815 = vmatpush1.msra.mxu0 0.0
        %3816 = vmatprep.subr.mxu0 0.0
        %3817 = vmatpush1.msra.mxu0 0.0
        %3818 = vmatprep.subr.mxu0 0.0
        %3819 = vmatpush1.msra.mxu0 0.0
        %3820 = vmatprep.subr.mxu0 0.0
        %3821 = vmatpush1.msra.mxu0 0.0
        %3822 = vmatprep.subr.mxu0 0.0
        %3823 = vmatpush1.msra.mxu0 0.0
        %3824 = vmatprep.subr.mxu0 0.0
        %3825 = vmatpush1.msra.mxu0 0.0
        %3826 = vmatprep.subr.mxu0 0.0
        %3827 = vmatpush1.msra.mxu0 0.0
        %3828 = vmatprep.subr.mxu0 0.0
        %3829 = vmatpush1.msra.mxu0 0.0
        %3830 = vmatprep.subr.mxu0 0.0
        %3831 = vmatpush1.msra.mxu0 0.0
        %3832 = vmatprep.subr.mxu0 0.0
        %3833 = vmatpush1.msra.mxu0 0.0
        %3834 = vmatprep.subr.mxu0 0.0
        %3835 = vmatpush1.msra.mxu0 0.0
        %3836 = vmatprep.subr.mxu0 0.0
        %3837 = vmatpush1.msra.mxu0 0.0
        %3838 = vmatprep.mubr.f32.mxu0 0.0
        %3839 = vmatmul.mubr.f32.gmra.mrb[0].mxu0 %v3676
        %v3840 = vpop.f32.mrb[0].mxu0
        %v3841 = vadd.f32 0.0, %v3840
        %v3842 = vpop.f32.mrb[0].mxu0
        %3843 = vmatprep.mubr.f32.mxu0 0.0
        %3844 = vmatmul.mubr.f32.gmra.mrb[0].mxu0 %v3679
        %v3845 = vpop.f32.mrb[0].mxu0
        %v3846 = vadd.f32 0.0, %v3845
        %v3847 = vpop.f32.mrb[0].mxu0
        %3848 = vmatprep.mubr.f32.mxu0 0.0
        %3849 = vmatmul.mubr.f32.gmra.mrb[0].mxu0 %v3682
        %v3850 = vpop.f32.mrb[0].mxu0
        %v3851 = vadd.f32 0.0, %v3850
        %v3852 = vpop.f32.mrb[0].mxu0
        %3853 = vmatprep.mubr.f32.mxu0 0.0
        %3854 = vmatmul.mubr.f32.gmra.mrb[0].mxu0 %v3685
        %v3855 = vpop.f32.mrb[0].mxu0
        %v3856 = vadd.f32 0.0, %v3855
        %v3857 = vpop.f32.mrb[0].mxu0
        %3858 = vmatprep.mubr.f32.mxu0 0.0
        %3859 = vmatmul.mubr.f32.gmra.mrb[0].mxu0 %v3688
        %v3860 = vpop.f32.mrb[0].mxu0
        %v3861 = vadd.f32 0.0, %v3860
        %v3862 = vpop.f32.mrb[0].mxu0
        %3863 = vmatprep.mubr.f32.mxu0 0.0
        %3864 = vmatmul.mubr.f32.gmra.mrb[0].mxu0 %v3691
        %v3865 = vpop.f32.mrb[0].mxu0
        %v3866 = vadd.f32 0.0, %v3865
        %v3867 = vpop.f32.mrb[0].mxu0
        %3868 = vmatprep.mubr.f32.mxu0 0.0
        %3869 = vmatmul.mubr.f32.gmra.mrb[0].mxu0 %v3694
        %v3870 = vpop.f32.mrb[0].mxu0
        %v3871 = vadd.f32 0.0, %v3870
        %v3872 = vpop.f32.mrb[0].mxu0
        %3873 = vmatprep.mubr.f32.mxu0 0.0
        %3874 = vmatmul.mubr.f32.gmra.mrb[0].mxu0 %v3697
        %v3875 = vpop.f32.mrb[0].mxu0
        %v3876 = vadd.f32 0.0, %v3875
        %v3877 = vpop.f32.mrb[0].mxu0
        %3878 = vmatprep.mubr.f32.mxu0 0.0
        %3879 = vmatmul.mubr.f32.gmra.mrb[0].mxu0 %v3700
        %v3880 = vpop.f32.mrb[0].mxu0
        %v3881 = vadd.f32 0.0, %v3880
        %v3882 = vpop.f32.mrb[0].mxu0
        %3883 = vmatprep.mubr.f32.mxu0 0.0
        %3884 = vmatmul.mubr.f32.gmra.mrb[0].mxu0 %v3703
        %v3885 = vpop.f32.mrb[0].mxu0
        %v3886 = vadd.f32 0.0, %v3885
        %v3887 = vpop.f32.mrb[0].mxu0
        %3888 = vmatprep.mubr.f32.mxu0 0.0
        %3889 = vmatmul.mubr.f32.gmra.mrb[0].mxu0 %v3706
        %v3890 = vpop.f32.mrb[0].mxu0
        %v3891 = vadd.f32 0.0, %v3890
        %v3892 = vpop.f32.mrb[0].mxu0
        %3893 = vmatprep.mubr.f32.mxu0 0.0
        %3894 = vmatmul.mubr.f32.gmra.mrb[0].mxu0 %v3709
        %v3895 = vpop.f32.mrb[0].mxu0
        %v3896 = vadd.f32 0.0, %v3895
        %v3897 = vpop.f32.mrb[0].mxu0
        %3898 = vmatprep.mubr.f32.mxu0 0.0
        %3899 = vmatmul.mubr.f32.gmra.mrb[0].mxu0 %v3712
        %v3900 = vpop.f32.mrb[0].mxu0
        %v3901 = vadd.f32 0.0, %v3900
        %v3902 = vpop.f32.mrb[0].mxu0
        %3903 = vmatprep.mubr.f32.mxu0 0.0
        %3904 = vmatmul.mubr.f32.gmra.mrb[0].mxu0 %v3715
        %v3905 = vpop.f32.mrb[0].mxu0
        %v3906 = vadd.f32 0.0, %v3905
        %v3907 = vpop.f32.mrb[0].mxu0
        %3908 = vmatprep.mubr.f32.mxu0 0.0
        %3909 = vmatmul.mubr.f32.gmra.mrb[0].mxu0 %v3718
        %v3910 = vpop.f32.mrb[0].mxu0
        %v3911 = vadd.f32 0.0, %v3910
        %v3912 = vpop.f32.mrb[0].mxu0
        %3913 = vmatprep.mubr.f32.mxu0 0.0
        %3914 = vmatmul.mubr.f32.gmra.mrb[0].mxu0 %v3721
        %v3915 = vpop.f32.mrb[0].mxu0
        %v3916 = vadd.f32 0.0, %v3915
        %v3917 = vpop.f32.mrb[0].mxu0
        %3918 = vmatprep.mubr.f32.mxu0 0.0
        %3919 = vmatmul.mubr.f32.gmra.mrb[0].mxu0 %v3724
        %v3920 = vpop.f32.mrb[0].mxu0
        %v3921 = vadd.f32 0.0, %v3920
        %v3922 = vpop.f32.mrb[0].mxu0
        %3923 = vmatprep.mubr.f32.mxu0 0.0
        %3924 = vmatmul.mubr.f32.gmra.mrb[0].mxu0 %v3727
        %v3925 = vpop.f32.mrb[0].mxu0
        %v3926 = vadd.f32 0.0, %v3925
        %v3927 = vpop.f32.mrb[0].mxu0
        %3928 = vmatprep.mubr.f32.mxu0 0.0
        %3929 = vmatmul.mubr.f32.gmra.mrb[0].mxu0 %v3730
        %v3930 = vpop.f32.mrb[0].mxu0
        %v3931 = vadd.f32 0.0, %v3930
        %v3932 = vpop.f32.mrb[0].mxu0
        %3933 = vmatprep.mubr.f32.mxu0 0.0
        %3934 = vmatmul.mubr.f32.gmra.mrb[0].mxu0 %v3733
        %v3935 = vpop.f32.mrb[0].mxu0
        %v3936 = vadd.f32 0.0, %v3935
        %v3937 = vpop.f32.mrb[0].mxu0
        %3938 = vmatprep.mubr.f32.mxu0 0.0
        %3939 = vmatmul.mubr.f32.gmra.mrb[0].mxu0 %v3736
        %v3940 = vpop.f32.mrb[0].mxu0
        %v3941 = vadd.f32 0.0, %v3940
        %v3942 = vpop.f32.mrb[0].mxu0
        %3943 = vmatprep.mubr.f32.mxu0 0.0
        %3944 = vmatmul.mubr.f32.gmra.mrb[0].mxu0 %v3739
        %v3945 = vpop.f32.mrb[0].mxu0
        %v3946 = vadd.f32 0.0, %v3945
        %v3947 = vpop.f32.mrb[0].mxu0
        %3948 = vmatprep.mubr.f32.mxu0 0.0
        %3949 = vmatmul.mubr.f32.gmra.mrb[0].mxu0 %v3742
        %v3950 = vpop.f32.mrb[0].mxu0
        %v3951 = vadd.f32 0.0, %v3950
        %v3952 = vpop.f32.mrb[0].mxu0
        %3953 = vmatprep.mubr.f32.mxu0 0.0
        %3954 = vmatmul.mubr.f32.gmra.mrb[0].mxu0 %v3745
        %v3955 = vpop.f32.mrb[0].mxu0
        %v3956 = vadd.f32 0.0, %v3955
        %v3957 = vpop.f32.mrb[0].mxu0
        %3958 = vmatprep.mubr.f32.mxu0 0.0
        %3959 = vmatmul.mubr.f32.gmra.mrb[0].mxu0 %v3748
        %v3960 = vpop.f32.mrb[0].mxu0
        %v3961 = vadd.f32 0.0, %v3960
        %v3962 = vpop.f32.mrb[0].mxu0
        %3963 = vmatprep.mubr.f32.mxu0 0.0
        %3964 = vmatmul.mubr.f32.gmra.mrb[0].mxu0 %v3751
        %v3965 = vpop.f32.mrb[0].mxu0
        %v3966 = vadd.f32 0.0, %v3965
        %v3967 = vpop.f32.mrb[0].mxu0
        %3968 = vmatprep.mubr.f32.mxu0 0.0
        %3969 = vmatmul.mubr.f32.gmra.mrb[0].mxu0 %v3754
        %v3970 = vpop.f32.mrb[0].mxu0
        %v3971 = vadd.f32 0.0, %v3970
        %v3972 = vpop.f32.mrb[0].mxu0
        %3973 = vmatprep.mubr.f32.mxu0 0.0
        %3974 = vmatmul.mubr.f32.gmra.mrb[0].mxu0 %v3757
        %v3975 = vpop.f32.mrb[0].mxu0
        %v3976 = vadd.f32 0.0, %v3975
        %v3977 = vpop.f32.mrb[0].mxu0
        %3978 = vmatprep.mubr.f32.mxu0 0.0
        %3979 = vmatmul.mubr.f32.gmra.mrb[0].mxu0 %v3760
        %v3980 = vpop.f32.mrb[0].mxu0
        %v3981 = vadd.f32 0.0, %v3980
        %v3982 = vpop.f32.mrb[0].mxu0
        %3983 = vmatprep.mubr.f32.mxu0 0.0
        %3984 = vmatmul.mubr.f32.gmra.mrb[0].mxu0 %v3763
        %v3985 = vpop.f32.mrb[0].mxu0
        %v3986 = vadd.f32 0.0, %v3985
        %v3987 = vpop.f32.mrb[0].mxu0
        %3988 = vmatprep.mubr.f32.mxu0 0.0
        %3989 = vmatmul.mubr.f32.gmra.mrb[0].mxu0 %v3766
        %v3990 = vpop.f32.mrb[0].mxu0
        %v3991 = vadd.f32 0.0, %v3990
        %v3992 = vpop.f32.mrb[0].mxu0
        %3993 = vmatprep.mubr.f32.mxu0 0.0
        %3994 = vmatmul.mubr.f32.gmra.mrb[0].mxu0 %v3769
        %v3995 = vpop.f32.mrb[0].mxu0
        %v3996 = vadd.f32 0.0, %v3995
        %v3997 = vpop.f32.mrb[0].mxu0
        %3998 = vdwg.mxu0
        %v3999 = vadd.f32 %v3609, %v3841
        %v4000 = vadd.f32 %v3610, %v3846
        %v4001 = vadd.f32 %v3611, %v3851
        %v4002 = vadd.f32 %v3612, %v3856
        %v4003 = vadd.f32 %v3613, %v3861
        %v4004 = vadd.f32 %v3614, %v3866
        %v4005 = vadd.f32 %v3615, %v3871
        %v4006 = vadd.f32 %v3616, %v3876
        %v4007 = vadd.f32 %v3617, %v3881
        %v4008 = vadd.f32 %v3618, %v3886
        %v4009 = vadd.f32 %v3619, %v3891
        %v4010 = vadd.f32 %v3620, %v3896
        %v4011 = vadd.f32 %v3621, %v3901
        %v4012 = vadd.f32 %v3622, %v3906
        %v4013 = vadd.f32 %v3623, %v3911
        %v4014 = vadd.f32 %v3624, %v3916
        %v4015 = vadd.f32 %v3625, %v3921
        %v4016 = vadd.f32 %v3626, %v3926
        %v4017 = vadd.f32 %v3627, %v3931
        %v4018 = vadd.f32 %v3628, %v3936
        %v4019 = vadd.f32 %v3629, %v3941
        %v4020 = vadd.f32 %v3630, %v3946
        %v4021 = vadd.f32 %v3631, %v3951
        %v4022 = vadd.f32 %v3632, %v3956
        %v4023 = vadd.f32 %v3633, %v3961
        %v4024 = vadd.f32 %v3634, %v3966
        %v4025 = vadd.f32 %v3635, %v3971
        %v4026 = vadd.f32 %v3636, %v3976
        %v4027 = vadd.f32 %v3637, %v3981
        %v4028 = vadd.f32 %v3638, %v3986
        %v4029 = vadd.f32 %v3639, %v3991
        %v4030 = vadd.f32 %v3640, %v3996
        %v4031 = vld [vmem:[%s2] sm:$0x1]
        %v4033 = vlaneseq
        %v4034 = vshrl.u32 %v4033, 7
        %v4035 = vsub.s32 0, %v4034
        %v4036 = vrot.slane %v4031, %v4035
        %v4038 = vadd.f32 %v3999, %v4036
        %v4039 = vadd.f32 %v4000, %v4036
        %v4040 = vadd.f32 %v4001, %v4036
        %v4041 = vadd.f32 %v4002, %v4036
        %v4042 = vadd.f32 %v4003, %v4036
        %v4043 = vadd.f32 %v4004, %v4036
        %v4044 = vadd.f32 %v4005, %v4036
        %v4045 = vadd.f32 %v4006, %v4036
        %v4046 = vadd.f32 %v4007, %v4036
        %v4047 = vadd.f32 %v4008, %v4036
        %v4048 = vadd.f32 %v4009, %v4036
        %v4049 = vadd.f32 %v4010, %v4036
        %v4050 = vadd.f32 %v4011, %v4036
        %v4051 = vadd.f32 %v4012, %v4036
        %v4052 = vadd.f32 %v4013, %v4036
        %v4053 = vadd.f32 %v4014, %v4036
        %v4054 = vadd.f32 %v4015, %v4036
        %v4055 = vadd.f32 %v4016, %v4036
        %v4056 = vadd.f32 %v4017, %v4036
        %v4057 = vadd.f32 %v4018, %v4036
        %v4058 = vadd.f32 %v4019, %v4036
        %v4059 = vadd.f32 %v4020, %v4036
        %v4060 = vadd.f32 %v4021, %v4036
        %v4061 = vadd.f32 %v4022, %v4036
        %v4062 = vadd.f32 %v4023, %v4036
        %v4063 = vadd.f32 %v4024, %v4036
        %v4064 = vadd.f32 %v4025, %v4036
        %v4065 = vadd.f32 %v4026, %v4036
        %v4066 = vadd.f32 %v4027, %v4036
        %v4067 = vadd.f32 %v4028, %v4036
        %v4068 = vadd.f32 %v4029, %v4036
        %v4069 = vadd.f32 %v4030, %v4036
        %v4070 = vmax.f32 %v4038, 0.0
        %v4071 = vmax.f32 %v4039, 0.0
        %v4072 = vmax.f32 %v4040, 0.0
        %v4073 = vmax.f32 %v4041, 0.0
        %v4074 = vmax.f32 %v4042, 0.0
        %v4075 = vmax.f32 %v4043, 0.0
        %v4076 = vmax.f32 %v4044, 0.0
        %v4077 = vmax.f32 %v4045, 0.0
        %v4078 = vmax.f32 %v4046, 0.0
        %v4079 = vmax.f32 %v4047, 0.0
        %v4080 = vmax.f32 %v4048, 0.0
        %v4081 = vmax.f32 %v4049, 0.0
        %v4082 = vmax.f32 %v4050, 0.0
        %v4083 = vmax.f32 %v4051, 0.0
        %v4084 = vmax.f32 %v4052, 0.0
        %v4085 = vmax.f32 %v4053, 0.0
        %v4086 = vmax.f32 %v4054, 0.0
        %v4087 = vmax.f32 %v4055, 0.0
        %v4088 = vmax.f32 %v4056, 0.0
        %v4089 = vmax.f32 %v4057, 0.0
        %v4090 = vmax.f32 %v4058, 0.0
        %v4091 = vmax.f32 %v4059, 0.0
        %v4092 = vmax.f32 %v4060, 0.0
        %v4093 = vmax.f32 %v4061, 0.0
        %v4094 = vmax.f32 %v4062, 0.0
        %v4095 = vmax.f32 %v4063, 0.0
        %v4096 = vmax.f32 %v4064, 0.0
        %v4097 = vmax.f32 %v4065, 0.0
        %v4098 = vmax.f32 %v4066, 0.0
        %v4099 = vmax.f32 %v4067, 0.0
        %v4100 = vmax.f32 %v4068, 0.0
        %v4101 = vmax.f32 %v4069, 0.0
        %vm4102 = vcmask 523264
        %4103 = vst.msk [vmem:[#allocation3 + $0x7] sm:$0xff] %vm4102, 0.0
        %4104 = vst.msk [vmem:[#allocation3 + $0xf] sm:$0xff] %vm4102, 0.0
        %vm4105 = vcmask 517120
        %4106 = vst.msk [vmem:[#allocation3 + $0x17] sm:$0x3] %vm4105, 0.0
        %s4107 = scalar_lea.vmem [#allocation3], 544
        %4108 = vst.msk [vmem:[%s4107 + $0x7] sm:$0xff] %vm4102, 0.0
        %4109 = vst.msk [vmem:[%s4107 + $0xf] sm:$0xff] %vm4102, 0.0
        %4110 = vst.msk [vmem:[%s4107 + $0x17] sm:$0x3] %vm4105, 0.0
        %s4111 = scalar_lea.vmem [#allocation3], 32
        %vm4112 = vcmask 516096
        %4113 = vst.msk [vmem:[%s4111 + $0x7] sm:$0x1] %vm4112, 0.0
        %4114 = vst.msk [vmem:[%s4111 + $0x27] sm:$0x1] %vm4112, 0.0
        %4115 = vst.msk [vmem:[%s4111 + $0x47] sm:$0x1] %vm4112, 0.0
        %4116 = vst.msk [vmem:[%s4111 + $0x67] sm:$0x1] %vm4112, 0.0
        %4117 = vst.msk [vmem:[%s4111 + $0x87] sm:$0x1] %vm4112, 0.0
        %4118 = vst.msk [vmem:[%s4111 + $0xa7] sm:$0x1] %vm4112, 0.0
        %4119 = vst.msk [vmem:[%s4111 + $0xc7] sm:$0x1] %vm4112, 0.0
        %4120 = vst.msk [vmem:[%s4111 + $0xe7] sm:$0x1] %vm4112, 0.0
        %4121 = vst.msk [vmem:[%s4111 + $0x107] sm:$0x1] %vm4112, 0.0
        %4122 = vst.msk [vmem:[%s4111 + $0x127] sm:$0x1] %vm4112, 0.0
        %4123 = vst.msk [vmem:[%s4111 + $0x147] sm:$0x1] %vm4112, 0.0
        %4124 = vst.msk [vmem:[%s4111 + $0x167] sm:$0x1] %vm4112, 0.0
        %4125 = vst.msk [vmem:[%s4111 + $0x187] sm:$0x1] %vm4112, 0.0
        %4126 = vst.msk [vmem:[%s4111 + $0x1a7] sm:$0x1] %vm4112, 0.0
        %4127 = vst.msk [vmem:[%s4111 + $0x1c7] sm:$0x1] %vm4112, 0.0
        %4128 = vst.msk [vmem:[%s4111 + $0x1e7] sm:$0x1] %vm4112, 0.0
        %4129 = vst.msk [vmem:[%s4111 + $0x18] sm:$0x1] %vm4112, 0.0
        %4130 = vst.msk [vmem:[%s4111 + $0x38] sm:$0x1] %vm4112, 0.0
        %4131 = vst.msk [vmem:[%s4111 + $0x58] sm:$0x1] %vm4112, 0.0
        %4132 = vst.msk [vmem:[%s4111 + $0x78] sm:$0x1] %vm4112, 0.0
        %4133 = vst.msk [vmem:[%s4111 + $0x98] sm:$0x1] %vm4112, 0.0
        %4134 = vst.msk [vmem:[%s4111 + $0xb8] sm:$0x1] %vm4112, 0.0
        %4135 = vst.msk [vmem:[%s4111 + $0xd8] sm:$0x1] %vm4112, 0.0
        %4136 = vst.msk [vmem:[%s4111 + $0xf8] sm:$0x1] %vm4112, 0.0
        %4137 = vst.msk [vmem:[%s4111 + $0x118] sm:$0x1] %vm4112, 0.0
        %4138 = vst.msk [vmem:[%s4111 + $0x138] sm:$0x1] %vm4112, 0.0
        %4139 = vst.msk [vmem:[%s4111 + $0x158] sm:$0x1] %vm4112, 0.0
        %4140 = vst.msk [vmem:[%s4111 + $0x178] sm:$0x1] %vm4112, 0.0
        %4141 = vst.msk [vmem:[%s4111 + $0x198] sm:$0x1] %vm4112, 0.0
        %4142 = vst.msk [vmem:[%s4111 + $0x1b8] sm:$0x1] %vm4112, 0.0
        %4143 = vst.msk [vmem:[%s4111 + $0x1d8] sm:$0x1] %vm4112, 0.0
        %4144 = vst.msk [vmem:[%s4111 + $0x1f8] sm:$0x1] %vm4112, 0.0
        %4145 = vst.msk [vmem:[%s4111 + $0x8] sm:$0xff] %vm4102, %v4070
        %4146 = vst.msk [vmem:[%s4111 + $0x10] sm:$0xff] %vm4102, %v4071
        %4147 = vst.msk [vmem:[%s4111 + $0x28] sm:$0xff] %vm4102, %v4072
        %4148 = vst.msk [vmem:[%s4111 + $0x30] sm:$0xff] %vm4102, %v4073
        %4149 = vst.msk [vmem:[%s4111 + $0x48] sm:$0xff] %vm4102, %v4074
        %4150 = vst.msk [vmem:[%s4111 + $0x50] sm:$0xff] %vm4102, %v4075
        %4151 = vst.msk [vmem:[%s4111 + $0x68] sm:$0xff] %vm4102, %v4076
        %4152 = vst.msk [vmem:[%s4111 + $0x70] sm:$0xff] %vm4102, %v4077
        %4153 = vst.msk [vmem:[%s4111 + $0x88] sm:$0xff] %vm4102, %v4078
        %4154 = vst.msk [vmem:[%s4111 + $0x90] sm:$0xff] %vm4102, %v4079
        %4155 = vst.msk [vmem:[%s4111 + $0xa8] sm:$0xff] %vm4102, %v4080
        %4156 = vst.msk [vmem:[%s4111 + $0xb0] sm:$0xff] %vm4102, %v4081
        %4157 = vst.msk [vmem:[%s4111 + $0xc8] sm:$0xff] %vm4102, %v4082
        %4158 = vst.msk [vmem:[%s4111 + $0xd0] sm:$0xff] %vm4102, %v4083
        %4159 = vst.msk [vmem:[%s4111 + $0xe8] sm:$0xff] %vm4102, %v4084
        %4160 = vst.msk [vmem:[%s4111 + $0xf0] sm:$0xff] %vm4102, %v4085
        %4161 = vst.msk [vmem:[%s4111 + $0x108] sm:$0xff] %vm4102, %v4086
        %4162 = vst.msk [vmem:[%s4111 + $0x110] sm:$0xff] %vm4102, %v4087
        %4163 = vst.msk [vmem:[%s4111 + $0x128] sm:$0xff] %vm4102, %v4088
        %4164 = vst.msk [vmem:[%s4111 + $0x130] sm:$0xff] %vm4102, %v4089
        %4165 = vst.msk [vmem:[%s4111 + $0x148] sm:$0xff] %vm4102, %v4090
        %4166 = vst.msk [vmem:[%s4111 + $0x150] sm:$0xff] %vm4102, %v4091
        %4167 = vst.msk [vmem:[%s4111 + $0x168] sm:$0xff] %vm4102, %v4092
        %4168 = vst.msk [vmem:[%s4111 + $0x170] sm:$0xff] %vm4102, %v4093
        %4169 = vst.msk [vmem:[%s4111 + $0x188] sm:$0xff] %vm4102, %v4094
        %4170 = vst.msk [vmem:[%s4111 + $0x190] sm:$0xff] %vm4102, %v4095
        %4171 = vst.msk [vmem:[%s4111 + $0x1a8] sm:$0xff] %vm4102, %v4096
        %4172 = vst.msk [vmem:[%s4111 + $0x1b0] sm:$0xff] %vm4102, %v4097
        %4173 = vst.msk [vmem:[%s4111 + $0x1c8] sm:$0xff] %vm4102, %v4098
        %4174 = vst.msk [vmem:[%s4111 + $0x1d0] sm:$0xff] %vm4102, %v4099
        %4175 = vst.msk [vmem:[%s4111 + $0x1e8] sm:$0xff] %vm4102, %v4100
        %4176 = vst.msk [vmem:[%s4111 + $0x1f0] sm:$0xff] %vm4102, %v4101
        %s4177 = scalar_lea.vmem %s4111, 8 [#allocation3]
        %v4178 = vld [vmem:[%s4177] ss:$2 sm:$0xff]
        %s4179 = scalar_lea.vmem %s4111, 40 [#allocation3]
        %v4180 = vld [vmem:[%s4179] ss:$2 sm:$0xff]
        %s4181 = scalar_lea.vmem %s4111, 72 [#allocation3]
        %v4182 = vld [vmem:[%s4181] ss:$2 sm:$0xff]
        %s4183 = scalar_lea.vmem %s4111, 104 [#allocation3]
        %v4184 = vld [vmem:[%s4183] ss:$2 sm:$0xff]
        %s4185 = scalar_lea.vmem %s4111, 136 [#allocation3]
        %v4186 = vld [vmem:[%s4185] ss:$2 sm:$0xff]
        %s4187 = scalar_lea.vmem %s4111, 168 [#allocation3]
        %v4188 = vld [vmem:[%s4187] ss:$2 sm:$0xff]
        %s4189 = scalar_lea.vmem %s4111, 200 [#allocation3]
        %v4190 = vld [vmem:[%s4189] ss:$2 sm:$0xff]
        %s4191 = scalar_lea.vmem %s4111, 232 [#allocation3]
        %v4192 = vld [vmem:[%s4191] ss:$2 sm:$0xff]
        %s4193 = scalar_lea.vmem %s4111, 264 [#allocation3]
        %v4194 = vld [vmem:[%s4193] ss:$2 sm:$0xff]
        %s4195 = scalar_lea.vmem %s4111, 296 [#allocation3]
        %v4196 = vld [vmem:[%s4195] ss:$2 sm:$0xff]
        %s4197 = scalar_lea.vmem %s4111, 328 [#allocation3]
        %v4198 = vld [vmem:[%s4197] ss:$2 sm:$0xff]
        %s4199 = scalar_lea.vmem %s4111, 360 [#allocation3]
        %v4200 = vld [vmem:[%s4199] ss:$2 sm:$0xff]
        %s4201 = scalar_lea.vmem %s4111, 392 [#allocation3]
        %v4202 = vld [vmem:[%s4201] ss:$2 sm:$0xff]
        %s4203 = scalar_lea.vmem %s4111, 424 [#allocation3]
        %v4204 = vld [vmem:[%s4203] ss:$2 sm:$0xff]
        %s4205 = scalar_lea.vmem %s4111, 456 [#allocation3]
        %v4206 = vld [vmem:[%s4205] ss:$2 sm:$0xff]
        %s4207 = scalar_lea.vmem %s4111, 488 [#allocation3]
        %v4208 = vld [vmem:[%s4207] ss:$2 sm:$0xff]
        %s4209 = scalar_lea.vmem %s4111, 9 [#allocation3]
        %v4210 = vld [vmem:[%s4209] ss:$2 sm:$0xff]
        %s4211 = scalar_lea.vmem %s4111, 41 [#allocation3]
        %v4212 = vld [vmem:[%s4211] ss:$2 sm:$0xff]
        %s4213 = scalar_lea.vmem %s4111, 73 [#allocation3]
        %v4214 = vld [vmem:[%s4213] ss:$2 sm:$0xff]
        %s4215 = scalar_lea.vmem %s4111, 105 [#allocation3]
        %v4216 = vld [vmem:[%s4215] ss:$2 sm:$0xff]
        %s4217 = scalar_lea.vmem %s4111, 137 [#allocation3]
        %v4218 = vld [vmem:[%s4217] ss:$2 sm:$0xff]
        %s4219 = scalar_lea.vmem %s4111, 169 [#allocation3]
        %v4220 = vld [vmem:[%s4219] ss:$2 sm:$0xff]
        %s4221 = scalar_lea.vmem %s4111, 201 [#allocation3]
        %v4222 = vld [vmem:[%s4221] ss:$2 sm:$0xff]
        %s4223 = scalar_lea.vmem %s4111, 233 [#allocation3]
        %v4224 = vld [vmem:[%s4223] ss:$2 sm:$0xff]
        %s4225 = scalar_lea.vmem %s4111, 265 [#allocation3]
        %v4226 = vld [vmem:[%s4225] ss:$2 sm:$0xff]
        %s4227 = scalar_lea.vmem %s4111, 297 [#allocation3]
        %v4228 = vld [vmem:[%s4227] ss:$2 sm:$0xff]
        %s4229 = scalar_lea.vmem %s4111, 329 [#allocation3]
        %v4230 = vld [vmem:[%s4229] ss:$2 sm:$0xff]
        %s4231 = scalar_lea.vmem %s4111, 361 [#allocation3]
        %v4232 = vld [vmem:[%s4231] ss:$2 sm:$0xff]
        %s4233 = scalar_lea.vmem %s4111, 393 [#allocation3]
        %v4234 = vld [vmem:[%s4233] ss:$2 sm:$0xff]
        %s4235 = scalar_lea.vmem %s4111, 425 [#allocation3]
        %v4236 = vld [vmem:[%s4235] ss:$2 sm:$0xff]
        %s4237 = scalar_lea.vmem %s4111, 457 [#allocation3]
        %v4238 = vld [vmem:[%s4237] ss:$2 sm:$0xff]
        %s4239 = scalar_lea.vmem %s4111, 489 [#allocation3]
        %v4240 = vld [vmem:[%s4239] ss:$2 sm:$0xff]
        %4257 = vrot.lane.b32.xlu0 %v4210, 64
        %v4258 = vpop.permute.xlu0 %4257
        %4259 = vrot.lane.b32.xlu0 %v4212, 64
        %v4260 = vpop.permute.xlu0 %4259
        %4261 = vrot.lane.b32.xlu0 %v4214, 64
        %v4262 = vpop.permute.xlu0 %4261
        %4263 = vrot.lane.b32.xlu0 %v4216, 64
        %v4264 = vpop.permute.xlu0 %4263
        %4265 = vrot.lane.b32.xlu0 %v4218, 64
        %v4266 = vpop.permute.xlu0 %4265
        %4267 = vrot.lane.b32.xlu0 %v4220, 64
        %v4268 = vpop.permute.xlu0 %4267
        %4269 = vrot.lane.b32.xlu0 %v4222, 64
        %v4270 = vpop.permute.xlu0 %4269
        %4271 = vrot.lane.b32.xlu0 %v4224, 64
        %v4272 = vpop.permute.xlu0 %4271
        %4273 = vrot.lane.b32.xlu0 %v4226, 64
        %v4274 = vpop.permute.xlu0 %4273
        %4275 = vrot.lane.b32.xlu0 %v4228, 64
        %v4276 = vpop.permute.xlu0 %4275
        %4277 = vrot.lane.b32.xlu0 %v4230, 64
        %v4278 = vpop.permute.xlu0 %4277
        %4279 = vrot.lane.b32.xlu0 %v4232, 64
        %v4280 = vpop.permute.xlu0 %4279
        %4281 = vrot.lane.b32.xlu0 %v4234, 64
        %v4282 = vpop.permute.xlu0 %4281
        %4283 = vrot.lane.b32.xlu0 %v4236, 64
        %v4284 = vpop.permute.xlu0 %4283
        %4285 = vrot.lane.b32.xlu0 %v4238, 64
        %v4286 = vpop.permute.xlu0 %4285
        %4287 = vrot.lane.b32.xlu0 %v4240, 64
        %v4288 = vpop.permute.xlu0 %4287
        %v4305 = vsel %vm4102, %v4178, %v4258
        %v4306 = vsel %vm4102, %v4180, %v4260
        %v4307 = vsel %vm4102, %v4182, %v4262
        %v4308 = vsel %vm4102, %v4184, %v4264
        %v4309 = vsel %vm4102, %v4186, %v4266
        %v4310 = vsel %vm4102, %v4188, %v4268
        %v4311 = vsel %vm4102, %v4190, %v4270
        %v4312 = vsel %vm4102, %v4192, %v4272
        %v4313 = vsel %vm4102, %v4194, %v4274
        %v4314 = vsel %vm4102, %v4196, %v4276
        %v4315 = vsel %vm4102, %v4198, %v4278
        %v4316 = vsel %vm4102, %v4200, %v4280
        %v4317 = vsel %vm4102, %v4202, %v4282
        %v4318 = vsel %vm4102, %v4204, %v4284
        %v4319 = vsel %vm4102, %v4206, %v4286
        %v4320 = vsel %vm4102, %v4208, %v4288
        %4321 = vst [vmem:[%s471] sm:$0xff] %v4305
        %4322 = vst [vmem:[%s471 + $0x8] sm:$0xff] %v4306
        %4323 = vst [vmem:[%s471 + $0x10] sm:$0xff] %v4307
        %4324 = vst [vmem:[%s471 + $0x18] sm:$0xff] %v4308
        %4325 = vst [vmem:[%s471 + $0x20] sm:$0xff] %v4309
        %4326 = vst [vmem:[%s471 + $0x28] sm:$0xff] %v4310
        %4327 = vst [vmem:[%s471 + $0x30] sm:$0xff] %v4311
        %4328 = vst [vmem:[%s471 + $0x38] sm:$0xff] %v4312
        %4329 = vst [vmem:[%s471 + $0x40] sm:$0xff] %v4313
        %4330 = vst [vmem:[%s471 + $0x48] sm:$0xff] %v4314
        %4331 = vst [vmem:[%s471 + $0x50] sm:$0xff] %v4315
        %4332 = vst [vmem:[%s471 + $0x58] sm:$0xff] %v4316
        %4333 = vst [vmem:[%s471 + $0x60] sm:$0xff] %v4317
        %4334 = vst [vmem:[%s471 + $0x68] sm:$0xff] %v4318
        %4335 = vst [vmem:[%s471 + $0x70] sm:$0xff] %v4319
        %4336 = vst [vmem:[%s471 + $0x78] sm:$0xff] %v4320
        %v4337 = vld [vmem:[#allocation3 + $0x7] sm:$0xff]
        %v4338 = vld [vmem:[#allocation3 + $0xf] sm:$0xff]
        %v4339 = vld [vmem:[#allocation3 + $0x27] sm:$0xff]
        %v4340 = vld [vmem:[#allocation3 + $0x2f] sm:$0xff]
        %v4341 = vld [vmem:[#allocation3 + $0x47] sm:$0xff]
        %v4342 = vld [vmem:[#allocation3 + $0x4f] sm:$0xff]
        %v4343 = vld [vmem:[#allocation3 + $0x67] sm:$0xff]
        %v4344 = vld [vmem:[#allocation3 + $0x6f] sm:$0xff]
        %v4345 = vld [vmem:[#allocation3 + $0x87] sm:$0xff]
        %v4346 = vld [vmem:[#allocation3 + $0x8f] sm:$0xff]
        %v4347 = vld [vmem:[#allocation3 + $0xa7] sm:$0xff]
        %v4348 = vld [vmem:[#allocation3 + $0xaf] sm:$0xff]
        %v4349 = vld [vmem:[#allocation3 + $0xc7] sm:$0xff]
        %v4350 = vld [vmem:[#allocation3 + $0xcf] sm:$0xff]
        %v4351 = vld [vmem:[#allocation3 + $0xe7] sm:$0xff]
        %v4352 = vld [vmem:[#allocation3 + $0xef] sm:$0xff]
        %v4353 = vld [vmem:[#allocation3 + $0x107] sm:$0xff]
        %v4354 = vld [vmem:[#allocation3 + $0x10f] sm:$0xff]
        %v4355 = vld [vmem:[#allocation3 + $0x127] sm:$0xff]
        %v4356 = vld [vmem:[#allocation3 + $0x12f] sm:$0xff]
        %v4357 = vld [vmem:[#allocation3 + $0x147] sm:$0xff]
        %v4358 = vld [vmem:[#allocation3 + $0x14f] sm:$0xff]
        %v4359 = vld [vmem:[#allocation3 + $0x167] sm:$0xff]
        %v4360 = vld [vmem:[#allocation3 + $0x16f] sm:$0xff]
        %v4361 = vld [vmem:[#allocation3 + $0x187] sm:$0xff]
        %v4362 = vld [vmem:[#allocation3 + $0x18f] sm:$0xff]
        %v4363 = vld [vmem:[#allocation3 + $0x1a7] sm:$0xff]
        %v4364 = vld [vmem:[#allocation3 + $0x1af] sm:$0xff]
        %v4365 = vld [vmem:[#allocation3 + $0x1c7] sm:$0xff]
        %v4366 = vld [vmem:[#allocation3 + $0x1cf] sm:$0xff]
        %v4367 = vld [vmem:[#allocation3 + $0x1e7] sm:$0xff]
        %v4368 = vld [vmem:[#allocation3 + $0x1ef] sm:$0xff]
        %v4369 = vld [vmem:[#allocation3 + $0x8] sm:$0xff]
        %v4370 = vld [vmem:[#allocation3 + $0x10] sm:$0xff]
        %v4371 = vld [vmem:[#allocation3 + $0x28] sm:$0xff]
        %v4372 = vld [vmem:[#allocation3 + $0x30] sm:$0xff]
        %v4373 = vld [vmem:[#allocation3 + $0x48] sm:$0xff]
        %v4374 = vld [vmem:[#allocation3 + $0x50] sm:$0xff]
        %v4375 = vld [vmem:[#allocation3 + $0x68] sm:$0xff]
        %v4376 = vld [vmem:[#allocation3 + $0x70] sm:$0xff]
        %v4377 = vld [vmem:[#allocation3 + $0x88] sm:$0xff]
        %v4378 = vld [vmem:[#allocation3 + $0x90] sm:$0xff]
        %v4379 = vld [vmem:[#allocation3 + $0xa8] sm:$0xff]
        %v4380 = vld [vmem:[#allocation3 + $0xb0] sm:$0xff]
        %v4381 = vld [vmem:[#allocation3 + $0xc8] sm:$0xff]
        %v4382 = vld [vmem:[#allocation3 + $0xd0] sm:$0xff]
        %v4383 = vld [vmem:[#allocation3 + $0xe8] sm:$0xff]
        %v4384 = vld [vmem:[#allocation3 + $0xf0] sm:$0xff]
        %v4385 = vld [vmem:[#allocation3 + $0x108] sm:$0xff]
        %v4386 = vld [vmem:[#allocation3 + $0x110] sm:$0xff]
        %v4387 = vld [vmem:[#allocation3 + $0x128] sm:$0xff]
        %v4388 = vld [vmem:[#allocation3 + $0x130] sm:$0xff]
        %v4389 = vld [vmem:[#allocation3 + $0x148] sm:$0xff]
        %v4390 = vld [vmem:[#allocation3 + $0x150] sm:$0xff]
        %v4391 = vld [vmem:[#allocation3 + $0x168] sm:$0xff]
        %v4392 = vld [vmem:[#allocation3 + $0x170] sm:$0xff]
        %v4393 = vld [vmem:[#allocation3 + $0x188] sm:$0xff]
        %v4394 = vld [vmem:[#allocation3 + $0x190] sm:$0xff]
        %v4395 = vld [vmem:[#allocation3 + $0x1a8] sm:$0xff]
        %v4396 = vld [vmem:[#allocation3 + $0x1b0] sm:$0xff]
        %v4397 = vld [vmem:[#allocation3 + $0x1c8] sm:$0xff]
        %v4398 = vld [vmem:[#allocation3 + $0x1d0] sm:$0xff]
        %v4399 = vld [vmem:[#allocation3 + $0x1e8] sm:$0xff]
        %v4400 = vld [vmem:[#allocation3 + $0x1f0] sm:$0xff]
        %v4401 = vld [vmem:[#allocation3 + $0x9] sm:$0xff]
        %v4402 = vld [vmem:[#allocation3 + $0x11] sm:$0xff]
        %v4403 = vld [vmem:[#allocation3 + $0x29] sm:$0xff]
        %v4404 = vld [vmem:[#allocation3 + $0x31] sm:$0xff]
        %v4405 = vld [vmem:[#allocation3 + $0x49] sm:$0xff]
        %v4406 = vld [vmem:[#allocation3 + $0x51] sm:$0xff]
        %v4407 = vld [vmem:[#allocation3 + $0x69] sm:$0xff]
        %v4408 = vld [vmem:[#allocation3 + $0x71] sm:$0xff]
        %v4409 = vld [vmem:[#allocation3 + $0x89] sm:$0xff]
        %v4410 = vld [vmem:[#allocation3 + $0x91] sm:$0xff]
        %v4411 = vld [vmem:[#allocation3 + $0xa9] sm:$0xff]
        %v4412 = vld [vmem:[#allocation3 + $0xb1] sm:$0xff]
        %v4413 = vld [vmem:[#allocation3 + $0xc9] sm:$0xff]
        %v4414 = vld [vmem:[#allocation3 + $0xd1] sm:$0xff]
        %v4415 = vld [vmem:[#allocation3 + $0xe9] sm:$0xff]
        %v4416 = vld [vmem:[#allocation3 + $0xf1] sm:$0xff]
        %v4417 = vld [vmem:[#allocation3 + $0x109] sm:$0xff]
        %v4418 = vld [vmem:[#allocation3 + $0x111] sm:$0xff]
        %v4419 = vld [vmem:[#allocation3 + $0x129] sm:$0xff]
        %v4420 = vld [vmem:[#allocation3 + $0x131] sm:$0xff]
        %v4421 = vld [vmem:[#allocation3 + $0x149] sm:$0xff]
        %v4422 = vld [vmem:[#allocation3 + $0x151] sm:$0xff]
        %v4423 = vld [vmem:[#allocation3 + $0x169] sm:$0xff]
        %v4424 = vld [vmem:[#allocation3 + $0x171] sm:$0xff]
        %v4425 = vld [vmem:[#allocation3 + $0x189] sm:$0xff]
        %v4426 = vld [vmem:[#allocation3 + $0x191] sm:$0xff]
        %v4427 = vld [vmem:[#allocation3 + $0x1a9] sm:$0xff]
        %v4428 = vld [vmem:[#allocation3 + $0x1b1] sm:$0xff]
        %v4429 = vld [vmem:[#allocation3 + $0x1c9] sm:$0xff]
        %v4430 = vld [vmem:[#allocation3 + $0x1d1] sm:$0xff]
        %v4431 = vld [vmem:[#allocation3 + $0x1e9] sm:$0xff]
        %v4432 = vld [vmem:[#allocation3 + $0x1f1] sm:$0xff]
        %4465 = vrot.lane.b32.xlu0 %v4369, 64
        %v4466 = vpop.permute.xlu0 %4465
        %4467 = vrot.lane.b32.xlu0 %v4370, 64
        %v4468 = vpop.permute.xlu0 %4467
        %4469 = vrot.lane.b32.xlu0 %v4371, 64
        %v4470 = vpop.permute.xlu0 %4469
        %4471 = vrot.lane.b32.xlu0 %v4372, 64
        %v4472 = vpop.permute.xlu0 %4471
        %4473 = vrot.lane.b32.xlu0 %v4373, 64
        %v4474 = vpop.permute.xlu0 %4473
        %4475 = vrot.lane.b32.xlu0 %v4374, 64
        %v4476 = vpop.permute.xlu0 %4475
        %4477 = vrot.lane.b32.xlu0 %v4375, 64
        %v4478 = vpop.permute.xlu0 %4477
        %4479 = vrot.lane.b32.xlu0 %v4376, 64
        %v4480 = vpop.permute.xlu0 %4479
        %4481 = vrot.lane.b32.xlu0 %v4377, 64
        %v4482 = vpop.permute.xlu0 %4481
        %4483 = vrot.lane.b32.xlu0 %v4378, 64
        %v4484 = vpop.permute.xlu0 %4483
        %4485 = vrot.lane.b32.xlu0 %v4379, 64
        %v4486 = vpop.permute.xlu0 %4485
        %4487 = vrot.lane.b32.xlu0 %v4380, 64
        %v4488 = vpop.permute.xlu0 %4487
        %4489 = vrot.lane.b32.xlu0 %v4381, 64
        %v4490 = vpop.permute.xlu0 %4489
        %4491 = vrot.lane.b32.xlu0 %v4382, 64
        %v4492 = vpop.permute.xlu0 %4491
        %4493 = vrot.lane.b32.xlu0 %v4383, 64
        %v4494 = vpop.permute.xlu0 %4493
        %4495 = vrot.lane.b32.xlu0 %v4384, 64
        %v4496 = vpop.permute.xlu0 %4495
        %4497 = vrot.lane.b32.xlu0 %v4385, 64
        %v4498 = vpop.permute.xlu0 %4497
        %4499 = vrot.lane.b32.xlu0 %v4386, 64
        %v4500 = vpop.permute.xlu0 %4499
        %4501 = vrot.lane.b32.xlu0 %v4387, 64
        %v4502 = vpop.permute.xlu0 %4501
        %4503 = vrot.lane.b32.xlu0 %v4388, 64
        %v4504 = vpop.permute.xlu0 %4503
        %4505 = vrot.lane.b32.xlu0 %v4389, 64
        %v4506 = vpop.permute.xlu0 %4505
        %4507 = vrot.lane.b32.xlu0 %v4390, 64
        %v4508 = vpop.permute.xlu0 %4507
        %4509 = vrot.lane.b32.xlu0 %v4391, 64
        %v4510 = vpop.permute.xlu0 %4509
        %4511 = vrot.lane.b32.xlu0 %v4392, 64
        %v4512 = vpop.permute.xlu0 %4511
        %4513 = vrot.lane.b32.xlu0 %v4393, 64
        %v4514 = vpop.permute.xlu0 %4513
        %4515 = vrot.lane.b32.xlu0 %v4394, 64
        %v4516 = vpop.permute.xlu0 %4515
        %4517 = vrot.lane.b32.xlu0 %v4395, 64
        %v4518 = vpop.permute.xlu0 %4517
        %4519 = vrot.lane.b32.xlu0 %v4396, 64
        %v4520 = vpop.permute.xlu0 %4519
        %4521 = vrot.lane.b32.xlu0 %v4397, 64
        %v4522 = vpop.permute.xlu0 %4521
        %4523 = vrot.lane.b32.xlu0 %v4398, 64
        %v4524 = vpop.permute.xlu0 %4523
        %4525 = vrot.lane.b32.xlu0 %v4399, 64
        %v4526 = vpop.permute.xlu0 %4525
        %4527 = vrot.lane.b32.xlu0 %v4400, 64
        %v4528 = vpop.permute.xlu0 %4527
        %v4561 = vsel %vm4102, %v4337, %v4466
        %v4562 = vsel %vm4102, %v4338, %v4468
        %v4563 = vsel %vm4102, %v4339, %v4470
        %v4564 = vsel %vm4102, %v4340, %v4472
        %v4565 = vsel %vm4102, %v4341, %v4474
        %v4566 = vsel %vm4102, %v4342, %v4476
        %v4567 = vsel %vm4102, %v4343, %v4478
        %v4568 = vsel %vm4102, %v4344, %v4480
        %v4569 = vsel %vm4102, %v4345, %v4482
        %v4570 = vsel %vm4102, %v4346, %v4484
        %v4571 = vsel %vm4102, %v4347, %v4486
        %v4572 = vsel %vm4102, %v4348, %v4488
        %v4573 = vsel %vm4102, %v4349, %v4490
        %v4574 = vsel %vm4102, %v4350, %v4492
        %v4575 = vsel %vm4102, %v4351, %v4494
        %v4576 = vsel %vm4102, %v4352, %v4496
        %v4577 = vsel %vm4102, %v4353, %v4498
        %v4578 = vsel %vm4102, %v4354, %v4500
        %v4579 = vsel %vm4102, %v4355, %v4502
        %v4580 = vsel %vm4102, %v4356, %v4504
        %v4581 = vsel %vm4102, %v4357, %v4506
        %v4582 = vsel %vm4102, %v4358, %v4508
        %v4583 = vsel %vm4102, %v4359, %v4510
        %v4584 = vsel %vm4102, %v4360, %v4512
        %v4585 = vsel %vm4102, %v4361, %v4514
        %v4586 = vsel %vm4102, %v4362, %v4516
        %v4587 = vsel %vm4102, %v4363, %v4518
        %v4588 = vsel %vm4102, %v4364, %v4520
        %v4589 = vsel %vm4102, %v4365, %v4522
        %v4590 = vsel %vm4102, %v4366, %v4524
        %v4591 = vsel %vm4102, %v4367, %v4526
        %v4592 = vsel %vm4102, %v4368, %v4528
        %4593 = vst [vmem:[#allocation6] sm:$0xff] %v4561
        %4594 = vst [vmem:[#allocation6 + $0x10] sm:$0xff] %v4562
        %4595 = vst [vmem:[#allocation6 + $0x20] sm:$0xff] %v4563
        %4596 = vst [vmem:[#allocation6 + $0x30] sm:$0xff] %v4564
        %4597 = vst [vmem:[#allocation6 + $0x40] sm:$0xff] %v4565
        %4598 = vst [vmem:[#allocation6 + $0x50] sm:$0xff] %v4566
        %4599 = vst [vmem:[#allocation6 + $0x60] sm:$0xff] %v4567
        %4600 = vst [vmem:[#allocation6 + $0x70] sm:$0xff] %v4568
        %4601 = vst [vmem:[#allocation6 + $0x80] sm:$0xff] %v4569
        %4602 = vst [vmem:[#allocation6 + $0x90] sm:$0xff] %v4570
        %4603 = vst [vmem:[#allocation6 + $0xa0] sm:$0xff] %v4571
        %4604 = vst [vmem:[#allocation6 + $0xb0] sm:$0xff] %v4572
        %4605 = vst [vmem:[#allocation6 + $0xc0] sm:$0xff] %v4573
        %4606 = vst [vmem:[#allocation6 + $0xd0] sm:$0xff] %v4574
        %4607 = vst [vmem:[#allocation6 + $0xe0] sm:$0xff] %v4575
        %4608 = vst [vmem:[#allocation6 + $0xf0] sm:$0xff] %v4576
        %4609 = vst [vmem:[#allocation6 + $0x100] sm:$0xff] %v4577
        %4610 = vst [vmem:[#allocation6 + $0x110] sm:$0xff] %v4578
        %4611 = vst [vmem:[#allocation6 + $0x120] sm:$0xff] %v4579
        %4612 = vst [vmem:[#allocation6 + $0x130] sm:$0xff] %v4580
        %4613 = vst [vmem:[#allocation6 + $0x140] sm:$0xff] %v4581
        %4614 = vst [vmem:[#allocation6 + $0x150] sm:$0xff] %v4582
        %4615 = vst [vmem:[#allocation6 + $0x160] sm:$0xff] %v4583
        %4616 = vst [vmem:[#allocation6 + $0x170] sm:$0xff] %v4584
        %4617 = vst [vmem:[#allocation6 + $0x180] sm:$0xff] %v4585
        %4618 = vst [vmem:[#allocation6 + $0x190] sm:$0xff] %v4586
        %4619 = vst [vmem:[#allocation6 + $0x1a0] sm:$0xff] %v4587
        %4620 = vst [vmem:[#allocation6 + $0x1b0] sm:$0xff] %v4588
        %4621 = vst [vmem:[#allocation6 + $0x1c0] sm:$0xff] %v4589
        %4622 = vst [vmem:[#allocation6 + $0x1d0] sm:$0xff] %v4590
        %4623 = vst [vmem:[#allocation6 + $0x1e0] sm:$0xff] %v4591
        %4624 = vst [vmem:[#allocation6 + $0x1f0] sm:$0xff] %v4592
        %4625 = vst.msk [vmem:[#allocation6 + $0x8] sm:$0xff] %vm4102, %v4401
        %4626 = vst.msk [vmem:[#allocation6 + $0x18] sm:$0xff] %vm4102, %v4402
        %4627 = vst.msk [vmem:[#allocation6 + $0x28] sm:$0xff] %vm4102, %v4403
        %4628 = vst.msk [vmem:[#allocation6 + $0x38] sm:$0xff] %vm4102, %v4404
        %4629 = vst.msk [vmem:[#allocation6 + $0x48] sm:$0xff] %vm4102, %v4405
        %4630 = vst.msk [vmem:[#allocation6 + $0x58] sm:$0xff] %vm4102, %v4406
        %4631 = vst.msk [vmem:[#allocation6 + $0x68] sm:$0xff] %vm4102, %v4407
        %4632 = vst.msk [vmem:[#allocation6 + $0x78] sm:$0xff] %vm4102, %v4408
        %4633 = vst.msk [vmem:[#allocation6 + $0x88] sm:$0xff] %vm4102, %v4409
        %4634 = vst.msk [vmem:[#allocation6 + $0x98] sm:$0xff] %vm4102, %v4410
        %4635 = vst.msk [vmem:[#allocation6 + $0xa8] sm:$0xff] %vm4102, %v4411
        %4636 = vst.msk [vmem:[#allocation6 + $0xb8] sm:$0xff] %vm4102, %v4412
        %4637 = vst.msk [vmem:[#allocation6 + $0xc8] sm:$0xff] %vm4102, %v4413
        %4638 = vst.msk [vmem:[#allocation6 + $0xd8] sm:$0xff] %vm4102, %v4414
        %4639 = vst.msk [vmem:[#allocation6 + $0xe8] sm:$0xff] %vm4102, %v4415
        %4640 = vst.msk [vmem:[#allocation6 + $0xf8] sm:$0xff] %vm4102, %v4416
        %4641 = vst.msk [vmem:[#allocation6 + $0x108] sm:$0xff] %vm4102, %v4417
        %4642 = vst.msk [vmem:[#allocation6 + $0x118] sm:$0xff] %vm4102, %v4418
        %4643 = vst.msk [vmem:[#allocation6 + $0x128] sm:$0xff] %vm4102, %v4419
        %4644 = vst.msk [vmem:[#allocation6 + $0x138] sm:$0xff] %vm4102, %v4420
        %4645 = vst.msk [vmem:[#allocation6 + $0x148] sm:$0xff] %vm4102, %v4421
        %4646 = vst.msk [vmem:[#allocation6 + $0x158] sm:$0xff] %vm4102, %v4422
        %4647 = vst.msk [vmem:[#allocation6 + $0x168] sm:$0xff] %vm4102, %v4423
        %4648 = vst.msk [vmem:[#allocation6 + $0x178] sm:$0xff] %vm4102, %v4424
        %4649 = vst.msk [vmem:[#allocation6 + $0x188] sm:$0xff] %vm4102, %v4425
        %4650 = vst.msk [vmem:[#allocation6 + $0x198] sm:$0xff] %vm4102, %v4426
        %4651 = vst.msk [vmem:[#allocation6 + $0x1a8] sm:$0xff] %vm4102, %v4427
        %4652 = vst.msk [vmem:[#allocation6 + $0x1b8] sm:$0xff] %vm4102, %v4428
        %4653 = vst.msk [vmem:[#allocation6 + $0x1c8] sm:$0xff] %vm4102, %v4429
        %4654 = vst.msk [vmem:[#allocation6 + $0x1d8] sm:$0xff] %vm4102, %v4430
        %4655 = vst.msk [vmem:[#allocation6 + $0x1e8] sm:$0xff] %vm4102, %v4431
        %4656 = vst.msk [vmem:[#allocation6 + $0x1f8] sm:$0xff] %vm4102, %v4432
        %v4657 = vld [vmem:[#allocation6] sm:$0xff]
        %v4658 = vld [vmem:[#allocation6 + $0x8] sm:$0xff]
        %v4659 = vld [vmem:[#allocation6 + $0x10] sm:$0xff]
        %v4660 = vld [vmem:[#allocation6 + $0x18] sm:$0xff]
        %v4661 = vld [vmem:[#allocation6 + $0x20] sm:$0xff]
        %v4662 = vld [vmem:[#allocation6 + $0x28] sm:$0xff]
        %v4663 = vld [vmem:[#allocation6 + $0x30] sm:$0xff]
        %v4664 = vld [vmem:[#allocation6 + $0x38] sm:$0xff]
        %v4665 = vld [vmem:[#allocation6 + $0x40] sm:$0xff]
        %v4666 = vld [vmem:[#allocation6 + $0x48] sm:$0xff]
        %v4667 = vld [vmem:[#allocation6 + $0x50] sm:$0xff]
        %v4668 = vld [vmem:[#allocation6 + $0x58] sm:$0xff]
        %v4669 = vld [vmem:[#allocation6 + $0x60] sm:$0xff]
        %v4670 = vld [vmem:[#allocation6 + $0x68] sm:$0xff]
        %v4671 = vld [vmem:[#allocation6 + $0x70] sm:$0xff]
        %v4672 = vld [vmem:[#allocation6 + $0x78] sm:$0xff]
        %v4673 = vld [vmem:[#allocation6 + $0x80] sm:$0xff]
        %v4674 = vld [vmem:[#allocation6 + $0x88] sm:$0xff]
        %v4675 = vld [vmem:[#allocation6 + $0x90] sm:$0xff]
        %v4676 = vld [vmem:[#allocation6 + $0x98] sm:$0xff]
        %v4677 = vld [vmem:[#allocation6 + $0xa0] sm:$0xff]
        %v4678 = vld [vmem:[#allocation6 + $0xa8] sm:$0xff]
        %v4679 = vld [vmem:[#allocation6 + $0xb0] sm:$0xff]
        %v4680 = vld [vmem:[#allocation6 + $0xb8] sm:$0xff]
        %v4681 = vld [vmem:[#allocation6 + $0xc0] sm:$0xff]
        %v4682 = vld [vmem:[#allocation6 + $0xc8] sm:$0xff]
        %v4683 = vld [vmem:[#allocation6 + $0xd0] sm:$0xff]
        %v4684 = vld [vmem:[#allocation6 + $0xd8] sm:$0xff]
        %v4685 = vld [vmem:[#allocation6 + $0xe0] sm:$0xff]
        %v4686 = vld [vmem:[#allocation6 + $0xe8] sm:$0xff]
        %v4687 = vld [vmem:[#allocation6 + $0xf0] sm:$0xff]
        %v4688 = vld [vmem:[#allocation6 + $0xf8] sm:$0xff]
        %v4689 = vld [vmem:[#allocation6 + $0x100] sm:$0xff]
        %v4690 = vld [vmem:[#allocation6 + $0x108] sm:$0xff]
        %v4691 = vld [vmem:[#allocation6 + $0x110] sm:$0xff]
        %v4692 = vld [vmem:[#allocation6 + $0x118] sm:$0xff]
        %v4693 = vld [vmem:[#allocation6 + $0x120] sm:$0xff]
        %v4694 = vld [vmem:[#allocation6 + $0x128] sm:$0xff]
        %v4695 = vld [vmem:[#allocation6 + $0x130] sm:$0xff]
        %v4696 = vld [vmem:[#allocation6 + $0x138] sm:$0xff]
        %v4697 = vld [vmem:[#allocation6 + $0x140] sm:$0xff]
        %v4698 = vld [vmem:[#allocation6 + $0x148] sm:$0xff]
        %v4699 = vld [vmem:[#allocation6 + $0x150] sm:$0xff]
        %v4700 = vld [vmem:[#allocation6 + $0x158] sm:$0xff]
        %v4701 = vld [vmem:[#allocation6 + $0x160] sm:$0xff]
        %v4702 = vld [vmem:[#allocation6 + $0x168] sm:$0xff]
        %v4703 = vld [vmem:[#allocation6 + $0x170] sm:$0xff]
        %v4704 = vld [vmem:[#allocation6 + $0x178] sm:$0xff]
        %v4705 = vld [vmem:[#allocation6 + $0x180] sm:$0xff]
        %v4706 = vld [vmem:[#allocation6 + $0x188] sm:$0xff]
        %v4707 = vld [vmem:[#allocation6 + $0x190] sm:$0xff]
        %v4708 = vld [vmem:[#allocation6 + $0x198] sm:$0xff]
        %v4709 = vld [vmem:[#allocation6 + $0x1a0] sm:$0xff]
        %v4710 = vld [vmem:[#allocation6 + $0x1a8] sm:$0xff]
        %v4711 = vld [vmem:[#allocation6 + $0x1b0] sm:$0xff]
        %v4712 = vld [vmem:[#allocation6 + $0x1b8] sm:$0xff]
        %v4713 = vld [vmem:[#allocation6 + $0x1c0] sm:$0xff]
        %v4714 = vld [vmem:[#allocation6 + $0x1c8] sm:$0xff]
        %v4715 = vld [vmem:[#allocation6 + $0x1d0] sm:$0xff]
        %v4716 = vld [vmem:[#allocation6 + $0x1d8] sm:$0xff]
        %v4717 = vld [vmem:[#allocation6 + $0x1e0] sm:$0xff]
        %v4718 = vld [vmem:[#allocation6 + $0x1e8] sm:$0xff]
        %v4719 = vld [vmem:[#allocation6 + $0x1f0] sm:$0xff]
        %v4720 = vld [vmem:[#allocation6 + $0x1f8] sm:$0xff]
        %v4721 = vld [vmem:[%s3] sm:$0xff]
        %v4722 = vld [vmem:[%s3 + $0x8] sm:$0xff]
        %v4723 = vld [vmem:[%s3 + $0x10] sm:$0xff]
        %v4724 = vld [vmem:[%s3 + $0x18] sm:$0xff]
        %v4725 = vld [vmem:[%s3 + $0x20] sm:$0xff]
        %v4726 = vld [vmem:[%s3 + $0x28] sm:$0xff]
        %v4727 = vld [vmem:[%s3 + $0x30] sm:$0xff]
        %v4728 = vld [vmem:[%s3 + $0x38] sm:$0xff]
        %v4729 = vld [vmem:[%s3 + $0x40] sm:$0xff]
        %v4730 = vld [vmem:[%s3 + $0x48] sm:$0xff]
        %v4731 = vld [vmem:[%s3 + $0x50] sm:$0xff]
        %v4732 = vld [vmem:[%s3 + $0x58] sm:$0xff]
        %v4733 = vld [vmem:[%s3 + $0x60] sm:$0xff]
        %v4734 = vld [vmem:[%s3 + $0x68] sm:$0xff]
        %v4735 = vld [vmem:[%s3 + $0x70] sm:$0xff]
        %v4736 = vld [vmem:[%s3 + $0x78] sm:$0xff]
        %v4737 = vld [vmem:[%s3 + $0x80] sm:$0xff]
        %v4738 = vld [vmem:[%s3 + $0x88] sm:$0xff]
        %v4739 = vld [vmem:[%s3 + $0x90] sm:$0xff]
        %v4740 = vld [vmem:[%s3 + $0x98] sm:$0xff]
        %v4741 = vld [vmem:[%s3 + $0xa0] sm:$0xff]
        %v4742 = vld [vmem:[%s3 + $0xa8] sm:$0xff]
        %v4743 = vld [vmem:[%s3 + $0xb0] sm:$0xff]
        %v4744 = vld [vmem:[%s3 + $0xb8] sm:$0xff]
        %v4745 = vld [vmem:[%s4111 + $0x7] sm:$0xff]
        %v4746 = vld [vmem:[%s4111 + $0xf] sm:$0xff]
        %v4747 = vld [vmem:[%s4111 + $0x27] sm:$0xff]
        %v4748 = vld [vmem:[%s4111 + $0x2f] sm:$0xff]
        %v4749 = vld [vmem:[%s4111 + $0x47] sm:$0xff]
        %v4750 = vld [vmem:[%s4111 + $0x4f] sm:$0xff]
        %v4751 = vld [vmem:[%s4111 + $0x67] sm:$0xff]
        %v4752 = vld [vmem:[%s4111 + $0x6f] sm:$0xff]
        %v4753 = vld [vmem:[%s4111 + $0x87] sm:$0xff]
        %v4754 = vld [vmem:[%s4111 + $0x8f] sm:$0xff]
        %v4755 = vld [vmem:[%s4111 + $0xa7] sm:$0xff]
        %v4756 = vld [vmem:[%s4111 + $0xaf] sm:$0xff]
        %v4757 = vld [vmem:[%s4111 + $0xc7] sm:$0xff]
        %v4758 = vld [vmem:[%s4111 + $0xcf] sm:$0xff]
        %v4759 = vld [vmem:[%s4111 + $0xe7] sm:$0xff]
        %v4760 = vld [vmem:[%s4111 + $0xef] sm:$0xff]
        %v4761 = vld [vmem:[%s4111 + $0x107] sm:$0xff]
        %v4762 = vld [vmem:[%s4111 + $0x10f] sm:$0xff]
        %v4763 = vld [vmem:[%s4111 + $0x127] sm:$0xff]
        %v4764 = vld [vmem:[%s4111 + $0x12f] sm:$0xff]
        %v4765 = vld [vmem:[%s4111 + $0x147] sm:$0xff]
        %v4766 = vld [vmem:[%s4111 + $0x14f] sm:$0xff]
        %v4767 = vld [vmem:[%s4111 + $0x167] sm:$0xff]
        %v4768 = vld [vmem:[%s4111 + $0x16f] sm:$0xff]
        %v4769 = vld [vmem:[%s4111 + $0x187] sm:$0xff]
        %v4770 = vld [vmem:[%s4111 + $0x18f] sm:$0xff]
        %v4771 = vld [vmem:[%s4111 + $0x1a7] sm:$0xff]
        %v4772 = vld [vmem:[%s4111 + $0x1af] sm:$0xff]
        %v4773 = vld [vmem:[%s4111 + $0x1c7] sm:$0xff]
        %v4774 = vld [vmem:[%s4111 + $0x1cf] sm:$0xff]
        %v4775 = vld [vmem:[%s4111 + $0x1e7] sm:$0xff]
        %v4776 = vld [vmem:[%s4111 + $0x1ef] sm:$0xff]
        %v4777 = vld [vmem:[%s4111 + $0x8] sm:$0xff]
        %v4778 = vld [vmem:[%s4111 + $0x10] sm:$0xff]
        %v4779 = vld [vmem:[%s4111 + $0x28] sm:$0xff]
        %v4780 = vld [vmem:[%s4111 + $0x30] sm:$0xff]
        %v4781 = vld [vmem:[%s4111 + $0x48] sm:$0xff]
        %v4782 = vld [vmem:[%s4111 + $0x50] sm:$0xff]
        %v4783 = vld [vmem:[%s4111 + $0x68] sm:$0xff]
        %v4784 = vld [vmem:[%s4111 + $0x70] sm:$0xff]
        %v4785 = vld [vmem:[%s4111 + $0x88] sm:$0xff]
        %v4786 = vld [vmem:[%s4111 + $0x90] sm:$0xff]
        %v4787 = vld [vmem:[%s4111 + $0xa8] sm:$0xff]
        %v4788 = vld [vmem:[%s4111 + $0xb0] sm:$0xff]
        %v4789 = vld [vmem:[%s4111 + $0xc8] sm:$0xff]
        %v4790 = vld [vmem:[%s4111 + $0xd0] sm:$0xff]
        %v4791 = vld [vmem:[%s4111 + $0xe8] sm:$0xff]
        %v4792 = vld [vmem:[%s4111 + $0xf0] sm:$0xff]
        %v4793 = vld [vmem:[%s4111 + $0x108] sm:$0xff]
        %v4794 = vld [vmem:[%s4111 + $0x110] sm:$0xff]
        %v4795 = vld [vmem:[%s4111 + $0x128] sm:$0xff]
        %v4796 = vld [vmem:[%s4111 + $0x130] sm:$0xff]
        %v4797 = vld [vmem:[%s4111 + $0x148] sm:$0xff]
        %v4798 = vld [vmem:[%s4111 + $0x150] sm:$0xff]
        %v4799 = vld [vmem:[%s4111 + $0x168] sm:$0xff]
        %v4800 = vld [vmem:[%s4111 + $0x170] sm:$0xff]
        %v4801 = vld [vmem:[%s4111 + $0x188] sm:$0xff]
        %v4802 = vld [vmem:[%s4111 + $0x190] sm:$0xff]
        %v4803 = vld [vmem:[%s4111 + $0x1a8] sm:$0xff]
        %v4804 = vld [vmem:[%s4111 + $0x1b0] sm:$0xff]
        %v4805 = vld [vmem:[%s4111 + $0x1c8] sm:$0xff]
        %v4806 = vld [vmem:[%s4111 + $0x1d0] sm:$0xff]
        %v4807 = vld [vmem:[%s4111 + $0x1e8] sm:$0xff]
        %v4808 = vld [vmem:[%s4111 + $0x1f0] sm:$0xff]
        %v4809 = vld [vmem:[%s4111 + $0x9] sm:$0xff]
        %v4810 = vld [vmem:[%s4111 + $0x11] sm:$0xff]
        %v4811 = vld [vmem:[%s4111 + $0x29] sm:$0xff]
        %v4812 = vld [vmem:[%s4111 + $0x31] sm:$0xff]
        %v4813 = vld [vmem:[%s4111 + $0x49] sm:$0xff]
        %v4814 = vld [vmem:[%s4111 + $0x51] sm:$0xff]
        %v4815 = vld [vmem:[%s4111 + $0x69] sm:$0xff]
        %v4816 = vld [vmem:[%s4111 + $0x71] sm:$0xff]
        %v4817 = vld [vmem:[%s4111 + $0x89] sm:$0xff]
        %v4818 = vld [vmem:[%s4111 + $0x91] sm:$0xff]
        %v4819 = vld [vmem:[%s4111 + $0xa9] sm:$0xff]
        %v4820 = vld [vmem:[%s4111 + $0xb1] sm:$0xff]
        %v4821 = vld [vmem:[%s4111 + $0xc9] sm:$0xff]
        %v4822 = vld [vmem:[%s4111 + $0xd1] sm:$0xff]
        %v4823 = vld [vmem:[%s4111 + $0xe9] sm:$0xff]
        %v4824 = vld [vmem:[%s4111 + $0xf1] sm:$0xff]
        %v4825 = vld [vmem:[%s4111 + $0x109] sm:$0xff]
        %v4826 = vld [vmem:[%s4111 + $0x111] sm:$0xff]
        %v4827 = vld [vmem:[%s4111 + $0x129] sm:$0xff]
        %v4828 = vld [vmem:[%s4111 + $0x131] sm:$0xff]
        %v4829 = vld [vmem:[%s4111 + $0x149] sm:$0xff]
        %v4830 = vld [vmem:[%s4111 + $0x151] sm:$0xff]
        %v4831 = vld [vmem:[%s4111 + $0x169] sm:$0xff]
        %v4832 = vld [vmem:[%s4111 + $0x171] sm:$0xff]
        %v4833 = vld [vmem:[%s4111 + $0x189] sm:$0xff]
        %v4834 = vld [vmem:[%s4111 + $0x191] sm:$0xff]
        %v4835 = vld [vmem:[%s4111 + $0x1a9] sm:$0xff]
        %v4836 = vld [vmem:[%s4111 + $0x1b1] sm:$0xff]
        %v4837 = vld [vmem:[%s4111 + $0x1c9] sm:$0xff]
        %v4838 = vld [vmem:[%s4111 + $0x1d1] sm:$0xff]
        %v4839 = vld [vmem:[%s4111 + $0x1e9] sm:$0xff]
        %v4840 = vld [vmem:[%s4111 + $0x1f1] sm:$0xff]
        %4873 = vrot.lane.b32.xlu0 %v4777, 64
        %v4874 = vpop.permute.xlu0 %4873
        %4875 = vrot.lane.b32.xlu0 %v4778, 64
        %v4876 = vpop.permute.xlu0 %4875
        %4877 = vrot.lane.b32.xlu0 %v4779, 64
        %v4878 = vpop.permute.xlu0 %4877
        %4879 = vrot.lane.b32.xlu0 %v4780, 64
        %v4880 = vpop.permute.xlu0 %4879
        %4881 = vrot.lane.b32.xlu0 %v4781, 64
        %v4882 = vpop.permute.xlu0 %4881
        %4883 = vrot.lane.b32.xlu0 %v4782, 64
        %v4884 = vpop.permute.xlu0 %4883
        %4885 = vrot.lane.b32.xlu0 %v4783, 64
        %v4886 = vpop.permute.xlu0 %4885
        %4887 = vrot.lane.b32.xlu0 %v4784, 64
        %v4888 = vpop.permute.xlu0 %4887
        %4889 = vrot.lane.b32.xlu0 %v4785, 64
        %v4890 = vpop.permute.xlu0 %4889
        %4891 = vrot.lane.b32.xlu0 %v4786, 64
        %v4892 = vpop.permute.xlu0 %4891
        %4893 = vrot.lane.b32.xlu0 %v4787, 64
        %v4894 = vpop.permute.xlu0 %4893
        %4895 = vrot.lane.b32.xlu0 %v4788, 64
        %v4896 = vpop.permute.xlu0 %4895
        %4897 = vrot.lane.b32.xlu0 %v4789, 64
        %v4898 = vpop.permute.xlu0 %4897
        %4899 = vrot.lane.b32.xlu0 %v4790, 64
        %v4900 = vpop.permute.xlu0 %4899
        %4901 = vrot.lane.b32.xlu0 %v4791, 64
        %v4902 = vpop.permute.xlu0 %4901
        %4903 = vrot.lane.b32.xlu0 %v4792, 64
        %v4904 = vpop.permute.xlu0 %4903
        %4905 = vrot.lane.b32.xlu0 %v4793, 64
        %v4906 = vpop.permute.xlu0 %4905
        %4907 = vrot.lane.b32.xlu0 %v4794, 64
        %v4908 = vpop.permute.xlu0 %4907
        %4909 = vrot.lane.b32.xlu0 %v4795, 64
        %v4910 = vpop.permute.xlu0 %4909
        %4911 = vrot.lane.b32.xlu0 %v4796, 64
        %v4912 = vpop.permute.xlu0 %4911
        %4913 = vrot.lane.b32.xlu0 %v4797, 64
        %v4914 = vpop.permute.xlu0 %4913
        %4915 = vrot.lane.b32.xlu0 %v4798, 64
        %v4916 = vpop.permute.xlu0 %4915
        %4917 = vrot.lane.b32.xlu0 %v4799, 64
        %v4918 = vpop.permute.xlu0 %4917
        %4919 = vrot.lane.b32.xlu0 %v4800, 64
        %v4920 = vpop.permute.xlu0 %4919
        %4921 = vrot.lane.b32.xlu0 %v4801, 64
        %v4922 = vpop.permute.xlu0 %4921
        %4923 = vrot.lane.b32.xlu0 %v4802, 64
        %v4924 = vpop.permute.xlu0 %4923
        %4925 = vrot.lane.b32.xlu0 %v4803, 64
        %v4926 = vpop.permute.xlu0 %4925
        %4927 = vrot.lane.b32.xlu0 %v4804, 64
        %v4928 = vpop.permute.xlu0 %4927
        %4929 = vrot.lane.b32.xlu0 %v4805, 64
        %v4930 = vpop.permute.xlu0 %4929
        %4931 = vrot.lane.b32.xlu0 %v4806, 64
        %v4932 = vpop.permute.xlu0 %4931
        %4933 = vrot.lane.b32.xlu0 %v4807, 64
        %v4934 = vpop.permute.xlu0 %4933
        %4935 = vrot.lane.b32.xlu0 %v4808, 64
        %v4936 = vpop.permute.xlu0 %4935
        %v4969 = vsel %vm4102, %v4745, %v4874
        %v4970 = vsel %vm4102, %v4746, %v4876
        %v4971 = vsel %vm4102, %v4747, %v4878
        %v4972 = vsel %vm4102, %v4748, %v4880
        %v4973 = vsel %vm4102, %v4749, %v4882
        %v4974 = vsel %vm4102, %v4750, %v4884
        %v4975 = vsel %vm4102, %v4751, %v4886
        %v4976 = vsel %vm4102, %v4752, %v4888
        %v4977 = vsel %vm4102, %v4753, %v4890
        %v4978 = vsel %vm4102, %v4754, %v4892
        %v4979 = vsel %vm4102, %v4755, %v4894
        %v4980 = vsel %vm4102, %v4756, %v4896
        %v4981 = vsel %vm4102, %v4757, %v4898
        %v4982 = vsel %vm4102, %v4758, %v4900
        %v4983 = vsel %vm4102, %v4759, %v4902
        %v4984 = vsel %vm4102, %v4760, %v4904
        %v4985 = vsel %vm4102, %v4761, %v4906
        %v4986 = vsel %vm4102, %v4762, %v4908
        %v4987 = vsel %vm4102, %v4763, %v4910
        %v4988 = vsel %vm4102, %v4764, %v4912
        %v4989 = vsel %vm4102, %v4765, %v4914
        %v4990 = vsel %vm4102, %v4766, %v4916
        %v4991 = vsel %vm4102, %v4767, %v4918
        %v4992 = vsel %vm4102, %v4768, %v4920
        %v4993 = vsel %vm4102, %v4769, %v4922
        %v4994 = vsel %vm4102, %v4770, %v4924
        %v4995 = vsel %vm4102, %v4771, %v4926
        %v4996 = vsel %vm4102, %v4772, %v4928
        %v4997 = vsel %vm4102, %v4773, %v4930
        %v4998 = vsel %vm4102, %v4774, %v4932
        %v4999 = vsel %vm4102, %v4775, %v4934
        %v5000 = vsel %vm4102, %v4776, %v4936
        %5001 = vst [vmem:[#allocation6] sm:$0xff] %v4969
        %5002 = vst [vmem:[#allocation6 + $0x10] sm:$0xff] %v4970
        %5003 = vst [vmem:[#allocation6 + $0x20] sm:$0xff] %v4971
        %5004 = vst [vmem:[#allocation6 + $0x30] sm:$0xff] %v4972
        %5005 = vst [vmem:[#allocation6 + $0x40] sm:$0xff] %v4973
        %5006 = vst [vmem:[#allocation6 + $0x50] sm:$0xff] %v4974
        %5007 = vst [vmem:[#allocation6 + $0x60] sm:$0xff] %v4975
        %5008 = vst [vmem:[#allocation6 + $0x70] sm:$0xff] %v4976
        %5009 = vst [vmem:[#allocation6 + $0x80] sm:$0xff] %v4977
        %5010 = vst [vmem:[#allocation6 + $0x90] sm:$0xff] %v4978
        %5011 = vst [vmem:[#allocation6 + $0xa0] sm:$0xff] %v4979
        %5012 = vst [vmem:[#allocation6 + $0xb0] sm:$0xff] %v4980
        %5013 = vst [vmem:[#allocation6 + $0xc0] sm:$0xff] %v4981
        %5014 = vst [vmem:[#allocation6 + $0xd0] sm:$0xff] %v4982
        %5015 = vst [vmem:[#allocation6 + $0xe0] sm:$0xff] %v4983
        %5016 = vst [vmem:[#allocation6 + $0xf0] sm:$0xff] %v4984
        %5017 = vst [vmem:[#allocation6 + $0x100] sm:$0xff] %v4985
        %5018 = vst [vmem:[#allocation6 + $0x110] sm:$0xff] %v4986
        %5019 = vst [vmem:[#allocation6 + $0x120] sm:$0xff] %v4987
        %5020 = vst [vmem:[#allocation6 + $0x130] sm:$0xff] %v4988
        %5021 = vst [vmem:[#allocation6 + $0x140] sm:$0xff] %v4989
        %5022 = vst [vmem:[#allocation6 + $0x150] sm:$0xff] %v4990
        %5023 = vst [vmem:[#allocation6 + $0x160] sm:$0xff] %v4991
        %5024 = vst [vmem:[#allocation6 + $0x170] sm:$0xff] %v4992
        %5025 = vst [vmem:[#allocation6 + $0x180] sm:$0xff] %v4993
        %5026 = vst [vmem:[#allocation6 + $0x190] sm:$0xff] %v4994
        %5027 = vst [vmem:[#allocation6 + $0x1a0] sm:$0xff] %v4995
        %5028 = vst [vmem:[#allocation6 + $0x1b0] sm:$0xff] %v4996
        %5029 = vst [vmem:[#allocation6 + $0x1c0] sm:$0xff] %v4997
        %5030 = vst [vmem:[#allocation6 + $0x1d0] sm:$0xff] %v4998
        %5031 = vst [vmem:[#allocation6 + $0x1e0] sm:$0xff] %v4999
        %5032 = vst [vmem:[#allocation6 + $0x1f0] sm:$0xff] %v5000
        %5033 = vst.msk [vmem:[#allocation6 + $0x8] sm:$0xff] %vm4102, %v4809
        %5034 = vst.msk [vmem:[#allocation6 + $0x18] sm:$0xff] %vm4102, %v4810
        %5035 = vst.msk [vmem:[#allocation6 + $0x28] sm:$0xff] %vm4102, %v4811
        %5036 = vst.msk [vmem:[#allocation6 + $0x38] sm:$0xff] %vm4102, %v4812
        %5037 = vst.msk [vmem:[#allocation6 + $0x48] sm:$0xff] %vm4102, %v4813
        %5038 = vst.msk [vmem:[#allocation6 + $0x58] sm:$0xff] %vm4102, %v4814
        %5039 = vst.msk [vmem:[#allocation6 + $0x68] sm:$0xff] %vm4102, %v4815
        %5040 = vst.msk [vmem:[#allocation6 + $0x78] sm:$0xff] %vm4102, %v4816
        %5041 = vst.msk [vmem:[#allocation6 + $0x88] sm:$0xff] %vm4102, %v4817
        %5042 = vst.msk [vmem:[#allocation6 + $0x98] sm:$0xff] %vm4102, %v4818
        %5043 = vst.msk [vmem:[#allocation6 + $0xa8] sm:$0xff] %vm4102, %v4819
        %5044 = vst.msk [vmem:[#allocation6 + $0xb8] sm:$0xff] %vm4102, %v4820
        %5045 = vst.msk [vmem:[#allocation6 + $0xc8] sm:$0xff] %vm4102, %v4821
        %5046 = vst.msk [vmem:[#allocation6 + $0xd8] sm:$0xff] %vm4102, %v4822
        %5047 = vst.msk [vmem:[#allocation6 + $0xe8] sm:$0xff] %vm4102, %v4823
        %5048 = vst.msk [vmem:[#allocation6 + $0xf8] sm:$0xff] %vm4102, %v4824
        %5049 = vst.msk [vmem:[#allocation6 + $0x108] sm:$0xff] %vm4102, %v4825
        %5050 = vst.msk [vmem:[#allocation6 + $0x118] sm:$0xff] %vm4102, %v4826
        %5051 = vst.msk [vmem:[#allocation6 + $0x128] sm:$0xff] %vm4102, %v4827
        %5052 = vst.msk [vmem:[#allocation6 + $0x138] sm:$0xff] %vm4102, %v4828
        %5053 = vst.msk [vmem:[#allocation6 + $0x148] sm:$0xff] %vm4102, %v4829
        %5054 = vst.msk [vmem:[#allocation6 + $0x158] sm:$0xff] %vm4102, %v4830
        %5055 = vst.msk [vmem:[#allocation6 + $0x168] sm:$0xff] %vm4102, %v4831
        %5056 = vst.msk [vmem:[#allocation6 + $0x178] sm:$0xff] %vm4102, %v4832
        %5057 = vst.msk [vmem:[#allocation6 + $0x188] sm:$0xff] %vm4102, %v4833
        %5058 = vst.msk [vmem:[#allocation6 + $0x198] sm:$0xff] %vm4102, %v4834
        %5059 = vst.msk [vmem:[#allocation6 + $0x1a8] sm:$0xff] %vm4102, %v4835
        %5060 = vst.msk [vmem:[#allocation6 + $0x1b8] sm:$0xff] %vm4102, %v4836
        %5061 = vst.msk [vmem:[#allocation6 + $0x1c8] sm:$0xff] %vm4102, %v4837
        %5062 = vst.msk [vmem:[#allocation6 + $0x1d8] sm:$0xff] %vm4102, %v4838
        %5063 = vst.msk [vmem:[#allocation6 + $0x1e8] sm:$0xff] %vm4102, %v4839
        %5064 = vst.msk [vmem:[#allocation6 + $0x1f8] sm:$0xff] %vm4102, %v4840
        %v5065 = vld [vmem:[#allocation6] sm:$0xff]
        %v5066 = vld [vmem:[#allocation6 + $0x8] sm:$0xff]
        %v5067 = vld [vmem:[#allocation6 + $0x10] sm:$0xff]
        %v5068 = vld [vmem:[#allocation6 + $0x18] sm:$0xff]
        %v5069 = vld [vmem:[#allocation6 + $0x20] sm:$0xff]
        %v5070 = vld [vmem:[#allocation6 + $0x28] sm:$0xff]
        %v5071 = vld [vmem:[#allocation6 + $0x30] sm:$0xff]
        %v5072 = vld [vmem:[#allocation6 + $0x38] sm:$0xff]
        %v5073 = vld [vmem:[#allocation6 + $0x40] sm:$0xff]
        %v5074 = vld [vmem:[#allocation6 + $0x48] sm:$0xff]
        %v5075 = vld [vmem:[#allocation6 + $0x50] sm:$0xff]
        %v5076 = vld [vmem:[#allocation6 + $0x58] sm:$0xff]
        %v5077 = vld [vmem:[#allocation6 + $0x60] sm:$0xff]
        %v5078 = vld [vmem:[#allocation6 + $0x68] sm:$0xff]
        %v5079 = vld [vmem:[#allocation6 + $0x70] sm:$0xff]
        %v5080 = vld [vmem:[#allocation6 + $0x78] sm:$0xff]
        %v5081 = vld [vmem:[#allocation6 + $0x80] sm:$0xff]
        %v5082 = vld [vmem:[#allocation6 + $0x88] sm:$0xff]
        %v5083 = vld [vmem:[#allocation6 + $0x90] sm:$0xff]
        %v5084 = vld [vmem:[#allocation6 + $0x98] sm:$0xff]
        %v5085 = vld [vmem:[#allocation6 + $0xa0] sm:$0xff]
        %v5086 = vld [vmem:[#allocation6 + $0xa8] sm:$0xff]
        %v5087 = vld [vmem:[#allocation6 + $0xb0] sm:$0xff]
        %v5088 = vld [vmem:[#allocation6 + $0xb8] sm:$0xff]
        %v5089 = vld [vmem:[#allocation6 + $0xc0] sm:$0xff]
        %v5090 = vld [vmem:[#allocation6 + $0xc8] sm:$0xff]
        %v5091 = vld [vmem:[#allocation6 + $0xd0] sm:$0xff]
        %v5092 = vld [vmem:[#allocation6 + $0xd8] sm:$0xff]
        %v5093 = vld [vmem:[#allocation6 + $0xe0] sm:$0xff]
        %v5094 = vld [vmem:[#allocation6 + $0xe8] sm:$0xff]
        %v5095 = vld [vmem:[#allocation6 + $0xf0] sm:$0xff]
        %v5096 = vld [vmem:[#allocation6 + $0xf8] sm:$0xff]
        %v5097 = vld [vmem:[#allocation6 + $0x100] sm:$0xff]
        %v5098 = vld [vmem:[#allocation6 + $0x108] sm:$0xff]
        %v5099 = vld [vmem:[#allocation6 + $0x110] sm:$0xff]
        %v5100 = vld [vmem:[#allocation6 + $0x118] sm:$0xff]
        %v5101 = vld [vmem:[#allocation6 + $0x120] sm:$0xff]
        %v5102 = vld [vmem:[#allocation6 + $0x128] sm:$0xff]
        %v5103 = vld [vmem:[#allocation6 + $0x130] sm:$0xff]
        %v5104 = vld [vmem:[#allocation6 + $0x138] sm:$0xff]
        %v5105 = vld [vmem:[#allocation6 + $0x140] sm:$0xff]
        %v5106 = vld [vmem:[#allocation6 + $0x148] sm:$0xff]
        %v5107 = vld [vmem:[#allocation6 + $0x150] sm:$0xff]
        %v5108 = vld [vmem:[#allocation6 + $0x158] sm:$0xff]
        %v5109 = vld [vmem:[#allocation6 + $0x160] sm:$0xff]
        %v5110 = vld [vmem:[#allocation6 + $0x168] sm:$0xff]
        %v5111 = vld [vmem:[#allocation6 + $0x170] sm:$0xff]
        %v5112 = vld [vmem:[#allocation6 + $0x178] sm:$0xff]
        %v5113 = vld [vmem:[#allocation6 + $0x180] sm:$0xff]
        %v5114 = vld [vmem:[#allocation6 + $0x188] sm:$0xff]
        %v5115 = vld [vmem:[#allocation6 + $0x190] sm:$0xff]
        %v5116 = vld [vmem:[#allocation6 + $0x198] sm:$0xff]
        %v5117 = vld [vmem:[#allocation6 + $0x1a0] sm:$0xff]
        %v5118 = vld [vmem:[#allocation6 + $0x1a8] sm:$0xff]
        %v5119 = vld [vmem:[#allocation6 + $0x1b0] sm:$0xff]
        %v5120 = vld [vmem:[#allocation6 + $0x1b8] sm:$0xff]
        %v5121 = vld [vmem:[#allocation6 + $0x1c0] sm:$0xff]
        %v5122 = vld [vmem:[#allocation6 + $0x1c8] sm:$0xff]
        %v5123 = vld [vmem:[#allocation6 + $0x1d0] sm:$0xff]
        %v5124 = vld [vmem:[#allocation6 + $0x1d8] sm:$0xff]
        %v5125 = vld [vmem:[#allocation6 + $0x1e0] sm:$0xff]
        %v5126 = vld [vmem:[#allocation6 + $0x1e8] sm:$0xff]
        %v5127 = vld [vmem:[#allocation6 + $0x1f0] sm:$0xff]
        %v5128 = vld [vmem:[#allocation6 + $0x1f8] sm:$0xff]
        %s5129 = scalar_lea.vmem %s3, 192
        %v5130 = vld [vmem:[%s5129] sm:$0xff]
        %v5131 = vld [vmem:[%s5129 + $0x8] sm:$0xff]
        %v5132 = vld [vmem:[%s5129 + $0x10] sm:$0xff]
        %v5133 = vld [vmem:[%s5129 + $0x18] sm:$0xff]
        %v5134 = vld [vmem:[%s5129 + $0x20] sm:$0xff]
        %v5135 = vld [vmem:[%s5129 + $0x28] sm:$0xff]
        %v5136 = vld [vmem:[%s5129 + $0x30] sm:$0xff]
        %v5137 = vld [vmem:[%s5129 + $0x38] sm:$0xff]
        %v5138 = vld [vmem:[%s5129 + $0x40] sm:$0xff]
        %v5139 = vld [vmem:[%s5129 + $0x48] sm:$0xff]
        %v5140 = vld [vmem:[%s5129 + $0x50] sm:$0xff]
        %v5141 = vld [vmem:[%s5129 + $0x58] sm:$0xff]
        %v5142 = vld [vmem:[%s5129 + $0x60] sm:$0xff]
        %v5143 = vld [vmem:[%s5129 + $0x68] sm:$0xff]
        %v5144 = vld [vmem:[%s5129 + $0x70] sm:$0xff]
        %v5145 = vld [vmem:[%s5129 + $0x78] sm:$0xff]
        %v5146 = vld [vmem:[%s5129 + $0x80] sm:$0xff]
        %v5147 = vld [vmem:[%s5129 + $0x88] sm:$0xff]
        %v5148 = vld [vmem:[%s5129 + $0x90] sm:$0xff]
        %v5149 = vld [vmem:[%s5129 + $0x98] sm:$0xff]
        %v5150 = vld [vmem:[%s5129 + $0xa0] sm:$0xff]
        %v5151 = vld [vmem:[%s5129 + $0xa8] sm:$0xff]
        %v5152 = vld [vmem:[%s5129 + $0xb0] sm:$0xff]
        %v5153 = vld [vmem:[%s5129 + $0xb8] sm:$0xff]
        %v5155 = vsel %vm4102, %v5066, 0
        %v5158 = vsel %vm4102, %v5068, 0
        %v5161 = vsel %vm4102, %v5070, 0
        %v5164 = vsel %vm4102, %v5072, 0
        %v5167 = vsel %vm4102, %v5074, 0
        %v5170 = vsel %vm4102, %v5076, 0
        %v5173 = vsel %vm4102, %v5078, 0
        %v5176 = vsel %vm4102, %v5080, 0
        %v5179 = vsel %vm4102, %v5082, 0
        %v5182 = vsel %vm4102, %v5084, 0
        %v5185 = vsel %vm4102, %v5086, 0
        %v5188 = vsel %vm4102, %v5088, 0
        %v5191 = vsel %vm4102, %v5090, 0
        %v5194 = vsel %vm4102, %v5092, 0
        %v5197 = vsel %vm4102, %v5094, 0
        %v5200 = vsel %vm4102, %v5096, 0
        %v5203 = vsel %vm4102, %v5098, 0
        %v5206 = vsel %vm4102, %v5100, 0
        %v5209 = vsel %vm4102, %v5102, 0
        %v5212 = vsel %vm4102, %v5104, 0
        %v5215 = vsel %vm4102, %v5106, 0
        %v5218 = vsel %vm4102, %v5108, 0
        %v5221 = vsel %vm4102, %v5110, 0
        %v5224 = vsel %vm4102, %v5112, 0
        %v5227 = vsel %vm4102, %v5114, 0
        %v5230 = vsel %vm4102, %v5116, 0
        %v5233 = vsel %vm4102, %v5118, 0
        %v5236 = vsel %vm4102, %v5120, 0
        %v5239 = vsel %vm4102, %v5122, 0
        %v5242 = vsel %vm4102, %v5124, 0
        %v5245 = vsel %vm4102, %v5126, 0
        %v5248 = vsel %vm4102, %v5128, 0
        %5250 = vmatprep.subr.mxu0 0.0
        %5251 = vmatpush1.msra.mxu0 %v5130
        %5252 = vmatprep.subr.mxu0 0.0
        %5253 = vmatpush1.msra.mxu0 %v5131
        %5254 = vmatprep.subr.mxu0 0.0
        %5255 = vmatpush1.msra.mxu0 %v5132
        %5256 = vmatprep.subr.mxu0 0.0
        %5257 = vmatpush1.msra.mxu0 %v5133
        %5258 = vmatprep.subr.mxu0 0.0
        %5259 = vmatpush1.msra.mxu0 %v5134
        %5260 = vmatprep.subr.mxu0 0.0
        %5261 = vmatpush1.msra.mxu0 %v5135
        %5262 = vmatprep.subr.mxu0 0.0
        %5263 = vmatpush1.msra.mxu0 %v5136
        %5264 = vmatprep.subr.mxu0 0.0
        %5265 = vmatpush1.msra.mxu0 %v5137
        %5266 = vmatprep.subr.mxu0 0.0
        %5267 = vmatpush1.msra.mxu0 %v5138
        %5268 = vmatprep.subr.mxu0 0.0
        %5269 = vmatpush1.msra.mxu0 %v5139
        %5270 = vmatprep.subr.mxu0 0.0
        %5271 = vmatpush1.msra.mxu0 %v5140
        %5272 = vmatprep.subr.mxu0 0.0
        %5273 = vmatpush1.msra.mxu0 %v5141
        %5274 = vmatprep.subr.mxu0 0.0
        %5275 = vmatpush1.msra.mxu0 %v5142
        %5276 = vmatprep.subr.mxu0 0.0
        %5277 = vmatpush1.msra.mxu0 %v5143
        %5278 = vmatprep.subr.mxu0 0.0
        %5279 = vmatpush1.msra.mxu0 %v5144
        %5280 = vmatprep.subr.mxu0 0.0
        %5281 = vmatpush1.msra.mxu0 %v5145
        %5282 = vmatprep.subr.mxu0 0.0
        %5283 = vmatpush1.msra.mxu0 %v5146
        %5284 = vmatprep.subr.mxu0 0.0
        %5285 = vmatpush1.msra.mxu0 %v5147
        %5286 = vmatprep.subr.mxu0 0.0
        %5287 = vmatpush1.msra.mxu0 %v5148
        %5288 = vmatprep.subr.mxu0 0.0
        %5289 = vmatpush1.msra.mxu0 %v5149
        %5290 = vmatprep.subr.mxu0 0.0
        %5291 = vmatpush1.msra.mxu0 %v5150
        %5292 = vmatprep.subr.mxu0 0.0
        %5293 = vmatpush1.msra.mxu0 %v5151
        %5294 = vmatprep.subr.mxu0 0.0
        %5295 = vmatpush1.msra.mxu0 %v5152
        %5296 = vmatprep.subr.mxu0 0.0
        %5297 = vmatpush1.msra.mxu0 %v5153
        %5298 = vmatprep.subr.mxu0 0.0
        %5299 = vmatpush1.msra.mxu0 0.0
        %5300 = vmatprep.subr.mxu0 0.0
        %5301 = vmatpush1.msra.mxu0 0.0
        %5302 = vmatprep.subr.mxu0 0.0
        %5303 = vmatpush1.msra.mxu0 0.0
        %5304 = vmatprep.subr.mxu0 0.0
        %5305 = vmatpush1.msra.mxu0 0.0
        %5306 = vmatprep.subr.mxu0 0.0
        %5307 = vmatpush1.msra.mxu0 0.0
        %5308 = vmatprep.subr.mxu0 0.0
        %5309 = vmatpush1.msra.mxu0 0.0
        %5310 = vmatprep.subr.mxu0 0.0
        %5311 = vmatpush1.msra.mxu0 0.0
        %5312 = vmatprep.subr.mxu0 0.0
        %5313 = vmatpush1.msra.mxu0 0.0
        %5314 = vmatprep.mubr.f32.mxu0 %v5155
        %5315 = vmatmul.mubr.f32.gmra.mrb[0].mxu0 %v5065
        %v5316 = vpop.f32.mrb[0].mxu0
        %v5317 = vadd.f32 0.0, %v5316
        %v5318 = vpop.f32.mrb[0].mxu0
        %5319 = vmatprep.mubr.f32.mxu0 %v5158
        %5320 = vmatmul.mubr.f32.gmra.mrb[0].mxu0 %v5067
        %v5321 = vpop.f32.mrb[0].mxu0
        %v5322 = vadd.f32 0.0, %v5321
        %v5323 = vpop.f32.mrb[0].mxu0
        %5324 = vmatprep.mubr.f32.mxu0 %v5161
        %5325 = vmatmul.mubr.f32.gmra.mrb[0].mxu0 %v5069
        %v5326 = vpop.f32.mrb[0].mxu0
        %v5327 = vadd.f32 0.0, %v5326
        %v5328 = vpop.f32.mrb[0].mxu0
        %5329 = vmatprep.mubr.f32.mxu0 %v5164
        %5330 = vmatmul.mubr.f32.gmra.mrb[0].mxu0 %v5071
        %v5331 = vpop.f32.mrb[0].mxu0
        %v5332 = vadd.f32 0.0, %v5331
        %v5333 = vpop.f32.mrb[0].mxu0
        %5334 = vmatprep.mubr.f32.mxu0 %v5167
        %5335 = vmatmul.mubr.f32.gmra.mrb[0].mxu0 %v5073
        %v5336 = vpop.f32.mrb[0].mxu0
        %v5337 = vadd.f32 0.0, %v5336
        %v5338 = vpop.f32.mrb[0].mxu0
        %5339 = vmatprep.mubr.f32.mxu0 %v5170
        %5340 = vmatmul.mubr.f32.gmra.mrb[0].mxu0 %v5075
        %v5341 = vpop.f32.mrb[0].mxu0
        %v5342 = vadd.f32 0.0, %v5341
        %v5343 = vpop.f32.mrb[0].mxu0
        %5344 = vmatprep.mubr.f32.mxu0 %v5173
        %5345 = vmatmul.mubr.f32.gmra.mrb[0].mxu0 %v5077
        %v5346 = vpop.f32.mrb[0].mxu0
        %v5347 = vadd.f32 0.0, %v5346
        %v5348 = vpop.f32.mrb[0].mxu0
        %5349 = vmatprep.mubr.f32.mxu0 %v5176
        %5350 = vmatmul.mubr.f32.gmra.mrb[0].mxu0 %v5079
        %v5351 = vpop.f32.mrb[0].mxu0
        %v5352 = vadd.f32 0.0, %v5351
        %v5353 = vpop.f32.mrb[0].mxu0
        %5354 = vmatprep.mubr.f32.mxu0 %v5179
        %5355 = vmatmul.mubr.f32.gmra.mrb[0].mxu0 %v5081
        %v5356 = vpop.f32.mrb[0].mxu0
        %v5357 = vadd.f32 0.0, %v5356
        %v5358 = vpop.f32.mrb[0].mxu0
        %5359 = vmatprep.mubr.f32.mxu0 %v5182
        %5360 = vmatmul.mubr.f32.gmra.mrb[0].mxu0 %v5083
        %v5361 = vpop.f32.mrb[0].mxu0
        %v5362 = vadd.f32 0.0, %v5361
        %v5363 = vpop.f32.mrb[0].mxu0
        %5364 = vmatprep.mubr.f32.mxu0 %v5185
        %5365 = vmatmul.mubr.f32.gmra.mrb[0].mxu0 %v5085
        %v5366 = vpop.f32.mrb[0].mxu0
        %v5367 = vadd.f32 0.0, %v5366
        %v5368 = vpop.f32.mrb[0].mxu0
        %5369 = vmatprep.mubr.f32.mxu0 %v5188
        %5370 = vmatmul.mubr.f32.gmra.mrb[0].mxu0 %v5087
        %v5371 = vpop.f32.mrb[0].mxu0
        %v5372 = vadd.f32 0.0, %v5371
        %v5373 = vpop.f32.mrb[0].mxu0
        %5374 = vmatprep.mubr.f32.mxu0 %v5191
        %5375 = vmatmul.mubr.f32.gmra.mrb[0].mxu0 %v5089
        %v5376 = vpop.f32.mrb[0].mxu0
        %v5377 = vadd.f32 0.0, %v5376
        %v5378 = vpop.f32.mrb[0].mxu0
        %5379 = vmatprep.mubr.f32.mxu0 %v5194
        %5380 = vmatmul.mubr.f32.gmra.mrb[0].mxu0 %v5091
        %v5381 = vpop.f32.mrb[0].mxu0
        %v5382 = vadd.f32 0.0, %v5381
        %v5383 = vpop.f32.mrb[0].mxu0
        %5384 = vmatprep.mubr.f32.mxu0 %v5197
        %5385 = vmatmul.mubr.f32.gmra.mrb[0].mxu0 %v5093
        %v5386 = vpop.f32.mrb[0].mxu0
        %v5387 = vadd.f32 0.0, %v5386
        %v5388 = vpop.f32.mrb[0].mxu0
        %5389 = vmatprep.mubr.f32.mxu0 %v5200
        %5390 = vmatmul.mubr.f32.gmra.mrb[0].mxu0 %v5095
        %v5391 = vpop.f32.mrb[0].mxu0
        %v5392 = vadd.f32 0.0, %v5391
        %v5393 = vpop.f32.mrb[0].mxu0
        %5394 = vmatprep.mubr.f32.mxu0 %v5203
        %5395 = vmatmul.mubr.f32.gmra.mrb[0].mxu0 %v5097
        %v5396 = vpop.f32.mrb[0].mxu0
        %v5397 = vadd.f32 0.0, %v5396
        %v5398 = vpop.f32.mrb[0].mxu0
        %5399 = vmatprep.mubr.f32.mxu0 %v5206
        %5400 = vmatmul.mubr.f32.gmra.mrb[0].mxu0 %v5099
        %v5401 = vpop.f32.mrb[0].mxu0
        %v5402 = vadd.f32 0.0, %v5401
        %v5403 = vpop.f32.mrb[0].mxu0
        %5404 = vmatprep.mubr.f32.mxu0 %v5209
        %5405 = vmatmul.mubr.f32.gmra.mrb[0].mxu0 %v5101
        %v5406 = vpop.f32.mrb[0].mxu0
        %v5407 = vadd.f32 0.0, %v5406
        %v5408 = vpop.f32.mrb[0].mxu0
        %5409 = vmatprep.mubr.f32.mxu0 %v5212
        %5410 = vmatmul.mubr.f32.gmra.mrb[0].mxu0 %v5103
        %v5411 = vpop.f32.mrb[0].mxu0
        %v5412 = vadd.f32 0.0, %v5411
        %v5413 = vpop.f32.mrb[0].mxu0
        %5414 = vmatprep.mubr.f32.mxu0 %v5215
        %5415 = vmatmul.mubr.f32.gmra.mrb[0].mxu0 %v5105
        %v5416 = vpop.f32.mrb[0].mxu0
        %v5417 = vadd.f32 0.0, %v5416
        %v5418 = vpop.f32.mrb[0].mxu0
        %5419 = vmatprep.mubr.f32.mxu0 %v5218
        %5420 = vmatmul.mubr.f32.gmra.mrb[0].mxu0 %v5107
        %v5421 = vpop.f32.mrb[0].mxu0
        %v5422 = vadd.f32 0.0, %v5421
        %v5423 = vpop.f32.mrb[0].mxu0
        %5424 = vmatprep.mubr.f32.mxu0 %v5221
        %5425 = vmatmul.mubr.f32.gmra.mrb[0].mxu0 %v5109
        %v5426 = vpop.f32.mrb[0].mxu0
        %v5427 = vadd.f32 0.0, %v5426
        %v5428 = vpop.f32.mrb[0].mxu0
        %5429 = vmatprep.mubr.f32.mxu0 %v5224
        %5430 = vmatmul.mubr.f32.gmra.mrb[0].mxu0 %v5111
        %v5431 = vpop.f32.mrb[0].mxu0
        %v5432 = vadd.f32 0.0, %v5431
        %v5433 = vpop.f32.mrb[0].mxu0
        %5434 = vmatprep.mubr.f32.mxu0 %v5227
        %5435 = vmatmul.mubr.f32.gmra.mrb[0].mxu0 %v5113
        %v5436 = vpop.f32.mrb[0].mxu0
        %v5437 = vadd.f32 0.0, %v5436
        %v5438 = vpop.f32.mrb[0].mxu0
        %5439 = vmatprep.mubr.f32.mxu0 %v5230
        %5440 = vmatmul.mubr.f32.gmra.mrb[0].mxu0 %v5115
        %v5441 = vpop.f32.mrb[0].mxu0
        %v5442 = vadd.f32 0.0, %v5441
        %v5443 = vpop.f32.mrb[0].mxu0
        %5444 = vmatprep.mubr.f32.mxu0 %v5233
        %5445 = vmatmul.mubr.f32.gmra.mrb[0].mxu0 %v5117
        %v5446 = vpop.f32.mrb[0].mxu0
        %v5447 = vadd.f32 0.0, %v5446
        %v5448 = vpop.f32.mrb[0].mxu0
        %5449 = vmatprep.mubr.f32.mxu0 %v5236
        %5450 = vmatmul.mubr.f32.gmra.mrb[0].mxu0 %v5119
        %v5451 = vpop.f32.mrb[0].mxu0
        %v5452 = vadd.f32 0.0, %v5451
        %v5453 = vpop.f32.mrb[0].mxu0
        %5454 = vmatprep.mubr.f32.mxu0 %v5239
        %5455 = vmatmul.mubr.f32.gmra.mrb[0].mxu0 %v5121
        %v5456 = vpop.f32.mrb[0].mxu0
        %v5457 = vadd.f32 0.0, %v5456
        %v5458 = vpop.f32.mrb[0].mxu0
        %5459 = vmatprep.mubr.f32.mxu0 %v5242
        %5460 = vmatmul.mubr.f32.gmra.mrb[0].mxu0 %v5123
        %v5461 = vpop.f32.mrb[0].mxu0
        %v5462 = vadd.f32 0.0, %v5461
        %v5463 = vpop.f32.mrb[0].mxu0
        %5464 = vmatprep.mubr.f32.mxu0 %v5245
        %5465 = vmatmul.mubr.f32.gmra.mrb[0].mxu0 %v5125
        %v5466 = vpop.f32.mrb[0].mxu0
        %v5467 = vadd.f32 0.0, %v5466
        %v5468 = vpop.f32.mrb[0].mxu0
        %5469 = vmatprep.mubr.f32.mxu0 %v5248
        %5470 = vmatmul.mubr.f32.gmra.mrb[0].mxu0 %v5127
        %v5471 = vpop.f32.mrb[0].mxu0
        %v5472 = vadd.f32 0.0, %v5471
        %v5473 = vpop.f32.mrb[0].mxu0
        %5474 = vdwg.mxu0
        %v5476 = vsel %vm4102, %v4658, 0
        %v5479 = vsel %vm4102, %v4660, 0
        %v5482 = vsel %vm4102, %v4662, 0
        %v5485 = vsel %vm4102, %v4664, 0
        %v5488 = vsel %vm4102, %v4666, 0
        %v5491 = vsel %vm4102, %v4668, 0
        %v5494 = vsel %vm4102, %v4670, 0
        %v5497 = vsel %vm4102, %v4672, 0
        %v5500 = vsel %vm4102, %v4674, 0
        %v5503 = vsel %vm4102, %v4676, 0
        %v5506 = vsel %vm4102, %v4678, 0
        %v5509 = vsel %vm4102, %v4680, 0
        %v5512 = vsel %vm4102, %v4682, 0
        %v5515 = vsel %vm4102, %v4684, 0
        %v5518 = vsel %vm4102, %v4686, 0
        %v5521 = vsel %vm4102, %v4688, 0
        %v5524 = vsel %vm4102, %v4690, 0
        %v5527 = vsel %vm4102, %v4692, 0
        %v5530 = vsel %vm4102, %v4694, 0
        %v5533 = vsel %vm4102, %v4696, 0
        %v5536 = vsel %vm4102, %v4698, 0
        %v5539 = vsel %vm4102, %v4700, 0
        %v5542 = vsel %vm4102, %v4702, 0
        %v5545 = vsel %vm4102, %v4704, 0
        %v5548 = vsel %vm4102, %v4706, 0
        %v5551 = vsel %vm4102, %v4708, 0
        %v5554 = vsel %vm4102, %v4710, 0
        %v5557 = vsel %vm4102, %v4712, 0
        %v5560 = vsel %vm4102, %v4714, 0
        %v5563 = vsel %vm4102, %v4716, 0
        %v5566 = vsel %vm4102, %v4718, 0
        %v5569 = vsel %vm4102, %v4720, 0
        %5571 = vmatprep.subr.mxu0 0.0
        %5572 = vmatpush1.msra.mxu0 %v4721
        %5573 = vmatprep.subr.mxu0 0.0
        %5574 = vmatpush1.msra.mxu0 %v4722
        %5575 = vmatprep.subr.mxu0 0.0
        %5576 = vmatpush1.msra.mxu0 %v4723
        %5577 = vmatprep.subr.mxu0 0.0
        %5578 = vmatpush1.msra.mxu0 %v4724
        %5579 = vmatprep.subr.mxu0 0.0
        %5580 = vmatpush1.msra.mxu0 %v4725
        %5581 = vmatprep.subr.mxu0 0.0
        %5582 = vmatpush1.msra.mxu0 %v4726
        %5583 = vmatprep.subr.mxu0 0.0
        %5584 = vmatpush1.msra.mxu0 %v4727
        %5585 = vmatprep.subr.mxu0 0.0
        %5586 = vmatpush1.msra.mxu0 %v4728
        %5587 = vmatprep.subr.mxu0 0.0
        %5588 = vmatpush1.msra.mxu0 %v4729
        %5589 = vmatprep.subr.mxu0 0.0
        %5590 = vmatpush1.msra.mxu0 %v4730
        %5591 = vmatprep.subr.mxu0 0.0
        %5592 = vmatpush1.msra.mxu0 %v4731
        %5593 = vmatprep.subr.mxu0 0.0
        %5594 = vmatpush1.msra.mxu0 %v4732
        %5595 = vmatprep.subr.mxu0 0.0
        %5596 = vmatpush1.msra.mxu0 %v4733
        %5597 = vmatprep.subr.mxu0 0.0
        %5598 = vmatpush1.msra.mxu0 %v4734
        %5599 = vmatprep.subr.mxu0 0.0
        %5600 = vmatpush1.msra.mxu0 %v4735
        %5601 = vmatprep.subr.mxu0 0.0
        %5602 = vmatpush1.msra.mxu0 %v4736
        %5603 = vmatprep.subr.mxu0 0.0
        %5604 = vmatpush1.msra.mxu0 %v4737
        %5605 = vmatprep.subr.mxu0 0.0
        %5606 = vmatpush1.msra.mxu0 %v4738
        %5607 = vmatprep.subr.mxu0 0.0
        %5608 = vmatpush1.msra.mxu0 %v4739
        %5609 = vmatprep.subr.mxu0 0.0
        %5610 = vmatpush1.msra.mxu0 %v4740
        %5611 = vmatprep.subr.mxu0 0.0
        %5612 = vmatpush1.msra.mxu0 %v4741
        %5613 = vmatprep.subr.mxu0 0.0
        %5614 = vmatpush1.msra.mxu0 %v4742
        %5615 = vmatprep.subr.mxu0 0.0
        %5616 = vmatpush1.msra.mxu0 %v4743
        %5617 = vmatprep.subr.mxu0 0.0
        %5618 = vmatpush1.msra.mxu0 %v4744
        %5619 = vmatprep.subr.mxu0 0.0
        %5620 = vmatpush1.msra.mxu0 0.0
        %5621 = vmatprep.subr.mxu0 0.0
        %5622 = vmatpush1.msra.mxu0 0.0
        %5623 = vmatprep.subr.mxu0 0.0
        %5624 = vmatpush1.msra.mxu0 0.0
        %5625 = vmatprep.subr.mxu0 0.0
        %5626 = vmatpush1.msra.mxu0 0.0
        %5627 = vmatprep.subr.mxu0 0.0
        %5628 = vmatpush1.msra.mxu0 0.0
        %5629 = vmatprep.subr.mxu0 0.0
        %5630 = vmatpush1.msra.mxu0 0.0
        %5631 = vmatprep.subr.mxu0 0.0
        %5632 = vmatpush1.msra.mxu0 0.0
        %5633 = vmatprep.subr.mxu0 0.0
        %5634 = vmatpush1.msra.mxu0 0.0
        %5635 = vmatprep.mubr.f32.mxu0 %v5476
        %5636 = vmatmul.mubr.f32.gmra.mrb[0].mxu0 %v4657
        %v5637 = vpop.f32.mrb[0].mxu0
        %v5638 = vadd.f32 %v5317, %v5637
        %v5639 = vpop.f32.mrb[0].mxu0
        %5640 = vmatprep.mubr.f32.mxu0 %v5479
        %5641 = vmatmul.mubr.f32.gmra.mrb[0].mxu0 %v4659
        %v5642 = vpop.f32.mrb[0].mxu0
        %v5643 = vadd.f32 %v5322, %v5642
        %v5644 = vpop.f32.mrb[0].mxu0
        %5645 = vmatprep.mubr.f32.mxu0 %v5482
        %5646 = vmatmul.mubr.f32.gmra.mrb[0].mxu0 %v4661
        %v5647 = vpop.f32.mrb[0].mxu0
        %v5648 = vadd.f32 %v5327, %v5647
        %v5649 = vpop.f32.mrb[0].mxu0
        %5650 = vmatprep.mubr.f32.mxu0 %v5485
        %5651 = vmatmul.mubr.f32.gmra.mrb[0].mxu0 %v4663
        %v5652 = vpop.f32.mrb[0].mxu0
        %v5653 = vadd.f32 %v5332, %v5652
        %v5654 = vpop.f32.mrb[0].mxu0
        %5655 = vmatprep.mubr.f32.mxu0 %v5488
        %5656 = vmatmul.mubr.f32.gmra.mrb[0].mxu0 %v4665
        %v5657 = vpop.f32.mrb[0].mxu0
        %v5658 = vadd.f32 %v5337, %v5657
        %v5659 = vpop.f32.mrb[0].mxu0
        %5660 = vmatprep.mubr.f32.mxu0 %v5491
        %5661 = vmatmul.mubr.f32.gmra.mrb[0].mxu0 %v4667
        %v5662 = vpop.f32.mrb[0].mxu0
        %v5663 = vadd.f32 %v5342, %v5662
        %v5664 = vpop.f32.mrb[0].mxu0
        %5665 = vmatprep.mubr.f32.mxu0 %v5494
        %5666 = vmatmul.mubr.f32.gmra.mrb[0].mxu0 %v4669
        %v5667 = vpop.f32.mrb[0].mxu0
        %v5668 = vadd.f32 %v5347, %v5667
        %v5669 = vpop.f32.mrb[0].mxu0
        %5670 = vmatprep.mubr.f32.mxu0 %v5497
        %5671 = vmatmul.mubr.f32.gmra.mrb[0].mxu0 %v4671
        %v5672 = vpop.f32.mrb[0].mxu0
        %v5673 = vadd.f32 %v5352, %v5672
        %v5674 = vpop.f32.mrb[0].mxu0
        %5675 = vmatprep.mubr.f32.mxu0 %v5500
        %5676 = vmatmul.mubr.f32.gmra.mrb[0].mxu0 %v4673
        %v5677 = vpop.f32.mrb[0].mxu0
        %v5678 = vadd.f32 %v5357, %v5677
        %v5679 = vpop.f32.mrb[0].mxu0
        %5680 = vmatprep.mubr.f32.mxu0 %v5503
        %5681 = vmatmul.mubr.f32.gmra.mrb[0].mxu0 %v4675
        %v5682 = vpop.f32.mrb[0].mxu0
        %v5683 = vadd.f32 %v5362, %v5682
        %v5684 = vpop.f32.mrb[0].mxu0
        %5685 = vmatprep.mubr.f32.mxu0 %v5506
        %5686 = vmatmul.mubr.f32.gmra.mrb[0].mxu0 %v4677
        %v5687 = vpop.f32.mrb[0].mxu0
        %v5688 = vadd.f32 %v5367, %v5687
        %v5689 = vpop.f32.mrb[0].mxu0
        %5690 = vmatprep.mubr.f32.mxu0 %v5509
        %5691 = vmatmul.mubr.f32.gmra.mrb[0].mxu0 %v4679
        %v5692 = vpop.f32.mrb[0].mxu0
        %v5693 = vadd.f32 %v5372, %v5692
        %v5694 = vpop.f32.mrb[0].mxu0
        %5695 = vmatprep.mubr.f32.mxu0 %v5512
        %5696 = vmatmul.mubr.f32.gmra.mrb[0].mxu0 %v4681
        %v5697 = vpop.f32.mrb[0].mxu0
        %v5698 = vadd.f32 %v5377, %v5697
        %v5699 = vpop.f32.mrb[0].mxu0
        %5700 = vmatprep.mubr.f32.mxu0 %v5515
        %5701 = vmatmul.mubr.f32.gmra.mrb[0].mxu0 %v4683
        %v5702 = vpop.f32.mrb[0].mxu0
        %v5703 = vadd.f32 %v5382, %v5702
        %v5704 = vpop.f32.mrb[0].mxu0
        %5705 = vmatprep.mubr.f32.mxu0 %v5518
        %5706 = vmatmul.mubr.f32.gmra.mrb[0].mxu0 %v4685
        %v5707 = vpop.f32.mrb[0].mxu0
        %v5708 = vadd.f32 %v5387, %v5707
        %v5709 = vpop.f32.mrb[0].mxu0
        %5710 = vmatprep.mubr.f32.mxu0 %v5521
        %5711 = vmatmul.mubr.f32.gmra.mrb[0].mxu0 %v4687
        %v5712 = vpop.f32.mrb[0].mxu0
        %v5713 = vadd.f32 %v5392, %v5712
        %v5714 = vpop.f32.mrb[0].mxu0
        %5715 = vmatprep.mubr.f32.mxu0 %v5524
        %5716 = vmatmul.mubr.f32.gmra.mrb[0].mxu0 %v4689
        %v5717 = vpop.f32.mrb[0].mxu0
        %v5718 = vadd.f32 %v5397, %v5717
        %v5719 = vpop.f32.mrb[0].mxu0
        %5720 = vmatprep.mubr.f32.mxu0 %v5527
        %5721 = vmatmul.mubr.f32.gmra.mrb[0].mxu0 %v4691
        %v5722 = vpop.f32.mrb[0].mxu0
        %v5723 = vadd.f32 %v5402, %v5722
        %v5724 = vpop.f32.mrb[0].mxu0
        %5725 = vmatprep.mubr.f32.mxu0 %v5530
        %5726 = vmatmul.mubr.f32.gmra.mrb[0].mxu0 %v4693
        %v5727 = vpop.f32.mrb[0].mxu0
        %v5728 = vadd.f32 %v5407, %v5727
        %v5729 = vpop.f32.mrb[0].mxu0
        %5730 = vmatprep.mubr.f32.mxu0 %v5533
        %5731 = vmatmul.mubr.f32.gmra.mrb[0].mxu0 %v4695
        %v5732 = vpop.f32.mrb[0].mxu0
        %v5733 = vadd.f32 %v5412, %v5732
        %v5734 = vpop.f32.mrb[0].mxu0
        %5735 = vmatprep.mubr.f32.mxu0 %v5536
        %5736 = vmatmul.mubr.f32.gmra.mrb[0].mxu0 %v4697
        %v5737 = vpop.f32.mrb[0].mxu0
        %v5738 = vadd.f32 %v5417, %v5737
        %v5739 = vpop.f32.mrb[0].mxu0
        %5740 = vmatprep.mubr.f32.mxu0 %v5539
        %5741 = vmatmul.mubr.f32.gmra.mrb[0].mxu0 %v4699
        %v5742 = vpop.f32.mrb[0].mxu0
        %v5743 = vadd.f32 %v5422, %v5742
        %v5744 = vpop.f32.mrb[0].mxu0
        %5745 = vmatprep.mubr.f32.mxu0 %v5542
        %5746 = vmatmul.mubr.f32.gmra.mrb[0].mxu0 %v4701
        %v5747 = vpop.f32.mrb[0].mxu0
        %v5748 = vadd.f32 %v5427, %v5747
        %v5749 = vpop.f32.mrb[0].mxu0
        %5750 = vmatprep.mubr.f32.mxu0 %v5545
        %5751 = vmatmul.mubr.f32.gmra.mrb[0].mxu0 %v4703
        %v5752 = vpop.f32.mrb[0].mxu0
        %v5753 = vadd.f32 %v5432, %v5752
        %v5754 = vpop.f32.mrb[0].mxu0
        %5755 = vmatprep.mubr.f32.mxu0 %v5548
        %5756 = vmatmul.mubr.f32.gmra.mrb[0].mxu0 %v4705
        %v5757 = vpop.f32.mrb[0].mxu0
        %v5758 = vadd.f32 %v5437, %v5757
        %v5759 = vpop.f32.mrb[0].mxu0
        %5760 = vmatprep.mubr.f32.mxu0 %v5551
        %5761 = vmatmul.mubr.f32.gmra.mrb[0].mxu0 %v4707
        %v5762 = vpop.f32.mrb[0].mxu0
        %v5763 = vadd.f32 %v5442, %v5762
        %v5764 = vpop.f32.mrb[0].mxu0
        %5765 = vmatprep.mubr.f32.mxu0 %v5554
        %5766 = vmatmul.mubr.f32.gmra.mrb[0].mxu0 %v4709
        %v5767 = vpop.f32.mrb[0].mxu0
        %v5768 = vadd.f32 %v5447, %v5767
        %v5769 = vpop.f32.mrb[0].mxu0
        %5770 = vmatprep.mubr.f32.mxu0 %v5557
        %5771 = vmatmul.mubr.f32.gmra.mrb[0].mxu0 %v4711
        %v5772 = vpop.f32.mrb[0].mxu0
        %v5773 = vadd.f32 %v5452, %v5772
        %v5774 = vpop.f32.mrb[0].mxu0
        %5775 = vmatprep.mubr.f32.mxu0 %v5560
        %5776 = vmatmul.mubr.f32.gmra.mrb[0].mxu0 %v4713
        %v5777 = vpop.f32.mrb[0].mxu0
        %v5778 = vadd.f32 %v5457, %v5777
        %v5779 = vpop.f32.mrb[0].mxu0
        %5780 = vmatprep.mubr.f32.mxu0 %v5563
        %5781 = vmatmul.mubr.f32.gmra.mrb[0].mxu0 %v4715
        %v5782 = vpop.f32.mrb[0].mxu0
        %v5783 = vadd.f32 %v5462, %v5782
        %v5784 = vpop.f32.mrb[0].mxu0
        %5785 = vmatprep.mubr.f32.mxu0 %v5566
        %5786 = vmatmul.mubr.f32.gmra.mrb[0].mxu0 %v4717
        %v5787 = vpop.f32.mrb[0].mxu0
        %v5788 = vadd.f32 %v5467, %v5787
        %v5789 = vpop.f32.mrb[0].mxu0
        %5790 = vmatprep.mubr.f32.mxu0 %v5569
        %5791 = vmatmul.mubr.f32.gmra.mrb[0].mxu0 %v4719
        %v5792 = vpop.f32.mrb[0].mxu0
        %v5793 = vadd.f32 %v5472, %v5792
        %v5794 = vpop.f32.mrb[0].mxu0
        %5795 = vdwg.mxu0
        %s5796 = scalar_lea.vmem [#allocation3], 64
        %v5797 = vld [vmem:[%s5796 + $0x7] sm:$0xff]
        %v5798 = vld [vmem:[%s5796 + $0xf] sm:$0xff]
        %v5799 = vld [vmem:[%s5796 + $0x27] sm:$0xff]
        %v5800 = vld [vmem:[%s5796 + $0x2f] sm:$0xff]
        %v5801 = vld [vmem:[%s5796 + $0x47] sm:$0xff]
        %v5802 = vld [vmem:[%s5796 + $0x4f] sm:$0xff]
        %v5803 = vld [vmem:[%s5796 + $0x67] sm:$0xff]
        %v5804 = vld [vmem:[%s5796 + $0x6f] sm:$0xff]
        %v5805 = vld [vmem:[%s5796 + $0x87] sm:$0xff]
        %v5806 = vld [vmem:[%s5796 + $0x8f] sm:$0xff]
        %v5807 = vld [vmem:[%s5796 + $0xa7] sm:$0xff]
        %v5808 = vld [vmem:[%s5796 + $0xaf] sm:$0xff]
        %v5809 = vld [vmem:[%s5796 + $0xc7] sm:$0xff]
        %v5810 = vld [vmem:[%s5796 + $0xcf] sm:$0xff]
        %v5811 = vld [vmem:[%s5796 + $0xe7] sm:$0xff]
        %v5812 = vld [vmem:[%s5796 + $0xef] sm:$0xff]
        %v5813 = vld [vmem:[%s5796 + $0x107] sm:$0xff]
        %v5814 = vld [vmem:[%s5796 + $0x10f] sm:$0xff]
        %v5815 = vld [vmem:[%s5796 + $0x127] sm:$0xff]
        %v5816 = vld [vmem:[%s5796 + $0x12f] sm:$0xff]
        %v5817 = vld [vmem:[%s5796 + $0x147] sm:$0xff]
        %v5818 = vld [vmem:[%s5796 + $0x14f] sm:$0xff]
        %v5819 = vld [vmem:[%s5796 + $0x167] sm:$0xff]
        %v5820 = vld [vmem:[%s5796 + $0x16f] sm:$0xff]
        %v5821 = vld [vmem:[%s5796 + $0x187] sm:$0xff]
        %v5822 = vld [vmem:[%s5796 + $0x18f] sm:$0xff]
        %v5823 = vld [vmem:[%s5796 + $0x1a7] sm:$0xff]
        %v5824 = vld [vmem:[%s5796 + $0x1af] sm:$0xff]
        %v5825 = vld [vmem:[%s5796 + $0x1c7] sm:$0xff]
        %v5826 = vld [vmem:[%s5796 + $0x1cf] sm:$0xff]
        %v5827 = vld [vmem:[%s5796 + $0x1e7] sm:$0xff]
        %v5828 = vld [vmem:[%s5796 + $0x1ef] sm:$0xff]
        %v5829 = vld [vmem:[%s5796 + $0x8] sm:$0xff]
        %v5830 = vld [vmem:[%s5796 + $0x10] sm:$0xff]
        %v5831 = vld [vmem:[%s5796 + $0x28] sm:$0xff]
        %v5832 = vld [vmem:[%s5796 + $0x30] sm:$0xff]
        %v5833 = vld [vmem:[%s5796 + $0x48] sm:$0xff]
        %v5834 = vld [vmem:[%s5796 + $0x50] sm:$0xff]
        %v5835 = vld [vmem:[%s5796 + $0x68] sm:$0xff]
        %v5836 = vld [vmem:[%s5796 + $0x70] sm:$0xff]
        %v5837 = vld [vmem:[%s5796 + $0x88] sm:$0xff]
        %v5838 = vld [vmem:[%s5796 + $0x90] sm:$0xff]
        %v5839 = vld [vmem:[%s5796 + $0xa8] sm:$0xff]
        %v5840 = vld [vmem:[%s5796 + $0xb0] sm:$0xff]
        %v5841 = vld [vmem:[%s5796 + $0xc8] sm:$0xff]
        %v5842 = vld [vmem:[%s5796 + $0xd0] sm:$0xff]
        %v5843 = vld [vmem:[%s5796 + $0xe8] sm:$0xff]
        %v5844 = vld [vmem:[%s5796 + $0xf0] sm:$0xff]
        %v5845 = vld [vmem:[%s5796 + $0x108] sm:$0xff]
        %v5846 = vld [vmem:[%s5796 + $0x110] sm:$0xff]
        %v5847 = vld [vmem:[%s5796 + $0x128] sm:$0xff]
        %v5848 = vld [vmem:[%s5796 + $0x130] sm:$0xff]
        %v5849 = vld [vmem:[%s5796 + $0x148] sm:$0xff]
        %v5850 = vld [vmem:[%s5796 + $0x150] sm:$0xff]
        %v5851 = vld [vmem:[%s5796 + $0x168] sm:$0xff]
        %v5852 = vld [vmem:[%s5796 + $0x170] sm:$0xff]
        %v5853 = vld [vmem:[%s5796 + $0x188] sm:$0xff]
        %v5854 = vld [vmem:[%s5796 + $0x190] sm:$0xff]
        %v5855 = vld [vmem:[%s5796 + $0x1a8] sm:$0xff]
        %v5856 = vld [vmem:[%s5796 + $0x1b0] sm:$0xff]
        %v5857 = vld [vmem:[%s5796 + $0x1c8] sm:$0xff]
        %v5858 = vld [vmem:[%s5796 + $0x1d0] sm:$0xff]
        %v5859 = vld [vmem:[%s5796 + $0x1e8] sm:$0xff]
        %v5860 = vld [vmem:[%s5796 + $0x1f0] sm:$0xff]
        %v5861 = vld [vmem:[%s5796 + $0x9] sm:$0xff]
        %v5862 = vld [vmem:[%s5796 + $0x11] sm:$0xff]
        %v5863 = vld [vmem:[%s5796 + $0x29] sm:$0xff]
        %v5864 = vld [vmem:[%s5796 + $0x31] sm:$0xff]
        %v5865 = vld [vmem:[%s5796 + $0x49] sm:$0xff]
        %v5866 = vld [vmem:[%s5796 + $0x51] sm:$0xff]
        %v5867 = vld [vmem:[%s5796 + $0x69] sm:$0xff]
        %v5868 = vld [vmem:[%s5796 + $0x71] sm:$0xff]
        %v5869 = vld [vmem:[%s5796 + $0x89] sm:$0xff]
        %v5870 = vld [vmem:[%s5796 + $0x91] sm:$0xff]
        %v5871 = vld [vmem:[%s5796 + $0xa9] sm:$0xff]
        %v5872 = vld [vmem:[%s5796 + $0xb1] sm:$0xff]
        %v5873 = vld [vmem:[%s5796 + $0xc9] sm:$0xff]
        %v5874 = vld [vmem:[%s5796 + $0xd1] sm:$0xff]
        %v5875 = vld [vmem:[%s5796 + $0xe9] sm:$0xff]
        %v5876 = vld [vmem:[%s5796 + $0xf1] sm:$0xff]
        %v5877 = vld [vmem:[%s5796 + $0x109] sm:$0xff]
        %v5878 = vld [vmem:[%s5796 + $0x111] sm:$0xff]
        %v5879 = vld [vmem:[%s5796 + $0x129] sm:$0xff]
        %v5880 = vld [vmem:[%s5796 + $0x131] sm:$0xff]
        %v5881 = vld [vmem:[%s5796 + $0x149] sm:$0xff]
        %v5882 = vld [vmem:[%s5796 + $0x151] sm:$0xff]
        %v5883 = vld [vmem:[%s5796 + $0x169] sm:$0xff]
        %v5884 = vld [vmem:[%s5796 + $0x171] sm:$0xff]
        %v5885 = vld [vmem:[%s5796 + $0x189] sm:$0xff]
        %v5886 = vld [vmem:[%s5796 + $0x191] sm:$0xff]
        %v5887 = vld [vmem:[%s5796 + $0x1a9] sm:$0xff]
        %v5888 = vld [vmem:[%s5796 + $0x1b1] sm:$0xff]
        %v5889 = vld [vmem:[%s5796 + $0x1c9] sm:$0xff]
        %v5890 = vld [vmem:[%s5796 + $0x1d1] sm:$0xff]
        %v5891 = vld [vmem:[%s5796 + $0x1e9] sm:$0xff]
        %v5892 = vld [vmem:[%s5796 + $0x1f1] sm:$0xff]
        %5925 = vrot.lane.b32.xlu0 %v5829, 64
        %v5926 = vpop.permute.xlu0 %5925
        %5927 = vrot.lane.b32.xlu0 %v5830, 64
        %v5928 = vpop.permute.xlu0 %5927
        %5929 = vrot.lane.b32.xlu0 %v5831, 64
        %v5930 = vpop.permute.xlu0 %5929
        %5931 = vrot.lane.b32.xlu0 %v5832, 64
        %v5932 = vpop.permute.xlu0 %5931
        %5933 = vrot.lane.b32.xlu0 %v5833, 64
        %v5934 = vpop.permute.xlu0 %5933
        %5935 = vrot.lane.b32.xlu0 %v5834, 64
        %v5936 = vpop.permute.xlu0 %5935
        %5937 = vrot.lane.b32.xlu0 %v5835, 64
        %v5938 = vpop.permute.xlu0 %5937
        %5939 = vrot.lane.b32.xlu0 %v5836, 64
        %v5940 = vpop.permute.xlu0 %5939
        %5941 = vrot.lane.b32.xlu0 %v5837, 64
        %v5942 = vpop.permute.xlu0 %5941
        %5943 = vrot.lane.b32.xlu0 %v5838, 64
        %v5944 = vpop.permute.xlu0 %5943
        %5945 = vrot.lane.b32.xlu0 %v5839, 64
        %v5946 = vpop.permute.xlu0 %5945
        %5947 = vrot.lane.b32.xlu0 %v5840, 64
        %v5948 = vpop.permute.xlu0 %5947
        %5949 = vrot.lane.b32.xlu0 %v5841, 64
        %v5950 = vpop.permute.xlu0 %5949
        %5951 = vrot.lane.b32.xlu0 %v5842, 64
        %v5952 = vpop.permute.xlu0 %5951
        %5953 = vrot.lane.b32.xlu0 %v5843, 64
        %v5954 = vpop.permute.xlu0 %5953
        %5955 = vrot.lane.b32.xlu0 %v5844, 64
        %v5956 = vpop.permute.xlu0 %5955
        %5957 = vrot.lane.b32.xlu0 %v5845, 64
        %v5958 = vpop.permute.xlu0 %5957
        %5959 = vrot.lane.b32.xlu0 %v5846, 64
        %v5960 = vpop.permute.xlu0 %5959
        %5961 = vrot.lane.b32.xlu0 %v5847, 64
        %v5962 = vpop.permute.xlu0 %5961
        %5963 = vrot.lane.b32.xlu0 %v5848, 64
        %v5964 = vpop.permute.xlu0 %5963
        %5965 = vrot.lane.b32.xlu0 %v5849, 64
        %v5966 = vpop.permute.xlu0 %5965
        %5967 = vrot.lane.b32.xlu0 %v5850, 64
        %v5968 = vpop.permute.xlu0 %5967
        %5969 = vrot.lane.b32.xlu0 %v5851, 64
        %v5970 = vpop.permute.xlu0 %5969
        %5971 = vrot.lane.b32.xlu0 %v5852, 64
        %v5972 = vpop.permute.xlu0 %5971
        %5973 = vrot.lane.b32.xlu0 %v5853, 64
        %v5974 = vpop.permute.xlu0 %5973
        %5975 = vrot.lane.b32.xlu0 %v5854, 64
        %v5976 = vpop.permute.xlu0 %5975
        %5977 = vrot.lane.b32.xlu0 %v5855, 64
        %v5978 = vpop.permute.xlu0 %5977
        %5979 = vrot.lane.b32.xlu0 %v5856, 64
        %v5980 = vpop.permute.xlu0 %5979
        %5981 = vrot.lane.b32.xlu0 %v5857, 64
        %v5982 = vpop.permute.xlu0 %5981
        %5983 = vrot.lane.b32.xlu0 %v5858, 64
        %v5984 = vpop.permute.xlu0 %5983
        %5985 = vrot.lane.b32.xlu0 %v5859, 64
        %v5986 = vpop.permute.xlu0 %5985
        %5987 = vrot.lane.b32.xlu0 %v5860, 64
        %v5988 = vpop.permute.xlu0 %5987
        %v6021 = vsel %vm4102, %v5797, %v5926
        %v6022 = vsel %vm4102, %v5798, %v5928
        %v6023 = vsel %vm4102, %v5799, %v5930
        %v6024 = vsel %vm4102, %v5800, %v5932
        %v6025 = vsel %vm4102, %v5801, %v5934
        %v6026 = vsel %vm4102, %v5802, %v5936
        %v6027 = vsel %vm4102, %v5803, %v5938
        %v6028 = vsel %vm4102, %v5804, %v5940
        %v6029 = vsel %vm4102, %v5805, %v5942
        %v6030 = vsel %vm4102, %v5806, %v5944
        %v6031 = vsel %vm4102, %v5807, %v5946
        %v6032 = vsel %vm4102, %v5808, %v5948
        %v6033 = vsel %vm4102, %v5809, %v5950
        %v6034 = vsel %vm4102, %v5810, %v5952
        %v6035 = vsel %vm4102, %v5811, %v5954
        %v6036 = vsel %vm4102, %v5812, %v5956
        %v6037 = vsel %vm4102, %v5813, %v5958
        %v6038 = vsel %vm4102, %v5814, %v5960
        %v6039 = vsel %vm4102, %v5815, %v5962
        %v6040 = vsel %vm4102, %v5816, %v5964
        %v6041 = vsel %vm4102, %v5817, %v5966
        %v6042 = vsel %vm4102, %v5818, %v5968
        %v6043 = vsel %vm4102, %v5819, %v5970
        %v6044 = vsel %vm4102, %v5820, %v5972
        %v6045 = vsel %vm4102, %v5821, %v5974
        %v6046 = vsel %vm4102, %v5822, %v5976
        %v6047 = vsel %vm4102, %v5823, %v5978
        %v6048 = vsel %vm4102, %v5824, %v5980
        %v6049 = vsel %vm4102, %v5825, %v5982
        %v6050 = vsel %vm4102, %v5826, %v5984
        %v6051 = vsel %vm4102, %v5827, %v5986
        %v6052 = vsel %vm4102, %v5828, %v5988
        %6053 = vst [vmem:[#allocation6] sm:$0xff] %v6021
        %6054 = vst [vmem:[#allocation6 + $0x10] sm:$0xff] %v6022
        %6055 = vst [vmem:[#allocation6 + $0x20] sm:$0xff] %v6023
        %6056 = vst [vmem:[#allocation6 + $0x30] sm:$0xff] %v6024
        %6057 = vst [vmem:[#allocation6 + $0x40] sm:$0xff] %v6025
        %6058 = vst [vmem:[#allocation6 + $0x50] sm:$0xff] %v6026
        %6059 = vst [vmem:[#allocation6 + $0x60] sm:$0xff] %v6027
        %6060 = vst [vmem:[#allocation6 + $0x70] sm:$0xff] %v6028
        %6061 = vst [vmem:[#allocation6 + $0x80] sm:$0xff] %v6029
        %6062 = vst [vmem:[#allocation6 + $0x90] sm:$0xff] %v6030
        %6063 = vst [vmem:[#allocation6 + $0xa0] sm:$0xff] %v6031
        %6064 = vst [vmem:[#allocation6 + $0xb0] sm:$0xff] %v6032
        %6065 = vst [vmem:[#allocation6 + $0xc0] sm:$0xff] %v6033
        %6066 = vst [vmem:[#allocation6 + $0xd0] sm:$0xff] %v6034
        %6067 = vst [vmem:[#allocation6 + $0xe0] sm:$0xff] %v6035
        %6068 = vst [vmem:[#allocation6 + $0xf0] sm:$0xff] %v6036
        %6069 = vst [vmem:[#allocation6 + $0x100] sm:$0xff] %v6037
        %6070 = vst [vmem:[#allocation6 + $0x110] sm:$0xff] %v6038
        %6071 = vst [vmem:[#allocation6 + $0x120] sm:$0xff] %v6039
        %6072 = vst [vmem:[#allocation6 + $0x130] sm:$0xff] %v6040
        %6073 = vst [vmem:[#allocation6 + $0x140] sm:$0xff] %v6041
        %6074 = vst [vmem:[#allocation6 + $0x150] sm:$0xff] %v6042
        %6075 = vst [vmem:[#allocation6 + $0x160] sm:$0xff] %v6043
        %6076 = vst [vmem:[#allocation6 + $0x170] sm:$0xff] %v6044
        %6077 = vst [vmem:[#allocation6 + $0x180] sm:$0xff] %v6045
        %6078 = vst [vmem:[#allocation6 + $0x190] sm:$0xff] %v6046
        %6079 = vst [vmem:[#allocation6 + $0x1a0] sm:$0xff] %v6047
        %6080 = vst [vmem:[#allocation6 + $0x1b0] sm:$0xff] %v6048
        %6081 = vst [vmem:[#allocation6 + $0x1c0] sm:$0xff] %v6049
        %6082 = vst [vmem:[#allocation6 + $0x1d0] sm:$0xff] %v6050
        %6083 = vst [vmem:[#allocation6 + $0x1e0] sm:$0xff] %v6051
        %6084 = vst [vmem:[#allocation6 + $0x1f0] sm:$0xff] %v6052
        %6085 = vst.msk [vmem:[#allocation6 + $0x8] sm:$0xff] %vm4102, %v5861
        %6086 = vst.msk [vmem:[#allocation6 + $0x18] sm:$0xff] %vm4102, %v5862
        %6087 = vst.msk [vmem:[#allocation6 + $0x28] sm:$0xff] %vm4102, %v5863
        %6088 = vst.msk [vmem:[#allocation6 + $0x38] sm:$0xff] %vm4102, %v5864
        %6089 = vst.msk [vmem:[#allocation6 + $0x48] sm:$0xff] %vm4102, %v5865
        %6090 = vst.msk [vmem:[#allocation6 + $0x58] sm:$0xff] %vm4102, %v5866
        %6091 = vst.msk [vmem:[#allocation6 + $0x68] sm:$0xff] %vm4102, %v5867
        %6092 = vst.msk [vmem:[#allocation6 + $0x78] sm:$0xff] %vm4102, %v5868
        %6093 = vst.msk [vmem:[#allocation6 + $0x88] sm:$0xff] %vm4102, %v5869
        %6094 = vst.msk [vmem:[#allocation6 + $0x98] sm:$0xff] %vm4102, %v5870
        %6095 = vst.msk [vmem:[#allocation6 + $0xa8] sm:$0xff] %vm4102, %v5871
        %6096 = vst.msk [vmem:[#allocation6 + $0xb8] sm:$0xff] %vm4102, %v5872
        %6097 = vst.msk [vmem:[#allocation6 + $0xc8] sm:$0xff] %vm4102, %v5873
        %6098 = vst.msk [vmem:[#allocation6 + $0xd8] sm:$0xff] %vm4102, %v5874
        %6099 = vst.msk [vmem:[#allocation6 + $0xe8] sm:$0xff] %vm4102, %v5875
        %6100 = vst.msk [vmem:[#allocation6 + $0xf8] sm:$0xff] %vm4102, %v5876
        %6101 = vst.msk [vmem:[#allocation6 + $0x108] sm:$0xff] %vm4102, %v5877
        %6102 = vst.msk [vmem:[#allocation6 + $0x118] sm:$0xff] %vm4102, %v5878
        %6103 = vst.msk [vmem:[#allocation6 + $0x128] sm:$0xff] %vm4102, %v5879
        %6104 = vst.msk [vmem:[#allocation6 + $0x138] sm:$0xff] %vm4102, %v5880
        %6105 = vst.msk [vmem:[#allocation6 + $0x148] sm:$0xff] %vm4102, %v5881
        %6106 = vst.msk [vmem:[#allocation6 + $0x158] sm:$0xff] %vm4102, %v5882
        %6107 = vst.msk [vmem:[#allocation6 + $0x168] sm:$0xff] %vm4102, %v5883
        %6108 = vst.msk [vmem:[#allocation6 + $0x178] sm:$0xff] %vm4102, %v5884
        %6109 = vst.msk [vmem:[#allocation6 + $0x188] sm:$0xff] %vm4102, %v5885
        %6110 = vst.msk [vmem:[#allocation6 + $0x198] sm:$0xff] %vm4102, %v5886
        %6111 = vst.msk [vmem:[#allocation6 + $0x1a8] sm:$0xff] %vm4102, %v5887
        %6112 = vst.msk [vmem:[#allocation6 + $0x1b8] sm:$0xff] %vm4102, %v5888
        %6113 = vst.msk [vmem:[#allocation6 + $0x1c8] sm:$0xff] %vm4102, %v5889
        %6114 = vst.msk [vmem:[#allocation6 + $0x1d8] sm:$0xff] %vm4102, %v5890
        %6115 = vst.msk [vmem:[#allocation6 + $0x1e8] sm:$0xff] %vm4102, %v5891
        %6116 = vst.msk [vmem:[#allocation6 + $0x1f8] sm:$0xff] %vm4102, %v5892
        %v6117 = vld [vmem:[#allocation6] sm:$0xff]
        %v6118 = vld [vmem:[#allocation6 + $0x8] sm:$0xff]
        %v6119 = vld [vmem:[#allocation6 + $0x10] sm:$0xff]
        %v6120 = vld [vmem:[#allocation6 + $0x18] sm:$0xff]
        %v6121 = vld [vmem:[#allocation6 + $0x20] sm:$0xff]
        %v6122 = vld [vmem:[#allocation6 + $0x28] sm:$0xff]
        %v6123 = vld [vmem:[#allocation6 + $0x30] sm:$0xff]
        %v6124 = vld [vmem:[#allocation6 + $0x38] sm:$0xff]
        %v6125 = vld [vmem:[#allocation6 + $0x40] sm:$0xff]
        %v6126 = vld [vmem:[#allocation6 + $0x48] sm:$0xff]
        %v6127 = vld [vmem:[#allocation6 + $0x50] sm:$0xff]
        %v6128 = vld [vmem:[#allocation6 + $0x58] sm:$0xff]
        %v6129 = vld [vmem:[#allocation6 + $0x60] sm:$0xff]
        %v6130 = vld [vmem:[#allocation6 + $0x68] sm:$0xff]
        %v6131 = vld [vmem:[#allocation6 + $0x70] sm:$0xff]
        %v6132 = vld [vmem:[#allocation6 + $0x78] sm:$0xff]
        %v6133 = vld [vmem:[#allocation6 + $0x80] sm:$0xff]
        %v6134 = vld [vmem:[#allocation6 + $0x88] sm:$0xff]
        %v6135 = vld [vmem:[#allocation6 + $0x90] sm:$0xff]
        %v6136 = vld [vmem:[#allocation6 + $0x98] sm:$0xff]
        %v6137 = vld [vmem:[#allocation6 + $0xa0] sm:$0xff]
        %v6138 = vld [vmem:[#allocation6 + $0xa8] sm:$0xff]
        %v6139 = vld [vmem:[#allocation6 + $0xb0] sm:$0xff]
        %v6140 = vld [vmem:[#allocation6 + $0xb8] sm:$0xff]
        %v6141 = vld [vmem:[#allocation6 + $0xc0] sm:$0xff]
        %v6142 = vld [vmem:[#allocation6 + $0xc8] sm:$0xff]
        %v6143 = vld [vmem:[#allocation6 + $0xd0] sm:$0xff]
        %v6144 = vld [vmem:[#allocation6 + $0xd8] sm:$0xff]
        %v6145 = vld [vmem:[#allocation6 + $0xe0] sm:$0xff]
        %v6146 = vld [vmem:[#allocation6 + $0xe8] sm:$0xff]
        %v6147 = vld [vmem:[#allocation6 + $0xf0] sm:$0xff]
        %v6148 = vld [vmem:[#allocation6 + $0xf8] sm:$0xff]
        %v6149 = vld [vmem:[#allocation6 + $0x100] sm:$0xff]
        %v6150 = vld [vmem:[#allocation6 + $0x108] sm:$0xff]
        %v6151 = vld [vmem:[#allocation6 + $0x110] sm:$0xff]
        %v6152 = vld [vmem:[#allocation6 + $0x118] sm:$0xff]
        %v6153 = vld [vmem:[#allocation6 + $0x120] sm:$0xff]
        %v6154 = vld [vmem:[#allocation6 + $0x128] sm:$0xff]
        %v6155 = vld [vmem:[#allocation6 + $0x130] sm:$0xff]
        %v6156 = vld [vmem:[#allocation6 + $0x138] sm:$0xff]
        %v6157 = vld [vmem:[#allocation6 + $0x140] sm:$0xff]
        %v6158 = vld [vmem:[#allocation6 + $0x148] sm:$0xff]
        %v6159 = vld [vmem:[#allocation6 + $0x150] sm:$0xff]
        %v6160 = vld [vmem:[#allocation6 + $0x158] sm:$0xff]
        %v6161 = vld [vmem:[#allocation6 + $0x160] sm:$0xff]
        %v6162 = vld [vmem:[#allocation6 + $0x168] sm:$0xff]
        %v6163 = vld [vmem:[#allocation6 + $0x170] sm:$0xff]
        %v6164 = vld [vmem:[#allocation6 + $0x178] sm:$0xff]
        %v6165 = vld [vmem:[#allocation6 + $0x180] sm:$0xff]
        %v6166 = vld [vmem:[#allocation6 + $0x188] sm:$0xff]
        %v6167 = vld [vmem:[#allocation6 + $0x190] sm:$0xff]
        %v6168 = vld [vmem:[#allocation6 + $0x198] sm:$0xff]
        %v6169 = vld [vmem:[#allocation6 + $0x1a0] sm:$0xff]
        %v6170 = vld [vmem:[#allocation6 + $0x1a8] sm:$0xff]
        %v6171 = vld [vmem:[#allocation6 + $0x1b0] sm:$0xff]
        %v6172 = vld [vmem:[#allocation6 + $0x1b8] sm:$0xff]
        %v6173 = vld [vmem:[#allocation6 + $0x1c0] sm:$0xff]
        %v6174 = vld [vmem:[#allocation6 + $0x1c8] sm:$0xff]
        %v6175 = vld [vmem:[#allocation6 + $0x1d0] sm:$0xff]
        %v6176 = vld [vmem:[#allocation6 + $0x1d8] sm:$0xff]
        %v6177 = vld [vmem:[#allocation6 + $0x1e0] sm:$0xff]
        %v6178 = vld [vmem:[#allocation6 + $0x1e8] sm:$0xff]
        %v6179 = vld [vmem:[#allocation6 + $0x1f0] sm:$0xff]
        %v6180 = vld [vmem:[#allocation6 + $0x1f8] sm:$0xff]
        %s6181 = scalar_lea.vmem %s3, 384
        %v6182 = vld [vmem:[%s6181] sm:$0xff]
        %v6183 = vld [vmem:[%s6181 + $0x8] sm:$0xff]
        %v6184 = vld [vmem:[%s6181 + $0x10] sm:$0xff]
        %v6185 = vld [vmem:[%s6181 + $0x18] sm:$0xff]
        %v6186 = vld [vmem:[%s6181 + $0x20] sm:$0xff]
        %v6187 = vld [vmem:[%s6181 + $0x28] sm:$0xff]
        %v6188 = vld [vmem:[%s6181 + $0x30] sm:$0xff]
        %v6189 = vld [vmem:[%s6181 + $0x38] sm:$0xff]
        %v6190 = vld [vmem:[%s6181 + $0x40] sm:$0xff]
        %v6191 = vld [vmem:[%s6181 + $0x48] sm:$0xff]
        %v6192 = vld [vmem:[%s6181 + $0x50] sm:$0xff]
        %v6193 = vld [vmem:[%s6181 + $0x58] sm:$0xff]
        %v6194 = vld [vmem:[%s6181 + $0x60] sm:$0xff]
        %v6195 = vld [vmem:[%s6181 + $0x68] sm:$0xff]
        %v6196 = vld [vmem:[%s6181 + $0x70] sm:$0xff]
        %v6197 = vld [vmem:[%s6181 + $0x78] sm:$0xff]
        %v6198 = vld [vmem:[%s6181 + $0x80] sm:$0xff]
        %v6199 = vld [vmem:[%s6181 + $0x88] sm:$0xff]
        %v6200 = vld [vmem:[%s6181 + $0x90] sm:$0xff]
        %v6201 = vld [vmem:[%s6181 + $0x98] sm:$0xff]
        %v6202 = vld [vmem:[%s6181 + $0xa0] sm:$0xff]
        %v6203 = vld [vmem:[%s6181 + $0xa8] sm:$0xff]
        %v6204 = vld [vmem:[%s6181 + $0xb0] sm:$0xff]
        %v6205 = vld [vmem:[%s6181 + $0xb8] sm:$0xff]
        %v6207 = vsel %vm4102, %v6118, 0
        %v6210 = vsel %vm4102, %v6120, 0
        %v6213 = vsel %vm4102, %v6122, 0
        %v6216 = vsel %vm4102, %v6124, 0
        %v6219 = vsel %vm4102, %v6126, 0
        %v6222 = vsel %vm4102, %v6128, 0
        %v6225 = vsel %vm4102, %v6130, 0
        %v6228 = vsel %vm4102, %v6132, 0
        %v6231 = vsel %vm4102, %v6134, 0
        %v6234 = vsel %vm4102, %v6136, 0
        %v6237 = vsel %vm4102, %v6138, 0
        %v6240 = vsel %vm4102, %v6140, 0
        %v6243 = vsel %vm4102, %v6142, 0
        %v6246 = vsel %vm4102, %v6144, 0
        %v6249 = vsel %vm4102, %v6146, 0
        %v6252 = vsel %vm4102, %v6148, 0
        %v6255 = vsel %vm4102, %v6150, 0
        %v6258 = vsel %vm4102, %v6152, 0
        %v6261 = vsel %vm4102, %v6154, 0
        %v6264 = vsel %vm4102, %v6156, 0
        %v6267 = vsel %vm4102, %v6158, 0
        %v6270 = vsel %vm4102, %v6160, 0
        %v6273 = vsel %vm4102, %v6162, 0
        %v6276 = vsel %vm4102, %v6164, 0
        %v6279 = vsel %vm4102, %v6166, 0
        %v6282 = vsel %vm4102, %v6168, 0
        %v6285 = vsel %vm4102, %v6170, 0
        %v6288 = vsel %vm4102, %v6172, 0
        %v6291 = vsel %vm4102, %v6174, 0
        %v6294 = vsel %vm4102, %v6176, 0
        %v6297 = vsel %vm4102, %v6178, 0
        %v6300 = vsel %vm4102, %v6180, 0
        %6302 = vmatprep.subr.mxu0 0.0
        %6303 = vmatpush1.msra.mxu0 %v6182
        %6304 = vmatprep.subr.mxu0 0.0
        %6305 = vmatpush1.msra.mxu0 %v6183
        %6306 = vmatprep.subr.mxu0 0.0
        %6307 = vmatpush1.msra.mxu0 %v6184
        %6308 = vmatprep.subr.mxu0 0.0
        %6309 = vmatpush1.msra.mxu0 %v6185
        %6310 = vmatprep.subr.mxu0 0.0
        %6311 = vmatpush1.msra.mxu0 %v6186
        %6312 = vmatprep.subr.mxu0 0.0
        %6313 = vmatpush1.msra.mxu0 %v6187
        %6314 = vmatprep.subr.mxu0 0.0
        %6315 = vmatpush1.msra.mxu0 %v6188
        %6316 = vmatprep.subr.mxu0 0.0
        %6317 = vmatpush1.msra.mxu0 %v6189
        %6318 = vmatprep.subr.mxu0 0.0
        %6319 = vmatpush1.msra.mxu0 %v6190
        %6320 = vmatprep.subr.mxu0 0.0
        %6321 = vmatpush1.msra.mxu0 %v6191
        %6322 = vmatprep.subr.mxu0 0.0
        %6323 = vmatpush1.msra.mxu0 %v6192
        %6324 = vmatprep.subr.mxu0 0.0
        %6325 = vmatpush1.msra.mxu0 %v6193
        %6326 = vmatprep.subr.mxu0 0.0
        %6327 = vmatpush1.msra.mxu0 %v6194
        %6328 = vmatprep.subr.mxu0 0.0
        %6329 = vmatpush1.msra.mxu0 %v6195
        %6330 = vmatprep.subr.mxu0 0.0
        %6331 = vmatpush1.msra.mxu0 %v6196
        %6332 = vmatprep.subr.mxu0 0.0
        %6333 = vmatpush1.msra.mxu0 %v6197
        %6334 = vmatprep.subr.mxu0 0.0
        %6335 = vmatpush1.msra.mxu0 %v6198
        %6336 = vmatprep.subr.mxu0 0.0
        %6337 = vmatpush1.msra.mxu0 %v6199
        %6338 = vmatprep.subr.mxu0 0.0
        %6339 = vmatpush1.msra.mxu0 %v6200
        %6340 = vmatprep.subr.mxu0 0.0
        %6341 = vmatpush1.msra.mxu0 %v6201
        %6342 = vmatprep.subr.mxu0 0.0
        %6343 = vmatpush1.msra.mxu0 %v6202
        %6344 = vmatprep.subr.mxu0 0.0
        %6345 = vmatpush1.msra.mxu0 %v6203
        %6346 = vmatprep.subr.mxu0 0.0
        %6347 = vmatpush1.msra.mxu0 %v6204
        %6348 = vmatprep.subr.mxu0 0.0
        %6349 = vmatpush1.msra.mxu0 %v6205
        %6350 = vmatprep.subr.mxu0 0.0
        %6351 = vmatpush1.msra.mxu0 0.0
        %6352 = vmatprep.subr.mxu0 0.0
        %6353 = vmatpush1.msra.mxu0 0.0
        %6354 = vmatprep.subr.mxu0 0.0
        %6355 = vmatpush1.msra.mxu0 0.0
        %6356 = vmatprep.subr.mxu0 0.0
        %6357 = vmatpush1.msra.mxu0 0.0
        %6358 = vmatprep.subr.mxu0 0.0
        %6359 = vmatpush1.msra.mxu0 0.0
        %6360 = vmatprep.subr.mxu0 0.0
        %6361 = vmatpush1.msra.mxu0 0.0
        %6362 = vmatprep.subr.mxu0 0.0
        %6363 = vmatpush1.msra.mxu0 0.0
        %6364 = vmatprep.subr.mxu0 0.0
        %6365 = vmatpush1.msra.mxu0 0.0
        %6366 = vmatprep.mubr.f32.mxu0 %v6207
        %6367 = vmatmul.mubr.f32.gmra.mrb[0].mxu0 %v6117
        %v6368 = vpop.f32.mrb[0].mxu0
        %v6369 = vadd.f32 0.0, %v6368
        %v6370 = vpop.f32.mrb[0].mxu0
        %6371 = vmatprep.mubr.f32.mxu0 %v6210
        %6372 = vmatmul.mubr.f32.gmra.mrb[0].mxu0 %v6119
        %v6373 = vpop.f32.mrb[0].mxu0
        %v6374 = vadd.f32 0.0, %v6373
        %v6375 = vpop.f32.mrb[0].mxu0
        %6376 = vmatprep.mubr.f32.mxu0 %v6213
        %6377 = vmatmul.mubr.f32.gmra.mrb[0].mxu0 %v6121
        %v6378 = vpop.f32.mrb[0].mxu0
        %v6379 = vadd.f32 0.0, %v6378
        %v6380 = vpop.f32.mrb[0].mxu0
        %6381 = vmatprep.mubr.f32.mxu0 %v6216
        %6382 = vmatmul.mubr.f32.gmra.mrb[0].mxu0 %v6123
        %v6383 = vpop.f32.mrb[0].mxu0
        %v6384 = vadd.f32 0.0, %v6383
        %v6385 = vpop.f32.mrb[0].mxu0
        %6386 = vmatprep.mubr.f32.mxu0 %v6219
        %6387 = vmatmul.mubr.f32.gmra.mrb[0].mxu0 %v6125
        %v6388 = vpop.f32.mrb[0].mxu0
        %v6389 = vadd.f32 0.0, %v6388
        %v6390 = vpop.f32.mrb[0].mxu0
        %6391 = vmatprep.mubr.f32.mxu0 %v6222
        %6392 = vmatmul.mubr.f32.gmra.mrb[0].mxu0 %v6127
        %v6393 = vpop.f32.mrb[0].mxu0
        %v6394 = vadd.f32 0.0, %v6393
        %v6395 = vpop.f32.mrb[0].mxu0
        %6396 = vmatprep.mubr.f32.mxu0 %v6225
        %6397 = vmatmul.mubr.f32.gmra.mrb[0].mxu0 %v6129
        %v6398 = vpop.f32.mrb[0].mxu0
        %v6399 = vadd.f32 0.0, %v6398
        %v6400 = vpop.f32.mrb[0].mxu0
        %6401 = vmatprep.mubr.f32.mxu0 %v6228
        %6402 = vmatmul.mubr.f32.gmra.mrb[0].mxu0 %v6131
        %v6403 = vpop.f32.mrb[0].mxu0
        %v6404 = vadd.f32 0.0, %v6403
        %v6405 = vpop.f32.mrb[0].mxu0
        %6406 = vmatprep.mubr.f32.mxu0 %v6231
        %6407 = vmatmul.mubr.f32.gmra.mrb[0].mxu0 %v6133
        %v6408 = vpop.f32.mrb[0].mxu0
        %v6409 = vadd.f32 0.0, %v6408
        %v6410 = vpop.f32.mrb[0].mxu0
        %6411 = vmatprep.mubr.f32.mxu0 %v6234
        %6412 = vmatmul.mubr.f32.gmra.mrb[0].mxu0 %v6135
        %v6413 = vpop.f32.mrb[0].mxu0
        %v6414 = vadd.f32 0.0, %v6413
        %v6415 = vpop.f32.mrb[0].mxu0
        %6416 = vmatprep.mubr.f32.mxu0 %v6237
        %6417 = vmatmul.mubr.f32.gmra.mrb[0].mxu0 %v6137
        %v6418 = vpop.f32.mrb[0].mxu0
        %v6419 = vadd.f32 0.0, %v6418
        %v6420 = vpop.f32.mrb[0].mxu0
        %6421 = vmatprep.mubr.f32.mxu0 %v6240
        %6422 = vmatmul.mubr.f32.gmra.mrb[0].mxu0 %v6139
        %v6423 = vpop.f32.mrb[0].mxu0
        %v6424 = vadd.f32 0.0, %v6423
        %v6425 = vpop.f32.mrb[0].mxu0
        %6426 = vmatprep.mubr.f32.mxu0 %v6243
        %6427 = vmatmul.mubr.f32.gmra.mrb[0].mxu0 %v6141
        %v6428 = vpop.f32.mrb[0].mxu0
        %v6429 = vadd.f32 0.0, %v6428
        %v6430 = vpop.f32.mrb[0].mxu0
        %6431 = vmatprep.mubr.f32.mxu0 %v6246
        %6432 = vmatmul.mubr.f32.gmra.mrb[0].mxu0 %v6143
        %v6433 = vpop.f32.mrb[0].mxu0
        %v6434 = vadd.f32 0.0, %v6433
        %v6435 = vpop.f32.mrb[0].mxu0
        %6436 = vmatprep.mubr.f32.mxu0 %v6249
        %6437 = vmatmul.mubr.f32.gmra.mrb[0].mxu0 %v6145
        %v6438 = vpop.f32.mrb[0].mxu0
        %v6439 = vadd.f32 0.0, %v6438
        %v6440 = vpop.f32.mrb[0].mxu0
        %6441 = vmatprep.mubr.f32.mxu0 %v6252
        %6442 = vmatmul.mubr.f32.gmra.mrb[0].mxu0 %v6147
        %v6443 = vpop.f32.mrb[0].mxu0
        %v6444 = vadd.f32 0.0, %v6443
        %v6445 = vpop.f32.mrb[0].mxu0
        %6446 = vmatprep.mubr.f32.mxu0 %v6255
        %6447 = vmatmul.mubr.f32.gmra.mrb[0].mxu0 %v6149
        %v6448 = vpop.f32.mrb[0].mxu0
        %v6449 = vadd.f32 0.0, %v6448
        %v6450 = vpop.f32.mrb[0].mxu0
        %6451 = vmatprep.mubr.f32.mxu0 %v6258
        %6452 = vmatmul.mubr.f32.gmra.mrb[0].mxu0 %v6151
        %v6453 = vpop.f32.mrb[0].mxu0
        %v6454 = vadd.f32 0.0, %v6453
        %v6455 = vpop.f32.mrb[0].mxu0
        %6456 = vmatprep.mubr.f32.mxu0 %v6261
        %6457 = vmatmul.mubr.f32.gmra.mrb[0].mxu0 %v6153
        %v6458 = vpop.f32.mrb[0].mxu0
        %v6459 = vadd.f32 0.0, %v6458
        %v6460 = vpop.f32.mrb[0].mxu0
        %6461 = vmatprep.mubr.f32.mxu0 %v6264
        %6462 = vmatmul.mubr.f32.gmra.mrb[0].mxu0 %v6155
        %v6463 = vpop.f32.mrb[0].mxu0
        %v6464 = vadd.f32 0.0, %v6463
        %v6465 = vpop.f32.mrb[0].mxu0
        %6466 = vmatprep.mubr.f32.mxu0 %v6267
        %6467 = vmatmul.mubr.f32.gmra.mrb[0].mxu0 %v6157
        %v6468 = vpop.f32.mrb[0].mxu0
        %v6469 = vadd.f32 0.0, %v6468
        %v6470 = vpop.f32.mrb[0].mxu0
        %6471 = vmatprep.mubr.f32.mxu0 %v6270
        %6472 = vmatmul.mubr.f32.gmra.mrb[0].mxu0 %v6159
        %v6473 = vpop.f32.mrb[0].mxu0
        %v6474 = vadd.f32 0.0, %v6473
        %v6475 = vpop.f32.mrb[0].mxu0
        %6476 = vmatprep.mubr.f32.mxu0 %v6273
        %6477 = vmatmul.mubr.f32.gmra.mrb[0].mxu0 %v6161
        %v6478 = vpop.f32.mrb[0].mxu0
        %v6479 = vadd.f32 0.0, %v6478
        %v6480 = vpop.f32.mrb[0].mxu0
        %6481 = vmatprep.mubr.f32.mxu0 %v6276
        %6482 = vmatmul.mubr.f32.gmra.mrb[0].mxu0 %v6163
        %v6483 = vpop.f32.mrb[0].mxu0
        %v6484 = vadd.f32 0.0, %v6483
        %v6485 = vpop.f32.mrb[0].mxu0
        %6486 = vmatprep.mubr.f32.mxu0 %v6279
        %6487 = vmatmul.mubr.f32.gmra.mrb[0].mxu0 %v6165
        %v6488 = vpop.f32.mrb[0].mxu0
        %v6489 = vadd.f32 0.0, %v6488
        %v6490 = vpop.f32.mrb[0].mxu0
        %6491 = vmatprep.mubr.f32.mxu0 %v6282
        %6492 = vmatmul.mubr.f32.gmra.mrb[0].mxu0 %v6167
        %v6493 = vpop.f32.mrb[0].mxu0
        %v6494 = vadd.f32 0.0, %v6493
        %v6495 = vpop.f32.mrb[0].mxu0
        %6496 = vmatprep.mubr.f32.mxu0 %v6285
        %6497 = vmatmul.mubr.f32.gmra.mrb[0].mxu0 %v6169
        %v6498 = vpop.f32.mrb[0].mxu0
        %v6499 = vadd.f32 0.0, %v6498
        %v6500 = vpop.f32.mrb[0].mxu0
        %6501 = vmatprep.mubr.f32.mxu0 %v6288
        %6502 = vmatmul.mubr.f32.gmra.mrb[0].mxu0 %v6171
        %v6503 = vpop.f32.mrb[0].mxu0
        %v6504 = vadd.f32 0.0, %v6503
        %v6505 = vpop.f32.mrb[0].mxu0
        %6506 = vmatprep.mubr.f32.mxu0 %v6291
        %6507 = vmatmul.mubr.f32.gmra.mrb[0].mxu0 %v6173
        %v6508 = vpop.f32.mrb[0].mxu0
        %v6509 = vadd.f32 0.0, %v6508
        %v6510 = vpop.f32.mrb[0].mxu0
        %6511 = vmatprep.mubr.f32.mxu0 %v6294
        %6512 = vmatmul.mubr.f32.gmra.mrb[0].mxu0 %v6175
        %v6513 = vpop.f32.mrb[0].mxu0
        %v6514 = vadd.f32 0.0, %v6513
        %v6515 = vpop.f32.mrb[0].mxu0
        %6516 = vmatprep.mubr.f32.mxu0 %v6297
        %6517 = vmatmul.mubr.f32.gmra.mrb[0].mxu0 %v6177
        %v6518 = vpop.f32.mrb[0].mxu0
        %v6519 = vadd.f32 0.0, %v6518
        %v6520 = vpop.f32.mrb[0].mxu0
        %6521 = vmatprep.mubr.f32.mxu0 %v6300
        %6522 = vmatmul.mubr.f32.gmra.mrb[0].mxu0 %v6179
        %v6523 = vpop.f32.mrb[0].mxu0
        %v6524 = vadd.f32 0.0, %v6523
        %v6525 = vpop.f32.mrb[0].mxu0
        %6526 = vdwg.mxu0
        %v6527 = vadd.f32 %v5638, %v6369
        %v6528 = vadd.f32 %v5643, %v6374
        %v6529 = vadd.f32 %v5648, %v6379
        %v6530 = vadd.f32 %v5653, %v6384
        %v6531 = vadd.f32 %v5658, %v6389
        %v6532 = vadd.f32 %v5663, %v6394
        %v6533 = vadd.f32 %v5668, %v6399
        %v6534 = vadd.f32 %v5673, %v6404
        %v6535 = vadd.f32 %v5678, %v6409
        %v6536 = vadd.f32 %v5683, %v6414
        %v6537 = vadd.f32 %v5688, %v6419
        %v6538 = vadd.f32 %v5693, %v6424
        %v6539 = vadd.f32 %v5698, %v6429
        %v6540 = vadd.f32 %v5703, %v6434
        %v6541 = vadd.f32 %v5708, %v6439
        %v6542 = vadd.f32 %v5713, %v6444
        %v6543 = vadd.f32 %v5718, %v6449
        %v6544 = vadd.f32 %v5723, %v6454
        %v6545 = vadd.f32 %v5728, %v6459
        %v6546 = vadd.f32 %v5733, %v6464
        %v6547 = vadd.f32 %v5738, %v6469
        %v6548 = vadd.f32 %v5743, %v6474
        %v6549 = vadd.f32 %v5748, %v6479
        %v6550 = vadd.f32 %v5753, %v6484
        %v6551 = vadd.f32 %v5758, %v6489
        %v6552 = vadd.f32 %v5763, %v6494
        %v6553 = vadd.f32 %v5768, %v6499
        %v6554 = vadd.f32 %v5773, %v6504
        %v6555 = vadd.f32 %v5778, %v6509
        %v6556 = vadd.f32 %v5783, %v6514
        %v6557 = vadd.f32 %v5788, %v6519
        %v6558 = vadd.f32 %v5793, %v6524
        %v6559 = vld [vmem:[%s4] sm:$0x1]
        %v6561 = vlaneseq
        %v6562 = vshrl.u32 %v6561, 7
        %v6563 = vsub.s32 0, %v6562
        %v6564 = vrot.slane %v6559, %v6563
        %v6566 = vadd.f32 %v6527, %v6564
        %v6567 = vadd.f32 %v6528, %v6564
        %v6568 = vadd.f32 %v6529, %v6564
        %v6569 = vadd.f32 %v6530, %v6564
        %v6570 = vadd.f32 %v6531, %v6564
        %v6571 = vadd.f32 %v6532, %v6564
        %v6572 = vadd.f32 %v6533, %v6564
        %v6573 = vadd.f32 %v6534, %v6564
        %v6574 = vadd.f32 %v6535, %v6564
        %v6575 = vadd.f32 %v6536, %v6564
        %v6576 = vadd.f32 %v6537, %v6564
        %v6577 = vadd.f32 %v6538, %v6564
        %v6578 = vadd.f32 %v6539, %v6564
        %v6579 = vadd.f32 %v6540, %v6564
        %v6580 = vadd.f32 %v6541, %v6564
        %v6581 = vadd.f32 %v6542, %v6564
        %v6582 = vadd.f32 %v6543, %v6564
        %v6583 = vadd.f32 %v6544, %v6564
        %v6584 = vadd.f32 %v6545, %v6564
        %v6585 = vadd.f32 %v6546, %v6564
        %v6586 = vadd.f32 %v6547, %v6564
        %v6587 = vadd.f32 %v6548, %v6564
        %v6588 = vadd.f32 %v6549, %v6564
        %v6589 = vadd.f32 %v6550, %v6564
        %v6590 = vadd.f32 %v6551, %v6564
        %v6591 = vadd.f32 %v6552, %v6564
        %v6592 = vadd.f32 %v6553, %v6564
        %v6593 = vadd.f32 %v6554, %v6564
        %v6594 = vadd.f32 %v6555, %v6564
        %v6595 = vadd.f32 %v6556, %v6564
        %v6596 = vadd.f32 %v6557, %v6564
        %v6597 = vadd.f32 %v6558, %v6564
        %v6598 = vmax.f32 %v6566, 0.0
        %v6599 = vmax.f32 %v6567, 0.0
        %v6600 = vmax.f32 %v6568, 0.0
        %v6601 = vmax.f32 %v6569, 0.0
        %v6602 = vmax.f32 %v6570, 0.0
        %v6603 = vmax.f32 %v6571, 0.0
        %v6604 = vmax.f32 %v6572, 0.0
        %v6605 = vmax.f32 %v6573, 0.0
        %v6606 = vmax.f32 %v6574, 0.0
        %v6607 = vmax.f32 %v6575, 0.0
        %v6608 = vmax.f32 %v6576, 0.0
        %v6609 = vmax.f32 %v6577, 0.0
        %v6610 = vmax.f32 %v6578, 0.0
        %v6611 = vmax.f32 %v6579, 0.0
        %v6612 = vmax.f32 %v6580, 0.0
        %v6613 = vmax.f32 %v6581, 0.0
        %v6614 = vmax.f32 %v6582, 0.0
        %v6615 = vmax.f32 %v6583, 0.0
        %v6616 = vmax.f32 %v6584, 0.0
        %v6617 = vmax.f32 %v6585, 0.0
        %v6618 = vmax.f32 %v6586, 0.0
        %v6619 = vmax.f32 %v6587, 0.0
        %v6620 = vmax.f32 %v6588, 0.0
        %v6621 = vmax.f32 %v6589, 0.0
        %v6622 = vmax.f32 %v6590, 0.0
        %v6623 = vmax.f32 %v6591, 0.0
        %v6624 = vmax.f32 %v6592, 0.0
        %v6625 = vmax.f32 %v6593, 0.0
        %v6626 = vmax.f32 %v6594, 0.0
        %v6627 = vmax.f32 %v6595, 0.0
        %v6628 = vmax.f32 %v6596, 0.0
        %v6629 = vmax.f32 %v6597, 0.0
        %6630 = vst.msk [vmem:[#allocation9] sm:$0xff] %vm4102, %v6598
        %6631 = vst.msk [vmem:[#allocation9 + $0x8] sm:$0xff] %vm4102, %v6599
        %6632 = vst.msk [vmem:[#allocation9 + $0x10] sm:$0xff] %vm4102, %v6600
        %6633 = vst.msk [vmem:[#allocation9 + $0x18] sm:$0xff] %vm4102, %v6601
        %6634 = vst.msk [vmem:[#allocation9 + $0x20] sm:$0xff] %vm4102, %v6602
        %6635 = vst.msk [vmem:[#allocation9 + $0x28] sm:$0xff] %vm4102, %v6603
        %6636 = vst.msk [vmem:[#allocation9 + $0x30] sm:$0xff] %vm4102, %v6604
        %6637 = vst.msk [vmem:[#allocation9 + $0x38] sm:$0xff] %vm4102, %v6605
        %6638 = vst.msk [vmem:[#allocation9 + $0x40] sm:$0xff] %vm4102, %v6606
        %6639 = vst.msk [vmem:[#allocation9 + $0x48] sm:$0xff] %vm4102, %v6607
        %6640 = vst.msk [vmem:[#allocation9 + $0x50] sm:$0xff] %vm4102, %v6608
        %6641 = vst.msk [vmem:[#allocation9 + $0x58] sm:$0xff] %vm4102, %v6609
        %6642 = vst.msk [vmem:[#allocation9 + $0x60] sm:$0xff] %vm4102, %v6610
        %6643 = vst.msk [vmem:[#allocation9 + $0x68] sm:$0xff] %vm4102, %v6611
        %6644 = vst.msk [vmem:[#allocation9 + $0x70] sm:$0xff] %vm4102, %v6612
        %6645 = vst.msk [vmem:[#allocation9 + $0x78] sm:$0xff] %vm4102, %v6613
        %6646 = vst.msk [vmem:[#allocation9 + $0x80] sm:$0xff] %vm4102, %v6614
        %6647 = vst.msk [vmem:[#allocation9 + $0x88] sm:$0xff] %vm4102, %v6615
        %6648 = vst.msk [vmem:[#allocation9 + $0x90] sm:$0xff] %vm4102, %v6616
        %6649 = vst.msk [vmem:[#allocation9 + $0x98] sm:$0xff] %vm4102, %v6617
        %6650 = vst.msk [vmem:[#allocation9 + $0xa0] sm:$0xff] %vm4102, %v6618
        %6651 = vst.msk [vmem:[#allocation9 + $0xa8] sm:$0xff] %vm4102, %v6619
        %6652 = vst.msk [vmem:[#allocation9 + $0xb0] sm:$0xff] %vm4102, %v6620
        %6653 = vst.msk [vmem:[#allocation9 + $0xb8] sm:$0xff] %vm4102, %v6621
        %6654 = vst.msk [vmem:[#allocation9 + $0xc0] sm:$0xff] %vm4102, %v6622
        %6655 = vst.msk [vmem:[#allocation9 + $0xc8] sm:$0xff] %vm4102, %v6623
        %6656 = vst.msk [vmem:[#allocation9 + $0xd0] sm:$0xff] %vm4102, %v6624
        %6657 = vst.msk [vmem:[#allocation9 + $0xd8] sm:$0xff] %vm4102, %v6625
        %6658 = vst.msk [vmem:[#allocation9 + $0xe0] sm:$0xff] %vm4102, %v6626
        %6659 = vst.msk [vmem:[#allocation9 + $0xe8] sm:$0xff] %vm4102, %v6627
        %6660 = vst.msk [vmem:[#allocation9 + $0xf0] sm:$0xff] %vm4102, %v6628
        %6661 = vst.msk [vmem:[#allocation9 + $0xf8] sm:$0xff] %vm4102, %v6629
        %v6662 = vld [vmem:[#allocation9] ss:$2 sm:$0xff]
        %s6663 = scalar_lea.vmem [#allocation9], 16
        %v6664 = vld [vmem:[%s6663] ss:$2 sm:$0xff]
        %s6665 = scalar_lea.vmem [#allocation9], 32
        %v6666 = vld [vmem:[%s6665] ss:$2 sm:$0xff]
        %s6667 = scalar_lea.vmem [#allocation9], 48
        %v6668 = vld [vmem:[%s6667] ss:$2 sm:$0xff]
        %s6669 = scalar_lea.vmem [#allocation9], 64
        %v6670 = vld [vmem:[%s6669] ss:$2 sm:$0xff]
        %s6671 = scalar_lea.vmem [#allocation9], 80
        %v6672 = vld [vmem:[%s6671] ss:$2 sm:$0xff]
        %s6673 = scalar_lea.vmem [#allocation9], 96
        %v6674 = vld [vmem:[%s6673] ss:$2 sm:$0xff]
        %s6675 = scalar_lea.vmem [#allocation9], 112
        %v6676 = vld [vmem:[%s6675] ss:$2 sm:$0xff]
        %s6677 = scalar_lea.vmem [#allocation9], 128
        %v6678 = vld [vmem:[%s6677] ss:$2 sm:$0xff]
        %s6679 = scalar_lea.vmem [#allocation9], 144
        %v6680 = vld [vmem:[%s6679] ss:$2 sm:$0xff]
        %s6681 = scalar_lea.vmem [#allocation9], 160
        %v6682 = vld [vmem:[%s6681] ss:$2 sm:$0xff]
        %s6683 = scalar_lea.vmem [#allocation9], 176
        %v6684 = vld [vmem:[%s6683] ss:$2 sm:$0xff]
        %s6685 = scalar_lea.vmem [#allocation9], 192
        %v6686 = vld [vmem:[%s6685] ss:$2 sm:$0xff]
        %s6687 = scalar_lea.vmem [#allocation9], 208
        %v6688 = vld [vmem:[%s6687] ss:$2 sm:$0xff]
        %s6689 = scalar_lea.vmem [#allocation9], 224
        %v6690 = vld [vmem:[%s6689] ss:$2 sm:$0xff]
        %s6691 = scalar_lea.vmem [#allocation9], 240
        %v6692 = vld [vmem:[%s6691] ss:$2 sm:$0xff]
        %s6693 = scalar_lea.vmem [#allocation9], 1
        %v6694 = vld [vmem:[%s6693] ss:$2 sm:$0xff]
        %s6695 = scalar_lea.vmem [#allocation9], 17
        %v6696 = vld [vmem:[%s6695] ss:$2 sm:$0xff]
        %s6697 = scalar_lea.vmem [#allocation9], 33
        %v6698 = vld [vmem:[%s6697] ss:$2 sm:$0xff]
        %s6699 = scalar_lea.vmem [#allocation9], 49
        %v6700 = vld [vmem:[%s6699] ss:$2 sm:$0xff]
        %s6701 = scalar_lea.vmem [#allocation9], 65
        %v6702 = vld [vmem:[%s6701] ss:$2 sm:$0xff]
        %s6703 = scalar_lea.vmem [#allocation9], 81
        %v6704 = vld [vmem:[%s6703] ss:$2 sm:$0xff]
        %s6705 = scalar_lea.vmem [#allocation9], 97
        %v6706 = vld [vmem:[%s6705] ss:$2 sm:$0xff]
        %s6707 = scalar_lea.vmem [#allocation9], 113
        %v6708 = vld [vmem:[%s6707] ss:$2 sm:$0xff]
        %s6709 = scalar_lea.vmem [#allocation9], 129
        %v6710 = vld [vmem:[%s6709] ss:$2 sm:$0xff]
        %s6711 = scalar_lea.vmem [#allocation9], 145
        %v6712 = vld [vmem:[%s6711] ss:$2 sm:$0xff]
        %s6713 = scalar_lea.vmem [#allocation9], 161
        %v6714 = vld [vmem:[%s6713] ss:$2 sm:$0xff]
        %s6715 = scalar_lea.vmem [#allocation9], 177
        %v6716 = vld [vmem:[%s6715] ss:$2 sm:$0xff]
        %s6717 = scalar_lea.vmem [#allocation9], 193
        %v6718 = vld [vmem:[%s6717] ss:$2 sm:$0xff]
        %s6719 = scalar_lea.vmem [#allocation9], 209
        %v6720 = vld [vmem:[%s6719] ss:$2 sm:$0xff]
        %s6721 = scalar_lea.vmem [#allocation9], 225
        %v6722 = vld [vmem:[%s6721] ss:$2 sm:$0xff]
        %s6723 = scalar_lea.vmem [#allocation9], 241
        %v6724 = vld [vmem:[%s6723] ss:$2 sm:$0xff]
        %6741 = vrot.lane.b32.xlu0 %v6694, 64
        %v6742 = vpop.permute.xlu0 %6741
        %6743 = vrot.lane.b32.xlu0 %v6696, 64
        %v6744 = vpop.permute.xlu0 %6743
        %6745 = vrot.lane.b32.xlu0 %v6698, 64
        %v6746 = vpop.permute.xlu0 %6745
        %6747 = vrot.lane.b32.xlu0 %v6700, 64
        %v6748 = vpop.permute.xlu0 %6747
        %6749 = vrot.lane.b32.xlu0 %v6702, 64
        %v6750 = vpop.permute.xlu0 %6749
        %6751 = vrot.lane.b32.xlu0 %v6704, 64
        %v6752 = vpop.permute.xlu0 %6751
        %6753 = vrot.lane.b32.xlu0 %v6706, 64
        %v6754 = vpop.permute.xlu0 %6753
        %6755 = vrot.lane.b32.xlu0 %v6708, 64
        %v6756 = vpop.permute.xlu0 %6755
        %6757 = vrot.lane.b32.xlu0 %v6710, 64
        %v6758 = vpop.permute.xlu0 %6757
        %6759 = vrot.lane.b32.xlu0 %v6712, 64
        %v6760 = vpop.permute.xlu0 %6759
        %6761 = vrot.lane.b32.xlu0 %v6714, 64
        %v6762 = vpop.permute.xlu0 %6761
        %6763 = vrot.lane.b32.xlu0 %v6716, 64
        %v6764 = vpop.permute.xlu0 %6763
        %6765 = vrot.lane.b32.xlu0 %v6718, 64
        %v6766 = vpop.permute.xlu0 %6765
        %6767 = vrot.lane.b32.xlu0 %v6720, 64
        %v6768 = vpop.permute.xlu0 %6767
        %6769 = vrot.lane.b32.xlu0 %v6722, 64
        %v6770 = vpop.permute.xlu0 %6769
        %6771 = vrot.lane.b32.xlu0 %v6724, 64
        %v6772 = vpop.permute.xlu0 %6771
        %v6789 = vsel %vm4102, %v6662, %v6742
        %v6790 = vsel %vm4102, %v6664, %v6744
        %v6791 = vsel %vm4102, %v6666, %v6746
        %v6792 = vsel %vm4102, %v6668, %v6748
        %v6793 = vsel %vm4102, %v6670, %v6750
        %v6794 = vsel %vm4102, %v6672, %v6752
        %v6795 = vsel %vm4102, %v6674, %v6754
        %v6796 = vsel %vm4102, %v6676, %v6756
        %v6797 = vsel %vm4102, %v6678, %v6758
        %v6798 = vsel %vm4102, %v6680, %v6760
        %v6799 = vsel %vm4102, %v6682, %v6762
        %v6800 = vsel %vm4102, %v6684, %v6764
        %v6801 = vsel %vm4102, %v6686, %v6766
        %v6802 = vsel %vm4102, %v6688, %v6768
        %v6803 = vsel %vm4102, %v6690, %v6770
        %v6804 = vsel %vm4102, %v6692, %v6772
        %6805 = vst [vmem:[%s476] sm:$0xff] %v6789
        %6806 = vst [vmem:[%s476 + $0x8] sm:$0xff] %v6790
        %6807 = vst [vmem:[%s476 + $0x10] sm:$0xff] %v6791
        %6808 = vst [vmem:[%s476 + $0x18] sm:$0xff] %v6792
        %6809 = vst [vmem:[%s476 + $0x20] sm:$0xff] %v6793
        %6810 = vst [vmem:[%s476 + $0x28] sm:$0xff] %v6794
        %6811 = vst [vmem:[%s476 + $0x30] sm:$0xff] %v6795
        %6812 = vst [vmem:[%s476 + $0x38] sm:$0xff] %v6796
        %6813 = vst [vmem:[%s476 + $0x40] sm:$0xff] %v6797
        %6814 = vst [vmem:[%s476 + $0x48] sm:$0xff] %v6798
        %6815 = vst [vmem:[%s476 + $0x50] sm:$0xff] %v6799
        %6816 = vst [vmem:[%s476 + $0x58] sm:$0xff] %v6800
        %6817 = vst [vmem:[%s476 + $0x60] sm:$0xff] %v6801
        %6818 = vst [vmem:[%s476 + $0x68] sm:$0xff] %v6802
        %6819 = vst [vmem:[%s476 + $0x70] sm:$0xff] %v6803
        %6820 = vst [vmem:[%s476 + $0x78] sm:$0xff] %v6804
        %v6821 = vmax.f32 %v6662, %v6694
        %v6822 = vmax.f32 %v6664, %v6696
        %v6823 = vmax.f32 %v6666, %v6698
        %v6824 = vmax.f32 %v6668, %v6700
        %v6825 = vmax.f32 %v6670, %v6702
        %v6826 = vmax.f32 %v6672, %v6704
        %v6827 = vmax.f32 %v6674, %v6706
        %v6828 = vmax.f32 %v6676, %v6708
        %v6829 = vmax.f32 %v6678, %v6710
        %v6830 = vmax.f32 %v6680, %v6712
        %v6831 = vmax.f32 %v6682, %v6714
        %v6832 = vmax.f32 %v6684, %v6716
        %v6833 = vmax.f32 %v6686, %v6718
        %v6834 = vmax.f32 %v6688, %v6720
        %v6835 = vmax.f32 %v6690, %v6722
        %v6836 = vmax.f32 %v6692, %v6724
        %v6837 = vmax.f32 %v6821, %v6822
        %v6838 = vmax.f32 %v6823, %v6824
        %v6839 = vmax.f32 %v6825, %v6826
        %v6840 = vmax.f32 %v6827, %v6828
        %v6841 = vmax.f32 %v6829, %v6830
        %v6842 = vmax.f32 %v6831, %v6832
        %v6843 = vmax.f32 %v6833, %v6834
        %v6844 = vmax.f32 %v6835, %v6836
        %6845 = vst.msk [vmem:[#allocation4 + $0x7] sm:$0xff] %vm4102, 0.0
        %6846 = vst.msk [vmem:[#allocation4 + $0xf] sm:$0x3] %vm4105, 0.0
        %s6847 = scalar_lea.vmem [#allocation4], 216
        %6848 = vst.msk [vmem:[%s6847 + $0x7] sm:$0xff] %vm4102, 0.0
        %6849 = vst.msk [vmem:[%s6847 + $0xf] sm:$0x3] %vm4105, 0.0
        %s6850 = scalar_lea.vmem [#allocation4], 24
        %6851 = vst.msk [vmem:[%s6850 + $0x7] sm:$0x1] %vm4112, 0.0
        %6852 = vst.msk [vmem:[%s6850 + $0x1f] sm:$0x1] %vm4112, 0.0
        %6853 = vst.msk [vmem:[%s6850 + $0x37] sm:$0x1] %vm4112, 0.0
        %6854 = vst.msk [vmem:[%s6850 + $0x4f] sm:$0x1] %vm4112, 0.0
        %6855 = vst.msk [vmem:[%s6850 + $0x67] sm:$0x1] %vm4112, 0.0
        %6856 = vst.msk [vmem:[%s6850 + $0x7f] sm:$0x1] %vm4112, 0.0
        %6857 = vst.msk [vmem:[%s6850 + $0x97] sm:$0x1] %vm4112, 0.0
        %6858 = vst.msk [vmem:[%s6850 + $0xaf] sm:$0x1] %vm4112, 0.0
        %6859 = vst.msk [vmem:[%s6850 + $0x10] sm:$0x1] %vm4112, 0.0
        %6860 = vst.msk [vmem:[%s6850 + $0x28] sm:$0x1] %vm4112, 0.0
        %6861 = vst.msk [vmem:[%s6850 + $0x40] sm:$0x1] %vm4112, 0.0
        %6862 = vst.msk [vmem:[%s6850 + $0x58] sm:$0x1] %vm4112, 0.0
        %6863 = vst.msk [vmem:[%s6850 + $0x70] sm:$0x1] %vm4112, 0.0
        %6864 = vst.msk [vmem:[%s6850 + $0x88] sm:$0x1] %vm4112, 0.0
        %6865 = vst.msk [vmem:[%s6850 + $0xa0] sm:$0x1] %vm4112, 0.0
        %6866 = vst.msk [vmem:[%s6850 + $0xb8] sm:$0x1] %vm4112, 0.0
        %6867 = vst.msk [vmem:[%s6850 + $0x8] sm:$0xff] %vm4102, %v6837
        %6868 = vst.msk [vmem:[%s6850 + $0x20] sm:$0xff] %vm4102, %v6838
        %6869 = vst.msk [vmem:[%s6850 + $0x38] sm:$0xff] %vm4102, %v6839
        %6870 = vst.msk [vmem:[%s6850 + $0x50] sm:$0xff] %vm4102, %v6840
        %6871 = vst.msk [vmem:[%s6850 + $0x68] sm:$0xff] %vm4102, %v6841
        %6872 = vst.msk [vmem:[%s6850 + $0x80] sm:$0xff] %vm4102, %v6842
        %6873 = vst.msk [vmem:[%s6850 + $0x98] sm:$0xff] %vm4102, %v6843
        %6874 = vst.msk [vmem:[%s6850 + $0xb0] sm:$0xff] %vm4102, %v6844
        %v6875 = vld [vmem:[#allocation4 + $0x7] sm:$0xff]
        %v6876 = vld [vmem:[#allocation4 + $0x1f] sm:$0xff]
        %v6877 = vld [vmem:[#allocation4 + $0x37] sm:$0xff]
        %v6878 = vld [vmem:[#allocation4 + $0x4f] sm:$0xff]
        %v6879 = vld [vmem:[#allocation4 + $0x67] sm:$0xff]
        %v6880 = vld [vmem:[#allocation4 + $0x7f] sm:$0xff]
        %v6881 = vld [vmem:[#allocation4 + $0x97] sm:$0xff]
        %v6882 = vld [vmem:[#allocation4 + $0xaf] sm:$0xff]
        %v6883 = vld [vmem:[#allocation4 + $0x8] sm:$0xff]
        %v6884 = vld [vmem:[#allocation4 + $0x20] sm:$0xff]
        %v6885 = vld [vmem:[#allocation4 + $0x38] sm:$0xff]
        %v6886 = vld [vmem:[#allocation4 + $0x50] sm:$0xff]
        %v6887 = vld [vmem:[#allocation4 + $0x68] sm:$0xff]
        %v6888 = vld [vmem:[#allocation4 + $0x80] sm:$0xff]
        %v6889 = vld [vmem:[#allocation4 + $0x98] sm:$0xff]
        %v6890 = vld [vmem:[#allocation4 + $0xb0] sm:$0xff]
        %v6891 = vld [vmem:[#allocation4 + $0x9] sm:$0xff]
        %v6892 = vld [vmem:[#allocation4 + $0x21] sm:$0xff]
        %v6893 = vld [vmem:[#allocation4 + $0x39] sm:$0xff]
        %v6894 = vld [vmem:[#allocation4 + $0x51] sm:$0xff]
        %v6895 = vld [vmem:[#allocation4 + $0x69] sm:$0xff]
        %v6896 = vld [vmem:[#allocation4 + $0x81] sm:$0xff]
        %v6897 = vld [vmem:[#allocation4 + $0x99] sm:$0xff]
        %v6898 = vld [vmem:[#allocation4 + $0xb1] sm:$0xff]
        %6907 = vrot.lane.b32.xlu0 %v6883, 64
        %v6908 = vpop.permute.xlu0 %6907
        %6909 = vrot.lane.b32.xlu0 %v6884, 64
        %v6910 = vpop.permute.xlu0 %6909
        %6911 = vrot.lane.b32.xlu0 %v6885, 64
        %v6912 = vpop.permute.xlu0 %6911
        %6913 = vrot.lane.b32.xlu0 %v6886, 64
        %v6914 = vpop.permute.xlu0 %6913
        %6915 = vrot.lane.b32.xlu0 %v6887, 64
        %v6916 = vpop.permute.xlu0 %6915
        %6917 = vrot.lane.b32.xlu0 %v6888, 64
        %v6918 = vpop.permute.xlu0 %6917
        %6919 = vrot.lane.b32.xlu0 %v6889, 64
        %v6920 = vpop.permute.xlu0 %6919
        %6921 = vrot.lane.b32.xlu0 %v6890, 64
        %v6922 = vpop.permute.xlu0 %6921
        %v6931 = vsel %vm4102, %v6875, %v6908
        %v6932 = vsel %vm4102, %v6876, %v6910
        %v6933 = vsel %vm4102, %v6877, %v6912
        %v6934 = vsel %vm4102, %v6878, %v6914
        %v6935 = vsel %vm4102, %v6879, %v6916
        %v6936 = vsel %vm4102, %v6880, %v6918
        %v6937 = vsel %vm4102, %v6881, %v6920
        %v6938 = vsel %vm4102, %v6882, %v6922
        %6939 = vst [vmem:[#allocation7] sm:$0xff] %v6931
        %6940 = vst [vmem:[#allocation7 + $0x10] sm:$0xff] %v6932
        %6941 = vst [vmem:[#allocation7 + $0x20] sm:$0xff] %v6933
        %6942 = vst [vmem:[#allocation7 + $0x30] sm:$0xff] %v6934
        %6943 = vst [vmem:[#allocation7 + $0x40] sm:$0xff] %v6935
        %6944 = vst [vmem:[#allocation7 + $0x50] sm:$0xff] %v6936
        %6945 = vst [vmem:[#allocation7 + $0x60] sm:$0xff] %v6937
        %6946 = vst [vmem:[#allocation7 + $0x70] sm:$0xff] %v6938
        %6947 = vst.msk [vmem:[#allocation7 + $0x8] sm:$0xff] %vm4102, %v6891
        %6948 = vst.msk [vmem:[#allocation7 + $0x18] sm:$0xff] %vm4102, %v6892
        %6949 = vst.msk [vmem:[#allocation7 + $0x28] sm:$0xff] %vm4102, %v6893
        %6950 = vst.msk [vmem:[#allocation7 + $0x38] sm:$0xff] %vm4102, %v6894
        %6951 = vst.msk [vmem:[#allocation7 + $0x48] sm:$0xff] %vm4102, %v6895
        %6952 = vst.msk [vmem:[#allocation7 + $0x58] sm:$0xff] %vm4102, %v6896
        %6953 = vst.msk [vmem:[#allocation7 + $0x68] sm:$0xff] %vm4102, %v6897
        %6954 = vst.msk [vmem:[#allocation7 + $0x78] sm:$0xff] %vm4102, %v6898
        %v6955 = vld [vmem:[#allocation7] sm:$0xff]
        %v6956 = vld [vmem:[#allocation7 + $0x8] sm:$0xff]
        %v6957 = vld [vmem:[#allocation7 + $0x10] sm:$0xff]
        %v6958 = vld [vmem:[#allocation7 + $0x18] sm:$0xff]
        %v6959 = vld [vmem:[#allocation7 + $0x20] sm:$0xff]
        %v6960 = vld [vmem:[#allocation7 + $0x28] sm:$0xff]
        %v6961 = vld [vmem:[#allocation7 + $0x30] sm:$0xff]
        %v6962 = vld [vmem:[#allocation7 + $0x38] sm:$0xff]
        %v6963 = vld [vmem:[#allocation7 + $0x40] sm:$0xff]
        %v6964 = vld [vmem:[#allocation7 + $0x48] sm:$0xff]
        %v6965 = vld [vmem:[#allocation7 + $0x50] sm:$0xff]
        %v6966 = vld [vmem:[#allocation7 + $0x58] sm:$0xff]
        %v6967 = vld [vmem:[#allocation7 + $0x60] sm:$0xff]
        %v6968 = vld [vmem:[#allocation7 + $0x68] sm:$0xff]
        %v6969 = vld [vmem:[#allocation7 + $0x70] sm:$0xff]
        %v6970 = vld [vmem:[#allocation7 + $0x78] sm:$0xff]
        %v6971 = vld [vmem:[#allocation10] sm:$0xff]
        %v6972 = vld [vmem:[#allocation10 + $0x8] sm:$0xff]
        %v6973 = vld [vmem:[#allocation10 + $0x10] sm:$0xff]
        %v6974 = vld [vmem:[#allocation10 + $0x18] sm:$0xff]
        %v6975 = vld [vmem:[#allocation10 + $0x20] sm:$0xff]
        %v6976 = vld [vmem:[#allocation10 + $0x28] sm:$0xff]
        %v6977 = vld [vmem:[#allocation10 + $0x30] sm:$0xff]
        %v6978 = vld [vmem:[#allocation10 + $0x38] sm:$0xff]
        %v6979 = vld [vmem:[#allocation10 + $0x40] sm:$0xff]
        %v6980 = vld [vmem:[#allocation10 + $0x48] sm:$0xff]
        %v6981 = vld [vmem:[#allocation10 + $0x50] sm:$0xff]
        %v6982 = vld [vmem:[#allocation10 + $0x58] sm:$0xff]
        %v6983 = vld [vmem:[#allocation10 + $0x60] sm:$0xff]
        %v6984 = vld [vmem:[#allocation10 + $0x68] sm:$0xff]
        %v6985 = vld [vmem:[#allocation10 + $0x70] sm:$0xff]
        %v6986 = vld [vmem:[#allocation10 + $0x78] sm:$0xff]
        %v6987 = vld [vmem:[#allocation10 + $0x80] sm:$0xff]
        %v6988 = vld [vmem:[#allocation10 + $0x88] sm:$0xff]
        %v6989 = vld [vmem:[#allocation10 + $0x90] sm:$0xff]
        %v6990 = vld [vmem:[#allocation10 + $0x98] sm:$0xff]
        %v6991 = vld [vmem:[#allocation10 + $0xa0] sm:$0xff]
        %v6992 = vld [vmem:[#allocation10 + $0xa8] sm:$0xff]
        %v6993 = vld [vmem:[#allocation10 + $0xb0] sm:$0xff]
        %v6994 = vld [vmem:[#allocation10 + $0xb8] sm:$0xff]
        %v6995 = vld [vmem:[%s6850 + $0x7] sm:$0xff]
        %v6996 = vld [vmem:[%s6850 + $0x1f] sm:$0xff]
        %v6997 = vld [vmem:[%s6850 + $0x37] sm:$0xff]
        %v6998 = vld [vmem:[%s6850 + $0x4f] sm:$0xff]
        %v6999 = vld [vmem:[%s6850 + $0x67] sm:$0xff]
        %v7000 = vld [vmem:[%s6850 + $0x7f] sm:$0xff]
        %v7001 = vld [vmem:[%s6850 + $0x97] sm:$0xff]
        %v7002 = vld [vmem:[%s6850 + $0xaf] sm:$0xff]
        %v7003 = vld [vmem:[%s6850 + $0x8] sm:$0xff]
        %v7004 = vld [vmem:[%s6850 + $0x20] sm:$0xff]
        %v7005 = vld [vmem:[%s6850 + $0x38] sm:$0xff]
        %v7006 = vld [vmem:[%s6850 + $0x50] sm:$0xff]
        %v7007 = vld [vmem:[%s6850 + $0x68] sm:$0xff]
        %v7008 = vld [vmem:[%s6850 + $0x80] sm:$0xff]
        %v7009 = vld [vmem:[%s6850 + $0x98] sm:$0xff]
        %v7010 = vld [vmem:[%s6850 + $0xb0] sm:$0xff]
        %v7011 = vld [vmem:[%s6850 + $0x9] sm:$0xff]
        %v7012 = vld [vmem:[%s6850 + $0x21] sm:$0xff]
        %v7013 = vld [vmem:[%s6850 + $0x39] sm:$0xff]
        %v7014 = vld [vmem:[%s6850 + $0x51] sm:$0xff]
        %v7015 = vld [vmem:[%s6850 + $0x69] sm:$0xff]
        %v7016 = vld [vmem:[%s6850 + $0x81] sm:$0xff]
        %v7017 = vld [vmem:[%s6850 + $0x99] sm:$0xff]
        %v7018 = vld [vmem:[%s6850 + $0xb1] sm:$0xff]
        %7027 = vrot.lane.b32.xlu0 %v7003, 64
        %v7028 = vpop.permute.xlu0 %7027
        %7029 = vrot.lane.b32.xlu0 %v7004, 64
        %v7030 = vpop.permute.xlu0 %7029
        %7031 = vrot.lane.b32.xlu0 %v7005, 64
        %v7032 = vpop.permute.xlu0 %7031
        %7033 = vrot.lane.b32.xlu0 %v7006, 64
        %v7034 = vpop.permute.xlu0 %7033
        %7035 = vrot.lane.b32.xlu0 %v7007, 64
        %v7036 = vpop.permute.xlu0 %7035
        %7037 = vrot.lane.b32.xlu0 %v7008, 64
        %v7038 = vpop.permute.xlu0 %7037
        %7039 = vrot.lane.b32.xlu0 %v7009, 64
        %v7040 = vpop.permute.xlu0 %7039
        %7041 = vrot.lane.b32.xlu0 %v7010, 64
        %v7042 = vpop.permute.xlu0 %7041
        %v7051 = vsel %vm4102, %v6995, %v7028
        %v7052 = vsel %vm4102, %v6996, %v7030
        %v7053 = vsel %vm4102, %v6997, %v7032
        %v7054 = vsel %vm4102, %v6998, %v7034
        %v7055 = vsel %vm4102, %v6999, %v7036
        %v7056 = vsel %vm4102, %v7000, %v7038
        %v7057 = vsel %vm4102, %v7001, %v7040
        %v7058 = vsel %vm4102, %v7002, %v7042
        %7059 = vst [vmem:[#allocation7] sm:$0xff] %v7051
        %7060 = vst [vmem:[#allocation7 + $0x10] sm:$0xff] %v7052
        %7061 = vst [vmem:[#allocation7 + $0x20] sm:$0xff] %v7053
        %7062 = vst [vmem:[#allocation7 + $0x30] sm:$0xff] %v7054
        %7063 = vst [vmem:[#allocation7 + $0x40] sm:$0xff] %v7055
        %7064 = vst [vmem:[#allocation7 + $0x50] sm:$0xff] %v7056
        %7065 = vst [vmem:[#allocation7 + $0x60] sm:$0xff] %v7057
        %7066 = vst [vmem:[#allocation7 + $0x70] sm:$0xff] %v7058
        %7067 = vst.msk [vmem:[#allocation7 + $0x8] sm:$0xff] %vm4102, %v7011
        %7068 = vst.msk [vmem:[#allocation7 + $0x18] sm:$0xff] %vm4102, %v7012
        %7069 = vst.msk [vmem:[#allocation7 + $0x28] sm:$0xff] %vm4102, %v7013
        %7070 = vst.msk [vmem:[#allocation7 + $0x38] sm:$0xff] %vm4102, %v7014
        %7071 = vst.msk [vmem:[#allocation7 + $0x48] sm:$0xff] %vm4102, %v7015
        %7072 = vst.msk [vmem:[#allocation7 + $0x58] sm:$0xff] %vm4102, %v7016
        %7073 = vst.msk [vmem:[#allocation7 + $0x68] sm:$0xff] %vm4102, %v7017
        %7074 = vst.msk [vmem:[#allocation7 + $0x78] sm:$0xff] %vm4102, %v7018
        %v7075 = vld [vmem:[#allocation7] sm:$0xff]
        %v7076 = vld [vmem:[#allocation7 + $0x8] sm:$0xff]
        %v7077 = vld [vmem:[#allocation7 + $0x10] sm:$0xff]
        %v7078 = vld [vmem:[#allocation7 + $0x18] sm:$0xff]
        %v7079 = vld [vmem:[#allocation7 + $0x20] sm:$0xff]
        %v7080 = vld [vmem:[#allocation7 + $0x28] sm:$0xff]
        %v7081 = vld [vmem:[#allocation7 + $0x30] sm:$0xff]
        %v7082 = vld [vmem:[#allocation7 + $0x38] sm:$0xff]
        %v7083 = vld [vmem:[#allocation7 + $0x40] sm:$0xff]
        %v7084 = vld [vmem:[#allocation7 + $0x48] sm:$0xff]
        %v7085 = vld [vmem:[#allocation7 + $0x50] sm:$0xff]
        %v7086 = vld [vmem:[#allocation7 + $0x58] sm:$0xff]
        %v7087 = vld [vmem:[#allocation7 + $0x60] sm:$0xff]
        %v7088 = vld [vmem:[#allocation7 + $0x68] sm:$0xff]
        %v7089 = vld [vmem:[#allocation7 + $0x70] sm:$0xff]
        %v7090 = vld [vmem:[#allocation7 + $0x78] sm:$0xff]
        %s7091 = scalar_lea.vmem [#allocation10], 192
        %v7092 = vld [vmem:[%s7091] sm:$0xff]
        %v7093 = vld [vmem:[%s7091 + $0x8] sm:$0xff]
        %v7094 = vld [vmem:[%s7091 + $0x10] sm:$0xff]
        %v7095 = vld [vmem:[%s7091 + $0x18] sm:$0xff]
        %v7096 = vld [vmem:[%s7091 + $0x20] sm:$0xff]
        %v7097 = vld [vmem:[%s7091 + $0x28] sm:$0xff]
        %v7098 = vld [vmem:[%s7091 + $0x30] sm:$0xff]
        %v7099 = vld [vmem:[%s7091 + $0x38] sm:$0xff]
        %v7100 = vld [vmem:[%s7091 + $0x40] sm:$0xff]
        %v7101 = vld [vmem:[%s7091 + $0x48] sm:$0xff]
        %v7102 = vld [vmem:[%s7091 + $0x50] sm:$0xff]
        %v7103 = vld [vmem:[%s7091 + $0x58] sm:$0xff]
        %v7104 = vld [vmem:[%s7091 + $0x60] sm:$0xff]
        %v7105 = vld [vmem:[%s7091 + $0x68] sm:$0xff]
        %v7106 = vld [vmem:[%s7091 + $0x70] sm:$0xff]
        %v7107 = vld [vmem:[%s7091 + $0x78] sm:$0xff]
        %v7108 = vld [vmem:[%s7091 + $0x80] sm:$0xff]
        %v7109 = vld [vmem:[%s7091 + $0x88] sm:$0xff]
        %v7110 = vld [vmem:[%s7091 + $0x90] sm:$0xff]
        %v7111 = vld [vmem:[%s7091 + $0x98] sm:$0xff]
        %v7112 = vld [vmem:[%s7091 + $0xa0] sm:$0xff]
        %v7113 = vld [vmem:[%s7091 + $0xa8] sm:$0xff]
        %v7114 = vld [vmem:[%s7091 + $0xb0] sm:$0xff]
        %v7115 = vld [vmem:[%s7091 + $0xb8] sm:$0xff]
        %v7117 = vsel %vm4102, %v7076, 0
        %v7120 = vsel %vm4102, %v7078, 0
        %v7123 = vsel %vm4102, %v7080, 0
        %v7126 = vsel %vm4102, %v7082, 0
        %v7129 = vsel %vm4102, %v7084, 0
        %v7132 = vsel %vm4102, %v7086, 0
        %v7135 = vsel %vm4102, %v7088, 0
        %v7138 = vsel %vm4102, %v7090, 0
        %7140 = vmatprep.subr.mxu0 0.0
        %7141 = vmatpush1.msra.mxu0 %v7092
        %7142 = vmatprep.subr.mxu0 0.0
        %7143 = vmatpush1.msra.mxu0 %v7093
        %7144 = vmatprep.subr.mxu0 0.0
        %7145 = vmatpush1.msra.mxu0 %v7094
        %7146 = vmatprep.subr.mxu0 0.0
        %7147 = vmatpush1.msra.mxu0 %v7095
        %7148 = vmatprep.subr.mxu0 0.0
        %7149 = vmatpush1.msra.mxu0 %v7096
        %7150 = vmatprep.subr.mxu0 0.0
        %7151 = vmatpush1.msra.mxu0 %v7097
        %7152 = vmatprep.subr.mxu0 0.0
        %7153 = vmatpush1.msra.mxu0 %v7098
        %7154 = vmatprep.subr.mxu0 0.0
        %7155 = vmatpush1.msra.mxu0 %v7099
        %7156 = vmatprep.subr.mxu0 0.0
        %7157 = vmatpush1.msra.mxu0 %v7100
        %7158 = vmatprep.subr.mxu0 0.0
        %7159 = vmatpush1.msra.mxu0 %v7101
        %7160 = vmatprep.subr.mxu0 0.0
        %7161 = vmatpush1.msra.mxu0 %v7102
        %7162 = vmatprep.subr.mxu0 0.0
        %7163 = vmatpush1.msra.mxu0 %v7103
        %7164 = vmatprep.subr.mxu0 0.0
        %7165 = vmatpush1.msra.mxu0 %v7104
        %7166 = vmatprep.subr.mxu0 0.0
        %7167 = vmatpush1.msra.mxu0 %v7105
        %7168 = vmatprep.subr.mxu0 0.0
        %7169 = vmatpush1.msra.mxu0 %v7106
        %7170 = vmatprep.subr.mxu0 0.0
        %7171 = vmatpush1.msra.mxu0 %v7107
        %7172 = vmatprep.subr.mxu0 0.0
        %7173 = vmatpush1.msra.mxu0 %v7108
        %7174 = vmatprep.subr.mxu0 0.0
        %7175 = vmatpush1.msra.mxu0 %v7109
        %7176 = vmatprep.subr.mxu0 0.0
        %7177 = vmatpush1.msra.mxu0 %v7110
        %7178 = vmatprep.subr.mxu0 0.0
        %7179 = vmatpush1.msra.mxu0 %v7111
        %7180 = vmatprep.subr.mxu0 0.0
        %7181 = vmatpush1.msra.mxu0 %v7112
        %7182 = vmatprep.subr.mxu0 0.0
        %7183 = vmatpush1.msra.mxu0 %v7113
        %7184 = vmatprep.subr.mxu0 0.0
        %7185 = vmatpush1.msra.mxu0 %v7114
        %7186 = vmatprep.subr.mxu0 0.0
        %7187 = vmatpush1.msra.mxu0 %v7115
        %7188 = vmatprep.subr.mxu0 0.0
        %7189 = vmatpush1.msra.mxu0 0.0
        %7190 = vmatprep.subr.mxu0 0.0
        %7191 = vmatpush1.msra.mxu0 0.0
        %7192 = vmatprep.subr.mxu0 0.0
        %7193 = vmatpush1.msra.mxu0 0.0
        %7194 = vmatprep.subr.mxu0 0.0
        %7195 = vmatpush1.msra.mxu0 0.0
        %7196 = vmatprep.subr.mxu0 0.0
        %7197 = vmatpush1.msra.mxu0 0.0
        %7198 = vmatprep.subr.mxu0 0.0
        %7199 = vmatpush1.msra.mxu0 0.0
        %7200 = vmatprep.subr.mxu0 0.0
        %7201 = vmatpush1.msra.mxu0 0.0
        %7202 = vmatprep.subr.mxu0 0.0
        %7203 = vmatpush1.msra.mxu0 0.0
        %7204 = vmatprep.mubr.f32.mxu0 %v7117
        %7205 = vmatmul.mubr.f32.gmra.mrb[0].mxu0 %v7075
        %v7206 = vpop.f32.mrb[0].mxu0
        %v7207 = vadd.f32 0.0, %v7206
        %v7208 = vpop.f32.mrb[0].mxu0
        %7209 = vmatprep.mubr.f32.mxu0 %v7120
        %7210 = vmatmul.mubr.f32.gmra.mrb[0].mxu0 %v7077
        %v7211 = vpop.f32.mrb[0].mxu0
        %v7212 = vadd.f32 0.0, %v7211
        %v7213 = vpop.f32.mrb[0].mxu0
        %7214 = vmatprep.mubr.f32.mxu0 %v7123
        %7215 = vmatmul.mubr.f32.gmra.mrb[0].mxu0 %v7079
        %v7216 = vpop.f32.mrb[0].mxu0
        %v7217 = vadd.f32 0.0, %v7216
        %v7218 = vpop.f32.mrb[0].mxu0
        %7219 = vmatprep.mubr.f32.mxu0 %v7126
        %7220 = vmatmul.mubr.f32.gmra.mrb[0].mxu0 %v7081
        %v7221 = vpop.f32.mrb[0].mxu0
        %v7222 = vadd.f32 0.0, %v7221
        %v7223 = vpop.f32.mrb[0].mxu0
        %7224 = vmatprep.mubr.f32.mxu0 %v7129
        %7225 = vmatmul.mubr.f32.gmra.mrb[0].mxu0 %v7083
        %v7226 = vpop.f32.mrb[0].mxu0
        %v7227 = vadd.f32 0.0, %v7226
        %v7228 = vpop.f32.mrb[0].mxu0
        %7229 = vmatprep.mubr.f32.mxu0 %v7132
        %7230 = vmatmul.mubr.f32.gmra.mrb[0].mxu0 %v7085
        %v7231 = vpop.f32.mrb[0].mxu0
        %v7232 = vadd.f32 0.0, %v7231
        %v7233 = vpop.f32.mrb[0].mxu0
        %7234 = vmatprep.mubr.f32.mxu0 %v7135
        %7235 = vmatmul.mubr.f32.gmra.mrb[0].mxu0 %v7087
        %v7236 = vpop.f32.mrb[0].mxu0
        %v7237 = vadd.f32 0.0, %v7236
        %v7238 = vpop.f32.mrb[0].mxu0
        %7239 = vmatprep.mubr.f32.mxu0 %v7138
        %7240 = vmatmul.mubr.f32.gmra.mrb[0].mxu0 %v7089
        %v7241 = vpop.f32.mrb[0].mxu0
        %v7242 = vadd.f32 0.0, %v7241
        %v7243 = vpop.f32.mrb[0].mxu0
        %7244 = vdwg.mxu0
        %v7246 = vsel %vm4102, %v6956, 0
        %v7249 = vsel %vm4102, %v6958, 0
        %v7252 = vsel %vm4102, %v6960, 0
        %v7255 = vsel %vm4102, %v6962, 0
        %v7258 = vsel %vm4102, %v6964, 0
        %v7261 = vsel %vm4102, %v6966, 0
        %v7264 = vsel %vm4102, %v6968, 0
        %v7267 = vsel %vm4102, %v6970, 0
        %7269 = vmatprep.subr.mxu0 0.0
        %7270 = vmatpush1.msra.mxu0 %v6971
        %7271 = vmatprep.subr.mxu0 0.0
        %7272 = vmatpush1.msra.mxu0 %v6972
        %7273 = vmatprep.subr.mxu0 0.0
        %7274 = vmatpush1.msra.mxu0 %v6973
        %7275 = vmatprep.subr.mxu0 0.0
        %7276 = vmatpush1.msra.mxu0 %v6974
        %7277 = vmatprep.subr.mxu0 0.0
        %7278 = vmatpush1.msra.mxu0 %v6975
        %7279 = vmatprep.subr.mxu0 0.0
        %7280 = vmatpush1.msra.mxu0 %v6976
        %7281 = vmatprep.subr.mxu0 0.0
        %7282 = vmatpush1.msra.mxu0 %v6977
        %7283 = vmatprep.subr.mxu0 0.0
        %7284 = vmatpush1.msra.mxu0 %v6978
        %7285 = vmatprep.subr.mxu0 0.0
        %7286 = vmatpush1.msra.mxu0 %v6979
        %7287 = vmatprep.subr.mxu0 0.0
        %7288 = vmatpush1.msra.mxu0 %v6980
        %7289 = vmatprep.subr.mxu0 0.0
        %7290 = vmatpush1.msra.mxu0 %v6981
        %7291 = vmatprep.subr.mxu0 0.0
        %7292 = vmatpush1.msra.mxu0 %v6982
        %7293 = vmatprep.subr.mxu0 0.0
        %7294 = vmatpush1.msra.mxu0 %v6983
        %7295 = vmatprep.subr.mxu0 0.0
        %7296 = vmatpush1.msra.mxu0 %v6984
        %7297 = vmatprep.subr.mxu0 0.0
        %7298 = vmatpush1.msra.mxu0 %v6985
        %7299 = vmatprep.subr.mxu0 0.0
        %7300 = vmatpush1.msra.mxu0 %v6986
        %7301 = vmatprep.subr.mxu0 0.0
        %7302 = vmatpush1.msra.mxu0 %v6987
        %7303 = vmatprep.subr.mxu0 0.0
        %7304 = vmatpush1.msra.mxu0 %v6988
        %7305 = vmatprep.subr.mxu0 0.0
        %7306 = vmatpush1.msra.mxu0 %v6989
        %7307 = vmatprep.subr.mxu0 0.0
        %7308 = vmatpush1.msra.mxu0 %v6990
        %7309 = vmatprep.subr.mxu0 0.0
        %7310 = vmatpush1.msra.mxu0 %v6991
        %7311 = vmatprep.subr.mxu0 0.0
        %7312 = vmatpush1.msra.mxu0 %v6992
        %7313 = vmatprep.subr.mxu0 0.0
        %7314 = vmatpush1.msra.mxu0 %v6993
        %7315 = vmatprep.subr.mxu0 0.0
        %7316 = vmatpush1.msra.mxu0 %v6994
        %7317 = vmatprep.subr.mxu0 0.0
        %7318 = vmatpush1.msra.mxu0 0.0
        %7319 = vmatprep.subr.mxu0 0.0
        %7320 = vmatpush1.msra.mxu0 0.0
        %7321 = vmatprep.subr.mxu0 0.0
        %7322 = vmatpush1.msra.mxu0 0.0
        %7323 = vmatprep.subr.mxu0 0.0
        %7324 = vmatpush1.msra.mxu0 0.0
        %7325 = vmatprep.subr.mxu0 0.0
        %7326 = vmatpush1.msra.mxu0 0.0
        %7327 = vmatprep.subr.mxu0 0.0
        %7328 = vmatpush1.msra.mxu0 0.0
        %7329 = vmatprep.subr.mxu0 0.0
        %7330 = vmatpush1.msra.mxu0 0.0
        %7331 = vmatprep.subr.mxu0 0.0
        %7332 = vmatpush1.msra.mxu0 0.0
        %7333 = vmatprep.mubr.f32.mxu0 %v7246
        %7334 = vmatmul.mubr.f32.gmra.mrb[0].mxu0 %v6955
        %v7335 = vpop.f32.mrb[0].mxu0
        %v7336 = vadd.f32 %v7207, %v7335
        %v7337 = vpop.f32.mrb[0].mxu0
        %7338 = vmatprep.mubr.f32.mxu0 %v7249
        %7339 = vmatmul.mubr.f32.gmra.mrb[0].mxu0 %v6957
        %v7340 = vpop.f32.mrb[0].mxu0
        %v7341 = vadd.f32 %v7212, %v7340
        %v7342 = vpop.f32.mrb[0].mxu0
        %7343 = vmatprep.mubr.f32.mxu0 %v7252
        %7344 = vmatmul.mubr.f32.gmra.mrb[0].mxu0 %v6959
        %v7345 = vpop.f32.mrb[0].mxu0
        %v7346 = vadd.f32 %v7217, %v7345
        %v7347 = vpop.f32.mrb[0].mxu0
        %7348 = vmatprep.mubr.f32.mxu0 %v7255
        %7349 = vmatmul.mubr.f32.gmra.mrb[0].mxu0 %v6961
        %v7350 = vpop.f32.mrb[0].mxu0
        %v7351 = vadd.f32 %v7222, %v7350
        %v7352 = vpop.f32.mrb[0].mxu0
        %7353 = vmatprep.mubr.f32.mxu0 %v7258
        %7354 = vmatmul.mubr.f32.gmra.mrb[0].mxu0 %v6963
        %v7355 = vpop.f32.mrb[0].mxu0
        %v7356 = vadd.f32 %v7227, %v7355
        %v7357 = vpop.f32.mrb[0].mxu0
        %7358 = vmatprep.mubr.f32.mxu0 %v7261
        %7359 = vmatmul.mubr.f32.gmra.mrb[0].mxu0 %v6965
        %v7360 = vpop.f32.mrb[0].mxu0
        %v7361 = vadd.f32 %v7232, %v7360
        %v7362 = vpop.f32.mrb[0].mxu0
        %7363 = vmatprep.mubr.f32.mxu0 %v7264
        %7364 = vmatmul.mubr.f32.gmra.mrb[0].mxu0 %v6967
        %v7365 = vpop.f32.mrb[0].mxu0
        %v7366 = vadd.f32 %v7237, %v7365
        %v7367 = vpop.f32.mrb[0].mxu0
        %7368 = vmatprep.mubr.f32.mxu0 %v7267
        %7369 = vmatmul.mubr.f32.gmra.mrb[0].mxu0 %v6969
        %v7370 = vpop.f32.mrb[0].mxu0
        %v7371 = vadd.f32 %v7242, %v7370
        %v7372 = vpop.f32.mrb[0].mxu0
        %7373 = vdwg.mxu0
        %s7374 = scalar_lea.vmem [#allocation4], 48
        %v7375 = vld [vmem:[%s7374 + $0x7] sm:$0xff]
        %v7376 = vld [vmem:[%s7374 + $0x1f] sm:$0xff]
        %v7377 = vld [vmem:[%s7374 + $0x37] sm:$0xff]
        %v7378 = vld [vmem:[%s7374 + $0x4f] sm:$0xff]
        %v7379 = vld [vmem:[%s7374 + $0x67] sm:$0xff]
        %v7380 = vld [vmem:[%s7374 + $0x7f] sm:$0xff]
        %v7381 = vld [vmem:[%s7374 + $0x97] sm:$0xff]
        %v7382 = vld [vmem:[%s7374 + $0xaf] sm:$0xff]
        %v7383 = vld [vmem:[%s7374 + $0x8] sm:$0xff]
        %v7384 = vld [vmem:[%s7374 + $0x20] sm:$0xff]
        %v7385 = vld [vmem:[%s7374 + $0x38] sm:$0xff]
        %v7386 = vld [vmem:[%s7374 + $0x50] sm:$0xff]
        %v7387 = vld [vmem:[%s7374 + $0x68] sm:$0xff]
        %v7388 = vld [vmem:[%s7374 + $0x80] sm:$0xff]
        %v7389 = vld [vmem:[%s7374 + $0x98] sm:$0xff]
        %v7390 = vld [vmem:[%s7374 + $0xb0] sm:$0xff]
        %v7391 = vld [vmem:[%s7374 + $0x9] sm:$0xff]
        %v7392 = vld [vmem:[%s7374 + $0x21] sm:$0xff]
        %v7393 = vld [vmem:[%s7374 + $0x39] sm:$0xff]
        %v7394 = vld [vmem:[%s7374 + $0x51] sm:$0xff]
        %v7395 = vld [vmem:[%s7374 + $0x69] sm:$0xff]
        %v7396 = vld [vmem:[%s7374 + $0x81] sm:$0xff]
        %v7397 = vld [vmem:[%s7374 + $0x99] sm:$0xff]
        %v7398 = vld [vmem:[%s7374 + $0xb1] sm:$0xff]
        %7407 = vrot.lane.b32.xlu0 %v7383, 64
        %v7408 = vpop.permute.xlu0 %7407
        %7409 = vrot.lane.b32.xlu0 %v7384, 64
        %v7410 = vpop.permute.xlu0 %7409
        %7411 = vrot.lane.b32.xlu0 %v7385, 64
        %v7412 = vpop.permute.xlu0 %7411
        %7413 = vrot.lane.b32.xlu0 %v7386, 64
        %v7414 = vpop.permute.xlu0 %7413
        %7415 = vrot.lane.b32.xlu0 %v7387, 64
        %v7416 = vpop.permute.xlu0 %7415
        %7417 = vrot.lane.b32.xlu0 %v7388, 64
        %v7418 = vpop.permute.xlu0 %7417
        %7419 = vrot.lane.b32.xlu0 %v7389, 64
        %v7420 = vpop.permute.xlu0 %7419
        %7421 = vrot.lane.b32.xlu0 %v7390, 64
        %v7422 = vpop.permute.xlu0 %7421
        %v7431 = vsel %vm4102, %v7375, %v7408
        %v7432 = vsel %vm4102, %v7376, %v7410
        %v7433 = vsel %vm4102, %v7377, %v7412
        %v7434 = vsel %vm4102, %v7378, %v7414
        %v7435 = vsel %vm4102, %v7379, %v7416
        %v7436 = vsel %vm4102, %v7380, %v7418
        %v7437 = vsel %vm4102, %v7381, %v7420
        %v7438 = vsel %vm4102, %v7382, %v7422
        %7439 = vst [vmem:[#allocation7] sm:$0xff] %v7431
        %7440 = vst [vmem:[#allocation7 + $0x10] sm:$0xff] %v7432
        %7441 = vst [vmem:[#allocation7 + $0x20] sm:$0xff] %v7433
        %7442 = vst [vmem:[#allocation7 + $0x30] sm:$0xff] %v7434
        %7443 = vst [vmem:[#allocation7 + $0x40] sm:$0xff] %v7435
        %7444 = vst [vmem:[#allocation7 + $0x50] sm:$0xff] %v7436
        %7445 = vst [vmem:[#allocation7 + $0x60] sm:$0xff] %v7437
        %7446 = vst [vmem:[#allocation7 + $0x70] sm:$0xff] %v7438
        %7447 = vst.msk [vmem:[#allocation7 + $0x8] sm:$0xff] %vm4102, %v7391
        %7448 = vst.msk [vmem:[#allocation7 + $0x18] sm:$0xff] %vm4102, %v7392
        %7449 = vst.msk [vmem:[#allocation7 + $0x28] sm:$0xff] %vm4102, %v7393
        %7450 = vst.msk [vmem:[#allocation7 + $0x38] sm:$0xff] %vm4102, %v7394
        %7451 = vst.msk [vmem:[#allocation7 + $0x48] sm:$0xff] %vm4102, %v7395
        %7452 = vst.msk [vmem:[#allocation7 + $0x58] sm:$0xff] %vm4102, %v7396
        %7453 = vst.msk [vmem:[#allocation7 + $0x68] sm:$0xff] %vm4102, %v7397
        %7454 = vst.msk [vmem:[#allocation7 + $0x78] sm:$0xff] %vm4102, %v7398
        %v7455 = vld [vmem:[#allocation7] sm:$0xff]
        %v7456 = vld [vmem:[#allocation7 + $0x8] sm:$0xff]
        %v7457 = vld [vmem:[#allocation7 + $0x10] sm:$0xff]
        %v7458 = vld [vmem:[#allocation7 + $0x18] sm:$0xff]
        %v7459 = vld [vmem:[#allocation7 + $0x20] sm:$0xff]
        %v7460 = vld [vmem:[#allocation7 + $0x28] sm:$0xff]
        %v7461 = vld [vmem:[#allocation7 + $0x30] sm:$0xff]
        %v7462 = vld [vmem:[#allocation7 + $0x38] sm:$0xff]
        %v7463 = vld [vmem:[#allocation7 + $0x40] sm:$0xff]
        %v7464 = vld [vmem:[#allocation7 + $0x48] sm:$0xff]
        %v7465 = vld [vmem:[#allocation7 + $0x50] sm:$0xff]
        %v7466 = vld [vmem:[#allocation7 + $0x58] sm:$0xff]
        %v7467 = vld [vmem:[#allocation7 + $0x60] sm:$0xff]
        %v7468 = vld [vmem:[#allocation7 + $0x68] sm:$0xff]
        %v7469 = vld [vmem:[#allocation7 + $0x70] sm:$0xff]
        %v7470 = vld [vmem:[#allocation7 + $0x78] sm:$0xff]
        %s7471 = scalar_lea.vmem [#allocation10], 384
        %v7472 = vld [vmem:[%s7471] sm:$0xff]
        %v7473 = vld [vmem:[%s7471 + $0x8] sm:$0xff]
        %v7474 = vld [vmem:[%s7471 + $0x10] sm:$0xff]
        %v7475 = vld [vmem:[%s7471 + $0x18] sm:$0xff]
        %v7476 = vld [vmem:[%s7471 + $0x20] sm:$0xff]
        %v7477 = vld [vmem:[%s7471 + $0x28] sm:$0xff]
        %v7478 = vld [vmem:[%s7471 + $0x30] sm:$0xff]
        %v7479 = vld [vmem:[%s7471 + $0x38] sm:$0xff]
        %v7480 = vld [vmem:[%s7471 + $0x40] sm:$0xff]
        %v7481 = vld [vmem:[%s7471 + $0x48] sm:$0xff]
        %v7482 = vld [vmem:[%s7471 + $0x50] sm:$0xff]
        %v7483 = vld [vmem:[%s7471 + $0x58] sm:$0xff]
        %v7484 = vld [vmem:[%s7471 + $0x60] sm:$0xff]
        %v7485 = vld [vmem:[%s7471 + $0x68] sm:$0xff]
        %v7486 = vld [vmem:[%s7471 + $0x70] sm:$0xff]
        %v7487 = vld [vmem:[%s7471 + $0x78] sm:$0xff]
        %v7488 = vld [vmem:[%s7471 + $0x80] sm:$0xff]
        %v7489 = vld [vmem:[%s7471 + $0x88] sm:$0xff]
        %v7490 = vld [vmem:[%s7471 + $0x90] sm:$0xff]
        %v7491 = vld [vmem:[%s7471 + $0x98] sm:$0xff]
        %v7492 = vld [vmem:[%s7471 + $0xa0] sm:$0xff]
        %v7493 = vld [vmem:[%s7471 + $0xa8] sm:$0xff]
        %v7494 = vld [vmem:[%s7471 + $0xb0] sm:$0xff]
        %v7495 = vld [vmem:[%s7471 + $0xb8] sm:$0xff]
        %v7497 = vsel %vm4102, %v7456, 0
        %v7500 = vsel %vm4102, %v7458, 0
        %v7503 = vsel %vm4102, %v7460, 0
        %v7506 = vsel %vm4102, %v7462, 0
        %v7509 = vsel %vm4102, %v7464, 0
        %v7512 = vsel %vm4102, %v7466, 0
        %v7515 = vsel %vm4102, %v7468, 0
        %v7518 = vsel %vm4102, %v7470, 0
        %7520 = vmatprep.subr.mxu0 0.0
        %7521 = vmatpush1.msra.mxu0 %v7472
        %7522 = vmatprep.subr.mxu0 0.0
        %7523 = vmatpush1.msra.mxu0 %v7473
        %7524 = vmatprep.subr.mxu0 0.0
        %7525 = vmatpush1.msra.mxu0 %v7474
        %7526 = vmatprep.subr.mxu0 0.0
        %7527 = vmatpush1.msra.mxu0 %v7475
        %7528 = vmatprep.subr.mxu0 0.0
        %7529 = vmatpush1.msra.mxu0 %v7476
        %7530 = vmatprep.subr.mxu0 0.0
        %7531 = vmatpush1.msra.mxu0 %v7477
        %7532 = vmatprep.subr.mxu0 0.0
        %7533 = vmatpush1.msra.mxu0 %v7478
        %7534 = vmatprep.subr.mxu0 0.0
        %7535 = vmatpush1.msra.mxu0 %v7479
        %7536 = vmatprep.subr.mxu0 0.0
        %7537 = vmatpush1.msra.mxu0 %v7480
        %7538 = vmatprep.subr.mxu0 0.0
        %7539 = vmatpush1.msra.mxu0 %v7481
        %7540 = vmatprep.subr.mxu0 0.0
        %7541 = vmatpush1.msra.mxu0 %v7482
        %7542 = vmatprep.subr.mxu0 0.0
        %7543 = vmatpush1.msra.mxu0 %v7483
        %7544 = vmatprep.subr.mxu0 0.0
        %7545 = vmatpush1.msra.mxu0 %v7484
        %7546 = vmatprep.subr.mxu0 0.0
        %7547 = vmatpush1.msra.mxu0 %v7485
        %7548 = vmatprep.subr.mxu0 0.0
        %7549 = vmatpush1.msra.mxu0 %v7486
        %7550 = vmatprep.subr.mxu0 0.0
        %7551 = vmatpush1.msra.mxu0 %v7487
        %7552 = vmatprep.subr.mxu0 0.0
        %7553 = vmatpush1.msra.mxu0 %v7488
        %7554 = vmatprep.subr.mxu0 0.0
        %7555 = vmatpush1.msra.mxu0 %v7489
        %7556 = vmatprep.subr.mxu0 0.0
        %7557 = vmatpush1.msra.mxu0 %v7490
        %7558 = vmatprep.subr.mxu0 0.0
        %7559 = vmatpush1.msra.mxu0 %v7491
        %7560 = vmatprep.subr.mxu0 0.0
        %7561 = vmatpush1.msra.mxu0 %v7492
        %7562 = vmatprep.subr.mxu0 0.0
        %7563 = vmatpush1.msra.mxu0 %v7493
        %7564 = vmatprep.subr.mxu0 0.0
        %7565 = vmatpush1.msra.mxu0 %v7494
        %7566 = vmatprep.subr.mxu0 0.0
        %7567 = vmatpush1.msra.mxu0 %v7495
        %7568 = vmatprep.subr.mxu0 0.0
        %7569 = vmatpush1.msra.mxu0 0.0
        %7570 = vmatprep.subr.mxu0 0.0
        %7571 = vmatpush1.msra.mxu0 0.0
        %7572 = vmatprep.subr.mxu0 0.0
        %7573 = vmatpush1.msra.mxu0 0.0
        %7574 = vmatprep.subr.mxu0 0.0
        %7575 = vmatpush1.msra.mxu0 0.0
        %7576 = vmatprep.subr.mxu0 0.0
        %7577 = vmatpush1.msra.mxu0 0.0
        %7578 = vmatprep.subr.mxu0 0.0
        %7579 = vmatpush1.msra.mxu0 0.0
        %7580 = vmatprep.subr.mxu0 0.0
        %7581 = vmatpush1.msra.mxu0 0.0
        %7582 = vmatprep.subr.mxu0 0.0
        %7583 = vmatpush1.msra.mxu0 0.0
        %7584 = vmatprep.mubr.f32.mxu0 %v7497
        %7585 = vmatmul.mubr.f32.gmra.mrb[0].mxu0 %v7455
        %v7586 = vpop.f32.mrb[0].mxu0
        %v7587 = vadd.f32 0.0, %v7586
        %v7588 = vpop.f32.mrb[0].mxu0
        %7589 = vmatprep.mubr.f32.mxu0 %v7500
        %7590 = vmatmul.mubr.f32.gmra.mrb[0].mxu0 %v7457
        %v7591 = vpop.f32.mrb[0].mxu0
        %v7592 = vadd.f32 0.0, %v7591
        %v7593 = vpop.f32.mrb[0].mxu0
        %7594 = vmatprep.mubr.f32.mxu0 %v7503
        %7595 = vmatmul.mubr.f32.gmra.mrb[0].mxu0 %v7459
        %v7596 = vpop.f32.mrb[0].mxu0
        %v7597 = vadd.f32 0.0, %v7596
        %v7598 = vpop.f32.mrb[0].mxu0
        %7599 = vmatprep.mubr.f32.mxu0 %v7506
        %7600 = vmatmul.mubr.f32.gmra.mrb[0].mxu0 %v7461
        %v7601 = vpop.f32.mrb[0].mxu0
        %v7602 = vadd.f32 0.0, %v7601
        %v7603 = vpop.f32.mrb[0].mxu0
        %7604 = vmatprep.mubr.f32.mxu0 %v7509
        %7605 = vmatmul.mubr.f32.gmra.mrb[0].mxu0 %v7463
        %v7606 = vpop.f32.mrb[0].mxu0
        %v7607 = vadd.f32 0.0, %v7606
        %v7608 = vpop.f32.mrb[0].mxu0
        %7609 = vmatprep.mubr.f32.mxu0 %v7512
        %7610 = vmatmul.mubr.f32.gmra.mrb[0].mxu0 %v7465
        %v7611 = vpop.f32.mrb[0].mxu0
        %v7612 = vadd.f32 0.0, %v7611
        %v7613 = vpop.f32.mrb[0].mxu0
        %7614 = vmatprep.mubr.f32.mxu0 %v7515
        %7615 = vmatmul.mubr.f32.gmra.mrb[0].mxu0 %v7467
        %v7616 = vpop.f32.mrb[0].mxu0
        %v7617 = vadd.f32 0.0, %v7616
        %v7618 = vpop.f32.mrb[0].mxu0
        %7619 = vmatprep.mubr.f32.mxu0 %v7518
        %7620 = vmatmul.mubr.f32.gmra.mrb[0].mxu0 %v7469
        %v7621 = vpop.f32.mrb[0].mxu0
        %v7622 = vadd.f32 0.0, %v7621
        %v7623 = vpop.f32.mrb[0].mxu0
        %7624 = vdwg.mxu0
        %v7625 = vadd.f32 %v7336, %v7587
        %v7626 = vadd.f32 %v7341, %v7592
        %v7627 = vadd.f32 %v7346, %v7597
        %v7628 = vadd.f32 %v7351, %v7602
        %v7629 = vadd.f32 %v7356, %v7607
        %v7630 = vadd.f32 %v7361, %v7612
        %v7631 = vadd.f32 %v7366, %v7617
        %v7632 = vadd.f32 %v7371, %v7622
        %v7633 = vld [vmem:[%s6] sm:$0x1]
        %v7635 = vlaneseq
        %v7636 = vshrl.u32 %v7635, 7
        %v7637 = vsub.s32 0, %v7636
        %v7638 = vrot.slane %v7633, %v7637
        %v7640 = vadd.f32 %v7625, %v7638
        %v7641 = vadd.f32 %v7626, %v7638
        %v7642 = vadd.f32 %v7627, %v7638
        %v7643 = vadd.f32 %v7628, %v7638
        %v7644 = vadd.f32 %v7629, %v7638
        %v7645 = vadd.f32 %v7630, %v7638
        %v7646 = vadd.f32 %v7631, %v7638
        %v7647 = vadd.f32 %v7632, %v7638
        %v7648 = vmax.f32 %v7640, 0.0
        %v7649 = vmax.f32 %v7641, 0.0
        %v7650 = vmax.f32 %v7642, 0.0
        %v7651 = vmax.f32 %v7643, 0.0
        %v7652 = vmax.f32 %v7644, 0.0
        %v7653 = vmax.f32 %v7645, 0.0
        %v7654 = vmax.f32 %v7646, 0.0
        %v7655 = vmax.f32 %v7647, 0.0
        %7656 = vst [vmem:[%s454] sm:$0xff] %v7648
        %7657 = vst [vmem:[%s454 + $0x8] sm:$0xff] %v7649
        %7658 = vst [vmem:[%s454 + $0x10] sm:$0xff] %v7650
        %7659 = vst [vmem:[%s454 + $0x18] sm:$0xff] %v7651
        %7660 = vst [vmem:[%s454 + $0x20] sm:$0xff] %v7652
        %7661 = vst [vmem:[%s454 + $0x28] sm:$0xff] %v7653
        %7662 = vst [vmem:[%s454 + $0x30] sm:$0xff] %v7654
        %7663 = vst [vmem:[%s454 + $0x38] sm:$0xff] %v7655
        %7664 = vst [vmem:[#allocation5 + $0x7] sm:$0xff] 0.0
        %7665 = vst [vmem:[#allocation5 + $0xf] sm:$0x3] 0.0
        %s7666 = scalar_lea.vmem [#allocation5], 216
        %7667 = vst [vmem:[%s7666 + $0x7] sm:$0xff] 0.0
        %7668 = vst [vmem:[%s7666 + $0xf] sm:$0x3] 0.0
        %s7669 = scalar_lea.vmem [#allocation5], 24
        %7670 = vst [vmem:[%s7669 + $0x7] sm:$0x1] 0.0
        %7671 = vst [vmem:[%s7669 + $0x1f] sm:$0x1] 0.0
        %7672 = vst [vmem:[%s7669 + $0x37] sm:$0x1] 0.0
        %7673 = vst [vmem:[%s7669 + $0x4f] sm:$0x1] 0.0
        %7674 = vst [vmem:[%s7669 + $0x67] sm:$0x1] 0.0
        %7675 = vst [vmem:[%s7669 + $0x7f] sm:$0x1] 0.0
        %7676 = vst [vmem:[%s7669 + $0x97] sm:$0x1] 0.0
        %7677 = vst [vmem:[%s7669 + $0xaf] sm:$0x1] 0.0
        %7678 = vst [vmem:[%s7669 + $0x10] sm:$0x1] 0.0
        %7679 = vst [vmem:[%s7669 + $0x28] sm:$0x1] 0.0
        %7680 = vst [vmem:[%s7669 + $0x40] sm:$0x1] 0.0
        %7681 = vst [vmem:[%s7669 + $0x58] sm:$0x1] 0.0
        %7682 = vst [vmem:[%s7669 + $0x70] sm:$0x1] 0.0
        %7683 = vst [vmem:[%s7669 + $0x88] sm:$0x1] 0.0
        %7684 = vst [vmem:[%s7669 + $0xa0] sm:$0x1] 0.0
        %7685 = vst [vmem:[%s7669 + $0xb8] sm:$0x1] 0.0
        %7686 = vst [vmem:[%s7669 + $0x8] sm:$0xff] %v7648
        %7687 = vst [vmem:[%s7669 + $0x20] sm:$0xff] %v7649
        %7688 = vst [vmem:[%s7669 + $0x38] sm:$0xff] %v7650
        %7689 = vst [vmem:[%s7669 + $0x50] sm:$0xff] %v7651
        %7690 = vst [vmem:[%s7669 + $0x68] sm:$0xff] %v7652
        %7691 = vst [vmem:[%s7669 + $0x80] sm:$0xff] %v7653
        %7692 = vst [vmem:[%s7669 + $0x98] sm:$0xff] %v7654
        %7693 = vst [vmem:[%s7669 + $0xb0] sm:$0xff] %v7655
        %v7694 = vld [vmem:[#allocation5 + $0x7] sm:$0xff]
        %v7695 = vld [vmem:[#allocation5 + $0x1f] sm:$0xff]
        %v7696 = vld [vmem:[#allocation5 + $0x37] sm:$0xff]
        %v7697 = vld [vmem:[#allocation5 + $0x4f] sm:$0xff]
        %v7698 = vld [vmem:[#allocation5 + $0x67] sm:$0xff]
        %v7699 = vld [vmem:[#allocation5 + $0x7f] sm:$0xff]
        %v7700 = vld [vmem:[#allocation5 + $0x97] sm:$0xff]
        %v7701 = vld [vmem:[#allocation5 + $0xaf] sm:$0xff]
        %v7702 = vld [vmem:[#allocation5 + $0x8] sm:$0xff]
        %v7703 = vld [vmem:[#allocation5 + $0x20] sm:$0xff]
        %v7704 = vld [vmem:[#allocation5 + $0x38] sm:$0xff]
        %v7705 = vld [vmem:[#allocation5 + $0x50] sm:$0xff]
        %v7706 = vld [vmem:[#allocation5 + $0x68] sm:$0xff]
        %v7707 = vld [vmem:[#allocation5 + $0x80] sm:$0xff]
        %v7708 = vld [vmem:[#allocation5 + $0x98] sm:$0xff]
        %v7709 = vld [vmem:[#allocation5 + $0xb0] sm:$0xff]
        %v7710 = vld [vmem:[#allocation5 + $0x9] sm:$0xff]
        %v7711 = vld [vmem:[#allocation5 + $0x21] sm:$0xff]
        %v7712 = vld [vmem:[#allocation5 + $0x39] sm:$0xff]
        %v7713 = vld [vmem:[#allocation5 + $0x51] sm:$0xff]
        %v7714 = vld [vmem:[#allocation5 + $0x69] sm:$0xff]
        %v7715 = vld [vmem:[#allocation5 + $0x81] sm:$0xff]
        %v7716 = vld [vmem:[#allocation5 + $0x99] sm:$0xff]
        %v7717 = vld [vmem:[#allocation5 + $0xb1] sm:$0xff]
        %7718 = vst [vmem:[#allocation8] sm:$0xff] %v7694
        %7719 = vst [vmem:[#allocation8 + $0x18] sm:$0xff] %v7695
        %7720 = vst [vmem:[#allocation8 + $0x30] sm:$0xff] %v7696
        %7721 = vst [vmem:[#allocation8 + $0x48] sm:$0xff] %v7697
        %7722 = vst [vmem:[#allocation8 + $0x60] sm:$0xff] %v7698
        %7723 = vst [vmem:[#allocation8 + $0x78] sm:$0xff] %v7699
        %7724 = vst [vmem:[#allocation8 + $0x90] sm:$0xff] %v7700
        %7725 = vst [vmem:[#allocation8 + $0xa8] sm:$0xff] %v7701
        %7726 = vst [vmem:[#allocation8 + $0x8] sm:$0xff] %v7702
        %7727 = vst [vmem:[#allocation8 + $0x20] sm:$0xff] %v7703
        %7728 = vst [vmem:[#allocation8 + $0x38] sm:$0xff] %v7704
        %7729 = vst [vmem:[#allocation8 + $0x50] sm:$0xff] %v7705
        %7730 = vst [vmem:[#allocation8 + $0x68] sm:$0xff] %v7706
        %7731 = vst [vmem:[#allocation8 + $0x80] sm:$0xff] %v7707
        %7732 = vst [vmem:[#allocation8 + $0x98] sm:$0xff] %v7708
        %7733 = vst [vmem:[#allocation8 + $0xb0] sm:$0xff] %v7709
        %7734 = vst [vmem:[#allocation8 + $0x10] sm:$0xff] %v7710
        %7735 = vst [vmem:[#allocation8 + $0x28] sm:$0xff] %v7711
        %7736 = vst [vmem:[#allocation8 + $0x40] sm:$0xff] %v7712
        %7737 = vst [vmem:[#allocation8 + $0x58] sm:$0xff] %v7713
        %7738 = vst [vmem:[#allocation8 + $0x70] sm:$0xff] %v7714
        %7739 = vst [vmem:[#allocation8 + $0x88] sm:$0xff] %v7715
        %7740 = vst [vmem:[#allocation8 + $0xa0] sm:$0xff] %v7716
        %7741 = vst [vmem:[#allocation8 + $0xb8] sm:$0xff] %v7717
        %v7742 = vld [vmem:[#allocation8] sm:$0xff]
        %v7743 = vld [vmem:[#allocation8 + $0x8] sm:$0xff]
        %v7744 = vld [vmem:[#allocation8 + $0x10] sm:$0xff]
        %v7745 = vld [vmem:[#allocation8 + $0x18] sm:$0xff]
        %v7746 = vld [vmem:[#allocation8 + $0x20] sm:$0xff]
        %v7747 = vld [vmem:[#allocation8 + $0x28] sm:$0xff]
        %v7748 = vld [vmem:[#allocation8 + $0x30] sm:$0xff]
        %v7749 = vld [vmem:[#allocation8 + $0x38] sm:$0xff]
        %v7750 = vld [vmem:[#allocation8 + $0x40] sm:$0xff]
        %v7751 = vld [vmem:[#allocation8 + $0x48] sm:$0xff]
        %v7752 = vld [vmem:[#allocation8 + $0x50] sm:$0xff]
        %v7753 = vld [vmem:[#allocation8 + $0x58] sm:$0xff]
        %v7754 = vld [vmem:[#allocation8 + $0x60] sm:$0xff]
        %v7755 = vld [vmem:[#allocation8 + $0x68] sm:$0xff]
        %v7756 = vld [vmem:[#allocation8 + $0x70] sm:$0xff]
        %v7757 = vld [vmem:[#allocation8 + $0x78] sm:$0xff]
        %v7758 = vld [vmem:[#allocation8 + $0x80] sm:$0xff]
        %v7759 = vld [vmem:[#allocation8 + $0x88] sm:$0xff]
        %v7760 = vld [vmem:[#allocation8 + $0x90] sm:$0xff]
        %v7761 = vld [vmem:[#allocation8 + $0x98] sm:$0xff]
        %v7762 = vld [vmem:[#allocation8 + $0xa0] sm:$0xff]
        %v7763 = vld [vmem:[#allocation8 + $0xa8] sm:$0xff]
        %v7764 = vld [vmem:[#allocation8 + $0xb0] sm:$0xff]
        %v7765 = vld [vmem:[#allocation8 + $0xb8] sm:$0xff]
        %v7766 = vld [vmem:[#allocation13] sm:$0xff]
        %v7767 = vld [vmem:[#allocation13 + $0x8] sm:$0xff]
        %v7768 = vld [vmem:[#allocation13 + $0x10] sm:$0xff]
        %v7769 = vld [vmem:[#allocation13 + $0x18] sm:$0xff]
        %v7770 = vld [vmem:[#allocation13 + $0x20] sm:$0xff]
        %v7771 = vld [vmem:[#allocation13 + $0x28] sm:$0xff]
        %v7772 = vld [vmem:[#allocation13 + $0x30] sm:$0xff]
        %v7773 = vld [vmem:[#allocation13 + $0x38] sm:$0xff]
        %v7774 = vld [vmem:[#allocation13 + $0x40] sm:$0xff]
        %v7775 = vld [vmem:[#allocation13 + $0x48] sm:$0xff]
        %v7776 = vld [vmem:[#allocation13 + $0x50] sm:$0xff]
        %v7777 = vld [vmem:[#allocation13 + $0x58] sm:$0xff]
        %v7778 = vld [vmem:[#allocation13 + $0x60] sm:$0xff]
        %v7779 = vld [vmem:[#allocation13 + $0x68] sm:$0xff]
        %v7780 = vld [vmem:[#allocation13 + $0x70] sm:$0xff]
        %v7781 = vld [vmem:[#allocation13 + $0x78] sm:$0xff]
        %v7782 = vld [vmem:[#allocation13 + $0x80] sm:$0xff]
        %v7783 = vld [vmem:[#allocation13 + $0x88] sm:$0xff]
        %v7784 = vld [vmem:[#allocation13 + $0x90] sm:$0xff]
        %v7785 = vld [vmem:[#allocation13 + $0x98] sm:$0xff]
        %v7786 = vld [vmem:[#allocation13 + $0xa0] sm:$0xff]
        %v7787 = vld [vmem:[#allocation13 + $0xa8] sm:$0xff]
        %v7788 = vld [vmem:[#allocation13 + $0xb0] sm:$0xff]
        %v7789 = vld [vmem:[#allocation13 + $0xb8] sm:$0xff]
        %v7790 = vld [vmem:[#allocation13 + $0xc0] sm:$0xff]
        %v7791 = vld [vmem:[#allocation13 + $0xc8] sm:$0xff]
        %v7792 = vld [vmem:[#allocation13 + $0xd0] sm:$0xff]
        %v7793 = vld [vmem:[#allocation13 + $0xd8] sm:$0xff]
        %v7794 = vld [vmem:[#allocation13 + $0xe0] sm:$0xff]
        %v7795 = vld [vmem:[#allocation13 + $0xe8] sm:$0xff]
        %v7796 = vld [vmem:[#allocation13 + $0xf0] sm:$0xff]
        %v7797 = vld [vmem:[#allocation13 + $0xf8] sm:$0xff]
        %v7798 = vld [vmem:[#allocation13 + $0x100] sm:$0xff]
        %v7799 = vld [vmem:[#allocation13 + $0x108] sm:$0xff]
        %v7800 = vld [vmem:[#allocation13 + $0x110] sm:$0xff]
        %v7801 = vld [vmem:[#allocation13 + $0x118] sm:$0xff]
        %v7802 = vld [vmem:[#allocation13 + $0x120] sm:$0xff]
        %v7803 = vld [vmem:[#allocation13 + $0x128] sm:$0xff]
        %v7804 = vld [vmem:[#allocation13 + $0x130] sm:$0xff]
        %v7805 = vld [vmem:[#allocation13 + $0x138] sm:$0xff]
        %v7806 = vld [vmem:[#allocation13 + $0x140] sm:$0xff]
        %v7807 = vld [vmem:[#allocation13 + $0x148] sm:$0xff]
        %v7808 = vld [vmem:[#allocation13 + $0x150] sm:$0xff]
        %v7809 = vld [vmem:[#allocation13 + $0x158] sm:$0xff]
        %v7810 = vld [vmem:[#allocation13 + $0x160] sm:$0xff]
        %v7811 = vld [vmem:[#allocation13 + $0x168] sm:$0xff]
        %v7812 = vld [vmem:[#allocation13 + $0x170] sm:$0xff]
        %v7813 = vld [vmem:[#allocation13 + $0x178] sm:$0xff]
        %v7814 = vld [vmem:[%s7669 + $0x7] sm:$0xff]
        %v7815 = vld [vmem:[%s7669 + $0x1f] sm:$0xff]
        %v7816 = vld [vmem:[%s7669 + $0x37] sm:$0xff]
        %v7817 = vld [vmem:[%s7669 + $0x4f] sm:$0xff]
        %v7818 = vld [vmem:[%s7669 + $0x67] sm:$0xff]
        %v7819 = vld [vmem:[%s7669 + $0x7f] sm:$0xff]
        %v7820 = vld [vmem:[%s7669 + $0x97] sm:$0xff]
        %v7821 = vld [vmem:[%s7669 + $0xaf] sm:$0xff]
        %v7822 = vld [vmem:[%s7669 + $0x8] sm:$0xff]
        %v7823 = vld [vmem:[%s7669 + $0x20] sm:$0xff]
        %v7824 = vld [vmem:[%s7669 + $0x38] sm:$0xff]
        %v7825 = vld [vmem:[%s7669 + $0x50] sm:$0xff]
        %v7826 = vld [vmem:[%s7669 + $0x68] sm:$0xff]
        %v7827 = vld [vmem:[%s7669 + $0x80] sm:$0xff]
        %v7828 = vld [vmem:[%s7669 + $0x98] sm:$0xff]
        %v7829 = vld [vmem:[%s7669 + $0xb0] sm:$0xff]
        %v7830 = vld [vmem:[%s7669 + $0x9] sm:$0xff]
        %v7831 = vld [vmem:[%s7669 + $0x21] sm:$0xff]
        %v7832 = vld [vmem:[%s7669 + $0x39] sm:$0xff]
        %v7833 = vld [vmem:[%s7669 + $0x51] sm:$0xff]
        %v7834 = vld [vmem:[%s7669 + $0x69] sm:$0xff]
        %v7835 = vld [vmem:[%s7669 + $0x81] sm:$0xff]
        %v7836 = vld [vmem:[%s7669 + $0x99] sm:$0xff]
        %v7837 = vld [vmem:[%s7669 + $0xb1] sm:$0xff]
        %7838 = vst [vmem:[#allocation8] sm:$0xff] %v7814
        %7839 = vst [vmem:[#allocation8 + $0x18] sm:$0xff] %v7815
        %7840 = vst [vmem:[#allocation8 + $0x30] sm:$0xff] %v7816
        %7841 = vst [vmem:[#allocation8 + $0x48] sm:$0xff] %v7817
        %7842 = vst [vmem:[#allocation8 + $0x60] sm:$0xff] %v7818
        %7843 = vst [vmem:[#allocation8 + $0x78] sm:$0xff] %v7819
        %7844 = vst [vmem:[#allocation8 + $0x90] sm:$0xff] %v7820
        %7845 = vst [vmem:[#allocation8 + $0xa8] sm:$0xff] %v7821
        %7846 = vst [vmem:[#allocation8 + $0x8] sm:$0xff] %v7822
        %7847 = vst [vmem:[#allocation8 + $0x20] sm:$0xff] %v7823
        %7848 = vst [vmem:[#allocation8 + $0x38] sm:$0xff] %v7824
        %7849 = vst [vmem:[#allocation8 + $0x50] sm:$0xff] %v7825
        %7850 = vst [vmem:[#allocation8 + $0x68] sm:$0xff] %v7826
        %7851 = vst [vmem:[#allocation8 + $0x80] sm:$0xff] %v7827
        %7852 = vst [vmem:[#allocation8 + $0x98] sm:$0xff] %v7828
        %7853 = vst [vmem:[#allocation8 + $0xb0] sm:$0xff] %v7829
        %7854 = vst [vmem:[#allocation8 + $0x10] sm:$0xff] %v7830
        %7855 = vst [vmem:[#allocation8 + $0x28] sm:$0xff] %v7831
        %7856 = vst [vmem:[#allocation8 + $0x40] sm:$0xff] %v7832
        %7857 = vst [vmem:[#allocation8 + $0x58] sm:$0xff] %v7833
        %7858 = vst [vmem:[#allocation8 + $0x70] sm:$0xff] %v7834
        %7859 = vst [vmem:[#allocation8 + $0x88] sm:$0xff] %v7835
        %7860 = vst [vmem:[#allocation8 + $0xa0] sm:$0xff] %v7836
        %7861 = vst [vmem:[#allocation8 + $0xb8] sm:$0xff] %v7837
        %v7862 = vld [vmem:[#allocation8] sm:$0xff]
        %v7863 = vld [vmem:[#allocation8 + $0x8] sm:$0xff]
        %v7864 = vld [vmem:[#allocation8 + $0x10] sm:$0xff]
        %v7865 = vld [vmem:[#allocation8 + $0x18] sm:$0xff]
        %v7866 = vld [vmem:[#allocation8 + $0x20] sm:$0xff]
        %v7867 = vld [vmem:[#allocation8 + $0x28] sm:$0xff]
        %v7868 = vld [vmem:[#allocation8 + $0x30] sm:$0xff]
        %v7869 = vld [vmem:[#allocation8 + $0x38] sm:$0xff]
        %v7870 = vld [vmem:[#allocation8 + $0x40] sm:$0xff]
        %v7871 = vld [vmem:[#allocation8 + $0x48] sm:$0xff]
        %v7872 = vld [vmem:[#allocation8 + $0x50] sm:$0xff]
        %v7873 = vld [vmem:[#allocation8 + $0x58] sm:$0xff]
        %v7874 = vld [vmem:[#allocation8 + $0x60] sm:$0xff]
        %v7875 = vld [vmem:[#allocation8 + $0x68] sm:$0xff]
        %v7876 = vld [vmem:[#allocation8 + $0x70] sm:$0xff]
        %v7877 = vld [vmem:[#allocation8 + $0x78] sm:$0xff]
        %v7878 = vld [vmem:[#allocation8 + $0x80] sm:$0xff]
        %v7879 = vld [vmem:[#allocation8 + $0x88] sm:$0xff]
        %v7880 = vld [vmem:[#allocation8 + $0x90] sm:$0xff]
        %v7881 = vld [vmem:[#allocation8 + $0x98] sm:$0xff]
        %v7882 = vld [vmem:[#allocation8 + $0xa0] sm:$0xff]
        %v7883 = vld [vmem:[#allocation8 + $0xa8] sm:$0xff]
        %v7884 = vld [vmem:[#allocation8 + $0xb0] sm:$0xff]
        %v7885 = vld [vmem:[#allocation8 + $0xb8] sm:$0xff]
        %s7886 = scalar_lea.vmem [#allocation13], 384
        %v7887 = vld [vmem:[%s7886] sm:$0xff]
        %v7888 = vld [vmem:[%s7886 + $0x8] sm:$0xff]
        %v7889 = vld [vmem:[%s7886 + $0x10] sm:$0xff]
        %v7890 = vld [vmem:[%s7886 + $0x18] sm:$0xff]
        %v7891 = vld [vmem:[%s7886 + $0x20] sm:$0xff]
        %v7892 = vld [vmem:[%s7886 + $0x28] sm:$0xff]
        %v7893 = vld [vmem:[%s7886 + $0x30] sm:$0xff]
        %v7894 = vld [vmem:[%s7886 + $0x38] sm:$0xff]
        %v7895 = vld [vmem:[%s7886 + $0x40] sm:$0xff]
        %v7896 = vld [vmem:[%s7886 + $0x48] sm:$0xff]
        %v7897 = vld [vmem:[%s7886 + $0x50] sm:$0xff]
        %v7898 = vld [vmem:[%s7886 + $0x58] sm:$0xff]
        %v7899 = vld [vmem:[%s7886 + $0x60] sm:$0xff]
        %v7900 = vld [vmem:[%s7886 + $0x68] sm:$0xff]
        %v7901 = vld [vmem:[%s7886 + $0x70] sm:$0xff]
        %v7902 = vld [vmem:[%s7886 + $0x78] sm:$0xff]
        %v7903 = vld [vmem:[%s7886 + $0x80] sm:$0xff]
        %v7904 = vld [vmem:[%s7886 + $0x88] sm:$0xff]
        %v7905 = vld [vmem:[%s7886 + $0x90] sm:$0xff]
        %v7906 = vld [vmem:[%s7886 + $0x98] sm:$0xff]
        %v7907 = vld [vmem:[%s7886 + $0xa0] sm:$0xff]
        %v7908 = vld [vmem:[%s7886 + $0xa8] sm:$0xff]
        %v7909 = vld [vmem:[%s7886 + $0xb0] sm:$0xff]
        %v7910 = vld [vmem:[%s7886 + $0xb8] sm:$0xff]
        %v7911 = vld [vmem:[%s7886 + $0xc0] sm:$0xff]
        %v7912 = vld [vmem:[%s7886 + $0xc8] sm:$0xff]
        %v7913 = vld [vmem:[%s7886 + $0xd0] sm:$0xff]
        %v7914 = vld [vmem:[%s7886 + $0xd8] sm:$0xff]
        %v7915 = vld [vmem:[%s7886 + $0xe0] sm:$0xff]
        %v7916 = vld [vmem:[%s7886 + $0xe8] sm:$0xff]
        %v7917 = vld [vmem:[%s7886 + $0xf0] sm:$0xff]
        %v7918 = vld [vmem:[%s7886 + $0xf8] sm:$0xff]
        %v7919 = vld [vmem:[%s7886 + $0x100] sm:$0xff]
        %v7920 = vld [vmem:[%s7886 + $0x108] sm:$0xff]
        %v7921 = vld [vmem:[%s7886 + $0x110] sm:$0xff]
        %v7922 = vld [vmem:[%s7886 + $0x118] sm:$0xff]
        %v7923 = vld [vmem:[%s7886 + $0x120] sm:$0xff]
        %v7924 = vld [vmem:[%s7886 + $0x128] sm:$0xff]
        %v7925 = vld [vmem:[%s7886 + $0x130] sm:$0xff]
        %v7926 = vld [vmem:[%s7886 + $0x138] sm:$0xff]
        %v7927 = vld [vmem:[%s7886 + $0x140] sm:$0xff]
        %v7928 = vld [vmem:[%s7886 + $0x148] sm:$0xff]
        %v7929 = vld [vmem:[%s7886 + $0x150] sm:$0xff]
        %v7930 = vld [vmem:[%s7886 + $0x158] sm:$0xff]
        %v7931 = vld [vmem:[%s7886 + $0x160] sm:$0xff]
        %v7932 = vld [vmem:[%s7886 + $0x168] sm:$0xff]
        %v7933 = vld [vmem:[%s7886 + $0x170] sm:$0xff]
        %v7934 = vld [vmem:[%s7886 + $0x178] sm:$0xff]
        %7935 = vmatprep.subr.mxu0 0.0
        %7936 = vmatpush1.msra.mxu0 %v7887
        %7937 = vmatprep.subr.mxu0 0.0
        %7938 = vmatpush1.msra.mxu0 %v7888
        %7939 = vmatprep.subr.mxu0 0.0
        %7940 = vmatpush1.msra.mxu0 %v7889
        %7941 = vmatprep.subr.mxu0 0.0
        %7942 = vmatpush1.msra.mxu0 %v7890
        %7943 = vmatprep.subr.mxu0 0.0
        %7944 = vmatpush1.msra.mxu0 %v7891
        %7945 = vmatprep.subr.mxu0 0.0
        %7946 = vmatpush1.msra.mxu0 %v7892
        %7947 = vmatprep.subr.mxu0 0.0
        %7948 = vmatpush1.msra.mxu0 %v7893
        %7949 = vmatprep.subr.mxu0 0.0
        %7950 = vmatpush1.msra.mxu0 %v7894
        %7951 = vmatprep.subr.mxu0 0.0
        %7952 = vmatpush1.msra.mxu0 %v7895
        %7953 = vmatprep.subr.mxu0 0.0
        %7954 = vmatpush1.msra.mxu0 %v7896
        %7955 = vmatprep.subr.mxu0 0.0
        %7956 = vmatpush1.msra.mxu0 %v7897
        %7957 = vmatprep.subr.mxu0 0.0
        %7958 = vmatpush1.msra.mxu0 %v7898
        %7959 = vmatprep.subr.mxu0 0.0
        %7960 = vmatpush1.msra.mxu0 %v7899
        %7961 = vmatprep.subr.mxu0 0.0
        %7962 = vmatpush1.msra.mxu0 %v7900
        %7963 = vmatprep.subr.mxu0 0.0
        %7964 = vmatpush1.msra.mxu0 %v7901
        %7965 = vmatprep.subr.mxu0 0.0
        %7966 = vmatpush1.msra.mxu0 %v7902
        %7967 = vmatprep.subr.mxu0 0.0
        %7968 = vmatpush1.msra.mxu0 %v7903
        %7969 = vmatprep.subr.mxu0 0.0
        %7970 = vmatpush1.msra.mxu0 %v7904
        %7971 = vmatprep.subr.mxu0 0.0
        %7972 = vmatpush1.msra.mxu0 %v7905
        %7973 = vmatprep.subr.mxu0 0.0
        %7974 = vmatpush1.msra.mxu0 %v7906
        %7975 = vmatprep.subr.mxu0 0.0
        %7976 = vmatpush1.msra.mxu0 %v7907
        %7977 = vmatprep.subr.mxu0 0.0
        %7978 = vmatpush1.msra.mxu0 %v7908
        %7979 = vmatprep.subr.mxu0 0.0
        %7980 = vmatpush1.msra.mxu0 %v7909
        %7981 = vmatprep.subr.mxu0 0.0
        %7982 = vmatpush1.msra.mxu0 %v7910
        %7983 = vmatprep.subr.mxu0 0.0
        %7984 = vmatpush1.msra.mxu0 %v7911
        %7985 = vmatprep.subr.mxu0 0.0
        %7986 = vmatpush1.msra.mxu0 %v7912
        %7987 = vmatprep.subr.mxu0 0.0
        %7988 = vmatpush1.msra.mxu0 %v7913
        %7989 = vmatprep.subr.mxu0 0.0
        %7990 = vmatpush1.msra.mxu0 %v7914
        %7991 = vmatprep.subr.mxu0 0.0
        %7992 = vmatpush1.msra.mxu0 %v7915
        %7993 = vmatprep.subr.mxu0 0.0
        %7994 = vmatpush1.msra.mxu0 %v7916
        %7995 = vmatprep.subr.mxu0 0.0
        %7996 = vmatpush1.msra.mxu0 %v7917
        %7997 = vmatprep.subr.mxu0 0.0
        %7998 = vmatpush1.msra.mxu0 %v7918
        %7999 = vmatprep.mubr.f32.mxu0 %v7863
        %8000 = vmatmul.mubr.f32.gmra.mrb[0].mxu0 %v7862
        %v8001 = vpop.f32.mrb[0].mxu0
        %v8002 = vadd.f32 0.0, %v8001
        %v8003 = vpop.f32.mrb[0].mxu0
        %8004 = vmatprep.mubr.f32.mxu0 %v7866
        %8005 = vmatmul.mubr.f32.gmra.mrb[0].mxu0 %v7865
        %v8006 = vpop.f32.mrb[0].mxu0
        %v8007 = vadd.f32 0.0, %v8006
        %v8008 = vpop.f32.mrb[0].mxu0
        %8009 = vmatprep.mubr.f32.mxu0 %v7869
        %8010 = vmatmul.mubr.f32.gmra.mrb[0].mxu0 %v7868
        %v8011 = vpop.f32.mrb[0].mxu0
        %v8012 = vadd.f32 0.0, %v8011
        %v8013 = vpop.f32.mrb[0].mxu0
        %8014 = vmatprep.mubr.f32.mxu0 %v7872
        %8015 = vmatmul.mubr.f32.gmra.mrb[0].mxu0 %v7871
        %v8016 = vpop.f32.mrb[0].mxu0
        %v8017 = vadd.f32 0.0, %v8016
        %v8018 = vpop.f32.mrb[0].mxu0
        %8019 = vmatprep.mubr.f32.mxu0 %v7875
        %8020 = vmatmul.mubr.f32.gmra.mrb[0].mxu0 %v7874
        %v8021 = vpop.f32.mrb[0].mxu0
        %v8022 = vadd.f32 0.0, %v8021
        %v8023 = vpop.f32.mrb[0].mxu0
        %8024 = vmatprep.mubr.f32.mxu0 %v7878
        %8025 = vmatmul.mubr.f32.gmra.mrb[0].mxu0 %v7877
        %v8026 = vpop.f32.mrb[0].mxu0
        %v8027 = vadd.f32 0.0, %v8026
        %v8028 = vpop.f32.mrb[0].mxu0
        %8029 = vmatprep.mubr.f32.mxu0 %v7881
        %8030 = vmatmul.mubr.f32.gmra.mrb[0].mxu0 %v7880
        %v8031 = vpop.f32.mrb[0].mxu0
        %v8032 = vadd.f32 0.0, %v8031
        %v8033 = vpop.f32.mrb[0].mxu0
        %8034 = vmatprep.mubr.f32.mxu0 %v7884
        %8035 = vmatmul.mubr.f32.gmra.mrb[0].mxu0 %v7883
        %v8036 = vpop.f32.mrb[0].mxu0
        %v8037 = vadd.f32 0.0, %v8036
        %v8038 = vpop.f32.mrb[0].mxu0
        %8039 = vdwg.mxu0
        %8040 = vmatprep.subr.mxu0 0.0
        %8041 = vmatpush1.msra.mxu0 %v7919
        %8042 = vmatprep.subr.mxu0 0.0
        %8043 = vmatpush1.msra.mxu0 %v7920
        %8044 = vmatprep.subr.mxu0 0.0
        %8045 = vmatpush1.msra.mxu0 %v7921
        %8046 = vmatprep.subr.mxu0 0.0
        %8047 = vmatpush1.msra.mxu0 %v7922
        %8048 = vmatprep.subr.mxu0 0.0
        %8049 = vmatpush1.msra.mxu0 %v7923
        %8050 = vmatprep.subr.mxu0 0.0
        %8051 = vmatpush1.msra.mxu0 %v7924
        %8052 = vmatprep.subr.mxu0 0.0
        %8053 = vmatpush1.msra.mxu0 %v7925
        %8054 = vmatprep.subr.mxu0 0.0
        %8055 = vmatpush1.msra.mxu0 %v7926
        %8056 = vmatprep.subr.mxu0 0.0
        %8057 = vmatpush1.msra.mxu0 %v7927
        %8058 = vmatprep.subr.mxu0 0.0
        %8059 = vmatpush1.msra.mxu0 %v7928
        %8060 = vmatprep.subr.mxu0 0.0
        %8061 = vmatpush1.msra.mxu0 %v7929
        %8062 = vmatprep.subr.mxu0 0.0
        %8063 = vmatpush1.msra.mxu0 %v7930
        %8064 = vmatprep.subr.mxu0 0.0
        %8065 = vmatpush1.msra.mxu0 %v7931
        %8066 = vmatprep.subr.mxu0 0.0
        %8067 = vmatpush1.msra.mxu0 %v7932
        %8068 = vmatprep.subr.mxu0 0.0
        %8069 = vmatpush1.msra.mxu0 %v7933
        %8070 = vmatprep.subr.mxu0 0.0
        %8071 = vmatpush1.msra.mxu0 %v7934
        %8072 = vmatprep.subr.mxu0 0.0
        %8073 = vmatpush1.msra.mxu0 0.0
        %8074 = vmatprep.subr.mxu0 0.0
        %8075 = vmatpush1.msra.mxu0 0.0
        %8076 = vmatprep.subr.mxu0 0.0
        %8077 = vmatpush1.msra.mxu0 0.0
        %8078 = vmatprep.subr.mxu0 0.0
        %8079 = vmatpush1.msra.mxu0 0.0
        %8080 = vmatprep.subr.mxu0 0.0
        %8081 = vmatpush1.msra.mxu0 0.0
        %8082 = vmatprep.subr.mxu0 0.0
        %8083 = vmatpush1.msra.mxu0 0.0
        %8084 = vmatprep.subr.mxu0 0.0
        %8085 = vmatpush1.msra.mxu0 0.0
        %8086 = vmatprep.subr.mxu0 0.0
        %8087 = vmatpush1.msra.mxu0 0.0
        %8088 = vmatprep.subr.mxu0 0.0
        %8089 = vmatpush1.msra.mxu0 0.0
        %8090 = vmatprep.subr.mxu0 0.0
        %8091 = vmatpush1.msra.mxu0 0.0
        %8092 = vmatprep.subr.mxu0 0.0
        %8093 = vmatpush1.msra.mxu0 0.0
        %8094 = vmatprep.subr.mxu0 0.0
        %8095 = vmatpush1.msra.mxu0 0.0
        %8096 = vmatprep.subr.mxu0 0.0
        %8097 = vmatpush1.msra.mxu0 0.0
        %8098 = vmatprep.subr.mxu0 0.0
        %8099 = vmatpush1.msra.mxu0 0.0
        %8100 = vmatprep.subr.mxu0 0.0
        %8101 = vmatpush1.msra.mxu0 0.0
        %8102 = vmatprep.subr.mxu0 0.0
        %8103 = vmatpush1.msra.mxu0 0.0
        %8104 = vmatprep.mubr.f32.mxu0 0.0
        %8105 = vmatmul.mubr.f32.gmra.mrb[0].mxu0 %v7864
        %v8106 = vpop.f32.mrb[0].mxu0
        %v8107 = vadd.f32 %v8002, %v8106
        %v8108 = vpop.f32.mrb[0].mxu0
        %8109 = vmatprep.mubr.f32.mxu0 0.0
        %8110 = vmatmul.mubr.f32.gmra.mrb[0].mxu0 %v7867
        %v8111 = vpop.f32.mrb[0].mxu0
        %v8112 = vadd.f32 %v8007, %v8111
        %v8113 = vpop.f32.mrb[0].mxu0
        %8114 = vmatprep.mubr.f32.mxu0 0.0
        %8115 = vmatmul.mubr.f32.gmra.mrb[0].mxu0 %v7870
        %v8116 = vpop.f32.mrb[0].mxu0
        %v8117 = vadd.f32 %v8012, %v8116
        %v8118 = vpop.f32.mrb[0].mxu0
        %8119 = vmatprep.mubr.f32.mxu0 0.0
        %8120 = vmatmul.mubr.f32.gmra.mrb[0].mxu0 %v7873
        %v8121 = vpop.f32.mrb[0].mxu0
        %v8122 = vadd.f32 %v8017, %v8121
        %v8123 = vpop.f32.mrb[0].mxu0
        %8124 = vmatprep.mubr.f32.mxu0 0.0
        %8125 = vmatmul.mubr.f32.gmra.mrb[0].mxu0 %v7876
        %v8126 = vpop.f32.mrb[0].mxu0
        %v8127 = vadd.f32 %v8022, %v8126
        %v8128 = vpop.f32.mrb[0].mxu0
        %8129 = vmatprep.mubr.f32.mxu0 0.0
        %8130 = vmatmul.mubr.f32.gmra.mrb[0].mxu0 %v7879
        %v8131 = vpop.f32.mrb[0].mxu0
        %v8132 = vadd.f32 %v8027, %v8131
        %v8133 = vpop.f32.mrb[0].mxu0
        %8134 = vmatprep.mubr.f32.mxu0 0.0
        %8135 = vmatmul.mubr.f32.gmra.mrb[0].mxu0 %v7882
        %v8136 = vpop.f32.mrb[0].mxu0
        %v8137 = vadd.f32 %v8032, %v8136
        %v8138 = vpop.f32.mrb[0].mxu0
        %8139 = vmatprep.mubr.f32.mxu0 0.0
        %8140 = vmatmul.mubr.f32.gmra.mrb[0].mxu0 %v7885
        %v8141 = vpop.f32.mrb[0].mxu0
        %v8142 = vadd.f32 %v8037, %v8141
        %v8143 = vpop.f32.mrb[0].mxu0
        %8144 = vdwg.mxu0
        %8145 = vmatprep.subr.mxu0 0.0
        %8146 = vmatpush1.msra.mxu0 %v7766
        %8147 = vmatprep.subr.mxu0 0.0
        %8148 = vmatpush1.msra.mxu0 %v7767
        %8149 = vmatprep.subr.mxu0 0.0
        %8150 = vmatpush1.msra.mxu0 %v7768
        %8151 = vmatprep.subr.mxu0 0.0
        %8152 = vmatpush1.msra.mxu0 %v7769
        %8153 = vmatprep.subr.mxu0 0.0
        %8154 = vmatpush1.msra.mxu0 %v7770
        %8155 = vmatprep.subr.mxu0 0.0
        %8156 = vmatpush1.msra.mxu0 %v7771
        %8157 = vmatprep.subr.mxu0 0.0
        %8158 = vmatpush1.msra.mxu0 %v7772
        %8159 = vmatprep.subr.mxu0 0.0
        %8160 = vmatpush1.msra.mxu0 %v7773
        %8161 = vmatprep.subr.mxu0 0.0
        %8162 = vmatpush1.msra.mxu0 %v7774
        %8163 = vmatprep.subr.mxu0 0.0
        %8164 = vmatpush1.msra.mxu0 %v7775
        %8165 = vmatprep.subr.mxu0 0.0
        %8166 = vmatpush1.msra.mxu0 %v7776
        %8167 = vmatprep.subr.mxu0 0.0
        %8168 = vmatpush1.msra.mxu0 %v7777
        %8169 = vmatprep.subr.mxu0 0.0
        %8170 = vmatpush1.msra.mxu0 %v7778
        %8171 = vmatprep.subr.mxu0 0.0
        %8172 = vmatpush1.msra.mxu0 %v7779
        %8173 = vmatprep.subr.mxu0 0.0
        %8174 = vmatpush1.msra.mxu0 %v7780
        %8175 = vmatprep.subr.mxu0 0.0
        %8176 = vmatpush1.msra.mxu0 %v7781
        %8177 = vmatprep.subr.mxu0 0.0
        %8178 = vmatpush1.msra.mxu0 %v7782
        %8179 = vmatprep.subr.mxu0 0.0
        %8180 = vmatpush1.msra.mxu0 %v7783
        %8181 = vmatprep.subr.mxu0 0.0
        %8182 = vmatpush1.msra.mxu0 %v7784
        %8183 = vmatprep.subr.mxu0 0.0
        %8184 = vmatpush1.msra.mxu0 %v7785
        %8185 = vmatprep.subr.mxu0 0.0
        %8186 = vmatpush1.msra.mxu0 %v7786
        %8187 = vmatprep.subr.mxu0 0.0
        %8188 = vmatpush1.msra.mxu0 %v7787
        %8189 = vmatprep.subr.mxu0 0.0
        %8190 = vmatpush1.msra.mxu0 %v7788
        %8191 = vmatprep.subr.mxu0 0.0
        %8192 = vmatpush1.msra.mxu0 %v7789
        %8193 = vmatprep.subr.mxu0 0.0
        %8194 = vmatpush1.msra.mxu0 %v7790
        %8195 = vmatprep.subr.mxu0 0.0
        %8196 = vmatpush1.msra.mxu0 %v7791
        %8197 = vmatprep.subr.mxu0 0.0
        %8198 = vmatpush1.msra.mxu0 %v7792
        %8199 = vmatprep.subr.mxu0 0.0
        %8200 = vmatpush1.msra.mxu0 %v7793
        %8201 = vmatprep.subr.mxu0 0.0
        %8202 = vmatpush1.msra.mxu0 %v7794
        %8203 = vmatprep.subr.mxu0 0.0
        %8204 = vmatpush1.msra.mxu0 %v7795
        %8205 = vmatprep.subr.mxu0 0.0
        %8206 = vmatpush1.msra.mxu0 %v7796
        %8207 = vmatprep.subr.mxu0 0.0
        %8208 = vmatpush1.msra.mxu0 %v7797
        %8209 = vmatprep.mubr.f32.mxu0 %v7743
        %8210 = vmatmul.mubr.f32.gmra.mrb[0].mxu0 %v7742
        %v8211 = vpop.f32.mrb[0].mxu0
        %v8212 = vadd.f32 %v8107, %v8211
        %v8213 = vpop.f32.mrb[0].mxu0
        %8214 = vmatprep.mubr.f32.mxu0 %v7746
        %8215 = vmatmul.mubr.f32.gmra.mrb[0].mxu0 %v7745
        %v8216 = vpop.f32.mrb[0].mxu0
        %v8217 = vadd.f32 %v8112, %v8216
        %v8218 = vpop.f32.mrb[0].mxu0
        %8219 = vmatprep.mubr.f32.mxu0 %v7749
        %8220 = vmatmul.mubr.f32.gmra.mrb[0].mxu0 %v7748
        %v8221 = vpop.f32.mrb[0].mxu0
        %v8222 = vadd.f32 %v8117, %v8221
        %v8223 = vpop.f32.mrb[0].mxu0
        %8224 = vmatprep.mubr.f32.mxu0 %v7752
        %8225 = vmatmul.mubr.f32.gmra.mrb[0].mxu0 %v7751
        %v8226 = vpop.f32.mrb[0].mxu0
        %v8227 = vadd.f32 %v8122, %v8226
        %v8228 = vpop.f32.mrb[0].mxu0
        %8229 = vmatprep.mubr.f32.mxu0 %v7755
        %8230 = vmatmul.mubr.f32.gmra.mrb[0].mxu0 %v7754
        %v8231 = vpop.f32.mrb[0].mxu0
        %v8232 = vadd.f32 %v8127, %v8231
        %v8233 = vpop.f32.mrb[0].mxu0
        %8234 = vmatprep.mubr.f32.mxu0 %v7758
        %8235 = vmatmul.mubr.f32.gmra.mrb[0].mxu0 %v7757
        %v8236 = vpop.f32.mrb[0].mxu0
        %v8237 = vadd.f32 %v8132, %v8236
        %v8238 = vpop.f32.mrb[0].mxu0
        %8239 = vmatprep.mubr.f32.mxu0 %v7761
        %8240 = vmatmul.mubr.f32.gmra.mrb[0].mxu0 %v7760
        %v8241 = vpop.f32.mrb[0].mxu0
        %v8242 = vadd.f32 %v8137, %v8241
        %v8243 = vpop.f32.mrb[0].mxu0
        %8244 = vmatprep.mubr.f32.mxu0 %v7764
        %8245 = vmatmul.mubr.f32.gmra.mrb[0].mxu0 %v7763
        %v8246 = vpop.f32.mrb[0].mxu0
        %v8247 = vadd.f32 %v8142, %v8246
        %v8248 = vpop.f32.mrb[0].mxu0
        %8249 = vdwg.mxu0
        %8250 = vmatprep.subr.mxu0 0.0
        %8251 = vmatpush1.msra.mxu0 %v7798
        %8252 = vmatprep.subr.mxu0 0.0
        %8253 = vmatpush1.msra.mxu0 %v7799
        %8254 = vmatprep.subr.mxu0 0.0
        %8255 = vmatpush1.msra.mxu0 %v7800
        %8256 = vmatprep.subr.mxu0 0.0
        %8257 = vmatpush1.msra.mxu0 %v7801
        %8258 = vmatprep.subr.mxu0 0.0
        %8259 = vmatpush1.msra.mxu0 %v7802
        %8260 = vmatprep.subr.mxu0 0.0
        %8261 = vmatpush1.msra.mxu0 %v7803
        %8262 = vmatprep.subr.mxu0 0.0
        %8263 = vmatpush1.msra.mxu0 %v7804
        %8264 = vmatprep.subr.mxu0 0.0
        %8265 = vmatpush1.msra.mxu0 %v7805
        %8266 = vmatprep.subr.mxu0 0.0
        %8267 = vmatpush1.msra.mxu0 %v7806
        %8268 = vmatprep.subr.mxu0 0.0
        %8269 = vmatpush1.msra.mxu0 %v7807
        %8270 = vmatprep.subr.mxu0 0.0
        %8271 = vmatpush1.msra.mxu0 %v7808
        %8272 = vmatprep.subr.mxu0 0.0
        %8273 = vmatpush1.msra.mxu0 %v7809
        %8274 = vmatprep.subr.mxu0 0.0
        %8275 = vmatpush1.msra.mxu0 %v7810
        %8276 = vmatprep.subr.mxu0 0.0
        %8277 = vmatpush1.msra.mxu0 %v7811
        %8278 = vmatprep.subr.mxu0 0.0
        %8279 = vmatpush1.msra.mxu0 %v7812
        %8280 = vmatprep.subr.mxu0 0.0
        %8281 = vmatpush1.msra.mxu0 %v7813
        %8282 = vmatprep.subr.mxu0 0.0
        %8283 = vmatpush1.msra.mxu0 0.0
        %8284 = vmatprep.subr.mxu0 0.0
        %8285 = vmatpush1.msra.mxu0 0.0
        %8286 = vmatprep.subr.mxu0 0.0
        %8287 = vmatpush1.msra.mxu0 0.0
        %8288 = vmatprep.subr.mxu0 0.0
        %8289 = vmatpush1.msra.mxu0 0.0
        %8290 = vmatprep.subr.mxu0 0.0
        %8291 = vmatpush1.msra.mxu0 0.0
        %8292 = vmatprep.subr.mxu0 0.0
        %8293 = vmatpush1.msra.mxu0 0.0
        %8294 = vmatprep.subr.mxu0 0.0
        %8295 = vmatpush1.msra.mxu0 0.0
        %8296 = vmatprep.subr.mxu0 0.0
        %8297 = vmatpush1.msra.mxu0 0.0
        %8298 = vmatprep.subr.mxu0 0.0
        %8299 = vmatpush1.msra.mxu0 0.0
        %8300 = vmatprep.subr.mxu0 0.0
        %8301 = vmatpush1.msra.mxu0 0.0
        %8302 = vmatprep.subr.mxu0 0.0
        %8303 = vmatpush1.msra.mxu0 0.0
        %8304 = vmatprep.subr.mxu0 0.0
        %8305 = vmatpush1.msra.mxu0 0.0
        %8306 = vmatprep.subr.mxu0 0.0
        %8307 = vmatpush1.msra.mxu0 0.0
        %8308 = vmatprep.subr.mxu0 0.0
        %8309 = vmatpush1.msra.mxu0 0.0
        %8310 = vmatprep.subr.mxu0 0.0
        %8311 = vmatpush1.msra.mxu0 0.0
        %8312 = vmatprep.subr.mxu0 0.0
        %8313 = vmatpush1.msra.mxu0 0.0
        %8314 = vmatprep.mubr.f32.mxu0 0.0
        %8315 = vmatmul.mubr.f32.gmra.mrb[0].mxu0 %v7744
        %v8316 = vpop.f32.mrb[0].mxu0
        %v8317 = vadd.f32 %v8212, %v8316
        %v8318 = vpop.f32.mrb[0].mxu0
        %8319 = vmatprep.mubr.f32.mxu0 0.0
        %8320 = vmatmul.mubr.f32.gmra.mrb[0].mxu0 %v7747
        %v8321 = vpop.f32.mrb[0].mxu0
        %v8322 = vadd.f32 %v8217, %v8321
        %v8323 = vpop.f32.mrb[0].mxu0
        %8324 = vmatprep.mubr.f32.mxu0 0.0
        %8325 = vmatmul.mubr.f32.gmra.mrb[0].mxu0 %v7750
        %v8326 = vpop.f32.mrb[0].mxu0
        %v8327 = vadd.f32 %v8222, %v8326
        %v8328 = vpop.f32.mrb[0].mxu0
        %8329 = vmatprep.mubr.f32.mxu0 0.0
        %8330 = vmatmul.mubr.f32.gmra.mrb[0].mxu0 %v7753
        %v8331 = vpop.f32.mrb[0].mxu0
        %v8332 = vadd.f32 %v8227, %v8331
        %v8333 = vpop.f32.mrb[0].mxu0
        %8334 = vmatprep.mubr.f32.mxu0 0.0
        %8335 = vmatmul.mubr.f32.gmra.mrb[0].mxu0 %v7756
        %v8336 = vpop.f32.mrb[0].mxu0
        %v8337 = vadd.f32 %v8232, %v8336
        %v8338 = vpop.f32.mrb[0].mxu0
        %8339 = vmatprep.mubr.f32.mxu0 0.0
        %8340 = vmatmul.mubr.f32.gmra.mrb[0].mxu0 %v7759
        %v8341 = vpop.f32.mrb[0].mxu0
        %v8342 = vadd.f32 %v8237, %v8341
        %v8343 = vpop.f32.mrb[0].mxu0
        %8344 = vmatprep.mubr.f32.mxu0 0.0
        %8345 = vmatmul.mubr.f32.gmra.mrb[0].mxu0 %v7762
        %v8346 = vpop.f32.mrb[0].mxu0
        %v8347 = vadd.f32 %v8242, %v8346
        %v8348 = vpop.f32.mrb[0].mxu0
        %8349 = vmatprep.mubr.f32.mxu0 0.0
        %8350 = vmatmul.mubr.f32.gmra.mrb[0].mxu0 %v7765
        %v8351 = vpop.f32.mrb[0].mxu0
        %v8352 = vadd.f32 %v8247, %v8351
        %v8353 = vpop.f32.mrb[0].mxu0
        %8354 = vdwg.mxu0
        %s8355 = scalar_lea.vmem [#allocation5], 48
        %v8356 = vld [vmem:[%s8355 + $0x7] sm:$0xff]
        %v8357 = vld [vmem:[%s8355 + $0x1f] sm:$0xff]
        %v8358 = vld [vmem:[%s8355 + $0x37] sm:$0xff]
        %v8359 = vld [vmem:[%s8355 + $0x4f] sm:$0xff]
        %v8360 = vld [vmem:[%s8355 + $0x67] sm:$0xff]
        %v8361 = vld [vmem:[%s8355 + $0x7f] sm:$0xff]
        %v8362 = vld [vmem:[%s8355 + $0x97] sm:$0xff]
        %v8363 = vld [vmem:[%s8355 + $0xaf] sm:$0xff]
        %v8364 = vld [vmem:[%s8355 + $0x8] sm:$0xff]
        %v8365 = vld [vmem:[%s8355 + $0x20] sm:$0xff]
        %v8366 = vld [vmem:[%s8355 + $0x38] sm:$0xff]
        %v8367 = vld [vmem:[%s8355 + $0x50] sm:$0xff]
        %v8368 = vld [vmem:[%s8355 + $0x68] sm:$0xff]
        %v8369 = vld [vmem:[%s8355 + $0x80] sm:$0xff]
        %v8370 = vld [vmem:[%s8355 + $0x98] sm:$0xff]
        %v8371 = vld [vmem:[%s8355 + $0xb0] sm:$0xff]
        %v8372 = vld [vmem:[%s8355 + $0x9] sm:$0xff]
        %v8373 = vld [vmem:[%s8355 + $0x21] sm:$0xff]
        %v8374 = vld [vmem:[%s8355 + $0x39] sm:$0xff]
        %v8375 = vld [vmem:[%s8355 + $0x51] sm:$0xff]
        %v8376 = vld [vmem:[%s8355 + $0x69] sm:$0xff]
        %v8377 = vld [vmem:[%s8355 + $0x81] sm:$0xff]
        %v8378 = vld [vmem:[%s8355 + $0x99] sm:$0xff]
        %v8379 = vld [vmem:[%s8355 + $0xb1] sm:$0xff]
        %8380 = vst [vmem:[#allocation8] sm:$0xff] %v8356
        %8381 = vst [vmem:[#allocation8 + $0x18] sm:$0xff] %v8357
        %8382 = vst [vmem:[#allocation8 + $0x30] sm:$0xff] %v8358
        %8383 = vst [vmem:[#allocation8 + $0x48] sm:$0xff] %v8359
        %8384 = vst [vmem:[#allocation8 + $0x60] sm:$0xff] %v8360
        %8385 = vst [vmem:[#allocation8 + $0x78] sm:$0xff] %v8361
        %8386 = vst [vmem:[#allocation8 + $0x90] sm:$0xff] %v8362
        %8387 = vst [vmem:[#allocation8 + $0xa8] sm:$0xff] %v8363
        %8388 = vst [vmem:[#allocation8 + $0x8] sm:$0xff] %v8364
        %8389 = vst [vmem:[#allocation8 + $0x20] sm:$0xff] %v8365
        %8390 = vst [vmem:[#allocation8 + $0x38] sm:$0xff] %v8366
        %8391 = vst [vmem:[#allocation8 + $0x50] sm:$0xff] %v8367
        %8392 = vst [vmem:[#allocation8 + $0x68] sm:$0xff] %v8368
        %8393 = vst [vmem:[#allocation8 + $0x80] sm:$0xff] %v8369
        %8394 = vst [vmem:[#allocation8 + $0x98] sm:$0xff] %v8370
        %8395 = vst [vmem:[#allocation8 + $0xb0] sm:$0xff] %v8371
        %8396 = vst [vmem:[#allocation8 + $0x10] sm:$0xff] %v8372
        %8397 = vst [vmem:[#allocation8 + $0x28] sm:$0xff] %v8373
        %8398 = vst [vmem:[#allocation8 + $0x40] sm:$0xff] %v8374
        %8399 = vst [vmem:[#allocation8 + $0x58] sm:$0xff] %v8375
        %8400 = vst [vmem:[#allocation8 + $0x70] sm:$0xff] %v8376
        %8401 = vst [vmem:[#allocation8 + $0x88] sm:$0xff] %v8377
        %8402 = vst [vmem:[#allocation8 + $0xa0] sm:$0xff] %v8378
        %8403 = vst [vmem:[#allocation8 + $0xb8] sm:$0xff] %v8379
        %v8404 = vld [vmem:[#allocation8] sm:$0xff]
        %v8405 = vld [vmem:[#allocation8 + $0x8] sm:$0xff]
        %v8406 = vld [vmem:[#allocation8 + $0x10] sm:$0xff]
        %v8407 = vld [vmem:[#allocation8 + $0x18] sm:$0xff]
        %v8408 = vld [vmem:[#allocation8 + $0x20] sm:$0xff]
        %v8409 = vld [vmem:[#allocation8 + $0x28] sm:$0xff]
        %v8410 = vld [vmem:[#allocation8 + $0x30] sm:$0xff]
        %v8411 = vld [vmem:[#allocation8 + $0x38] sm:$0xff]
        %v8412 = vld [vmem:[#allocation8 + $0x40] sm:$0xff]
        %v8413 = vld [vmem:[#allocation8 + $0x48] sm:$0xff]
        %v8414 = vld [vmem:[#allocation8 + $0x50] sm:$0xff]
        %v8415 = vld [vmem:[#allocation8 + $0x58] sm:$0xff]
        %v8416 = vld [vmem:[#allocation8 + $0x60] sm:$0xff]
        %v8417 = vld [vmem:[#allocation8 + $0x68] sm:$0xff]
        %v8418 = vld [vmem:[#allocation8 + $0x70] sm:$0xff]
        %v8419 = vld [vmem:[#allocation8 + $0x78] sm:$0xff]
        %v8420 = vld [vmem:[#allocation8 + $0x80] sm:$0xff]
        %v8421 = vld [vmem:[#allocation8 + $0x88] sm:$0xff]
        %v8422 = vld [vmem:[#allocation8 + $0x90] sm:$0xff]
        %v8423 = vld [vmem:[#allocation8 + $0x98] sm:$0xff]
        %v8424 = vld [vmem:[#allocation8 + $0xa0] sm:$0xff]
        %v8425 = vld [vmem:[#allocation8 + $0xa8] sm:$0xff]
        %v8426 = vld [vmem:[#allocation8 + $0xb0] sm:$0xff]
        %v8427 = vld [vmem:[#allocation8 + $0xb8] sm:$0xff]
        %s8428 = scalar_lea.vmem [#allocation13], 768
        %v8429 = vld [vmem:[%s8428] sm:$0xff]
        %v8430 = vld [vmem:[%s8428 + $0x8] sm:$0xff]
        %v8431 = vld [vmem:[%s8428 + $0x10] sm:$0xff]
        %v8432 = vld [vmem:[%s8428 + $0x18] sm:$0xff]
        %v8433 = vld [vmem:[%s8428 + $0x20] sm:$0xff]
        %v8434 = vld [vmem:[%s8428 + $0x28] sm:$0xff]
        %v8435 = vld [vmem:[%s8428 + $0x30] sm:$0xff]
        %v8436 = vld [vmem:[%s8428 + $0x38] sm:$0xff]
        %v8437 = vld [vmem:[%s8428 + $0x40] sm:$0xff]
        %v8438 = vld [vmem:[%s8428 + $0x48] sm:$0xff]
        %v8439 = vld [vmem:[%s8428 + $0x50] sm:$0xff]
        %v8440 = vld [vmem:[%s8428 + $0x58] sm:$0xff]
        %v8441 = vld [vmem:[%s8428 + $0x60] sm:$0xff]
        %v8442 = vld [vmem:[%s8428 + $0x68] sm:$0xff]
        %v8443 = vld [vmem:[%s8428 + $0x70] sm:$0xff]
        %v8444 = vld [vmem:[%s8428 + $0x78] sm:$0xff]
        %v8445 = vld [vmem:[%s8428 + $0x80] sm:$0xff]
        %v8446 = vld [vmem:[%s8428 + $0x88] sm:$0xff]
        %v8447 = vld [vmem:[%s8428 + $0x90] sm:$0xff]
        %v8448 = vld [vmem:[%s8428 + $0x98] sm:$0xff]
        %v8449 = vld [vmem:[%s8428 + $0xa0] sm:$0xff]
        %v8450 = vld [vmem:[%s8428 + $0xa8] sm:$0xff]
        %v8451 = vld [vmem:[%s8428 + $0xb0] sm:$0xff]
        %v8452 = vld [vmem:[%s8428 + $0xb8] sm:$0xff]
        %v8453 = vld [vmem:[%s8428 + $0xc0] sm:$0xff]
        %v8454 = vld [vmem:[%s8428 + $0xc8] sm:$0xff]
        %v8455 = vld [vmem:[%s8428 + $0xd0] sm:$0xff]
        %v8456 = vld [vmem:[%s8428 + $0xd8] sm:$0xff]
        %v8457 = vld [vmem:[%s8428 + $0xe0] sm:$0xff]
        %v8458 = vld [vmem:[%s8428 + $0xe8] sm:$0xff]
        %v8459 = vld [vmem:[%s8428 + $0xf0] sm:$0xff]
        %v8460 = vld [vmem:[%s8428 + $0xf8] sm:$0xff]
        %v8461 = vld [vmem:[%s8428 + $0x100] sm:$0xff]
        %v8462 = vld [vmem:[%s8428 + $0x108] sm:$0xff]
        %v8463 = vld [vmem:[%s8428 + $0x110] sm:$0xff]
        %v8464 = vld [vmem:[%s8428 + $0x118] sm:$0xff]
        %v8465 = vld [vmem:[%s8428 + $0x120] sm:$0xff]
        %v8466 = vld [vmem:[%s8428 + $0x128] sm:$0xff]
        %v8467 = vld [vmem:[%s8428 + $0x130] sm:$0xff]
        %v8468 = vld [vmem:[%s8428 + $0x138] sm:$0xff]
        %v8469 = vld [vmem:[%s8428 + $0x140] sm:$0xff]
        %v8470 = vld [vmem:[%s8428 + $0x148] sm:$0xff]
        %v8471 = vld [vmem:[%s8428 + $0x150] sm:$0xff]
        %v8472 = vld [vmem:[%s8428 + $0x158] sm:$0xff]
        %v8473 = vld [vmem:[%s8428 + $0x160] sm:$0xff]
        %v8474 = vld [vmem:[%s8428 + $0x168] sm:$0xff]
        %v8475 = vld [vmem:[%s8428 + $0x170] sm:$0xff]
        %v8476 = vld [vmem:[%s8428 + $0x178] sm:$0xff]
        %8477 = vmatprep.subr.mxu0 0.0
        %8478 = vmatpush1.msra.mxu0 %v8429
        %8479 = vmatprep.subr.mxu0 0.0
        %8480 = vmatpush1.msra.mxu0 %v8430
        %8481 = vmatprep.subr.mxu0 0.0
        %8482 = vmatpush1.msra.mxu0 %v8431
        %8483 = vmatprep.subr.mxu0 0.0
        %8484 = vmatpush1.msra.mxu0 %v8432
        %8485 = vmatprep.subr.mxu0 0.0
        %8486 = vmatpush1.msra.mxu0 %v8433
        %8487 = vmatprep.subr.mxu0 0.0
        %8488 = vmatpush1.msra.mxu0 %v8434
        %8489 = vmatprep.subr.mxu0 0.0
        %8490 = vmatpush1.msra.mxu0 %v8435
        %8491 = vmatprep.subr.mxu0 0.0
        %8492 = vmatpush1.msra.mxu0 %v8436
        %8493 = vmatprep.subr.mxu0 0.0
        %8494 = vmatpush1.msra.mxu0 %v8437
        %8495 = vmatprep.subr.mxu0 0.0
        %8496 = vmatpush1.msra.mxu0 %v8438
        %8497 = vmatprep.subr.mxu0 0.0
        %8498 = vmatpush1.msra.mxu0 %v8439
        %8499 = vmatprep.subr.mxu0 0.0
        %8500 = vmatpush1.msra.mxu0 %v8440
        %8501 = vmatprep.subr.mxu0 0.0
        %8502 = vmatpush1.msra.mxu0 %v8441
        %8503 = vmatprep.subr.mxu0 0.0
        %8504 = vmatpush1.msra.mxu0 %v8442
        %8505 = vmatprep.subr.mxu0 0.0
        %8506 = vmatpush1.msra.mxu0 %v8443
        %8507 = vmatprep.subr.mxu0 0.0
        %8508 = vmatpush1.msra.mxu0 %v8444
        %8509 = vmatprep.subr.mxu0 0.0
        %8510 = vmatpush1.msra.mxu0 %v8445
        %8511 = vmatprep.subr.mxu0 0.0
        %8512 = vmatpush1.msra.mxu0 %v8446
        %8513 = vmatprep.subr.mxu0 0.0
        %8514 = vmatpush1.msra.mxu0 %v8447
        %8515 = vmatprep.subr.mxu0 0.0
        %8516 = vmatpush1.msra.mxu0 %v8448
        %8517 = vmatprep.subr.mxu0 0.0
        %8518 = vmatpush1.msra.mxu0 %v8449
        %8519 = vmatprep.subr.mxu0 0.0
        %8520 = vmatpush1.msra.mxu0 %v8450
        %8521 = vmatprep.subr.mxu0 0.0
        %8522 = vmatpush1.msra.mxu0 %v8451
        %8523 = vmatprep.subr.mxu0 0.0
        %8524 = vmatpush1.msra.mxu0 %v8452
        %8525 = vmatprep.subr.mxu0 0.0
        %8526 = vmatpush1.msra.mxu0 %v8453
        %8527 = vmatprep.subr.mxu0 0.0
        %8528 = vmatpush1.msra.mxu0 %v8454
        %8529 = vmatprep.subr.mxu0 0.0
        %8530 = vmatpush1.msra.mxu0 %v8455
        %8531 = vmatprep.subr.mxu0 0.0
        %8532 = vmatpush1.msra.mxu0 %v8456
        %8533 = vmatprep.subr.mxu0 0.0
        %8534 = vmatpush1.msra.mxu0 %v8457
        %8535 = vmatprep.subr.mxu0 0.0
        %8536 = vmatpush1.msra.mxu0 %v8458
        %8537 = vmatprep.subr.mxu0 0.0
        %8538 = vmatpush1.msra.mxu0 %v8459
        %8539 = vmatprep.subr.mxu0 0.0
        %8540 = vmatpush1.msra.mxu0 %v8460
        %8541 = vmatprep.mubr.f32.mxu0 %v8405
        %8542 = vmatmul.mubr.f32.gmra.mrb[0].mxu0 %v8404
        %v8543 = vpop.f32.mrb[0].mxu0
        %v8544 = vadd.f32 0.0, %v8543
        %v8545 = vpop.f32.mrb[0].mxu0
        %8546 = vmatprep.mubr.f32.mxu0 %v8408
        %8547 = vmatmul.mubr.f32.gmra.mrb[0].mxu0 %v8407
        %v8548 = vpop.f32.mrb[0].mxu0
        %v8549 = vadd.f32 0.0, %v8548
        %v8550 = vpop.f32.mrb[0].mxu0
        %8551 = vmatprep.mubr.f32.mxu0 %v8411
        %8552 = vmatmul.mubr.f32.gmra.mrb[0].mxu0 %v8410
        %v8553 = vpop.f32.mrb[0].mxu0
        %v8554 = vadd.f32 0.0, %v8553
        %v8555 = vpop.f32.mrb[0].mxu0
        %8556 = vmatprep.mubr.f32.mxu0 %v8414
        %8557 = vmatmul.mubr.f32.gmra.mrb[0].mxu0 %v8413
        %v8558 = vpop.f32.mrb[0].mxu0
        %v8559 = vadd.f32 0.0, %v8558
        %v8560 = vpop.f32.mrb[0].mxu0
        %8561 = vmatprep.mubr.f32.mxu0 %v8417
        %8562 = vmatmul.mubr.f32.gmra.mrb[0].mxu0 %v8416
        %v8563 = vpop.f32.mrb[0].mxu0
        %v8564 = vadd.f32 0.0, %v8563
        %v8565 = vpop.f32.mrb[0].mxu0
        %8566 = vmatprep.mubr.f32.mxu0 %v8420
        %8567 = vmatmul.mubr.f32.gmra.mrb[0].mxu0 %v8419
        %v8568 = vpop.f32.mrb[0].mxu0
        %v8569 = vadd.f32 0.0, %v8568
        %v8570 = vpop.f32.mrb[0].mxu0
        %8571 = vmatprep.mubr.f32.mxu0 %v8423
        %8572 = vmatmul.mubr.f32.gmra.mrb[0].mxu0 %v8422
        %v8573 = vpop.f32.mrb[0].mxu0
        %v8574 = vadd.f32 0.0, %v8573
        %v8575 = vpop.f32.mrb[0].mxu0
        %8576 = vmatprep.mubr.f32.mxu0 %v8426
        %8577 = vmatmul.mubr.f32.gmra.mrb[0].mxu0 %v8425
        %v8578 = vpop.f32.mrb[0].mxu0
        %v8579 = vadd.f32 0.0, %v8578
        %v8580 = vpop.f32.mrb[0].mxu0
        %8581 = vdwg.mxu0
        %8582 = vmatprep.subr.mxu0 0.0
        %8583 = vmatpush1.msra.mxu0 %v8461
        %8584 = vmatprep.subr.mxu0 0.0
        %8585 = vmatpush1.msra.mxu0 %v8462
        %8586 = vmatprep.subr.mxu0 0.0
        %8587 = vmatpush1.msra.mxu0 %v8463
        %8588 = vmatprep.subr.mxu0 0.0
        %8589 = vmatpush1.msra.mxu0 %v8464
        %8590 = vmatprep.subr.mxu0 0.0
        %8591 = vmatpush1.msra.mxu0 %v8465
        %8592 = vmatprep.subr.mxu0 0.0
        %8593 = vmatpush1.msra.mxu0 %v8466
        %8594 = vmatprep.subr.mxu0 0.0
        %8595 = vmatpush1.msra.mxu0 %v8467
        %8596 = vmatprep.subr.mxu0 0.0
        %8597 = vmatpush1.msra.mxu0 %v8468
        %8598 = vmatprep.subr.mxu0 0.0
        %8599 = vmatpush1.msra.mxu0 %v8469
        %8600 = vmatprep.subr.mxu0 0.0
        %8601 = vmatpush1.msra.mxu0 %v8470
        %8602 = vmatprep.subr.mxu0 0.0
        %8603 = vmatpush1.msra.mxu0 %v8471
        %8604 = vmatprep.subr.mxu0 0.0
        %8605 = vmatpush1.msra.mxu0 %v8472
        %8606 = vmatprep.subr.mxu0 0.0
        %8607 = vmatpush1.msra.mxu0 %v8473
        %8608 = vmatprep.subr.mxu0 0.0
        %8609 = vmatpush1.msra.mxu0 %v8474
        %8610 = vmatprep.subr.mxu0 0.0
        %8611 = vmatpush1.msra.mxu0 %v8475
        %8612 = vmatprep.subr.mxu0 0.0
        %8613 = vmatpush1.msra.mxu0 %v8476
        %8614 = vmatprep.subr.mxu0 0.0
        %8615 = vmatpush1.msra.mxu0 0.0
        %8616 = vmatprep.subr.mxu0 0.0
        %8617 = vmatpush1.msra.mxu0 0.0
        %8618 = vmatprep.subr.mxu0 0.0
        %8619 = vmatpush1.msra.mxu0 0.0
        %8620 = vmatprep.subr.mxu0 0.0
        %8621 = vmatpush1.msra.mxu0 0.0
        %8622 = vmatprep.subr.mxu0 0.0
        %8623 = vmatpush1.msra.mxu0 0.0
        %8624 = vmatprep.subr.mxu0 0.0
        %8625 = vmatpush1.msra.mxu0 0.0
        %8626 = vmatprep.subr.mxu0 0.0
        %8627 = vmatpush1.msra.mxu0 0.0
        %8628 = vmatprep.subr.mxu0 0.0
        %8629 = vmatpush1.msra.mxu0 0.0
        %8630 = vmatprep.subr.mxu0 0.0
        %8631 = vmatpush1.msra.mxu0 0.0
        %8632 = vmatprep.subr.mxu0 0.0
        %8633 = vmatpush1.msra.mxu0 0.0
        %8634 = vmatprep.subr.mxu0 0.0
        %8635 = vmatpush1.msra.mxu0 0.0
        %8636 = vmatprep.subr.mxu0 0.0
        %8637 = vmatpush1.msra.mxu0 0.0
        %8638 = vmatprep.subr.mxu0 0.0
        %8639 = vmatpush1.msra.mxu0 0.0
        %8640 = vmatprep.subr.mxu0 0.0
        %8641 = vmatpush1.msra.mxu0 0.0
        %8642 = vmatprep.subr.mxu0 0.0
        %8643 = vmatpush1.msra.mxu0 0.0
        %8644 = vmatprep.subr.mxu0 0.0
        %8645 = vmatpush1.msra.mxu0 0.0
        %8646 = vmatprep.mubr.f32.mxu0 0.0
        %8647 = vmatmul.mubr.f32.gmra.mrb[0].mxu0 %v8406
        %v8648 = vpop.f32.mrb[0].mxu0
        %v8649 = vadd.f32 %v8544, %v8648
        %v8650 = vpop.f32.mrb[0].mxu0
        %8651 = vmatprep.mubr.f32.mxu0 0.0
        %8652 = vmatmul.mubr.f32.gmra.mrb[0].mxu0 %v8409
        %v8653 = vpop.f32.mrb[0].mxu0
        %v8654 = vadd.f32 %v8549, %v8653
        %v8655 = vpop.f32.mrb[0].mxu0
        %8656 = vmatprep.mubr.f32.mxu0 0.0
        %8657 = vmatmul.mubr.f32.gmra.mrb[0].mxu0 %v8412
        %v8658 = vpop.f32.mrb[0].mxu0
        %v8659 = vadd.f32 %v8554, %v8658
        %v8660 = vpop.f32.mrb[0].mxu0
        %8661 = vmatprep.mubr.f32.mxu0 0.0
        %8662 = vmatmul.mubr.f32.gmra.mrb[0].mxu0 %v8415
        %v8663 = vpop.f32.mrb[0].mxu0
        %v8664 = vadd.f32 %v8559, %v8663
        %v8665 = vpop.f32.mrb[0].mxu0
        %8666 = vmatprep.mubr.f32.mxu0 0.0
        %8667 = vmatmul.mubr.f32.gmra.mrb[0].mxu0 %v8418
        %v8668 = vpop.f32.mrb[0].mxu0
        %v8669 = vadd.f32 %v8564, %v8668
        %v8670 = vpop.f32.mrb[0].mxu0
        %8671 = vmatprep.mubr.f32.mxu0 0.0
        %8672 = vmatmul.mubr.f32.gmra.mrb[0].mxu0 %v8421
        %v8673 = vpop.f32.mrb[0].mxu0
        %v8674 = vadd.f32 %v8569, %v8673
        %v8675 = vpop.f32.mrb[0].mxu0
        %8676 = vmatprep.mubr.f32.mxu0 0.0
        %8677 = vmatmul.mubr.f32.gmra.mrb[0].mxu0 %v8424
        %v8678 = vpop.f32.mrb[0].mxu0
        %v8679 = vadd.f32 %v8574, %v8678
        %v8680 = vpop.f32.mrb[0].mxu0
        %8681 = vmatprep.mubr.f32.mxu0 0.0
        %8682 = vmatmul.mubr.f32.gmra.mrb[0].mxu0 %v8427
        %v8683 = vpop.f32.mrb[0].mxu0
        %v8684 = vadd.f32 %v8579, %v8683
        %v8685 = vpop.f32.mrb[0].mxu0
        %8686 = vdwg.mxu0
        %v8687 = vadd.f32 %v8317, %v8649
        %v8688 = vadd.f32 %v8322, %v8654
        %v8689 = vadd.f32 %v8327, %v8659
        %v8690 = vadd.f32 %v8332, %v8664
        %v8691 = vadd.f32 %v8337, %v8669
        %v8692 = vadd.f32 %v8342, %v8674
        %v8693 = vadd.f32 %v8347, %v8679
        %v8694 = vadd.f32 %v8352, %v8684
        %v8695 = vld [vmem:[%s8] sm:$0x1]
        %v8697 = vlaneseq
        %v8698 = vshrl.u32 %v8697, 7
        %v8699 = vsub.s32 0, %v8698
        %v8700 = vrot.slane %v8695, %v8699
        %v8702 = vadd.f32 %v8687, %v8700
        %v8703 = vadd.f32 %v8688, %v8700
        %v8704 = vadd.f32 %v8689, %v8700
        %v8705 = vadd.f32 %v8690, %v8700
        %v8706 = vadd.f32 %v8691, %v8700
        %v8707 = vadd.f32 %v8692, %v8700
        %v8708 = vadd.f32 %v8693, %v8700
        %v8709 = vadd.f32 %v8694, %v8700
        %v8710 = vmax.f32 %v8702, 0.0
        %v8711 = vmax.f32 %v8703, 0.0
        %v8712 = vmax.f32 %v8704, 0.0
        %v8713 = vmax.f32 %v8705, 0.0
        %v8714 = vmax.f32 %v8706, 0.0
        %v8715 = vmax.f32 %v8707, 0.0
        %v8716 = vmax.f32 %v8708, 0.0
        %v8717 = vmax.f32 %v8709, 0.0
        %8718 = vst [vmem:[%s461] sm:$0xff] %v8710
        %8719 = vst [vmem:[%s461 + $0x8] sm:$0xff] %v8711
        %8720 = vst [vmem:[%s461 + $0x10] sm:$0xff] %v8712
        %8721 = vst [vmem:[%s461 + $0x18] sm:$0xff] %v8713
        %8722 = vst [vmem:[%s461 + $0x20] sm:$0xff] %v8714
        %8723 = vst [vmem:[%s461 + $0x28] sm:$0xff] %v8715
        %8724 = vst [vmem:[%s461 + $0x30] sm:$0xff] %v8716
        %8725 = vst [vmem:[%s461 + $0x38] sm:$0xff] %v8717
        %p8726 = scmp.lt.s32.totalorder %s32, 1
        %s8727 = scalar_select %p8726, %s32, 1
        %s8728 = smul.addr %s8727, 16
        %s8729 = smul.addr %s8728, 8
        %s8730 = scalar_lea.vmem %s9, %s8729
        %p8731 = scmp.lt.s32.totalorder %s32, 1
        %s8732 = scalar_select %p8731, %s32, 1
        %s8733 = smul.addr %s8732, 16
        %s8734 = smul.addr %s8733, 8
        %s8735 = scalar_lea.vmem %s10, %s8734
        %s8736 = sand.u32 %s286, 1
        %s8737 = scalar_lea.sflag [#allocation12], %s8736
        %s8738 = sand.u32 %s286, 1
        %s8739 = smul.addr %s8738, 64
        %s8740 = scalar_lea.vmem [#allocation15], %s8739
        %s8741 = sand.u32 %s312, 1
        %s8742 = scalar_lea.sflag [#allocation17], %s8741
        %s8743 = sand.u32 %s312, 1
        %s8744 = smul.addr %s8743, 64
        %s8745 = scalar_lea.vmem [#allocation16], %s8744
        // Predicated region
        $region65: #{vgg_v2_forward.1} parent=55 // pred_check
          %p8746 = pneg %p244
        $region66: #{vgg_v2_forward.1} parent=55 // pred_check_branch
          %8748 = sbr.rel (%p8746) target = $region68
        $region67: #{vgg_v2_forward.1} parent=55 // pred_region
          _
        $region68: #{vgg_v2_forward.1} parent=55 // pred_fallthru
          _
        // Predicated region
        $region69: #{vgg_v2_forward.1} parent=55 // pred_check
          %p8749 = pneg %p270
        $region70: #{vgg_v2_forward.1} parent=55 // pred_check_branch
          %8751 = sbr.rel (%p8749) target = $region72
        $region71: #{vgg_v2_forward.1} parent=55 // pred_region
          _
        $region72: #{vgg_v2_forward.1} parent=55 // pred_fallthru
          _
        // Predicated region
        $region73: #{vgg_v2_forward.1} parent=55 // pred_check
          %p8752 = pneg %p296
        $region74: #{vgg_v2_forward.1} parent=55 // pred_check_branch
          %8754 = sbr.rel (%p8752) target = $region76
        $region75: #{vgg_v2_forward.1} parent=55 // pred_region
          %s8756 = ssub.s32 1024, 1024
          %8757 = vsyncadd %s8737, %s8756
          %s8758 = smul.addr %s32, 8
          %s8759 = smul.addr %s8758, 128
          %s8760 = scalar_lea.hbm %s11, %s8759
          %s8761 = sshll.u32 %s8740, 4
          %s8762 = int_to_ptr.vmem [resolvable:$true] %s8761
          %8767 = dma.vmem_to_hbm [thread:$0]  %s8762, 1024, %s8760, %s8737, 128, 128, 8
        $region76: #{vgg_v2_forward.1} parent=55 // pred_fallthru
          _
        // Predicated region
        $region77: #{vgg_v2_forward.1} parent=55 // pred_check
          %p8768 = pneg %p322
        $region78: #{vgg_v2_forward.1} parent=55 // pred_check_branch
          %8770 = sbr.rel (%p8768) target = $region80
        $region79: #{vgg_v2_forward.1} parent=55 // pred_region
          %s8772 = ssub.s32 1024, 1024
          %8773 = vsyncadd %s8742, %s8772
          %s8774 = smul.addr %s32, 8
          %s8775 = smul.addr %s8774, 128
          %s8776 = scalar_lea.hbm %s12, %s8775
          %s8777 = sshll.u32 %s8745, 4
          %s8778 = int_to_ptr.vmem [resolvable:$true] %s8777
          %8783 = dma.vmem_to_hbm [thread:$0]  %s8778, 1024, %s8776, %s8742, 128, 128, 8
        $region80: #{vgg_v2_forward.1} parent=55 // pred_fallthru
          _
      $region56: #{vgg_v2_forward.1} parent=5 // pred_fallthru
        _
      %p8784 = scmp.le.s32.totalorder 2, %s27
      // Predicated region
      $region81: #{vgg_v2_forward.1} parent=5 // pred_check
        %p8785 = pneg %p8784
      $region82: #{vgg_v2_forward.1} parent=5 // pred_check_branch
        %8787 = sbr.rel (%p8785) target = $region84
      $region83: #{vgg_v2_forward.1} parent=5 // pred_region
        %s8788 = ssub.s32 %s27, 2
        // Predicated region
        $region85: #{vgg_v2_forward.1} parent=83 // pred_check
          %p8789 = pneg %p250
        $region86: #{vgg_v2_forward.1} parent=83 // pred_check_branch
          %8791 = sbr.rel (%p8789) target = $region88
        $region87: #{vgg_v2_forward.1} parent=83 // pred_region
          %p8792 = scmp.lt.s32.totalorder %s33, 1
          %s8793 = scalar_select %p8792, %s33, 1
          %s8794 = smul.addr %s8793, 16
          %s8795 = smul.addr %s8794, 8
          %s8796 = scalar_lea.vmem %s9, %s8795
        $region88: #{vgg_v2_forward.1} parent=83 // pred_fallthru
          _
        // Predicated region
        $region89: #{vgg_v2_forward.1} parent=83 // pred_check
          %p8797 = pneg %p276
        $region90: #{vgg_v2_forward.1} parent=83 // pred_check_branch
          %8799 = sbr.rel (%p8797) target = $region92
        $region91: #{vgg_v2_forward.1} parent=83 // pred_region
          %p8800 = scmp.lt.s32.totalorder %s33, 1
          %s8801 = scalar_select %p8800, %s33, 1
          %s8802 = smul.addr %s8801, 16
          %s8803 = smul.addr %s8802, 8
          %s8804 = scalar_lea.vmem %s10, %s8803
        $region92: #{vgg_v2_forward.1} parent=83 // pred_fallthru
          _
        // Predicated region
        $region93: #{vgg_v2_forward.1} parent=83 // pred_check
          %p8805 = pneg %p302
        $region94: #{vgg_v2_forward.1} parent=83 // pred_check_branch
          %8807 = sbr.rel (%p8805) target = $region96
        $region95: #{vgg_v2_forward.1} parent=83 // pred_region
          %s8808 = sand.u32 %s287, 1
          %s8809 = scalar_lea.sflag [#allocation12], %s8808
          %s8810 = sand.u32 %s287, 1
          %s8811 = smul.addr %s8810, 64
          %s8812 = scalar_lea.vmem [#allocation15], %s8811
          %8813 = dma.done %s8809, 1024
        $region96: #{vgg_v2_forward.1} parent=83 // pred_fallthru
          _
        // Predicated region
        $region97: #{vgg_v2_forward.1} parent=83 // pred_check
          %p8814 = pneg %p328
        $region98: #{vgg_v2_forward.1} parent=83 // pred_check_branch
          %8816 = sbr.rel (%p8814) target = $region100
        $region99: #{vgg_v2_forward.1} parent=83 // pred_region
          %s8817 = sand.u32 %s313, 1
          %s8818 = scalar_lea.sflag [#allocation17], %s8817
          %s8819 = sand.u32 %s313, 1
          %s8820 = smul.addr %s8819, 64
          %s8821 = scalar_lea.vmem [#allocation16], %s8820
          %8822 = dma.done %s8818, 1024
        $region100: #{vgg_v2_forward.1} parent=83 // pred_fallthru
          _
      $region84: #{vgg_v2_forward.1} parent=5 // pred_fallthru
        _
    $region6: #{vgg_v2_forward.1} parent=1 // loop_footer
      %s31 = sadd.s32 1, %s27
    $region7: #{vgg_v2_forward.1} parent=1 // loop_footer_branch
      %26 = sbr.rel target = $region3
    $region8: #{vgg_v2_forward.1} parent=1 // loop_exit
      _
    %8823 = vsyncpa [#allocation11], 1
    %s8824 = scalar_lea.sflag [#allocation11], 1
    %8825 = vsyncpa %s8824, 1
    %8826 = vsyncpa [#allocation14], 1
    %8827 = vsyncpa [#allocation12], 1
    %s8828 = scalar_lea.sflag [#allocation12], 1
    %8829 = vsyncpa %s8828, 1
    %8830 = vsyncpa [#allocation17], 1
    %s8831 = scalar_lea.sflag [#allocation17], 1
    %8832 = vsyncpa %s8831, 1

</llo_original>
